<compile_context>
chip_gen: v7x
topology: tpu7x:2x2x1
jax: 0.10.0
libtpu: 0.0.40
codegen_flags: <defaults>
</compile_context>

<pallas_src>
import functools

import jax
import jax.numpy as jnp
from jax.experimental import pallas as pl
from jax.experimental.pallas import tpu as pltpu

F32 = jnp.float32


# ----------------------------------------------------------------------------
# In-kernel helpers
# ----------------------------------------------------------------------------
def _gat_attention(wh, a1, a2, eb):
    """GATv1 attention weights.  wh: (N, H); a1, a2: (1, H); eb: (N, N) bias."""
    dn = (((1,), (1,)), ((), ()))
    s1 = jax.lax.dot_general(wh, a1, dn, preferred_element_type=F32)   # (N, 1)
    s2 = jax.lax.dot_general(a2, wh, dn, preferred_element_type=F32)   # (1, N)
    e = s1 + s2                                                        # e_ij = a1·Wh_i + a2·Wh_j
    e = jnp.where(e > 0, e, 0.2 * e)                                   # LeakyReLU(0.2)
    e = e + eb
    e = e - jnp.max(e, axis=-1, keepdims=True)
    p = jnp.exp(e)
    inv = pl.reciprocal(jnp.sum(p, axis=-1, keepdims=True), approx=True)  # EUP slot
    return p * inv                                                     # softmax over neighbours


# ----------------------------------------------------------------------------
# Fused kernel: whole forward pass for one batch element, everything in VMEM
# ----------------------------------------------------------------------------
def _mtad_gat_kernel(
    # inputs
    xcol_ref,                                      # (1, L, K*C) im2col'ed conv input
    conv_w_ref, conv_b_ref,                        # (K*C, C), (1, C)
    fgat_w_ref, fgat_wb_ref, fgat_a1_ref, fgat_a2_ref, fgat_eb_ref,
    tgat_w_ref, tgat_wb_ref, tgat_a1_ref, tgat_a2_ref, tgat_eb_ref,
    gru_wih_ref, gru_whh_ref, gru_bih_ref, gru_bhh_ref,
    rec_wih_ref, rec_whh_ref, rec_bih_ref, rec_bhh_ref, rec_wo_ref, rec_bo_ref,
    for_w1_ref, for_b1_ref, for_w2_ref, for_b2_ref, for_w3_ref, for_b3_ref,
    # outputs
    rec_ref,                                       # (1, L, C)
    fore_ref,                                      # (1, 1, C)
    # scratch
    gi_scr,                                        # (L, 3*G) VMEM
    hbuf_scr,                                      # (L, R)   VMEM
):
    L = rec_ref.shape[1]
    C = conv_b_ref.shape[1]
    G = gru_whh_ref.shape[0]
    R = rec_whh_ref.shape[0]

    # ---- ConvLayer: single (L, K*C) @ (K*C, C) matmul + bias + ReLU ----
    xc = jnp.dot(xcol_ref[0], conv_w_ref[...], preferred_element_type=F32) + conv_b_ref[...]
    xc = jnp.maximum(xc, 0.0)                                           # (L, C)

    # ---- Feature-oriented GAT (nodes = features); contract the time axis directly,
    #      no activation transposes. ----
    dn_tt = (((0,), (0,)), ((), ()))               # contract time axis of both operands
    wh_f = (jax.lax.dot_general(xc, fgat_w_ref[...], dn_tt, preferred_element_type=F32)
            + fgat_wb_ref[...])                                         # (C, H)
    attn_f = _gat_attention(wh_f, fgat_a1_ref[...], fgat_a2_ref[...], fgat_eb_ref[...])  # (C, C)
    dn_ff = (((1,), (1,)), ((), ()))               # contract feature axis
    hf = jax.nn.sigmoid(jax.lax.dot_general(xc, attn_f, dn_ff,
                                            preferred_element_type=F32))  # (L, C)

    # ---- Time-oriented GAT (nodes = time steps) ----
    wh_t = jnp.dot(xc, tgat_w_ref[...], preferred_element_type=F32) + tgat_wb_ref[...]   # (L, H)
    attn_t = _gat_attention(wh_t, tgat_a1_ref[...], tgat_a2_ref[...], tgat_eb_ref[...])   # (L, L)
    ht = jax.nn.sigmoid(jnp.dot(attn_t, xc, preferred_element_type=F32))                  # (L, C)

    # ---- GRU layer.  Input projection of cat([xc, hf, ht], -1) hoisted out of the
    #      recurrence as three accumulated matmuls (avoids an in-kernel lane concat). ----
    wih = gru_wih_ref[...]                                              # (3C, 3G)
    gi_scr[...] = (jnp.dot(xc, wih[0:C, :], preferred_element_type=F32)
                   + jnp.dot(hf, wih[C:2 * C, :], preferred_element_type=F32)
                   + jnp.dot(ht, wih[2 * C:3 * C, :], preferred_element_type=F32)
                   + gru_bih_ref[...])                                  # (L, 3G)
    whh = gru_whh_ref[...]
    bhh = gru_bhh_ref[...]

    def gru_step(t, hprev):                        # PyTorch gate order: r, z, n
        gi = gi_scr[pl.ds(t, 1), :]                                     # (1, 3G)
        gh = jnp.dot(hprev, whh, preferred_element_type=F32) + bhh      # (1, 3G)
        r = jax.nn.sigmoid(gi[:, 0:G] + gh[:, 0:G])
        z = jax.nn.sigmoid(gi[:, G:2 * G] + gh[:, G:2 * G])
        n = jnp.tanh(gi[:, 2 * G:3 * G] + r * gh[:, 2 * G:3 * G])
        return (1.0 - z) * n + z * hprev

    hL = jax.lax.fori_loop(0, L, gru_step, jnp.zeros((1, G), F32), unroll=True)  # (1, G)

    # ---- ReconstructModel: GRU decoder fed the repeated last hidden state.
    #      Constant input projection hoisted; hidden states accumulate in VMEM and the
    #      output projection is one (L, R) @ (R, C) matmul after the loop. ----
    gi_r = jnp.dot(hL, rec_wih_ref[...], preferred_element_type=F32) + rec_bih_ref[...]   # (1, 3R)
    whh_r = rec_whh_ref[...]
    bhh_r = rec_bhh_ref[...]

    def rec_step(t, hd):
        gh = jnp.dot(hd, whh_r, preferred_element_type=F32) + bhh_r
        r = jax.nn.sigmoid(gi_r[:, 0:R] + gh[:, 0:R])
        z = jax.nn.sigmoid(gi_r[:, R:2 * R] + gh[:, R:2 * R])
        n = jnp.tanh(gi_r[:, 2 * R:3 * R] + r * gh[:, 2 * R:3 * R])
        hnew = (1.0 - z) * n + z * hd
        hbuf_scr[pl.ds(t, 1), :] = hnew
        return hnew

    jax.lax.fori_loop(0, L, rec_step, jnp.zeros((1, R), F32), unroll=True)
    rec_ref[0] = (jnp.dot(hbuf_scr[...], rec_wo_ref[...], preferred_element_type=F32)
                  + rec_bo_ref[...]).astype(rec_ref.dtype)              # (L, C)

    # ---- ForecastModel: Linear -> ReLU -> Linear -> ReLU -> Linear ----
    x1 = jnp.maximum(jnp.dot(hL, for_w1_ref[...], preferred_element_type=F32) + for_b1_ref[...], 0.0)
    x2 = jnp.maximum(jnp.dot(x1, for_w2_ref[...], preferred_element_type=F32) + for_b2_ref[...], 0.0)
    fore_ref[0] = (jnp.dot(x2, for_w3_ref[...], preferred_element_type=F32)
                   + for_b3_ref[...]).astype(fore_ref.dtype)            # (1, C)


# ----------------------------------------------------------------------------
# Wrapper: one pallas_call, grid over batch ("parallel" -> v7x dual TensorCore)
# ----------------------------------------------------------------------------
def _full(shape):
    nd = len(shape)
    return pl.BlockSpec(shape, lambda b, nd=nd: (0,) * nd)


def mtad_gat_forward(x, p, ksize):
    B, L, C = x.shape
    K = ksize
    pad = (K - 1) // 2

    # Input prep (cheap, single XLA op each): same-pad + im2col along the last axis,
    # and reshape the conv weight to its (K*Cin, Cout) matmul form.
    x_pad = jnp.pad(x, ((0, 0), (pad, pad), (0, 0)))
    x_col = jnp.concatenate([x_pad[:, k:k + L, :] for k in range(K)], axis=-1)  # (B, L, K*C)
    conv_w2d = p["conv_w"].reshape(K * C, C)

    G = p["gru_whh"].shape[0]
    R = p["rec_whh"].shape[0]

    weights = [
        conv_w2d, p["conv_b"],
        p["fgat_w"], p["fgat_wb"], p["fgat_a1"], p["fgat_a2"], p["fgat_eb"],
        p["tgat_w"], p["tgat_wb"], p["tgat_a1"], p["tgat_a2"], p["tgat_eb"],
        p["gru_wih"], p["gru_whh"], p["gru_bih"], p["gru_bhh"],
        p["rec_wih"], p["rec_whh"], p["rec_bih"], p["rec_bhh"], p["rec_wo"], p["rec_bo"],
        p["for_w1"], p["for_b1"], p["for_w2"], p["for_b2"], p["for_w3"], p["for_b3"],
    ]

    in_specs = ([pl.BlockSpec((1, L, K * C), lambda b: (b, 0, 0))]
                + [_full(w.shape) for w in weights])

    rec, fore = pl.pallas_call(
        _mtad_gat_kernel,
        out_shape=(jax.ShapeDtypeStruct((B, L, C), x.dtype),
                   jax.ShapeDtypeStruct((B, 1, C), x.dtype)),
        grid=(B,),
        in_specs=in_specs,
        out_specs=(pl.BlockSpec((1, L, C), lambda b: (b, 0, 0)),
                   pl.BlockSpec((1, 1, C), lambda b: (b, 0, 0))),
        scratch_shapes=[pltpu.VMEM((L, 3 * G), F32),
                        pltpu.VMEM((L, R), F32)],
        compiler_params=pltpu.CompilerParams(dimension_semantics=("parallel",)),
    )(x_col, *weights)

    return rec, fore.reshape(B, C)


# ----------------------------------------------------------------------------
# Deterministic parameter initialization (synthetic weights)
# ----------------------------------------------------------------------------
def init_params(key, n_features, seq_len, gat_h, gru_h, rec_h, for_h, ksize):
    ks = iter(jax.random.split(key, 40))
    s = 0.1

    def rnd(shape):
        return s * jax.random.normal(next(ks), shape, F32)

    p = {}
    # ConvLayer: weight stored as (K, Cin, Cout), bias (1, Cout)
    p["conv_w"] = rnd((ksize, n_features, n_features))
    p["conv_b"] = rnd((1, n_features))
    # Feature GAT: in_features = seq_len
    p["fgat_w"], p["fgat_wb"] = rnd((seq_len, gat_h)), rnd((1, gat_h))
    p["fgat_a1"], p["fgat_a2"] = rnd((1, gat_h)), rnd((1, gat_h))
    p["fgat_eb"] = rnd((n_features, n_features))
    # Temporal GAT: in_features = n_features
    p["tgat_w"], p["tgat_wb"] = rnd((n_features, gat_h)), rnd((1, gat_h))
    p["tgat_a1"], p["tgat_a2"] = rnd((1, gat_h)), rnd((1, gat_h))
    p["tgat_eb"] = rnd((seq_len, seq_len))
    # GRU layer: in_dim = 3 * n_features (weights stored transposed: (in, 3H))
    D = 3 * n_features
    p["gru_wih"], p["gru_whh"] = rnd((D, 3 * gru_h)), rnd((gru_h, 3 * gru_h))
    p["gru_bih"], p["gru_bhh"] = rnd((1, 3 * gru_h)), rnd((1, 3 * gru_h))
    # Reconstruct model: GRU decoder (input = gru hidden) + Linear(rec_h -> n_features)
    p["rec_wih"], p["rec_whh"] = rnd((gru_h, 3 * rec_h)), rnd((rec_h, 3 * rec_h))
    p["rec_bih"], p["rec_bhh"] = rnd((1, 3 * rec_h)), rnd((1, 3 * rec_h))
    p["rec_wo"], p["rec_bo"] = rnd((rec_h, n_features)), rnd((1, n_features))
    # Forecast model: 3-layer MLP
    p["for_w1"], p["for_b1"] = rnd((gru_h, for_h)), rnd((1, for_h))
    p["for_w2"], p["for_b2"] = rnd((for_h, for_h)), rnd((1, for_h))
    p["for_w3"], p["for_b3"] = rnd((for_h, n_features)), rnd((1, n_features))
    return p


if __name__ == "__main__":
    B, SEQ_LEN, N_FEAT = 2, 16, 8
    GAT_H = GRU_H = REC_H = FOR_H = 16
    KSIZE = 7

    key = jax.random.PRNGKey(0)
    kx, kp = jax.random.split(key)
    x = jax.random.normal(kx, (B, SEQ_LEN, N_FEAT), F32)
    params = init_params(kp, N_FEAT, SEQ_LEN, GAT_H, GRU_H, REC_H, FOR_H, KSIZE)

    fwd = jax.jit(functools.partial(mtad_gat_forward, ksize=KSIZE))
    rec, fore = fwd(x, params)
    jax.block_until_ready((rec, fore))

    assert rec.shape == (B, SEQ_LEN, N_FEAT), rec.shape
    assert fore.shape == (B, N_FEAT), fore.shape
    assert bool(jnp.all(jnp.isfinite(rec))) and bool(jnp.all(jnp.isfinite(fore)))
    print("KERNEL_OK")
</pallas_src>

<mosaic_0001>
module attributes {stable_mosaic.version = 11 : i64} {
  func.func @_mtad_gat_kernel(%arg0: i32, %arg1: memref<1x16x56xf32, #tpu.memory_space<vmem>>, %arg2: memref<56x8xf32, #tpu.memory_space<vmem>>, %arg3: memref<1x8xf32, #tpu.memory_space<vmem>>, %arg4: memref<16x16xf32, #tpu.memory_space<vmem>>, %arg5: memref<1x16xf32, #tpu.memory_space<vmem>>, %arg6: memref<1x16xf32, #tpu.memory_space<vmem>>, %arg7: memref<1x16xf32, #tpu.memory_space<vmem>>, %arg8: memref<8x8xf32, #tpu.memory_space<vmem>>, %arg9: memref<8x16xf32, #tpu.memory_space<vmem>>, %arg10: memref<1x16xf32, #tpu.memory_space<vmem>>, %arg11: memref<1x16xf32, #tpu.memory_space<vmem>>, %arg12: memref<1x16xf32, #tpu.memory_space<vmem>>, %arg13: memref<16x16xf32, #tpu.memory_space<vmem>>, %arg14: memref<24x48xf32, #tpu.memory_space<vmem>>, %arg15: memref<16x48xf32, #tpu.memory_space<vmem>>, %arg16: memref<1x48xf32, #tpu.memory_space<vmem>>, %arg17: memref<1x48xf32, #tpu.memory_space<vmem>>, %arg18: memref<16x48xf32, #tpu.memory_space<vmem>>, %arg19: memref<16x48xf32, #tpu.memory_space<vmem>>, %arg20: memref<1x48xf32, #tpu.memory_space<vmem>>, %arg21: memref<1x48xf32, #tpu.memory_space<vmem>>, %arg22: memref<16x8xf32, #tpu.memory_space<vmem>>, %arg23: memref<1x8xf32, #tpu.memory_space<vmem>>, %arg24: memref<16x16xf32, #tpu.memory_space<vmem>>, %arg25: memref<1x16xf32, #tpu.memory_space<vmem>>, %arg26: memref<16x16xf32, #tpu.memory_space<vmem>>, %arg27: memref<1x16xf32, #tpu.memory_space<vmem>>, %arg28: memref<16x8xf32, #tpu.memory_space<vmem>>, %arg29: memref<1x8xf32, #tpu.memory_space<vmem>>, %arg30: memref<1x16x8xf32, #tpu.memory_space<vmem>>, %arg31: memref<1x1x8xf32, #tpu.memory_space<vmem>>, %arg32: memref<16x48xf32, #tpu.memory_space<vmem>>, %arg33: memref<16x16xf32, #tpu.memory_space<vmem>>) attributes {dimension_semantics = [#tpu.dimension_semantics<parallel>], iteration_bounds = array<i64: 2>, scalar_prefetch = 0 : i64, scratch_operands = 2 : i64, tpu.core_type = #tpu.core_type<tc>, window_params = [{transform_indices = @transform_0, window_bounds = array<i64: 1, 16, 56>}, {pipeline_mode = #tpu.pipeline_mode<synchronous>, transform_indices = @transform_1, window_bounds = array<i64: 56, 8>}, {pipeline_mode = #tpu.pipeline_mode<synchronous>, transform_indices = @transform_2, window_bounds = array<i64: 1, 8>}, {pipeline_mode = #tpu.pipeline_mode<synchronous>, transform_indices = @transform_3, window_bounds = array<i64: 16, 16>}, {pipeline_mode = #tpu.pipeline_mode<synchronous>, transform_indices = @transform_4, window_bounds = array<i64: 1, 16>}, {pipeline_mode = #tpu.pipeline_mode<synchronous>, transform_indices = @transform_5, window_bounds = array<i64: 1, 16>}, {pipeline_mode = #tpu.pipeline_mode<synchronous>, transform_indices = @transform_6, window_bounds = array<i64: 1, 16>}, {pipeline_mode = #tpu.pipeline_mode<synchronous>, transform_indices = @transform_7, window_bounds = array<i64: 8, 8>}, {pipeline_mode = #tpu.pipeline_mode<synchronous>, transform_indices = @transform_8, window_bounds = array<i64: 8, 16>}, {pipeline_mode = #tpu.pipeline_mode<synchronous>, transform_indices = @transform_9, window_bounds = array<i64: 1, 16>}, {pipeline_mode = #tpu.pipeline_mode<synchronous>, transform_indices = @transform_10, window_bounds = array<i64: 1, 16>}, {pipeline_mode = #tpu.pipeline_mode<synchronous>, transform_indices = @transform_11, window_bounds = array<i64: 1, 16>}, {pipeline_mode = #tpu.pipeline_mode<synchronous>, transform_indices = @transform_12, window_bounds = array<i64: 16, 16>}, {pipeline_mode = #tpu.pipeline_mode<synchronous>, transform_indices = @transform_13, window_bounds = array<i64: 24, 48>}, {pipeline_mode = #tpu.pipeline_mode<synchronous>, transform_indices = @transform_14, window_bounds = array<i64: 16, 48>}, {pipeline_mode = #tpu.pipeline_mode<synchronous>, transform_indices = @transform_15, window_bounds = array<i64: 1, 48>}, {pipeline_mode = #tpu.pipeline_mode<synchronous>, transform_indices = @transform_16, window_bounds = array<i64: 1, 48>}, {pipeline_mode = #tpu.pipeline_mode<synchronous>, transform_indices = @transform_17, window_bounds = array<i64: 16, 48>}, {pipeline_mode = #tpu.pipeline_mode<synchronous>, transform_indices = @transform_18, window_bounds = array<i64: 16, 48>}, {pipeline_mode = #tpu.pipeline_mode<synchronous>, transform_indices = @transform_19, window_bounds = array<i64: 1, 48>}, {pipeline_mode = #tpu.pipeline_mode<synchronous>, transform_indices = @transform_20, window_bounds = array<i64: 1, 48>}, {pipeline_mode = #tpu.pipeline_mode<synchronous>, transform_indices = @transform_21, window_bounds = array<i64: 16, 8>}, {pipeline_mode = #tpu.pipeline_mode<synchronous>, transform_indices = @transform_22, window_bounds = array<i64: 1, 8>}, {pipeline_mode = #tpu.pipeline_mode<synchronous>, transform_indices = @transform_23, window_bounds = array<i64: 16, 16>}, {pipeline_mode = #tpu.pipeline_mode<synchronous>, transform_indices = @transform_24, window_bounds = array<i64: 1, 16>}, {pipeline_mode = #tpu.pipeline_mode<synchronous>, transform_indices = @transform_25, window_bounds = array<i64: 16, 16>}, {pipeline_mode = #tpu.pipeline_mode<synchronous>, transform_indices = @transform_26, window_bounds = array<i64: 1, 16>}, {pipeline_mode = #tpu.pipeline_mode<synchronous>, transform_indices = @transform_27, window_bounds = array<i64: 16, 8>}, {pipeline_mode = #tpu.pipeline_mode<synchronous>, transform_indices = @transform_28, window_bounds = array<i64: 1, 8>}, {transform_indices = @transform_29, window_bounds = array<i64: 1, 16, 8>}, {transform_indices = @transform_30, window_bounds = array<i64: 1, 1, 8>}]} {
    %c0 = arith.constant 0 : index
    %c0_0 = arith.constant 0 : index
    %c0_1 = arith.constant 0 : index
    %0 = vector.load %arg1[%c0, %c0_0, %c0_1] : memref<1x16x56xf32, #tpu.memory_space<vmem>>, vector<1x16x56xf32>
    %1 = vector.shape_cast %0 : vector<1x16x56xf32> to vector<16x56xf32>
    %c0_2 = arith.constant 0 : index
    %c0_3 = arith.constant 0 : index
    %2 = vector.load %arg2[%c0_2, %c0_3] : memref<56x8xf32, #tpu.memory_space<vmem>>, vector<56x8xf32>
    %cst = arith.constant dense<0.000000e+00> : vector<16x8xf32>
    %3 = tpu.matmul %1, %2, %cst {dimension_numbers = #tpu.dot_dimension_numbers<[1], [0], [0], [1], [0, 0, 1, 1], [], []>} : vector<16x56xf32>, vector<56x8xf32>, vector<16x8xf32> -> vector<16x8xf32>
    %c0_4 = arith.constant 0 : index
    %c0_5 = arith.constant 0 : index
    %4 = vector.load %arg3[%c0_4, %c0_5] : memref<1x8xf32, #tpu.memory_space<vmem>>, vector<1x8xf32>
    %5 = vector.broadcast %4 : vector<1x8xf32> to vector<16x8xf32>
    %6 = arith.addf %3, %5 : vector<16x8xf32>
    %cst_6 = arith.constant 0.000000e+00 : f32
    %7 = vector.broadcast %cst_6 : f32 to vector<16x8xf32>
    %8 = arith.maximumf %6, %7 : vector<16x8xf32>
    %c0_7 = arith.constant 0 : index
    %c0_8 = arith.constant 0 : index
    %9 = vector.load %arg4[%c0_7, %c0_8] : memref<16x16xf32, #tpu.memory_space<vmem>>, vector<16x16xf32>
    %cst_9 = arith.constant dense<0.000000e+00> : vector<8x16xf32>
    %10 = tpu.matmul %8, %9, %cst_9 {dimension_numbers = #tpu.dot_dimension_numbers<[0], [0], [1], [1], [0, 1, 1, 1], [], []>} : vector<16x8xf32>, vector<16x16xf32>, vector<8x16xf32> -> vector<8x16xf32>
    %c0_10 = arith.constant 0 : index
    %c0_11 = arith.constant 0 : index
    %11 = vector.load %arg5[%c0_10, %c0_11] : memref<1x16xf32, #tpu.memory_space<vmem>>, vector<1x16xf32>
    %12 = vector.broadcast %11 : vector<1x16xf32> to vector<8x16xf32>
    %13 = arith.addf %10, %12 : vector<8x16xf32>
    %c0_12 = arith.constant 0 : index
    %c0_13 = arith.constant 0 : index
    %14 = vector.load %arg6[%c0_12, %c0_13] : memref<1x16xf32, #tpu.memory_space<vmem>>, vector<1x16xf32>
    %c0_14 = arith.constant 0 : index
    %c0_15 = arith.constant 0 : index
    %15 = vector.load %arg7[%c0_14, %c0_15] : memref<1x16xf32, #tpu.memory_space<vmem>>, vector<1x16xf32>
    %c0_16 = arith.constant 0 : index
    %c0_17 = arith.constant 0 : index
    %16 = vector.load %arg8[%c0_16, %c0_17] : memref<8x8xf32, #tpu.memory_space<vmem>>, vector<8x8xf32>
    %cst_18 = arith.constant dense<0.000000e+00> : vector<8x1xf32>
    %17 = tpu.matmul %13, %14, %cst_18 {dimension_numbers = #tpu.dot_dimension_numbers<[1], [1], [0], [0], [0, 0, 1, 0], [], []>} : vector<8x16xf32>, vector<1x16xf32>, vector<8x1xf32> -> vector<8x1xf32>
    %cst_19 = arith.constant dense<0.000000e+00> : vector<1x8xf32>
    %18 = tpu.matmul %15, %13, %cst_19 {dimension_numbers = #tpu.dot_dimension_numbers<[1], [1], [0], [0], [0, 0, 1, 0], [], []>} : vector<1x16xf32>, vector<8x16xf32>, vector<1x8xf32> -> vector<1x8xf32>
    %19 = vector.broadcast %17 : vector<8x1xf32> to vector<8x8xf32>
    %20 = vector.broadcast %18 : vector<1x8xf32> to vector<8x8xf32>
    %21 = arith.addf %19, %20 : vector<8x8xf32>
    %cst_20 = arith.constant 0.000000e+00 : f32
    %22 = vector.broadcast %cst_20 : f32 to vector<8x8xf32>
    %23 = arith.cmpf ogt, %21, %22 : vector<8x8xf32>
    %cst_21 = arith.constant 2.000000e-01 : f32
    %24 = vector.broadcast %cst_21 : f32 to vector<8x8xf32>
    %25 = arith.mulf %24, %21 : vector<8x8xf32>
    %26 = arith.select %23, %21, %25 : vector<8x8xi1>, vector<8x8xf32>
    %27 = arith.addf %26, %16 : vector<8x8xf32>
    %cst_22 = arith.constant dense<0xFF800000> : vector<8xf32>
    %28 = vector.multi_reduction <maximumf>, %27, %cst_22 [1] : vector<8x8xf32> to vector<8xf32>
    %29 = vector.shape_cast %28 : vector<8xf32> to vector<8x1xf32>
    %30 = vector.broadcast %29 : vector<8x1xf32> to vector<8x8xf32>
    %31 = arith.subf %27, %30 : vector<8x8xf32>
    %32 = math.exp %31 : vector<8x8xf32>
    %cst_23 = arith.constant dense<0.000000e+00> : vector<8xf32>
    %33 = vector.multi_reduction <add>, %32, %cst_23 [1] : vector<8x8xf32> to vector<8xf32>
    %34 = vector.shape_cast %33 : vector<8xf32> to vector<8x1xf32>
    %35 = tpu.reciprocal %34 {approx = true} : vector<8x1xf32> -> vector<8x1xf32>
    %36 = vector.broadcast %35 : vector<8x1xf32> to vector<8x8xf32>
    %37 = arith.mulf %32, %36 : vector<8x8xf32>
    %cst_24 = arith.constant dense<0.000000e+00> : vector<16x8xf32>
    %38 = tpu.matmul %8, %37, %cst_24 {dimension_numbers = #tpu.dot_dimension_numbers<[1], [1], [0], [0], [0, 0, 1, 0], [], []>} : vector<16x8xf32>, vector<8x8xf32>, vector<16x8xf32> -> vector<16x8xf32>
    %39 = arith.negf %38 : vector<16x8xf32>
    %40 = math.exp %39 : vector<16x8xf32>
    %cst_25 = arith.constant 1.000000e+00 : f32
    %41 = vector.broadcast %cst_25 : f32 to vector<16x8xf32>
    %42 = arith.addf %41, %40 : vector<16x8xf32>
    %43 = arith.divf %41, %42 : vector<16x8xf32>
    %c0_26 = arith.constant 0 : index
    %c0_27 = arith.constant 0 : index
    %44 = vector.load %arg9[%c0_26, %c0_27] : memref<8x16xf32, #tpu.memory_space<vmem>>, vector<8x16xf32>
    %cst_28 = arith.constant dense<0.000000e+00> : vector<16x16xf32>
    %45 = tpu.matmul %8, %44, %cst_28 {dimension_numbers = #tpu.dot_dimension_numbers<[1], [0], [0], [1], [0, 0, 1, 1], [], []>} : vector<16x8xf32>, vector<8x16xf32>, vector<16x16xf32> -> vector<16x16xf32>
    %c0_29 = arith.constant 0 : index
    %c0_30 = arith.constant 0 : index
    %46 = vector.load %arg10[%c0_29, %c0_30] : memref<1x16xf32, #tpu.memory_space<vmem>>, vector<1x16xf32>
    %47 = vector.broadcast %46 : vector<1x16xf32> to vector<16x16xf32>
    %48 = arith.addf %45, %47 : vector<16x16xf32>
    %c0_31 = arith.constant 0 : index
    %c0_32 = arith.constant 0 : index
    %49 = vector.load %arg11[%c0_31, %c0_32] : memref<1x16xf32, #tpu.memory_space<vmem>>, vector<1x16xf32>
    %c0_33 = arith.constant 0 : index
    %c0_34 = arith.constant 0 : index
    %50 = vector.load %arg12[%c0_33, %c0_34] : memref<1x16xf32, #tpu.memory_space<vmem>>, vector<1x16xf32>
    %c0_35 = arith.constant 0 : index
    %c0_36 = arith.constant 0 : index
    %51 = vector.load %arg13[%c0_35, %c0_36] : memref<16x16xf32, #tpu.memory_space<vmem>>, vector<16x16xf32>
    %cst_37 = arith.constant dense<0.000000e+00> : vector<16x1xf32>
    %52 = tpu.matmul %48, %49, %cst_37 {dimension_numbers = #tpu.dot_dimension_numbers<[1], [1], [0], [0], [0, 0, 1, 0], [], []>} : vector<16x16xf32>, vector<1x16xf32>, vector<16x1xf32> -> vector<16x1xf32>
    %cst_38 = arith.constant dense<0.000000e+00> : vector<1x16xf32>
    %53 = tpu.matmul %50, %48, %cst_38 {dimension_numbers = #tpu.dot_dimension_numbers<[1], [1], [0], [0], [0, 0, 1, 0], [], []>} : vector<1x16xf32>, vector<16x16xf32>, vector<1x16xf32> -> vector<1x16xf32>
    %54 = vector.broadcast %52 : vector<16x1xf32> to vector<16x16xf32>
    %55 = vector.broadcast %53 : vector<1x16xf32> to vector<16x16xf32>
    %56 = arith.addf %54, %55 : vector<16x16xf32>
    %cst_39 = arith.constant 0.000000e+00 : f32
    %57 = vector.broadcast %cst_39 : f32 to vector<16x16xf32>
    %58 = arith.cmpf ogt, %56, %57 : vector<16x16xf32>
    %cst_40 = arith.constant 2.000000e-01 : f32
    %59 = vector.broadcast %cst_40 : f32 to vector<16x16xf32>
    %60 = arith.mulf %59, %56 : vector<16x16xf32>
    %61 = arith.select %58, %56, %60 : vector<16x16xi1>, vector<16x16xf32>
    %62 = arith.addf %61, %51 : vector<16x16xf32>
    %cst_41 = arith.constant dense<0xFF800000> : vector<16xf32>
    %63 = vector.multi_reduction <maximumf>, %62, %cst_41 [1] : vector<16x16xf32> to vector<16xf32>
    %64 = vector.shape_cast %63 : vector<16xf32> to vector<16x1xf32>
    %65 = vector.broadcast %64 : vector<16x1xf32> to vector<16x16xf32>
    %66 = arith.subf %62, %65 : vector<16x16xf32>
    %67 = math.exp %66 : vector<16x16xf32>
    %cst_42 = arith.constant dense<0.000000e+00> : vector<16xf32>
    %68 = vector.multi_reduction <add>, %67, %cst_42 [1] : vector<16x16xf32> to vector<16xf32>
    %69 = vector.shape_cast %68 : vector<16xf32> to vector<16x1xf32>
    %70 = tpu.reciprocal %69 {approx = true} : vector<16x1xf32> -> vector<16x1xf32>
    %71 = vector.broadcast %70 : vector<16x1xf32> to vector<16x16xf32>
    %72 = arith.mulf %67, %71 : vector<16x16xf32>
    %cst_43 = arith.constant dense<0.000000e+00> : vector<16x8xf32>
    %73 = tpu.matmul %72, %8, %cst_43 {dimension_numbers = #tpu.dot_dimension_numbers<[1], [0], [0], [1], [0, 0, 1, 1], [], []>} : vector<16x16xf32>, vector<16x8xf32>, vector<16x8xf32> -> vector<16x8xf32>
    %74 = arith.negf %73 : vector<16x8xf32>
    %75 = math.exp %74 : vector<16x8xf32>
    %cst_44 = arith.constant 1.000000e+00 : f32
    %76 = vector.broadcast %cst_44 : f32 to vector<16x8xf32>
    %77 = arith.addf %76, %75 : vector<16x8xf32>
    %78 = arith.divf %76, %77 : vector<16x8xf32>
    %c0_45 = arith.constant 0 : index
    %c0_46 = arith.constant 0 : index
    %79 = vector.load %arg14[%c0_45, %c0_46] : memref<24x48xf32, #tpu.memory_space<vmem>>, vector<24x48xf32>
    %80 = vector.extract_strided_slice %79 {offsets = [0, 0], sizes = [8, 48], strides = [1, 1]} : vector<24x48xf32> to vector<8x48xf32>
    %cst_47 = arith.constant dense<0.000000e+00> : vector<16x48xf32>
    %81 = tpu.matmul %8, %80, %cst_47 {dimension_numbers = #tpu.dot_dimension_numbers<[1], [0], [0], [1], [0, 0, 1, 1], [], []>} : vector<16x8xf32>, vector<8x48xf32>, vector<16x48xf32> -> vector<16x48xf32>
    %82 = vector.extract_strided_slice %79 {offsets = [8, 0], sizes = [8, 48], strides = [1, 1]} : vector<24x48xf32> to vector<8x48xf32>
    %cst_48 = arith.constant dense<0.000000e+00> : vector<16x48xf32>
    %83 = tpu.matmul %43, %82, %cst_48 {dimension_numbers = #tpu.dot_dimension_numbers<[1], [0], [0], [1], [0, 0, 1, 1], [], []>} : vector<16x8xf32>, vector<8x48xf32>, vector<16x48xf32> -> vector<16x48xf32>
    %84 = arith.addf %81, %83 : vector<16x48xf32>
    %85 = vector.extract_strided_slice %79 {offsets = [16, 0], sizes = [8, 48], strides = [1, 1]} : vector<24x48xf32> to vector<8x48xf32>
    %cst_49 = arith.constant dense<0.000000e+00> : vector<16x48xf32>
    %86 = tpu.matmul %78, %85, %cst_49 {dimension_numbers = #tpu.dot_dimension_numbers<[1], [0], [0], [1], [0, 0, 1, 1], [], []>} : vector<16x8xf32>, vector<8x48xf32>, vector<16x48xf32> -> vector<16x48xf32>
    %87 = arith.addf %84, %86 : vector<16x48xf32>
    %c0_50 = arith.constant 0 : index
    %c0_51 = arith.constant 0 : index
    %88 = vector.load %arg16[%c0_50, %c0_51] : memref<1x48xf32, #tpu.memory_space<vmem>>, vector<1x48xf32>
    %89 = vector.broadcast %88 : vector<1x48xf32> to vector<16x48xf32>
    %90 = arith.addf %87, %89 : vector<16x48xf32>
    %c0_52 = arith.constant 0 : index
    %c0_53 = arith.constant 0 : index
    %91 = vector.load %arg32[%c0_52, %c0_53] : memref<16x48xf32, #tpu.memory_space<vmem>>, vector<16x48xf32>
    tpu.vector_store %arg32[%c0_52, %c0_53], %90 {strides = array<i32>} : memref<16x48xf32, #tpu.memory_space<vmem>>, vector<16x48xf32>,
    %c0_54 = arith.constant 0 : index
    %c0_55 = arith.constant 0 : index
    %92 = vector.load %arg15[%c0_54, %c0_55] : memref<16x48xf32, #tpu.memory_space<vmem>>, vector<16x48xf32>
    %c0_56 = arith.constant 0 : index
    %c0_57 = arith.constant 0 : index
    %93 = vector.load %arg17[%c0_56, %c0_57] : memref<1x48xf32, #tpu.memory_space<vmem>>, vector<1x48xf32>
    %cst_58 = arith.constant 0.000000e+00 : f32
    %94 = vector.broadcast %cst_58 : f32 to vector<1x16xf32>
    %c0_i32 = arith.constant 0 : i32
    %95 = arith.index_cast %c0_i32 : i32 to index
    %c0_59 = arith.constant 0 : index
    %96 = vector.load %arg32[%95, %c0_59] : memref<16x48xf32, #tpu.memory_space<vmem>>, vector<1x48xf32>
    %cst_60 = arith.constant dense<0.000000e+00> : vector<1x48xf32>
    %97 = tpu.matmul %94, %92, %cst_60 {dimension_numbers = #tpu.dot_dimension_numbers<[1], [0], [0], [1], [0, 0, 1, 1], [], []>} : vector<1x16xf32>, vector<16x48xf32>, vector<1x48xf32> -> vector<1x48xf32>
    %98 = arith.addf %97, %93 : vector<1x48xf32>
    %99 = vector.extract_strided_slice %96 {offsets = [0, 0], sizes = [1, 16], strides = [1, 1]} : vector<1x48xf32> to vector<1x16xf32>
    %100 = vector.extract_strided_slice %98 {offsets = [0, 0], sizes = [1, 16], strides = [1, 1]} : vector<1x48xf32> to vector<1x16xf32>
    %101 = arith.addf %99, %100 : vector<1x16xf32>
    %102 = arith.negf %101 : vector<1x16xf32>
    %103 = math.exp %102 : vector<1x16xf32>
    %cst_61 = arith.constant 1.000000e+00 : f32
    %104 = vector.broadcast %cst_61 : f32 to vector<1x16xf32>
    %105 = arith.addf %104, %103 : vector<1x16xf32>
    %106 = arith.divf %104, %105 : vector<1x16xf32>
    %107 = vector.extract_strided_slice %96 {offsets = [0, 16], sizes = [1, 16], strides = [1, 1]} : vector<1x48xf32> to vector<1x16xf32>
    %108 = vector.extract_strided_slice %98 {offsets = [0, 16], sizes = [1, 16], strides = [1, 1]} : vector<1x48xf32> to vector<1x16xf32>
    %109 = arith.addf %107, %108 : vector<1x16xf32>
    %110 = arith.negf %109 : vector<1x16xf32>
    %111 = math.exp %110 : vector<1x16xf32>
    %cst_62 = arith.constant 1.000000e+00 : f32
    %112 = vector.broadcast %cst_62 : f32 to vector<1x16xf32>
    %113 = arith.addf %112, %111 : vector<1x16xf32>
    %114 = arith.divf %112, %113 : vector<1x16xf32>
    %115 = vector.extract_strided_slice %96 {offsets = [0, 32], sizes = [1, 16], strides = [1, 1]} : vector<1x48xf32> to vector<1x16xf32>
    %116 = vector.extract_strided_slice %98 {offsets = [0, 32], sizes = [1, 16], strides = [1, 1]} : vector<1x48xf32> to vector<1x16xf32>
    %117 = arith.mulf %106, %116 : vector<1x16xf32>
    %118 = arith.addf %115, %117 : vector<1x16xf32>
    %119 = math.tanh %118 : vector<1x16xf32>
    %cst_63 = arith.constant 1.000000e+00 : f32
    %120 = vector.broadcast %cst_63 : f32 to vector<1x16xf32>
    %121 = arith.subf %120, %114 : vector<1x16xf32>
    %122 = arith.mulf %121, %119 : vector<1x16xf32>
    %123 = arith.mulf %114, %94 : vector<1x16xf32>
    %124 = arith.addf %122, %123 : vector<1x16xf32>
    %c1_i32 = arith.constant 1 : i32
    %125 = arith.index_cast %c1_i32 : i32 to index
    %c0_64 = arith.constant 0 : index
    %126 = vector.load %arg32[%125, %c0_64] : memref<16x48xf32, #tpu.memory_space<vmem>>, vector<1x48xf32>
    %cst_65 = arith.constant dense<0.000000e+00> : vector<1x48xf32>
    %127 = tpu.matmul %124, %92, %cst_65 {dimension_numbers = #tpu.dot_dimension_numbers<[1], [0], [0], [1], [0, 0, 1, 1], [], []>} : vector<1x16xf32>, vector<16x48xf32>, vector<1x48xf32> -> vector<1x48xf32>
    %128 = arith.addf %127, %93 : vector<1x48xf32>
    %129 = vector.extract_strided_slice %126 {offsets = [0, 0], sizes = [1, 16], strides = [1, 1]} : vector<1x48xf32> to vector<1x16xf32>
    %130 = vector.extract_strided_slice %128 {offsets = [0, 0], sizes = [1, 16], strides = [1, 1]} : vector<1x48xf32> to vector<1x16xf32>
    %131 = arith.addf %129, %130 : vector<1x16xf32>
    %132 = arith.negf %131 : vector<1x16xf32>
    %133 = math.exp %132 : vector<1x16xf32>
    %cst_66 = arith.constant 1.000000e+00 : f32
    %134 = vector.broadcast %cst_66 : f32 to vector<1x16xf32>
    %135 = arith.addf %134, %133 : vector<1x16xf32>
    %136 = arith.divf %134, %135 : vector<1x16xf32>
    %137 = vector.extract_strided_slice %126 {offsets = [0, 16], sizes = [1, 16], strides = [1, 1]} : vector<1x48xf32> to vector<1x16xf32>
    %138 = vector.extract_strided_slice %128 {offsets = [0, 16], sizes = [1, 16], strides = [1, 1]} : vector<1x48xf32> to vector<1x16xf32>
    %139 = arith.addf %137, %138 : vector<1x16xf32>
    %140 = arith.negf %139 : vector<1x16xf32>
    %141 = math.exp %140 : vector<1x16xf32>
    %cst_67 = arith.constant 1.000000e+00 : f32
    %142 = vector.broadcast %cst_67 : f32 to vector<1x16xf32>
    %143 = arith.addf %142, %141 : vector<1x16xf32>
    %144 = arith.divf %142, %143 : vector<1x16xf32>
    %145 = vector.extract_strided_slice %126 {offsets = [0, 32], sizes = [1, 16], strides = [1, 1]} : vector<1x48xf32> to vector<1x16xf32>
    %146 = vector.extract_strided_slice %128 {offsets = [0, 32], sizes = [1, 16], strides = [1, 1]} : vector<1x48xf32> to vector<1x16xf32>
    %147 = arith.mulf %136, %146 : vector<1x16xf32>
    %148 = arith.addf %145, %147 : vector<1x16xf32>
    %149 = math.tanh %148 : vector<1x16xf32>
    %cst_68 = arith.constant 1.000000e+00 : f32
    %150 = vector.broadcast %cst_68 : f32 to vector<1x16xf32>
    %151 = arith.subf %150, %144 : vector<1x16xf32>
    %152 = arith.mulf %151, %149 : vector<1x16xf32>
    %153 = arith.mulf %144, %124 : vector<1x16xf32>
    %154 = arith.addf %152, %153 : vector<1x16xf32>
    %c2_i32 = arith.constant 2 : i32
    %155 = arith.index_cast %c2_i32 : i32 to index
    %c0_69 = arith.constant 0 : index
    %156 = vector.load %arg32[%155, %c0_69] : memref<16x48xf32, #tpu.memory_space<vmem>>, vector<1x48xf32>
    %cst_70 = arith.constant dense<0.000000e+00> : vector<1x48xf32>
    %157 = tpu.matmul %154, %92, %cst_70 {dimension_numbers = #tpu.dot_dimension_numbers<[1], [0], [0], [1], [0, 0, 1, 1], [], []>} : vector<1x16xf32>, vector<16x48xf32>, vector<1x48xf32> -> vector<1x48xf32>
    %158 = arith.addf %157, %93 : vector<1x48xf32>
    %159 = vector.extract_strided_slice %156 {offsets = [0, 0], sizes = [1, 16], strides = [1, 1]} : vector<1x48xf32> to vector<1x16xf32>
    %160 = vector.extract_strided_slice %158 {offsets = [0, 0], sizes = [1, 16], strides = [1, 1]} : vector<1x48xf32> to vector<1x16xf32>
    %161 = arith.addf %159, %160 : vector<1x16xf32>
    %162 = arith.negf %161 : vector<1x16xf32>
    %163 = math.exp %162 : vector<1x16xf32>
    %cst_71 = arith.constant 1.000000e+00 : f32
    %164 = vector.broadcast %cst_71 : f32 to vector<1x16xf32>
    %165 = arith.addf %164, %163 : vector<1x16xf32>
    %166 = arith.divf %164, %165 : vector<1x16xf32>
    %167 = vector.extract_strided_slice %156 {offsets = [0, 16], sizes = [1, 16], strides = [1, 1]} : vector<1x48xf32> to vector<1x16xf32>
    %168 = vector.extract_strided_slice %158 {offsets = [0, 16], sizes = [1, 16], strides = [1, 1]} : vector<1x48xf32> to vector<1x16xf32>
    %169 = arith.addf %167, %168 : vector<1x16xf32>
    %170 = arith.negf %169 : vector<1x16xf32>
    %171 = math.exp %170 : vector<1x16xf32>
    %cst_72 = arith.constant 1.000000e+00 : f32
    %172 = vector.broadcast %cst_72 : f32 to vector<1x16xf32>
    %173 = arith.addf %172, %171 : vector<1x16xf32>
    %174 = arith.divf %172, %173 : vector<1x16xf32>
    %175 = vector.extract_strided_slice %156 {offsets = [0, 32], sizes = [1, 16], strides = [1, 1]} : vector<1x48xf32> to vector<1x16xf32>
    %176 = vector.extract_strided_slice %158 {offsets = [0, 32], sizes = [1, 16], strides = [1, 1]} : vector<1x48xf32> to vector<1x16xf32>
    %177 = arith.mulf %166, %176 : vector<1x16xf32>
    %178 = arith.addf %175, %177 : vector<1x16xf32>
    %179 = math.tanh %178 : vector<1x16xf32>
    %cst_73 = arith.constant 1.000000e+00 : f32
    %180 = vector.broadcast %cst_73 : f32 to vector<1x16xf32>
    %181 = arith.subf %180, %174 : vector<1x16xf32>
    %182 = arith.mulf %181, %179 : vector<1x16xf32>
    %183 = arith.mulf %174, %154 : vector<1x16xf32>
    %184 = arith.addf %182, %183 : vector<1x16xf32>
    %c3_i32 = arith.constant 3 : i32
    %185 = arith.index_cast %c3_i32 : i32 to index
    %c0_74 = arith.constant 0 : index
    %186 = vector.load %arg32[%185, %c0_74] : memref<16x48xf32, #tpu.memory_space<vmem>>, vector<1x48xf32>
    %cst_75 = arith.constant dense<0.000000e+00> : vector<1x48xf32>
    %187 = tpu.matmul %184, %92, %cst_75 {dimension_numbers = #tpu.dot_dimension_numbers<[1], [0], [0], [1], [0, 0, 1, 1], [], []>} : vector<1x16xf32>, vector<16x48xf32>, vector<1x48xf32> -> vector<1x48xf32>
    %188 = arith.addf %187, %93 : vector<1x48xf32>
    %189 = vector.extract_strided_slice %186 {offsets = [0, 0], sizes = [1, 16], strides = [1, 1]} : vector<1x48xf32> to vector<1x16xf32>
    %190 = vector.extract_strided_slice %188 {offsets = [0, 0], sizes = [1, 16], strides = [1, 1]} : vector<1x48xf32> to vector<1x16xf32>
    %191 = arith.addf %189, %190 : vector<1x16xf32>
    %192 = arith.negf %191 : vector<1x16xf32>
    %193 = math.exp %192 : vector<1x16xf32>
    %cst_76 = arith.constant 1.000000e+00 : f32
    %194 = vector.broadcast %cst_76 : f32 to vector<1x16xf32>
    %195 = arith.addf %194, %193 : vector<1x16xf32>
    %196 = arith.divf %194, %195 : vector<1x16xf32>
    %197 = vector.extract_strided_slice %186 {offsets = [0, 16], sizes = [1, 16], strides = [1, 1]} : vector<1x48xf32> to vector<1x16xf32>
    %198 = vector.extract_strided_slice %188 {offsets = [0, 16], sizes = [1, 16], strides = [1, 1]} : vector<1x48xf32> to vector<1x16xf32>
    %199 = arith.addf %197, %198 : vector<1x16xf32>
    %200 = arith.negf %199 : vector<1x16xf32>
    %201 = math.exp %200 : vector<1x16xf32>
    %cst_77 = arith.constant 1.000000e+00 : f32
    %202 = vector.broadcast %cst_77 : f32 to vector<1x16xf32>
    %203 = arith.addf %202, %201 : vector<1x16xf32>
    %204 = arith.divf %202, %203 : vector<1x16xf32>
    %205 = vector.extract_strided_slice %186 {offsets = [0, 32], sizes = [1, 16], strides = [1, 1]} : vector<1x48xf32> to vector<1x16xf32>
    %206 = vector.extract_strided_slice %188 {offsets = [0, 32], sizes = [1, 16], strides = [1, 1]} : vector<1x48xf32> to vector<1x16xf32>
    %207 = arith.mulf %196, %206 : vector<1x16xf32>
    %208 = arith.addf %205, %207 : vector<1x16xf32>
    %209 = math.tanh %208 : vector<1x16xf32>
    %cst_78 = arith.constant 1.000000e+00 : f32
    %210 = vector.broadcast %cst_78 : f32 to vector<1x16xf32>
    %211 = arith.subf %210, %204 : vector<1x16xf32>
    %212 = arith.mulf %211, %209 : vector<1x16xf32>
    %213 = arith.mulf %204, %184 : vector<1x16xf32>
    %214 = arith.addf %212, %213 : vector<1x16xf32>
    %c4_i32 = arith.constant 4 : i32
    %215 = arith.index_cast %c4_i32 : i32 to index
    %c0_79 = arith.constant 0 : index
    %216 = vector.load %arg32[%215, %c0_79] : memref<16x48xf32, #tpu.memory_space<vmem>>, vector<1x48xf32>
    %cst_80 = arith.constant dense<0.000000e+00> : vector<1x48xf32>
    %217 = tpu.matmul %214, %92, %cst_80 {dimension_numbers = #tpu.dot_dimension_numbers<[1], [0], [0], [1], [0, 0, 1, 1], [], []>} : vector<1x16xf32>, vector<16x48xf32>, vector<1x48xf32> -> vector<1x48xf32>
    %218 = arith.addf %217, %93 : vector<1x48xf32>
    %219 = vector.extract_strided_slice %216 {offsets = [0, 0], sizes = [1, 16], strides = [1, 1]} : vector<1x48xf32> to vector<1x16xf32>
    %220 = vector.extract_strided_slice %218 {offsets = [0, 0], sizes = [1, 16], strides = [1, 1]} : vector<1x48xf32> to vector<1x16xf32>
    %221 = arith.addf %219, %220 : vector<1x16xf32>
    %222 = arith.negf %221 : vector<1x16xf32>
    %223 = math.exp %222 : vector<1x16xf32>
    %cst_81 = arith.constant 1.000000e+00 : f32
    %224 = vector.broadcast %cst_81 : f32 to vector<1x16xf32>
    %225 = arith.addf %224, %223 : vector<1x16xf32>
    %226 = arith.divf %224, %225 : vector<1x16xf32>
    %227 = vector.extract_strided_slice %216 {offsets = [0, 16], sizes = [1, 16], strides = [1, 1]} : vector<1x48xf32> to vector<1x16xf32>
    %228 = vector.extract_strided_slice %218 {offsets = [0, 16], sizes = [1, 16], strides = [1, 1]} : vector<1x48xf32> to vector<1x16xf32>
    %229 = arith.addf %227, %228 : vector<1x16xf32>
    %230 = arith.negf %229 : vector<1x16xf32>
    %231 = math.exp %230 : vector<1x16xf32>
    %cst_82 = arith.constant 1.000000e+00 : f32
    %232 = vector.broadcast %cst_82 : f32 to vector<1x16xf32>
    %233 = arith.addf %232, %231 : vector<1x16xf32>
    %234 = arith.divf %232, %233 : vector<1x16xf32>
    %235 = vector.extract_strided_slice %216 {offsets = [0, 32], sizes = [1, 16], strides = [1, 1]} : vector<1x48xf32> to vector<1x16xf32>
    %236 = vector.extract_strided_slice %218 {offsets = [0, 32], sizes = [1, 16], strides = [1, 1]} : vector<1x48xf32> to vector<1x16xf32>
    %237 = arith.mulf %226, %236 : vector<1x16xf32>
    %238 = arith.addf %235, %237 : vector<1x16xf32>
    %239 = math.tanh %238 : vector<1x16xf32>
    %cst_83 = arith.constant 1.000000e+00 : f32
    %240 = vector.broadcast %cst_83 : f32 to vector<1x16xf32>
    %241 = arith.subf %240, %234 : vector<1x16xf32>
    %242 = arith.mulf %241, %239 : vector<1x16xf32>
    %243 = arith.mulf %234, %214 : vector<1x16xf32>
    %244 = arith.addf %242, %243 : vector<1x16xf32>
    %c5_i32 = arith.constant 5 : i32
    %245 = arith.index_cast %c5_i32 : i32 to index
    %c0_84 = arith.constant 0 : index
    %246 = vector.load %arg32[%245, %c0_84] : memref<16x48xf32, #tpu.memory_space<vmem>>, vector<1x48xf32>
    %cst_85 = arith.constant dense<0.000000e+00> : vector<1x48xf32>
    %247 = tpu.matmul %244, %92, %cst_85 {dimension_numbers = #tpu.dot_dimension_numbers<[1], [0], [0], [1], [0, 0, 1, 1], [], []>} : vector<1x16xf32>, vector<16x48xf32>, vector<1x48xf32> -> vector<1x48xf32>
    %248 = arith.addf %247, %93 : vector<1x48xf32>
    %249 = vector.extract_strided_slice %246 {offsets = [0, 0], sizes = [1, 16], strides = [1, 1]} : vector<1x48xf32> to vector<1x16xf32>
    %250 = vector.extract_strided_slice %248 {offsets = [0, 0], sizes = [1, 16], strides = [1, 1]} : vector<1x48xf32> to vector<1x16xf32>
    %251 = arith.addf %249, %250 : vector<1x16xf32>
    %252 = arith.negf %251 : vector<1x16xf32>
    %253 = math.exp %252 : vector<1x16xf32>
    %cst_86 = arith.constant 1.000000e+00 : f32
    %254 = vector.broadcast %cst_86 : f32 to vector<1x16xf32>
    %255 = arith.addf %254, %253 : vector<1x16xf32>
    %256 = arith.divf %254, %255 : vector<1x16xf32>
    %257 = vector.extract_strided_slice %246 {offsets = [0, 16], sizes = [1, 16], strides = [1, 1]} : vector<1x48xf32> to vector<1x16xf32>
    %258 = vector.extract_strided_slice %248 {offsets = [0, 16], sizes = [1, 16], strides = [1, 1]} : vector<1x48xf32> to vector<1x16xf32>
    %259 = arith.addf %257, %258 : vector<1x16xf32>
    %260 = arith.negf %259 : vector<1x16xf32>
    %261 = math.exp %260 : vector<1x16xf32>
    %cst_87 = arith.constant 1.000000e+00 : f32
    %262 = vector.broadcast %cst_87 : f32 to vector<1x16xf32>
    %263 = arith.addf %262, %261 : vector<1x16xf32>
    %264 = arith.divf %262, %263 : vector<1x16xf32>
    %265 = vector.extract_strided_slice %246 {offsets = [0, 32], sizes = [1, 16], strides = [1, 1]} : vector<1x48xf32> to vector<1x16xf32>
    %266 = vector.extract_strided_slice %248 {offsets = [0, 32], sizes = [1, 16], strides = [1, 1]} : vector<1x48xf32> to vector<1x16xf32>
    %267 = arith.mulf %256, %266 : vector<1x16xf32>
    %268 = arith.addf %265, %267 : vector<1x16xf32>
    %269 = math.tanh %268 : vector<1x16xf32>
    %cst_88 = arith.constant 1.000000e+00 : f32
    %270 = vector.broadcast %cst_88 : f32 to vector<1x16xf32>
    %271 = arith.subf %270, %264 : vector<1x16xf32>
    %272 = arith.mulf %271, %269 : vector<1x16xf32>
    %273 = arith.mulf %264, %244 : vector<1x16xf32>
    %274 = arith.addf %272, %273 : vector<1x16xf32>
    %c6_i32 = arith.constant 6 : i32
    %275 = arith.index_cast %c6_i32 : i32 to index
    %c0_89 = arith.constant 0 : index
    %276 = vector.load %arg32[%275, %c0_89] : memref<16x48xf32, #tpu.memory_space<vmem>>, vector<1x48xf32>
    %cst_90 = arith.constant dense<0.000000e+00> : vector<1x48xf32>
    %277 = tpu.matmul %274, %92, %cst_90 {dimension_numbers = #tpu.dot_dimension_numbers<[1], [0], [0], [1], [0, 0, 1, 1], [], []>} : vector<1x16xf32>, vector<16x48xf32>, vector<1x48xf32> -> vector<1x48xf32>
    %278 = arith.addf %277, %93 : vector<1x48xf32>
    %279 = vector.extract_strided_slice %276 {offsets = [0, 0], sizes = [1, 16], strides = [1, 1]} : vector<1x48xf32> to vector<1x16xf32>
    %280 = vector.extract_strided_slice %278 {offsets = [0, 0], sizes = [1, 16], strides = [1, 1]} : vector<1x48xf32> to vector<1x16xf32>
    %281 = arith.addf %279, %280 : vector<1x16xf32>
    %282 = arith.negf %281 : vector<1x16xf32>
    %283 = math.exp %282 : vector<1x16xf32>
    %cst_91 = arith.constant 1.000000e+00 : f32
    %284 = vector.broadcast %cst_91 : f32 to vector<1x16xf32>
    %285 = arith.addf %284, %283 : vector<1x16xf32>
    %286 = arith.divf %284, %285 : vector<1x16xf32>
    %287 = vector.extract_strided_slice %276 {offsets = [0, 16], sizes = [1, 16], strides = [1, 1]} : vector<1x48xf32> to vector<1x16xf32>
    %288 = vector.extract_strided_slice %278 {offsets = [0, 16], sizes = [1, 16], strides = [1, 1]} : vector<1x48xf32> to vector<1x16xf32>
    %289 = arith.addf %287, %288 : vector<1x16xf32>
    %290 = arith.negf %289 : vector<1x16xf32>
    %291 = math.exp %290 : vector<1x16xf32>
    %cst_92 = arith.constant 1.000000e+00 : f32
    %292 = vector.broadcast %cst_92 : f32 to vector<1x16xf32>
    %293 = arith.addf %292, %291 : vector<1x16xf32>
    %294 = arith.divf %292, %293 : vector<1x16xf32>
    %295 = vector.extract_strided_slice %276 {offsets = [0, 32], sizes = [1, 16], strides = [1, 1]} : vector<1x48xf32> to vector<1x16xf32>
    %296 = vector.extract_strided_slice %278 {offsets = [0, 32], sizes = [1, 16], strides = [1, 1]} : vector<1x48xf32> to vector<1x16xf32>
    %297 = arith.mulf %286, %296 : vector<1x16xf32>
    %298 = arith.addf %295, %297 : vector<1x16xf32>
    %299 = math.tanh %298 : vector<1x16xf32>
    %cst_93 = arith.constant 1.000000e+00 : f32
    %300 = vector.broadcast %cst_93 : f32 to vector<1x16xf32>
    %301 = arith.subf %300, %294 : vector<1x16xf32>
    %302 = arith.mulf %301, %299 : vector<1x16xf32>
    %303 = arith.mulf %294, %274 : vector<1x16xf32>
    %304 = arith.addf %302, %303 : vector<1x16xf32>
    %c7_i32 = arith.constant 7 : i32
    %305 = arith.index_cast %c7_i32 : i32 to index
    %c0_94 = arith.constant 0 : index
    %306 = vector.load %arg32[%305, %c0_94] : memref<16x48xf32, #tpu.memory_space<vmem>>, vector<1x48xf32>
    %cst_95 = arith.constant dense<0.000000e+00> : vector<1x48xf32>
    %307 = tpu.matmul %304, %92, %cst_95 {dimension_numbers = #tpu.dot_dimension_numbers<[1], [0], [0], [1], [0, 0, 1, 1], [], []>} : vector<1x16xf32>, vector<16x48xf32>, vector<1x48xf32> -> vector<1x48xf32>
    %308 = arith.addf %307, %93 : vector<1x48xf32>
    %309 = vector.extract_strided_slice %306 {offsets = [0, 0], sizes = [1, 16], strides = [1, 1]} : vector<1x48xf32> to vector<1x16xf32>
    %310 = vector.extract_strided_slice %308 {offsets = [0, 0], sizes = [1, 16], strides = [1, 1]} : vector<1x48xf32> to vector<1x16xf32>
    %311 = arith.addf %309, %310 : vector<1x16xf32>
    %312 = arith.negf %311 : vector<1x16xf32>
    %313 = math.exp %312 : vector<1x16xf32>
    %cst_96 = arith.constant 1.000000e+00 : f32
    %314 = vector.broadcast %cst_96 : f32 to vector<1x16xf32>
    %315 = arith.addf %314, %313 : vector<1x16xf32>
    %316 = arith.divf %314, %315 : vector<1x16xf32>
    %317 = vector.extract_strided_slice %306 {offsets = [0, 16], sizes = [1, 16], strides = [1, 1]} : vector<1x48xf32> to vector<1x16xf32>
    %318 = vector.extract_strided_slice %308 {offsets = [0, 16], sizes = [1, 16], strides = [1, 1]} : vector<1x48xf32> to vector<1x16xf32>
    %319 = arith.addf %317, %318 : vector<1x16xf32>
    %320 = arith.negf %319 : vector<1x16xf32>
    %321 = math.exp %320 : vector<1x16xf32>
    %cst_97 = arith.constant 1.000000e+00 : f32
    %322 = vector.broadcast %cst_97 : f32 to vector<1x16xf32>
    %323 = arith.addf %322, %321 : vector<1x16xf32>
    %324 = arith.divf %322, %323 : vector<1x16xf32>
    %325 = vector.extract_strided_slice %306 {offsets = [0, 32], sizes = [1, 16], strides = [1, 1]} : vector<1x48xf32> to vector<1x16xf32>
    %326 = vector.extract_strided_slice %308 {offsets = [0, 32], sizes = [1, 16], strides = [1, 1]} : vector<1x48xf32> to vector<1x16xf32>
    %327 = arith.mulf %316, %326 : vector<1x16xf32>
    %328 = arith.addf %325, %327 : vector<1x16xf32>
    %329 = math.tanh %328 : vector<1x16xf32>
    %cst_98 = arith.constant 1.000000e+00 : f32
    %330 = vector.broadcast %cst_98 : f32 to vector<1x16xf32>
    %331 = arith.subf %330, %324 : vector<1x16xf32>
    %332 = arith.mulf %331, %329 : vector<1x16xf32>
    %333 = arith.mulf %324, %304 : vector<1x16xf32>
    %334 = arith.addf %332, %333 : vector<1x16xf32>
    %c8_i32 = arith.constant 8 : i32
    %335 = arith.index_cast %c8_i32 : i32 to index
    %c0_99 = arith.constant 0 : index
    %336 = vector.load %arg32[%335, %c0_99] : memref<16x48xf32, #tpu.memory_space<vmem>>, vector<1x48xf32>
    %cst_100 = arith.constant dense<0.000000e+00> : vector<1x48xf32>
    %337 = tpu.matmul %334, %92, %cst_100 {dimension_numbers = #tpu.dot_dimension_numbers<[1], [0], [0], [1], [0, 0, 1, 1], [], []>} : vector<1x16xf32>, vector<16x48xf32>, vector<1x48xf32> -> vector<1x48xf32>
    %338 = arith.addf %337, %93 : vector<1x48xf32>
    %339 = vector.extract_strided_slice %336 {offsets = [0, 0], sizes = [1, 16], strides = [1, 1]} : vector<1x48xf32> to vector<1x16xf32>
    %340 = vector.extract_strided_slice %338 {offsets = [0, 0], sizes = [1, 16], strides = [1, 1]} : vector<1x48xf32> to vector<1x16xf32>
    %341 = arith.addf %339, %340 : vector<1x16xf32>
    %342 = arith.negf %341 : vector<1x16xf32>
    %343 = math.exp %342 : vector<1x16xf32>
    %cst_101 = arith.constant 1.000000e+00 : f32
    %344 = vector.broadcast %cst_101 : f32 to vector<1x16xf32>
    %345 = arith.addf %344, %343 : vector<1x16xf32>
    %346 = arith.divf %344, %345 : vector<1x16xf32>
    %347 = vector.extract_strided_slice %336 {offsets = [0, 16], sizes = [1, 16], strides = [1, 1]} : vector<1x48xf32> to vector<1x16xf32>
    %348 = vector.extract_strided_slice %338 {offsets = [0, 16], sizes = [1, 16], strides = [1, 1]} : vector<1x48xf32> to vector<1x16xf32>
    %349 = arith.addf %347, %348 : vector<1x16xf32>
    %350 = arith.negf %349 : vector<1x16xf32>
    %351 = math.exp %350 : vector<1x16xf32>
    %cst_102 = arith.constant 1.000000e+00 : f32
    %352 = vector.broadcast %cst_102 : f32 to vector<1x16xf32>
    %353 = arith.addf %352, %351 : vector<1x16xf32>
    %354 = arith.divf %352, %353 : vector<1x16xf32>
    %355 = vector.extract_strided_slice %336 {offsets = [0, 32], sizes = [1, 16], strides = [1, 1]} : vector<1x48xf32> to vector<1x16xf32>
    %356 = vector.extract_strided_slice %338 {offsets = [0, 32], sizes = [1, 16], strides = [1, 1]} : vector<1x48xf32> to vector<1x16xf32>
    %357 = arith.mulf %346, %356 : vector<1x16xf32>
    %358 = arith.addf %355, %357 : vector<1x16xf32>
    %359 = math.tanh %358 : vector<1x16xf32>
    %cst_103 = arith.constant 1.000000e+00 : f32
    %360 = vector.broadcast %cst_103 : f32 to vector<1x16xf32>
    %361 = arith.subf %360, %354 : vector<1x16xf32>
    %362 = arith.mulf %361, %359 : vector<1x16xf32>
    %363 = arith.mulf %354, %334 : vector<1x16xf32>
    %364 = arith.addf %362, %363 : vector<1x16xf32>
    %c9_i32 = arith.constant 9 : i32
    %365 = arith.index_cast %c9_i32 : i32 to index
    %c0_104 = arith.constant 0 : index
    %366 = vector.load %arg32[%365, %c0_104] : memref<16x48xf32, #tpu.memory_space<vmem>>, vector<1x48xf32>
    %cst_105 = arith.constant dense<0.000000e+00> : vector<1x48xf32>
    %367 = tpu.matmul %364, %92, %cst_105 {dimension_numbers = #tpu.dot_dimension_numbers<[1], [0], [0], [1], [0, 0, 1, 1], [], []>} : vector<1x16xf32>, vector<16x48xf32>, vector<1x48xf32> -> vector<1x48xf32>
    %368 = arith.addf %367, %93 : vector<1x48xf32>
    %369 = vector.extract_strided_slice %366 {offsets = [0, 0], sizes = [1, 16], strides = [1, 1]} : vector<1x48xf32> to vector<1x16xf32>
    %370 = vector.extract_strided_slice %368 {offsets = [0, 0], sizes = [1, 16], strides = [1, 1]} : vector<1x48xf32> to vector<1x16xf32>
    %371 = arith.addf %369, %370 : vector<1x16xf32>
    %372 = arith.negf %371 : vector<1x16xf32>
    %373 = math.exp %372 : vector<1x16xf32>
    %cst_106 = arith.constant 1.000000e+00 : f32
    %374 = vector.broadcast %cst_106 : f32 to vector<1x16xf32>
    %375 = arith.addf %374, %373 : vector<1x16xf32>
    %376 = arith.divf %374, %375 : vector<1x16xf32>
    %377 = vector.extract_strided_slice %366 {offsets = [0, 16], sizes = [1, 16], strides = [1, 1]} : vector<1x48xf32> to vector<1x16xf32>
    %378 = vector.extract_strided_slice %368 {offsets = [0, 16], sizes = [1, 16], strides = [1, 1]} : vector<1x48xf32> to vector<1x16xf32>
    %379 = arith.addf %377, %378 : vector<1x16xf32>
    %380 = arith.negf %379 : vector<1x16xf32>
    %381 = math.exp %380 : vector<1x16xf32>
    %cst_107 = arith.constant 1.000000e+00 : f32
    %382 = vector.broadcast %cst_107 : f32 to vector<1x16xf32>
    %383 = arith.addf %382, %381 : vector<1x16xf32>
    %384 = arith.divf %382, %383 : vector<1x16xf32>
    %385 = vector.extract_strided_slice %366 {offsets = [0, 32], sizes = [1, 16], strides = [1, 1]} : vector<1x48xf32> to vector<1x16xf32>
    %386 = vector.extract_strided_slice %368 {offsets = [0, 32], sizes = [1, 16], strides = [1, 1]} : vector<1x48xf32> to vector<1x16xf32>
    %387 = arith.mulf %376, %386 : vector<1x16xf32>
    %388 = arith.addf %385, %387 : vector<1x16xf32>
    %389 = math.tanh %388 : vector<1x16xf32>
    %cst_108 = arith.constant 1.000000e+00 : f32
    %390 = vector.broadcast %cst_108 : f32 to vector<1x16xf32>
    %391 = arith.subf %390, %384 : vector<1x16xf32>
    %392 = arith.mulf %391, %389 : vector<1x16xf32>
    %393 = arith.mulf %384, %364 : vector<1x16xf32>
    %394 = arith.addf %392, %393 : vector<1x16xf32>
    %c10_i32 = arith.constant 10 : i32
    %395 = arith.index_cast %c10_i32 : i32 to index
    %c0_109 = arith.constant 0 : index
    %396 = vector.load %arg32[%395, %c0_109] : memref<16x48xf32, #tpu.memory_space<vmem>>, vector<1x48xf32>
    %cst_110 = arith.constant dense<0.000000e+00> : vector<1x48xf32>
    %397 = tpu.matmul %394, %92, %cst_110 {dimension_numbers = #tpu.dot_dimension_numbers<[1], [0], [0], [1], [0, 0, 1, 1], [], []>} : vector<1x16xf32>, vector<16x48xf32>, vector<1x48xf32> -> vector<1x48xf32>
    %398 = arith.addf %397, %93 : vector<1x48xf32>
    %399 = vector.extract_strided_slice %396 {offsets = [0, 0], sizes = [1, 16], strides = [1, 1]} : vector<1x48xf32> to vector<1x16xf32>
    %400 = vector.extract_strided_slice %398 {offsets = [0, 0], sizes = [1, 16], strides = [1, 1]} : vector<1x48xf32> to vector<1x16xf32>
    %401 = arith.addf %399, %400 : vector<1x16xf32>
    %402 = arith.negf %401 : vector<1x16xf32>
    %403 = math.exp %402 : vector<1x16xf32>
    %cst_111 = arith.constant 1.000000e+00 : f32
    %404 = vector.broadcast %cst_111 : f32 to vector<1x16xf32>
    %405 = arith.addf %404, %403 : vector<1x16xf32>
    %406 = arith.divf %404, %405 : vector<1x16xf32>
    %407 = vector.extract_strided_slice %396 {offsets = [0, 16], sizes = [1, 16], strides = [1, 1]} : vector<1x48xf32> to vector<1x16xf32>
    %408 = vector.extract_strided_slice %398 {offsets = [0, 16], sizes = [1, 16], strides = [1, 1]} : vector<1x48xf32> to vector<1x16xf32>
    %409 = arith.addf %407, %408 : vector<1x16xf32>
    %410 = arith.negf %409 : vector<1x16xf32>
    %411 = math.exp %410 : vector<1x16xf32>
    %cst_112 = arith.constant 1.000000e+00 : f32
    %412 = vector.broadcast %cst_112 : f32 to vector<1x16xf32>
    %413 = arith.addf %412, %411 : vector<1x16xf32>
    %414 = arith.divf %412, %413 : vector<1x16xf32>
    %415 = vector.extract_strided_slice %396 {offsets = [0, 32], sizes = [1, 16], strides = [1, 1]} : vector<1x48xf32> to vector<1x16xf32>
    %416 = vector.extract_strided_slice %398 {offsets = [0, 32], sizes = [1, 16], strides = [1, 1]} : vector<1x48xf32> to vector<1x16xf32>
    %417 = arith.mulf %406, %416 : vector<1x16xf32>
    %418 = arith.addf %415, %417 : vector<1x16xf32>
    %419 = math.tanh %418 : vector<1x16xf32>
    %cst_113 = arith.constant 1.000000e+00 : f32
    %420 = vector.broadcast %cst_113 : f32 to vector<1x16xf32>
    %421 = arith.subf %420, %414 : vector<1x16xf32>
    %422 = arith.mulf %421, %419 : vector<1x16xf32>
    %423 = arith.mulf %414, %394 : vector<1x16xf32>
    %424 = arith.addf %422, %423 : vector<1x16xf32>
    %c11_i32 = arith.constant 11 : i32
    %425 = arith.index_cast %c11_i32 : i32 to index
    %c0_114 = arith.constant 0 : index
    %426 = vector.load %arg32[%425, %c0_114] : memref<16x48xf32, #tpu.memory_space<vmem>>, vector<1x48xf32>
    %cst_115 = arith.constant dense<0.000000e+00> : vector<1x48xf32>
    %427 = tpu.matmul %424, %92, %cst_115 {dimension_numbers = #tpu.dot_dimension_numbers<[1], [0], [0], [1], [0, 0, 1, 1], [], []>} : vector<1x16xf32>, vector<16x48xf32>, vector<1x48xf32> -> vector<1x48xf32>
    %428 = arith.addf %427, %93 : vector<1x48xf32>
    %429 = vector.extract_strided_slice %426 {offsets = [0, 0], sizes = [1, 16], strides = [1, 1]} : vector<1x48xf32> to vector<1x16xf32>
    %430 = vector.extract_strided_slice %428 {offsets = [0, 0], sizes = [1, 16], strides = [1, 1]} : vector<1x48xf32> to vector<1x16xf32>
    %431 = arith.addf %429, %430 : vector<1x16xf32>
    %432 = arith.negf %431 : vector<1x16xf32>
    %433 = math.exp %432 : vector<1x16xf32>
    %cst_116 = arith.constant 1.000000e+00 : f32
    %434 = vector.broadcast %cst_116 : f32 to vector<1x16xf32>
    %435 = arith.addf %434, %433 : vector<1x16xf32>
    %436 = arith.divf %434, %435 : vector<1x16xf32>
    %437 = vector.extract_strided_slice %426 {offsets = [0, 16], sizes = [1, 16], strides = [1, 1]} : vector<1x48xf32> to vector<1x16xf32>
    %438 = vector.extract_strided_slice %428 {offsets = [0, 16], sizes = [1, 16], strides = [1, 1]} : vector<1x48xf32> to vector<1x16xf32>
    %439 = arith.addf %437, %438 : vector<1x16xf32>
    %440 = arith.negf %439 : vector<1x16xf32>
    %441 = math.exp %440 : vector<1x16xf32>
    %cst_117 = arith.constant 1.000000e+00 : f32
    %442 = vector.broadcast %cst_117 : f32 to vector<1x16xf32>
    %443 = arith.addf %442, %441 : vector<1x16xf32>
    %444 = arith.divf %442, %443 : vector<1x16xf32>
    %445 = vector.extract_strided_slice %426 {offsets = [0, 32], sizes = [1, 16], strides = [1, 1]} : vector<1x48xf32> to vector<1x16xf32>
    %446 = vector.extract_strided_slice %428 {offsets = [0, 32], sizes = [1, 16], strides = [1, 1]} : vector<1x48xf32> to vector<1x16xf32>
    %447 = arith.mulf %436, %446 : vector<1x16xf32>
    %448 = arith.addf %445, %447 : vector<1x16xf32>
    %449 = math.tanh %448 : vector<1x16xf32>
    %cst_118 = arith.constant 1.000000e+00 : f32
    %450 = vector.broadcast %cst_118 : f32 to vector<1x16xf32>
    %451 = arith.subf %450, %444 : vector<1x16xf32>
    %452 = arith.mulf %451, %449 : vector<1x16xf32>
    %453 = arith.mulf %444, %424 : vector<1x16xf32>
    %454 = arith.addf %452, %453 : vector<1x16xf32>
    %c12_i32 = arith.constant 12 : i32
    %455 = arith.index_cast %c12_i32 : i32 to index
    %c0_119 = arith.constant 0 : index
    %456 = vector.load %arg32[%455, %c0_119] : memref<16x48xf32, #tpu.memory_space<vmem>>, vector<1x48xf32>
    %cst_120 = arith.constant dense<0.000000e+00> : vector<1x48xf32>
    %457 = tpu.matmul %454, %92, %cst_120 {dimension_numbers = #tpu.dot_dimension_numbers<[1], [0], [0], [1], [0, 0, 1, 1], [], []>} : vector<1x16xf32>, vector<16x48xf32>, vector<1x48xf32> -> vector<1x48xf32>
    %458 = arith.addf %457, %93 : vector<1x48xf32>
    %459 = vector.extract_strided_slice %456 {offsets = [0, 0], sizes = [1, 16], strides = [1, 1]} : vector<1x48xf32> to vector<1x16xf32>
    %460 = vector.extract_strided_slice %458 {offsets = [0, 0], sizes = [1, 16], strides = [1, 1]} : vector<1x48xf32> to vector<1x16xf32>
    %461 = arith.addf %459, %460 : vector<1x16xf32>
    %462 = arith.negf %461 : vector<1x16xf32>
    %463 = math.exp %462 : vector<1x16xf32>
    %cst_121 = arith.constant 1.000000e+00 : f32
    %464 = vector.broadcast %cst_121 : f32 to vector<1x16xf32>
    %465 = arith.addf %464, %463 : vector<1x16xf32>
    %466 = arith.divf %464, %465 : vector<1x16xf32>
    %467 = vector.extract_strided_slice %456 {offsets = [0, 16], sizes = [1, 16], strides = [1, 1]} : vector<1x48xf32> to vector<1x16xf32>
    %468 = vector.extract_strided_slice %458 {offsets = [0, 16], sizes = [1, 16], strides = [1, 1]} : vector<1x48xf32> to vector<1x16xf32>
    %469 = arith.addf %467, %468 : vector<1x16xf32>
    %470 = arith.negf %469 : vector<1x16xf32>
    %471 = math.exp %470 : vector<1x16xf32>
    %cst_122 = arith.constant 1.000000e+00 : f32
    %472 = vector.broadcast %cst_122 : f32 to vector<1x16xf32>
    %473 = arith.addf %472, %471 : vector<1x16xf32>
    %474 = arith.divf %472, %473 : vector<1x16xf32>
    %475 = vector.extract_strided_slice %456 {offsets = [0, 32], sizes = [1, 16], strides = [1, 1]} : vector<1x48xf32> to vector<1x16xf32>
    %476 = vector.extract_strided_slice %458 {offsets = [0, 32], sizes = [1, 16], strides = [1, 1]} : vector<1x48xf32> to vector<1x16xf32>
    %477 = arith.mulf %466, %476 : vector<1x16xf32>
    %478 = arith.addf %475, %477 : vector<1x16xf32>
    %479 = math.tanh %478 : vector<1x16xf32>
    %cst_123 = arith.constant 1.000000e+00 : f32
    %480 = vector.broadcast %cst_123 : f32 to vector<1x16xf32>
    %481 = arith.subf %480, %474 : vector<1x16xf32>
    %482 = arith.mulf %481, %479 : vector<1x16xf32>
    %483 = arith.mulf %474, %454 : vector<1x16xf32>
    %484 = arith.addf %482, %483 : vector<1x16xf32>
    %c13_i32 = arith.constant 13 : i32
    %485 = arith.index_cast %c13_i32 : i32 to index
    %c0_124 = arith.constant 0 : index
    %486 = vector.load %arg32[%485, %c0_124] : memref<16x48xf32, #tpu.memory_space<vmem>>, vector<1x48xf32>
    %cst_125 = arith.constant dense<0.000000e+00> : vector<1x48xf32>
    %487 = tpu.matmul %484, %92, %cst_125 {dimension_numbers = #tpu.dot_dimension_numbers<[1], [0], [0], [1], [0, 0, 1, 1], [], []>} : vector<1x16xf32>, vector<16x48xf32>, vector<1x48xf32> -> vector<1x48xf32>
    %488 = arith.addf %487, %93 : vector<1x48xf32>
    %489 = vector.extract_strided_slice %486 {offsets = [0, 0], sizes = [1, 16], strides = [1, 1]} : vector<1x48xf32> to vector<1x16xf32>
    %490 = vector.extract_strided_slice %488 {offsets = [0, 0], sizes = [1, 16], strides = [1, 1]} : vector<1x48xf32> to vector<1x16xf32>
    %491 = arith.addf %489, %490 : vector<1x16xf32>
    %492 = arith.negf %491 : vector<1x16xf32>
    %493 = math.exp %492 : vector<1x16xf32>
    %cst_126 = arith.constant 1.000000e+00 : f32
    %494 = vector.broadcast %cst_126 : f32 to vector<1x16xf32>
    %495 = arith.addf %494, %493 : vector<1x16xf32>
    %496 = arith.divf %494, %495 : vector<1x16xf32>
    %497 = vector.extract_strided_slice %486 {offsets = [0, 16], sizes = [1, 16], strides = [1, 1]} : vector<1x48xf32> to vector<1x16xf32>
    %498 = vector.extract_strided_slice %488 {offsets = [0, 16], sizes = [1, 16], strides = [1, 1]} : vector<1x48xf32> to vector<1x16xf32>
    %499 = arith.addf %497, %498 : vector<1x16xf32>
    %500 = arith.negf %499 : vector<1x16xf32>
    %501 = math.exp %500 : vector<1x16xf32>
    %cst_127 = arith.constant 1.000000e+00 : f32
    %502 = vector.broadcast %cst_127 : f32 to vector<1x16xf32>
    %503 = arith.addf %502, %501 : vector<1x16xf32>
    %504 = arith.divf %502, %503 : vector<1x16xf32>
    %505 = vector.extract_strided_slice %486 {offsets = [0, 32], sizes = [1, 16], strides = [1, 1]} : vector<1x48xf32> to vector<1x16xf32>
    %506 = vector.extract_strided_slice %488 {offsets = [0, 32], sizes = [1, 16], strides = [1, 1]} : vector<1x48xf32> to vector<1x16xf32>
    %507 = arith.mulf %496, %506 : vector<1x16xf32>
    %508 = arith.addf %505, %507 : vector<1x16xf32>
    %509 = math.tanh %508 : vector<1x16xf32>
    %cst_128 = arith.constant 1.000000e+00 : f32
    %510 = vector.broadcast %cst_128 : f32 to vector<1x16xf32>
    %511 = arith.subf %510, %504 : vector<1x16xf32>
    %512 = arith.mulf %511, %509 : vector<1x16xf32>
    %513 = arith.mulf %504, %484 : vector<1x16xf32>
    %514 = arith.addf %512, %513 : vector<1x16xf32>
    %c14_i32 = arith.constant 14 : i32
    %515 = arith.index_cast %c14_i32 : i32 to index
    %c0_129 = arith.constant 0 : index
    %516 = vector.load %arg32[%515, %c0_129] : memref<16x48xf32, #tpu.memory_space<vmem>>, vector<1x48xf32>
    %cst_130 = arith.constant dense<0.000000e+00> : vector<1x48xf32>
    %517 = tpu.matmul %514, %92, %cst_130 {dimension_numbers = #tpu.dot_dimension_numbers<[1], [0], [0], [1], [0, 0, 1, 1], [], []>} : vector<1x16xf32>, vector<16x48xf32>, vector<1x48xf32> -> vector<1x48xf32>
    %518 = arith.addf %517, %93 : vector<1x48xf32>
    %519 = vector.extract_strided_slice %516 {offsets = [0, 0], sizes = [1, 16], strides = [1, 1]} : vector<1x48xf32> to vector<1x16xf32>
    %520 = vector.extract_strided_slice %518 {offsets = [0, 0], sizes = [1, 16], strides = [1, 1]} : vector<1x48xf32> to vector<1x16xf32>
    %521 = arith.addf %519, %520 : vector<1x16xf32>
    %522 = arith.negf %521 : vector<1x16xf32>
    %523 = math.exp %522 : vector<1x16xf32>
    %cst_131 = arith.constant 1.000000e+00 : f32
    %524 = vector.broadcast %cst_131 : f32 to vector<1x16xf32>
    %525 = arith.addf %524, %523 : vector<1x16xf32>
    %526 = arith.divf %524, %525 : vector<1x16xf32>
    %527 = vector.extract_strided_slice %516 {offsets = [0, 16], sizes = [1, 16], strides = [1, 1]} : vector<1x48xf32> to vector<1x16xf32>
    %528 = vector.extract_strided_slice %518 {offsets = [0, 16], sizes = [1, 16], strides = [1, 1]} : vector<1x48xf32> to vector<1x16xf32>
    %529 = arith.addf %527, %528 : vector<1x16xf32>
    %530 = arith.negf %529 : vector<1x16xf32>
    %531 = math.exp %530 : vector<1x16xf32>
    %cst_132 = arith.constant 1.000000e+00 : f32
    %532 = vector.broadcast %cst_132 : f32 to vector<1x16xf32>
    %533 = arith.addf %532, %531 : vector<1x16xf32>
    %534 = arith.divf %532, %533 : vector<1x16xf32>
    %535 = vector.extract_strided_slice %516 {offsets = [0, 32], sizes = [1, 16], strides = [1, 1]} : vector<1x48xf32> to vector<1x16xf32>
    %536 = vector.extract_strided_slice %518 {offsets = [0, 32], sizes = [1, 16], strides = [1, 1]} : vector<1x48xf32> to vector<1x16xf32>
    %537 = arith.mulf %526, %536 : vector<1x16xf32>
    %538 = arith.addf %535, %537 : vector<1x16xf32>
    %539 = math.tanh %538 : vector<1x16xf32>
    %cst_133 = arith.constant 1.000000e+00 : f32
    %540 = vector.broadcast %cst_133 : f32 to vector<1x16xf32>
    %541 = arith.subf %540, %534 : vector<1x16xf32>
    %542 = arith.mulf %541, %539 : vector<1x16xf32>
    %543 = arith.mulf %534, %514 : vector<1x16xf32>
    %544 = arith.addf %542, %543 : vector<1x16xf32>
    %c15_i32 = arith.constant 15 : i32
    %545 = arith.index_cast %c15_i32 : i32 to index
    %c0_134 = arith.constant 0 : index
    %546 = vector.load %arg32[%545, %c0_134] : memref<16x48xf32, #tpu.memory_space<vmem>>, vector<1x48xf32>
    %cst_135 = arith.constant dense<0.000000e+00> : vector<1x48xf32>
    %547 = tpu.matmul %544, %92, %cst_135 {dimension_numbers = #tpu.dot_dimension_numbers<[1], [0], [0], [1], [0, 0, 1, 1], [], []>} : vector<1x16xf32>, vector<16x48xf32>, vector<1x48xf32> -> vector<1x48xf32>
    %548 = arith.addf %547, %93 : vector<1x48xf32>
    %549 = vector.extract_strided_slice %546 {offsets = [0, 0], sizes = [1, 16], strides = [1, 1]} : vector<1x48xf32> to vector<1x16xf32>
    %550 = vector.extract_strided_slice %548 {offsets = [0, 0], sizes = [1, 16], strides = [1, 1]} : vector<1x48xf32> to vector<1x16xf32>
    %551 = arith.addf %549, %550 : vector<1x16xf32>
    %552 = arith.negf %551 : vector<1x16xf32>
    %553 = math.exp %552 : vector<1x16xf32>
    %cst_136 = arith.constant 1.000000e+00 : f32
    %554 = vector.broadcast %cst_136 : f32 to vector<1x16xf32>
    %555 = arith.addf %554, %553 : vector<1x16xf32>
    %556 = arith.divf %554, %555 : vector<1x16xf32>
    %557 = vector.extract_strided_slice %546 {offsets = [0, 16], sizes = [1, 16], strides = [1, 1]} : vector<1x48xf32> to vector<1x16xf32>
    %558 = vector.extract_strided_slice %548 {offsets = [0, 16], sizes = [1, 16], strides = [1, 1]} : vector<1x48xf32> to vector<1x16xf32>
    %559 = arith.addf %557, %558 : vector<1x16xf32>
    %560 = arith.negf %559 : vector<1x16xf32>
    %561 = math.exp %560 : vector<1x16xf32>
    %cst_137 = arith.constant 1.000000e+00 : f32
    %562 = vector.broadcast %cst_137 : f32 to vector<1x16xf32>
    %563 = arith.addf %562, %561 : vector<1x16xf32>
    %564 = arith.divf %562, %563 : vector<1x16xf32>
    %565 = vector.extract_strided_slice %546 {offsets = [0, 32], sizes = [1, 16], strides = [1, 1]} : vector<1x48xf32> to vector<1x16xf32>
    %566 = vector.extract_strided_slice %548 {offsets = [0, 32], sizes = [1, 16], strides = [1, 1]} : vector<1x48xf32> to vector<1x16xf32>
    %567 = arith.mulf %556, %566 : vector<1x16xf32>
    %568 = arith.addf %565, %567 : vector<1x16xf32>
    %569 = math.tanh %568 : vector<1x16xf32>
    %cst_138 = arith.constant 1.000000e+00 : f32
    %570 = vector.broadcast %cst_138 : f32 to vector<1x16xf32>
    %571 = arith.subf %570, %564 : vector<1x16xf32>
    %572 = arith.mulf %571, %569 : vector<1x16xf32>
    %573 = arith.mulf %564, %544 : vector<1x16xf32>
    %574 = arith.addf %572, %573 : vector<1x16xf32>
    %c16_i32 = arith.constant 16 : i32
    %c0_139 = arith.constant 0 : index
    %c0_140 = arith.constant 0 : index
    %575 = vector.load %arg18[%c0_139, %c0_140] : memref<16x48xf32, #tpu.memory_space<vmem>>, vector<16x48xf32>
    %cst_141 = arith.constant dense<0.000000e+00> : vector<1x48xf32>
    %576 = tpu.matmul %574, %575, %cst_141 {dimension_numbers = #tpu.dot_dimension_numbers<[1], [0], [0], [1], [0, 0, 1, 1], [], []>} : vector<1x16xf32>, vector<16x48xf32>, vector<1x48xf32> -> vector<1x48xf32>
    %c0_142 = arith.constant 0 : index
    %c0_143 = arith.constant 0 : index
    %577 = vector.load %arg20[%c0_142, %c0_143] : memref<1x48xf32, #tpu.memory_space<vmem>>, vector<1x48xf32>
    %578 = arith.addf %576, %577 : vector<1x48xf32>
    %c0_144 = arith.constant 0 : index
    %c0_145 = arith.constant 0 : index
    %579 = vector.load %arg19[%c0_144, %c0_145] : memref<16x48xf32, #tpu.memory_space<vmem>>, vector<16x48xf32>
    %c0_146 = arith.constant 0 : index
    %c0_147 = arith.constant 0 : index
    %580 = vector.load %arg21[%c0_146, %c0_147] : memref<1x48xf32, #tpu.memory_space<vmem>>, vector<1x48xf32>
    %cst_148 = arith.constant 0.000000e+00 : f32
    %581 = vector.broadcast %cst_148 : f32 to vector<1x16xf32>
    %c0_i32_149 = arith.constant 0 : i32
    %cst_150 = arith.constant dense<0.000000e+00> : vector<1x48xf32>
    %582 = tpu.matmul %581, %579, %cst_150 {dimension_numbers = #tpu.dot_dimension_numbers<[1], [0], [0], [1], [0, 0, 1, 1], [], []>} : vector<1x16xf32>, vector<16x48xf32>, vector<1x48xf32> -> vector<1x48xf32>
    %583 = arith.addf %582, %580 : vector<1x48xf32>
    %584 = vector.extract_strided_slice %578 {offsets = [0, 0], sizes = [1, 16], strides = [1, 1]} : vector<1x48xf32> to vector<1x16xf32>
    %585 = vector.extract_strided_slice %583 {offsets = [0, 0], sizes = [1, 16], strides = [1, 1]} : vector<1x48xf32> to vector<1x16xf32>
    %586 = arith.addf %584, %585 : vector<1x16xf32>
    %587 = arith.negf %586 : vector<1x16xf32>
    %588 = math.exp %587 : vector<1x16xf32>
    %cst_151 = arith.constant 1.000000e+00 : f32
    %589 = vector.broadcast %cst_151 : f32 to vector<1x16xf32>
    %590 = arith.addf %589, %588 : vector<1x16xf32>
    %591 = arith.divf %589, %590 : vector<1x16xf32>
    %592 = vector.extract_strided_slice %578 {offsets = [0, 16], sizes = [1, 16], strides = [1, 1]} : vector<1x48xf32> to vector<1x16xf32>
    %593 = vector.extract_strided_slice %583 {offsets = [0, 16], sizes = [1, 16], strides = [1, 1]} : vector<1x48xf32> to vector<1x16xf32>
    %594 = arith.addf %592, %593 : vector<1x16xf32>
    %595 = arith.negf %594 : vector<1x16xf32>
    %596 = math.exp %595 : vector<1x16xf32>
    %cst_152 = arith.constant 1.000000e+00 : f32
    %597 = vector.broadcast %cst_152 : f32 to vector<1x16xf32>
    %598 = arith.addf %597, %596 : vector<1x16xf32>
    %599 = arith.divf %597, %598 : vector<1x16xf32>
    %600 = vector.extract_strided_slice %578 {offsets = [0, 32], sizes = [1, 16], strides = [1, 1]} : vector<1x48xf32> to vector<1x16xf32>
    %601 = vector.extract_strided_slice %583 {offsets = [0, 32], sizes = [1, 16], strides = [1, 1]} : vector<1x48xf32> to vector<1x16xf32>
    %602 = arith.mulf %591, %601 : vector<1x16xf32>
    %603 = arith.addf %600, %602 : vector<1x16xf32>
    %604 = math.tanh %603 : vector<1x16xf32>
    %cst_153 = arith.constant 1.000000e+00 : f32
    %605 = vector.broadcast %cst_153 : f32 to vector<1x16xf32>
    %606 = arith.subf %605, %599 : vector<1x16xf32>
    %607 = arith.mulf %606, %604 : vector<1x16xf32>
    %608 = arith.mulf %599, %581 : vector<1x16xf32>
    %609 = arith.addf %607, %608 : vector<1x16xf32>
    %610 = arith.index_cast %c0_i32_149 : i32 to index
    %c0_154 = arith.constant 0 : index
    %611 = vector.load %arg33[%610, %c0_154] : memref<16x16xf32, #tpu.memory_space<vmem>>, vector<1x16xf32>
    tpu.vector_store %arg33[%610, %c0_154], %609 {strides = array<i32>} : memref<16x16xf32, #tpu.memory_space<vmem>>, vector<1x16xf32>,
    %c1_i32_155 = arith.constant 1 : i32
    %cst_156 = arith.constant dense<0.000000e+00> : vector<1x48xf32>
    %612 = tpu.matmul %609, %579, %cst_156 {dimension_numbers = #tpu.dot_dimension_numbers<[1], [0], [0], [1], [0, 0, 1, 1], [], []>} : vector<1x16xf32>, vector<16x48xf32>, vector<1x48xf32> -> vector<1x48xf32>
    %613 = arith.addf %612, %580 : vector<1x48xf32>
    %614 = vector.extract_strided_slice %578 {offsets = [0, 0], sizes = [1, 16], strides = [1, 1]} : vector<1x48xf32> to vector<1x16xf32>
    %615 = vector.extract_strided_slice %613 {offsets = [0, 0], sizes = [1, 16], strides = [1, 1]} : vector<1x48xf32> to vector<1x16xf32>
    %616 = arith.addf %614, %615 : vector<1x16xf32>
    %617 = arith.negf %616 : vector<1x16xf32>
    %618 = math.exp %617 : vector<1x16xf32>
    %cst_157 = arith.constant 1.000000e+00 : f32
    %619 = vector.broadcast %cst_157 : f32 to vector<1x16xf32>
    %620 = arith.addf %619, %618 : vector<1x16xf32>
    %621 = arith.divf %619, %620 : vector<1x16xf32>
    %622 = vector.extract_strided_slice %578 {offsets = [0, 16], sizes = [1, 16], strides = [1, 1]} : vector<1x48xf32> to vector<1x16xf32>
    %623 = vector.extract_strided_slice %613 {offsets = [0, 16], sizes = [1, 16], strides = [1, 1]} : vector<1x48xf32> to vector<1x16xf32>
    %624 = arith.addf %622, %623 : vector<1x16xf32>
    %625 = arith.negf %624 : vector<1x16xf32>
    %626 = math.exp %625 : vector<1x16xf32>
    %cst_158 = arith.constant 1.000000e+00 : f32
    %627 = vector.broadcast %cst_158 : f32 to vector<1x16xf32>
    %628 = arith.addf %627, %626 : vector<1x16xf32>
    %629 = arith.divf %627, %628 : vector<1x16xf32>
    %630 = vector.extract_strided_slice %578 {offsets = [0, 32], sizes = [1, 16], strides = [1, 1]} : vector<1x48xf32> to vector<1x16xf32>
    %631 = vector.extract_strided_slice %613 {offsets = [0, 32], sizes = [1, 16], strides = [1, 1]} : vector<1x48xf32> to vector<1x16xf32>
    %632 = arith.mulf %621, %631 : vector<1x16xf32>
    %633 = arith.addf %630, %632 : vector<1x16xf32>
    %634 = math.tanh %633 : vector<1x16xf32>
    %cst_159 = arith.constant 1.000000e+00 : f32
    %635 = vector.broadcast %cst_159 : f32 to vector<1x16xf32>
    %636 = arith.subf %635, %629 : vector<1x16xf32>
    %637 = arith.mulf %636, %634 : vector<1x16xf32>
    %638 = arith.mulf %629, %609 : vector<1x16xf32>
    %639 = arith.addf %637, %638 : vector<1x16xf32>
    %640 = arith.index_cast %c1_i32_155 : i32 to index
    %c0_160 = arith.constant 0 : index
    %641 = vector.load %arg33[%640, %c0_160] : memref<16x16xf32, #tpu.memory_space<vmem>>, vector<1x16xf32>
    tpu.vector_store %arg33[%640, %c0_160], %639 {strides = array<i32>} : memref<16x16xf32, #tpu.memory_space<vmem>>, vector<1x16xf32>,
    %c2_i32_161 = arith.constant 2 : i32
    %cst_162 = arith.constant dense<0.000000e+00> : vector<1x48xf32>
    %642 = tpu.matmul %639, %579, %cst_162 {dimension_numbers = #tpu.dot_dimension_numbers<[1], [0], [0], [1], [0, 0, 1, 1], [], []>} : vector<1x16xf32>, vector<16x48xf32>, vector<1x48xf32> -> vector<1x48xf32>
    %643 = arith.addf %642, %580 : vector<1x48xf32>
    %644 = vector.extract_strided_slice %578 {offsets = [0, 0], sizes = [1, 16], strides = [1, 1]} : vector<1x48xf32> to vector<1x16xf32>
    %645 = vector.extract_strided_slice %643 {offsets = [0, 0], sizes = [1, 16], strides = [1, 1]} : vector<1x48xf32> to vector<1x16xf32>
    %646 = arith.addf %644, %645 : vector<1x16xf32>
    %647 = arith.negf %646 : vector<1x16xf32>
    %648 = math.exp %647 : vector<1x16xf32>
    %cst_163 = arith.constant 1.000000e+00 : f32
    %649 = vector.broadcast %cst_163 : f32 to vector<1x16xf32>
    %650 = arith.addf %649, %648 : vector<1x16xf32>
    %651 = arith.divf %649, %650 : vector<1x16xf32>
    %652 = vector.extract_strided_slice %578 {offsets = [0, 16], sizes = [1, 16], strides = [1, 1]} : vector<1x48xf32> to vector<1x16xf32>
    %653 = vector.extract_strided_slice %643 {offsets = [0, 16], sizes = [1, 16], strides = [1, 1]} : vector<1x48xf32> to vector<1x16xf32>
    %654 = arith.addf %652, %653 : vector<1x16xf32>
    %655 = arith.negf %654 : vector<1x16xf32>
    %656 = math.exp %655 : vector<1x16xf32>
    %cst_164 = arith.constant 1.000000e+00 : f32
    %657 = vector.broadcast %cst_164 : f32 to vector<1x16xf32>
    %658 = arith.addf %657, %656 : vector<1x16xf32>
    %659 = arith.divf %657, %658 : vector<1x16xf32>
    %660 = vector.extract_strided_slice %578 {offsets = [0, 32], sizes = [1, 16], strides = [1, 1]} : vector<1x48xf32> to vector<1x16xf32>
    %661 = vector.extract_strided_slice %643 {offsets = [0, 32], sizes = [1, 16], strides = [1, 1]} : vector<1x48xf32> to vector<1x16xf32>
    %662 = arith.mulf %651, %661 : vector<1x16xf32>
    %663 = arith.addf %660, %662 : vector<1x16xf32>
    %664 = math.tanh %663 : vector<1x16xf32>
    %cst_165 = arith.constant 1.000000e+00 : f32
    %665 = vector.broadcast %cst_165 : f32 to vector<1x16xf32>
    %666 = arith.subf %665, %659 : vector<1x16xf32>
    %667 = arith.mulf %666, %664 : vector<1x16xf32>
    %668 = arith.mulf %659, %639 : vector<1x16xf32>
    %669 = arith.addf %667, %668 : vector<1x16xf32>
    %670 = arith.index_cast %c2_i32_161 : i32 to index
    %c0_166 = arith.constant 0 : index
    %671 = vector.load %arg33[%670, %c0_166] : memref<16x16xf32, #tpu.memory_space<vmem>>, vector<1x16xf32>
    tpu.vector_store %arg33[%670, %c0_166], %669 {strides = array<i32>} : memref<16x16xf32, #tpu.memory_space<vmem>>, vector<1x16xf32>,
    %c3_i32_167 = arith.constant 3 : i32
    %cst_168 = arith.constant dense<0.000000e+00> : vector<1x48xf32>
    %672 = tpu.matmul %669, %579, %cst_168 {dimension_numbers = #tpu.dot_dimension_numbers<[1], [0], [0], [1], [0, 0, 1, 1], [], []>} : vector<1x16xf32>, vector<16x48xf32>, vector<1x48xf32> -> vector<1x48xf32>
    %673 = arith.addf %672, %580 : vector<1x48xf32>
    %674 = vector.extract_strided_slice %578 {offsets = [0, 0], sizes = [1, 16], strides = [1, 1]} : vector<1x48xf32> to vector<1x16xf32>
    %675 = vector.extract_strided_slice %673 {offsets = [0, 0], sizes = [1, 16], strides = [1, 1]} : vector<1x48xf32> to vector<1x16xf32>
    %676 = arith.addf %674, %675 : vector<1x16xf32>
    %677 = arith.negf %676 : vector<1x16xf32>
    %678 = math.exp %677 : vector<1x16xf32>
    %cst_169 = arith.constant 1.000000e+00 : f32
    %679 = vector.broadcast %cst_169 : f32 to vector<1x16xf32>
    %680 = arith.addf %679, %678 : vector<1x16xf32>
    %681 = arith.divf %679, %680 : vector<1x16xf32>
    %682 = vector.extract_strided_slice %578 {offsets = [0, 16], sizes = [1, 16], strides = [1, 1]} : vector<1x48xf32> to vector<1x16xf32>
    %683 = vector.extract_strided_slice %673 {offsets = [0, 16], sizes = [1, 16], strides = [1, 1]} : vector<1x48xf32> to vector<1x16xf32>
    %684 = arith.addf %682, %683 : vector<1x16xf32>
    %685 = arith.negf %684 : vector<1x16xf32>
    %686 = math.exp %685 : vector<1x16xf32>
    %cst_170 = arith.constant 1.000000e+00 : f32
    %687 = vector.broadcast %cst_170 : f32 to vector<1x16xf32>
    %688 = arith.addf %687, %686 : vector<1x16xf32>
    %689 = arith.divf %687, %688 : vector<1x16xf32>
    %690 = vector.extract_strided_slice %578 {offsets = [0, 32], sizes = [1, 16], strides = [1, 1]} : vector<1x48xf32> to vector<1x16xf32>
    %691 = vector.extract_strided_slice %673 {offsets = [0, 32], sizes = [1, 16], strides = [1, 1]} : vector<1x48xf32> to vector<1x16xf32>
    %692 = arith.mulf %681, %691 : vector<1x16xf32>
    %693 = arith.addf %690, %692 : vector<1x16xf32>
    %694 = math.tanh %693 : vector<1x16xf32>
    %cst_171 = arith.constant 1.000000e+00 : f32
    %695 = vector.broadcast %cst_171 : f32 to vector<1x16xf32>
    %696 = arith.subf %695, %689 : vector<1x16xf32>
    %697 = arith.mulf %696, %694 : vector<1x16xf32>
    %698 = arith.mulf %689, %669 : vector<1x16xf32>
    %699 = arith.addf %697, %698 : vector<1x16xf32>
    %700 = arith.index_cast %c3_i32_167 : i32 to index
    %c0_172 = arith.constant 0 : index
    %701 = vector.load %arg33[%700, %c0_172] : memref<16x16xf32, #tpu.memory_space<vmem>>, vector<1x16xf32>
    tpu.vector_store %arg33[%700, %c0_172], %699 {strides = array<i32>} : memref<16x16xf32, #tpu.memory_space<vmem>>, vector<1x16xf32>,
    %c4_i32_173 = arith.constant 4 : i32
    %cst_174 = arith.constant dense<0.000000e+00> : vector<1x48xf32>
    %702 = tpu.matmul %699, %579, %cst_174 {dimension_numbers = #tpu.dot_dimension_numbers<[1], [0], [0], [1], [0, 0, 1, 1], [], []>} : vector<1x16xf32>, vector<16x48xf32>, vector<1x48xf32> -> vector<1x48xf32>
    %703 = arith.addf %702, %580 : vector<1x48xf32>
    %704 = vector.extract_strided_slice %578 {offsets = [0, 0], sizes = [1, 16], strides = [1, 1]} : vector<1x48xf32> to vector<1x16xf32>
    %705 = vector.extract_strided_slice %703 {offsets = [0, 0], sizes = [1, 16], strides = [1, 1]} : vector<1x48xf32> to vector<1x16xf32>
    %706 = arith.addf %704, %705 : vector<1x16xf32>
    %707 = arith.negf %706 : vector<1x16xf32>
    %708 = math.exp %707 : vector<1x16xf32>
    %cst_175 = arith.constant 1.000000e+00 : f32
    %709 = vector.broadcast %cst_175 : f32 to vector<1x16xf32>
    %710 = arith.addf %709, %708 : vector<1x16xf32>
    %711 = arith.divf %709, %710 : vector<1x16xf32>
    %712 = vector.extract_strided_slice %578 {offsets = [0, 16], sizes = [1, 16], strides = [1, 1]} : vector<1x48xf32> to vector<1x16xf32>
    %713 = vector.extract_strided_slice %703 {offsets = [0, 16], sizes = [1, 16], strides = [1, 1]} : vector<1x48xf32> to vector<1x16xf32>
    %714 = arith.addf %712, %713 : vector<1x16xf32>
    %715 = arith.negf %714 : vector<1x16xf32>
    %716 = math.exp %715 : vector<1x16xf32>
    %cst_176 = arith.constant 1.000000e+00 : f32
    %717 = vector.broadcast %cst_176 : f32 to vector<1x16xf32>
    %718 = arith.addf %717, %716 : vector<1x16xf32>
    %719 = arith.divf %717, %718 : vector<1x16xf32>
    %720 = vector.extract_strided_slice %578 {offsets = [0, 32], sizes = [1, 16], strides = [1, 1]} : vector<1x48xf32> to vector<1x16xf32>
    %721 = vector.extract_strided_slice %703 {offsets = [0, 32], sizes = [1, 16], strides = [1, 1]} : vector<1x48xf32> to vector<1x16xf32>
    %722 = arith.mulf %711, %721 : vector<1x16xf32>
    %723 = arith.addf %720, %722 : vector<1x16xf32>
    %724 = math.tanh %723 : vector<1x16xf32>
    %cst_177 = arith.constant 1.000000e+00 : f32
    %725 = vector.broadcast %cst_177 : f32 to vector<1x16xf32>
    %726 = arith.subf %725, %719 : vector<1x16xf32>
    %727 = arith.mulf %726, %724 : vector<1x16xf32>
    %728 = arith.mulf %719, %699 : vector<1x16xf32>
    %729 = arith.addf %727, %728 : vector<1x16xf32>
    %730 = arith.index_cast %c4_i32_173 : i32 to index
    %c0_178 = arith.constant 0 : index
    %731 = vector.load %arg33[%730, %c0_178] : memref<16x16xf32, #tpu.memory_space<vmem>>, vector<1x16xf32>
    tpu.vector_store %arg33[%730, %c0_178], %729 {strides = array<i32>} : memref<16x16xf32, #tpu.memory_space<vmem>>, vector<1x16xf32>,
    %c5_i32_179 = arith.constant 5 : i32
    %cst_180 = arith.constant dense<0.000000e+00> : vector<1x48xf32>
    %732 = tpu.matmul %729, %579, %cst_180 {dimension_numbers = #tpu.dot_dimension_numbers<[1], [0], [0], [1], [0, 0, 1, 1], [], []>} : vector<1x16xf32>, vector<16x48xf32>, vector<1x48xf32> -> vector<1x48xf32>
    %733 = arith.addf %732, %580 : vector<1x48xf32>
    %734 = vector.extract_strided_slice %578 {offsets = [0, 0], sizes = [1, 16], strides = [1, 1]} : vector<1x48xf32> to vector<1x16xf32>
    %735 = vector.extract_strided_slice %733 {offsets = [0, 0], sizes = [1, 16], strides = [1, 1]} : vector<1x48xf32> to vector<1x16xf32>
    %736 = arith.addf %734, %735 : vector<1x16xf32>
    %737 = arith.negf %736 : vector<1x16xf32>
    %738 = math.exp %737 : vector<1x16xf32>
    %cst_181 = arith.constant 1.000000e+00 : f32
    %739 = vector.broadcast %cst_181 : f32 to vector<1x16xf32>
    %740 = arith.addf %739, %738 : vector<1x16xf32>
    %741 = arith.divf %739, %740 : vector<1x16xf32>
    %742 = vector.extract_strided_slice %578 {offsets = [0, 16], sizes = [1, 16], strides = [1, 1]} : vector<1x48xf32> to vector<1x16xf32>
    %743 = vector.extract_strided_slice %733 {offsets = [0, 16], sizes = [1, 16], strides = [1, 1]} : vector<1x48xf32> to vector<1x16xf32>
    %744 = arith.addf %742, %743 : vector<1x16xf32>
    %745 = arith.negf %744 : vector<1x16xf32>
    %746 = math.exp %745 : vector<1x16xf32>
    %cst_182 = arith.constant 1.000000e+00 : f32
    %747 = vector.broadcast %cst_182 : f32 to vector<1x16xf32>
    %748 = arith.addf %747, %746 : vector<1x16xf32>
    %749 = arith.divf %747, %748 : vector<1x16xf32>
    %750 = vector.extract_strided_slice %578 {offsets = [0, 32], sizes = [1, 16], strides = [1, 1]} : vector<1x48xf32> to vector<1x16xf32>
    %751 = vector.extract_strided_slice %733 {offsets = [0, 32], sizes = [1, 16], strides = [1, 1]} : vector<1x48xf32> to vector<1x16xf32>
    %752 = arith.mulf %741, %751 : vector<1x16xf32>
    %753 = arith.addf %750, %752 : vector<1x16xf32>
    %754 = math.tanh %753 : vector<1x16xf32>
    %cst_183 = arith.constant 1.000000e+00 : f32
    %755 = vector.broadcast %cst_183 : f32 to vector<1x16xf32>
    %756 = arith.subf %755, %749 : vector<1x16xf32>
    %757 = arith.mulf %756, %754 : vector<1x16xf32>
    %758 = arith.mulf %749, %729 : vector<1x16xf32>
    %759 = arith.addf %757, %758 : vector<1x16xf32>
    %760 = arith.index_cast %c5_i32_179 : i32 to index
    %c0_184 = arith.constant 0 : index
    %761 = vector.load %arg33[%760, %c0_184] : memref<16x16xf32, #tpu.memory_space<vmem>>, vector<1x16xf32>
    tpu.vector_store %arg33[%760, %c0_184], %759 {strides = array<i32>} : memref<16x16xf32, #tpu.memory_space<vmem>>, vector<1x16xf32>,
    %c6_i32_185 = arith.constant 6 : i32
    %cst_186 = arith.constant dense<0.000000e+00> : vector<1x48xf32>
    %762 = tpu.matmul %759, %579, %cst_186 {dimension_numbers = #tpu.dot_dimension_numbers<[1], [0], [0], [1], [0, 0, 1, 1], [], []>} : vector<1x16xf32>, vector<16x48xf32>, vector<1x48xf32> -> vector<1x48xf32>
    %763 = arith.addf %762, %580 : vector<1x48xf32>
    %764 = vector.extract_strided_slice %578 {offsets = [0, 0], sizes = [1, 16], strides = [1, 1]} : vector<1x48xf32> to vector<1x16xf32>
    %765 = vector.extract_strided_slice %763 {offsets = [0, 0], sizes = [1, 16], strides = [1, 1]} : vector<1x48xf32> to vector<1x16xf32>
    %766 = arith.addf %764, %765 : vector<1x16xf32>
    %767 = arith.negf %766 : vector<1x16xf32>
    %768 = math.exp %767 : vector<1x16xf32>
    %cst_187 = arith.constant 1.000000e+00 : f32
    %769 = vector.broadcast %cst_187 : f32 to vector<1x16xf32>
    %770 = arith.addf %769, %768 : vector<1x16xf32>
    %771 = arith.divf %769, %770 : vector<1x16xf32>
    %772 = vector.extract_strided_slice %578 {offsets = [0, 16], sizes = [1, 16], strides = [1, 1]} : vector<1x48xf32> to vector<1x16xf32>
    %773 = vector.extract_strided_slice %763 {offsets = [0, 16], sizes = [1, 16], strides = [1, 1]} : vector<1x48xf32> to vector<1x16xf32>
    %774 = arith.addf %772, %773 : vector<1x16xf32>
    %775 = arith.negf %774 : vector<1x16xf32>
    %776 = math.exp %775 : vector<1x16xf32>
    %cst_188 = arith.constant 1.000000e+00 : f32
    %777 = vector.broadcast %cst_188 : f32 to vector<1x16xf32>
    %778 = arith.addf %777, %776 : vector<1x16xf32>
    %779 = arith.divf %777, %778 : vector<1x16xf32>
    %780 = vector.extract_strided_slice %578 {offsets = [0, 32], sizes = [1, 16], strides = [1, 1]} : vector<1x48xf32> to vector<1x16xf32>
    %781 = vector.extract_strided_slice %763 {offsets = [0, 32], sizes = [1, 16], strides = [1, 1]} : vector<1x48xf32> to vector<1x16xf32>
    %782 = arith.mulf %771, %781 : vector<1x16xf32>
    %783 = arith.addf %780, %782 : vector<1x16xf32>
    %784 = math.tanh %783 : vector<1x16xf32>
    %cst_189 = arith.constant 1.000000e+00 : f32
    %785 = vector.broadcast %cst_189 : f32 to vector<1x16xf32>
    %786 = arith.subf %785, %779 : vector<1x16xf32>
    %787 = arith.mulf %786, %784 : vector<1x16xf32>
    %788 = arith.mulf %779, %759 : vector<1x16xf32>
    %789 = arith.addf %787, %788 : vector<1x16xf32>
    %790 = arith.index_cast %c6_i32_185 : i32 to index
    %c0_190 = arith.constant 0 : index
    %791 = vector.load %arg33[%790, %c0_190] : memref<16x16xf32, #tpu.memory_space<vmem>>, vector<1x16xf32>
    tpu.vector_store %arg33[%790, %c0_190], %789 {strides = array<i32>} : memref<16x16xf32, #tpu.memory_space<vmem>>, vector<1x16xf32>,
    %c7_i32_191 = arith.constant 7 : i32
    %cst_192 = arith.constant dense<0.000000e+00> : vector<1x48xf32>
    %792 = tpu.matmul %789, %579, %cst_192 {dimension_numbers = #tpu.dot_dimension_numbers<[1], [0], [0], [1], [0, 0, 1, 1], [], []>} : vector<1x16xf32>, vector<16x48xf32>, vector<1x48xf32> -> vector<1x48xf32>
    %793 = arith.addf %792, %580 : vector<1x48xf32>
    %794 = vector.extract_strided_slice %578 {offsets = [0, 0], sizes = [1, 16], strides = [1, 1]} : vector<1x48xf32> to vector<1x16xf32>
    %795 = vector.extract_strided_slice %793 {offsets = [0, 0], sizes = [1, 16], strides = [1, 1]} : vector<1x48xf32> to vector<1x16xf32>
    %796 = arith.addf %794, %795 : vector<1x16xf32>
    %797 = arith.negf %796 : vector<1x16xf32>
    %798 = math.exp %797 : vector<1x16xf32>
    %cst_193 = arith.constant 1.000000e+00 : f32
    %799 = vector.broadcast %cst_193 : f32 to vector<1x16xf32>
    %800 = arith.addf %799, %798 : vector<1x16xf32>
    %801 = arith.divf %799, %800 : vector<1x16xf32>
    %802 = vector.extract_strided_slice %578 {offsets = [0, 16], sizes = [1, 16], strides = [1, 1]} : vector<1x48xf32> to vector<1x16xf32>
    %803 = vector.extract_strided_slice %793 {offsets = [0, 16], sizes = [1, 16], strides = [1, 1]} : vector<1x48xf32> to vector<1x16xf32>
    %804 = arith.addf %802, %803 : vector<1x16xf32>
    %805 = arith.negf %804 : vector<1x16xf32>
    %806 = math.exp %805 : vector<1x16xf32>
    %cst_194 = arith.constant 1.000000e+00 : f32
    %807 = vector.broadcast %cst_194 : f32 to vector<1x16xf32>
    %808 = arith.addf %807, %806 : vector<1x16xf32>
    %809 = arith.divf %807, %808 : vector<1x16xf32>
    %810 = vector.extract_strided_slice %578 {offsets = [0, 32], sizes = [1, 16], strides = [1, 1]} : vector<1x48xf32> to vector<1x16xf32>
    %811 = vector.extract_strided_slice %793 {offsets = [0, 32], sizes = [1, 16], strides = [1, 1]} : vector<1x48xf32> to vector<1x16xf32>
    %812 = arith.mulf %801, %811 : vector<1x16xf32>
    %813 = arith.addf %810, %812 : vector<1x16xf32>
    %814 = math.tanh %813 : vector<1x16xf32>
    %cst_195 = arith.constant 1.000000e+00 : f32
    %815 = vector.broadcast %cst_195 : f32 to vector<1x16xf32>
    %816 = arith.subf %815, %809 : vector<1x16xf32>
    %817 = arith.mulf %816, %814 : vector<1x16xf32>
    %818 = arith.mulf %809, %789 : vector<1x16xf32>
    %819 = arith.addf %817, %818 : vector<1x16xf32>
    %820 = arith.index_cast %c7_i32_191 : i32 to index
    %c0_196 = arith.constant 0 : index
    %821 = vector.load %arg33[%820, %c0_196] : memref<16x16xf32, #tpu.memory_space<vmem>>, vector<1x16xf32>
    tpu.vector_store %arg33[%820, %c0_196], %819 {strides = array<i32>} : memref<16x16xf32, #tpu.memory_space<vmem>>, vector<1x16xf32>,
    %c8_i32_197 = arith.constant 8 : i32
    %cst_198 = arith.constant dense<0.000000e+00> : vector<1x48xf32>
    %822 = tpu.matmul %819, %579, %cst_198 {dimension_numbers = #tpu.dot_dimension_numbers<[1], [0], [0], [1], [0, 0, 1, 1], [], []>} : vector<1x16xf32>, vector<16x48xf32>, vector<1x48xf32> -> vector<1x48xf32>
    %823 = arith.addf %822, %580 : vector<1x48xf32>
    %824 = vector.extract_strided_slice %578 {offsets = [0, 0], sizes = [1, 16], strides = [1, 1]} : vector<1x48xf32> to vector<1x16xf32>
    %825 = vector.extract_strided_slice %823 {offsets = [0, 0], sizes = [1, 16], strides = [1, 1]} : vector<1x48xf32> to vector<1x16xf32>
    %826 = arith.addf %824, %825 : vector<1x16xf32>
    %827 = arith.negf %826 : vector<1x16xf32>
    %828 = math.exp %827 : vector<1x16xf32>
    %cst_199 = arith.constant 1.000000e+00 : f32
    %829 = vector.broadcast %cst_199 : f32 to vector<1x16xf32>
    %830 = arith.addf %829, %828 : vector<1x16xf32>
    %831 = arith.divf %829, %830 : vector<1x16xf32>
    %832 = vector.extract_strided_slice %578 {offsets = [0, 16], sizes = [1, 16], strides = [1, 1]} : vector<1x48xf32> to vector<1x16xf32>
    %833 = vector.extract_strided_slice %823 {offsets = [0, 16], sizes = [1, 16], strides = [1, 1]} : vector<1x48xf32> to vector<1x16xf32>
    %834 = arith.addf %832, %833 : vector<1x16xf32>
    %835 = arith.negf %834 : vector<1x16xf32>
    %836 = math.exp %835 : vector<1x16xf32>
    %cst_200 = arith.constant 1.000000e+00 : f32
    %837 = vector.broadcast %cst_200 : f32 to vector<1x16xf32>
    %838 = arith.addf %837, %836 : vector<1x16xf32>
    %839 = arith.divf %837, %838 : vector<1x16xf32>
    %840 = vector.extract_strided_slice %578 {offsets = [0, 32], sizes = [1, 16], strides = [1, 1]} : vector<1x48xf32> to vector<1x16xf32>
    %841 = vector.extract_strided_slice %823 {offsets = [0, 32], sizes = [1, 16], strides = [1, 1]} : vector<1x48xf32> to vector<1x16xf32>
    %842 = arith.mulf %831, %841 : vector<1x16xf32>
    %843 = arith.addf %840, %842 : vector<1x16xf32>
    %844 = math.tanh %843 : vector<1x16xf32>
    %cst_201 = arith.constant 1.000000e+00 : f32
    %845 = vector.broadcast %cst_201 : f32 to vector<1x16xf32>
    %846 = arith.subf %845, %839 : vector<1x16xf32>
    %847 = arith.mulf %846, %844 : vector<1x16xf32>
    %848 = arith.mulf %839, %819 : vector<1x16xf32>
    %849 = arith.addf %847, %848 : vector<1x16xf32>
    %850 = arith.index_cast %c8_i32_197 : i32 to index
    %c0_202 = arith.constant 0 : index
    %851 = vector.load %arg33[%850, %c0_202] : memref<16x16xf32, #tpu.memory_space<vmem>>, vector<1x16xf32>
    tpu.vector_store %arg33[%850, %c0_202], %849 {strides = array<i32>} : memref<16x16xf32, #tpu.memory_space<vmem>>, vector<1x16xf32>,
    %c9_i32_203 = arith.constant 9 : i32
    %cst_204 = arith.constant dense<0.000000e+00> : vector<1x48xf32>
    %852 = tpu.matmul %849, %579, %cst_204 {dimension_numbers = #tpu.dot_dimension_numbers<[1], [0], [0], [1], [0, 0, 1, 1], [], []>} : vector<1x16xf32>, vector<16x48xf32>, vector<1x48xf32> -> vector<1x48xf32>
    %853 = arith.addf %852, %580 : vector<1x48xf32>
    %854 = vector.extract_strided_slice %578 {offsets = [0, 0], sizes = [1, 16], strides = [1, 1]} : vector<1x48xf32> to vector<1x16xf32>
    %855 = vector.extract_strided_slice %853 {offsets = [0, 0], sizes = [1, 16], strides = [1, 1]} : vector<1x48xf32> to vector<1x16xf32>
    %856 = arith.addf %854, %855 : vector<1x16xf32>
    %857 = arith.negf %856 : vector<1x16xf32>
    %858 = math.exp %857 : vector<1x16xf32>
    %cst_205 = arith.constant 1.000000e+00 : f32
    %859 = vector.broadcast %cst_205 : f32 to vector<1x16xf32>
    %860 = arith.addf %859, %858 : vector<1x16xf32>
    %861 = arith.divf %859, %860 : vector<1x16xf32>
    %862 = vector.extract_strided_slice %578 {offsets = [0, 16], sizes = [1, 16], strides = [1, 1]} : vector<1x48xf32> to vector<1x16xf32>
    %863 = vector.extract_strided_slice %853 {offsets = [0, 16], sizes = [1, 16], strides = [1, 1]} : vector<1x48xf32> to vector<1x16xf32>
    %864 = arith.addf %862, %863 : vector<1x16xf32>
    %865 = arith.negf %864 : vector<1x16xf32>
    %866 = math.exp %865 : vector<1x16xf32>
    %cst_206 = arith.constant 1.000000e+00 : f32
    %867 = vector.broadcast %cst_206 : f32 to vector<1x16xf32>
    %868 = arith.addf %867, %866 : vector<1x16xf32>
    %869 = arith.divf %867, %868 : vector<1x16xf32>
    %870 = vector.extract_strided_slice %578 {offsets = [0, 32], sizes = [1, 16], strides = [1, 1]} : vector<1x48xf32> to vector<1x16xf32>
    %871 = vector.extract_strided_slice %853 {offsets = [0, 32], sizes = [1, 16], strides = [1, 1]} : vector<1x48xf32> to vector<1x16xf32>
    %872 = arith.mulf %861, %871 : vector<1x16xf32>
    %873 = arith.addf %870, %872 : vector<1x16xf32>
    %874 = math.tanh %873 : vector<1x16xf32>
    %cst_207 = arith.constant 1.000000e+00 : f32
    %875 = vector.broadcast %cst_207 : f32 to vector<1x16xf32>
    %876 = arith.subf %875, %869 : vector<1x16xf32>
    %877 = arith.mulf %876, %874 : vector<1x16xf32>
    %878 = arith.mulf %869, %849 : vector<1x16xf32>
    %879 = arith.addf %877, %878 : vector<1x16xf32>
    %880 = arith.index_cast %c9_i32_203 : i32 to index
    %c0_208 = arith.constant 0 : index
    %881 = vector.load %arg33[%880, %c0_208] : memref<16x16xf32, #tpu.memory_space<vmem>>, vector<1x16xf32>
    tpu.vector_store %arg33[%880, %c0_208], %879 {strides = array<i32>} : memref<16x16xf32, #tpu.memory_space<vmem>>, vector<1x16xf32>,
    %c10_i32_209 = arith.constant 10 : i32
    %cst_210 = arith.constant dense<0.000000e+00> : vector<1x48xf32>
    %882 = tpu.matmul %879, %579, %cst_210 {dimension_numbers = #tpu.dot_dimension_numbers<[1], [0], [0], [1], [0, 0, 1, 1], [], []>} : vector<1x16xf32>, vector<16x48xf32>, vector<1x48xf32> -> vector<1x48xf32>
    %883 = arith.addf %882, %580 : vector<1x48xf32>
    %884 = vector.extract_strided_slice %578 {offsets = [0, 0], sizes = [1, 16], strides = [1, 1]} : vector<1x48xf32> to vector<1x16xf32>
    %885 = vector.extract_strided_slice %883 {offsets = [0, 0], sizes = [1, 16], strides = [1, 1]} : vector<1x48xf32> to vector<1x16xf32>
    %886 = arith.addf %884, %885 : vector<1x16xf32>
    %887 = arith.negf %886 : vector<1x16xf32>
    %888 = math.exp %887 : vector<1x16xf32>
    %cst_211 = arith.constant 1.000000e+00 : f32
    %889 = vector.broadcast %cst_211 : f32 to vector<1x16xf32>
    %890 = arith.addf %889, %888 : vector<1x16xf32>
    %891 = arith.divf %889, %890 : vector<1x16xf32>
    %892 = vector.extract_strided_slice %578 {offsets = [0, 16], sizes = [1, 16], strides = [1, 1]} : vector<1x48xf32> to vector<1x16xf32>
    %893 = vector.extract_strided_slice %883 {offsets = [0, 16], sizes = [1, 16], strides = [1, 1]} : vector<1x48xf32> to vector<1x16xf32>
    %894 = arith.addf %892, %893 : vector<1x16xf32>
    %895 = arith.negf %894 : vector<1x16xf32>
    %896 = math.exp %895 : vector<1x16xf32>
    %cst_212 = arith.constant 1.000000e+00 : f32
    %897 = vector.broadcast %cst_212 : f32 to vector<1x16xf32>
    %898 = arith.addf %897, %896 : vector<1x16xf32>
    %899 = arith.divf %897, %898 : vector<1x16xf32>
    %900 = vector.extract_strided_slice %578 {offsets = [0, 32], sizes = [1, 16], strides = [1, 1]} : vector<1x48xf32> to vector<1x16xf32>
    %901 = vector.extract_strided_slice %883 {offsets = [0, 32], sizes = [1, 16], strides = [1, 1]} : vector<1x48xf32> to vector<1x16xf32>
    %902 = arith.mulf %891, %901 : vector<1x16xf32>
    %903 = arith.addf %900, %902 : vector<1x16xf32>
    %904 = math.tanh %903 : vector<1x16xf32>
    %cst_213 = arith.constant 1.000000e+00 : f32
    %905 = vector.broadcast %cst_213 : f32 to vector<1x16xf32>
    %906 = arith.subf %905, %899 : vector<1x16xf32>
    %907 = arith.mulf %906, %904 : vector<1x16xf32>
    %908 = arith.mulf %899, %879 : vector<1x16xf32>
    %909 = arith.addf %907, %908 : vector<1x16xf32>
    %910 = arith.index_cast %c10_i32_209 : i32 to index
    %c0_214 = arith.constant 0 : index
    %911 = vector.load %arg33[%910, %c0_214] : memref<16x16xf32, #tpu.memory_space<vmem>>, vector<1x16xf32>
    tpu.vector_store %arg33[%910, %c0_214], %909 {strides = array<i32>} : memref<16x16xf32, #tpu.memory_space<vmem>>, vector<1x16xf32>,
    %c11_i32_215 = arith.constant 11 : i32
    %cst_216 = arith.constant dense<0.000000e+00> : vector<1x48xf32>
    %912 = tpu.matmul %909, %579, %cst_216 {dimension_numbers = #tpu.dot_dimension_numbers<[1], [0], [0], [1], [0, 0, 1, 1], [], []>} : vector<1x16xf32>, vector<16x48xf32>, vector<1x48xf32> -> vector<1x48xf32>
    %913 = arith.addf %912, %580 : vector<1x48xf32>
    %914 = vector.extract_strided_slice %578 {offsets = [0, 0], sizes = [1, 16], strides = [1, 1]} : vector<1x48xf32> to vector<1x16xf32>
    %915 = vector.extract_strided_slice %913 {offsets = [0, 0], sizes = [1, 16], strides = [1, 1]} : vector<1x48xf32> to vector<1x16xf32>
    %916 = arith.addf %914, %915 : vector<1x16xf32>
    %917 = arith.negf %916 : vector<1x16xf32>
    %918 = math.exp %917 : vector<1x16xf32>
    %cst_217 = arith.constant 1.000000e+00 : f32
    %919 = vector.broadcast %cst_217 : f32 to vector<1x16xf32>
    %920 = arith.addf %919, %918 : vector<1x16xf32>
    %921 = arith.divf %919, %920 : vector<1x16xf32>
    %922 = vector.extract_strided_slice %578 {offsets = [0, 16], sizes = [1, 16], strides = [1, 1]} : vector<1x48xf32> to vector<1x16xf32>
    %923 = vector.extract_strided_slice %913 {offsets = [0, 16], sizes = [1, 16], strides = [1, 1]} : vector<1x48xf32> to vector<1x16xf32>
    %924 = arith.addf %922, %923 : vector<1x16xf32>
    %925 = arith.negf %924 : vector<1x16xf32>
    %926 = math.exp %925 : vector<1x16xf32>
    %cst_218 = arith.constant 1.000000e+00 : f32
    %927 = vector.broadcast %cst_218 : f32 to vector<1x16xf32>
    %928 = arith.addf %927, %926 : vector<1x16xf32>
    %929 = arith.divf %927, %928 : vector<1x16xf32>
    %930 = vector.extract_strided_slice %578 {offsets = [0, 32], sizes = [1, 16], strides = [1, 1]} : vector<1x48xf32> to vector<1x16xf32>
    %931 = vector.extract_strided_slice %913 {offsets = [0, 32], sizes = [1, 16], strides = [1, 1]} : vector<1x48xf32> to vector<1x16xf32>
    %932 = arith.mulf %921, %931 : vector<1x16xf32>
    %933 = arith.addf %930, %932 : vector<1x16xf32>
    %934 = math.tanh %933 : vector<1x16xf32>
    %cst_219 = arith.constant 1.000000e+00 : f32
    %935 = vector.broadcast %cst_219 : f32 to vector<1x16xf32>
    %936 = arith.subf %935, %929 : vector<1x16xf32>
    %937 = arith.mulf %936, %934 : vector<1x16xf32>
    %938 = arith.mulf %929, %909 : vector<1x16xf32>
    %939 = arith.addf %937, %938 : vector<1x16xf32>
    %940 = arith.index_cast %c11_i32_215 : i32 to index
    %c0_220 = arith.constant 0 : index
    %941 = vector.load %arg33[%940, %c0_220] : memref<16x16xf32, #tpu.memory_space<vmem>>, vector<1x16xf32>
    tpu.vector_store %arg33[%940, %c0_220], %939 {strides = array<i32>} : memref<16x16xf32, #tpu.memory_space<vmem>>, vector<1x16xf32>,
    %c12_i32_221 = arith.constant 12 : i32
    %cst_222 = arith.constant dense<0.000000e+00> : vector<1x48xf32>
    %942 = tpu.matmul %939, %579, %cst_222 {dimension_numbers = #tpu.dot_dimension_numbers<[1], [0], [0], [1], [0, 0, 1, 1], [], []>} : vector<1x16xf32>, vector<16x48xf32>, vector<1x48xf32> -> vector<1x48xf32>
    %943 = arith.addf %942, %580 : vector<1x48xf32>
    %944 = vector.extract_strided_slice %578 {offsets = [0, 0], sizes = [1, 16], strides = [1, 1]} : vector<1x48xf32> to vector<1x16xf32>
    %945 = vector.extract_strided_slice %943 {offsets = [0, 0], sizes = [1, 16], strides = [1, 1]} : vector<1x48xf32> to vector<1x16xf32>
    %946 = arith.addf %944, %945 : vector<1x16xf32>
    %947 = arith.negf %946 : vector<1x16xf32>
    %948 = math.exp %947 : vector<1x16xf32>
    %cst_223 = arith.constant 1.000000e+00 : f32
    %949 = vector.broadcast %cst_223 : f32 to vector<1x16xf32>
    %950 = arith.addf %949, %948 : vector<1x16xf32>
    %951 = arith.divf %949, %950 : vector<1x16xf32>
    %952 = vector.extract_strided_slice %578 {offsets = [0, 16], sizes = [1, 16], strides = [1, 1]} : vector<1x48xf32> to vector<1x16xf32>
    %953 = vector.extract_strided_slice %943 {offsets = [0, 16], sizes = [1, 16], strides = [1, 1]} : vector<1x48xf32> to vector<1x16xf32>
    %954 = arith.addf %952, %953 : vector<1x16xf32>
    %955 = arith.negf %954 : vector<1x16xf32>
    %956 = math.exp %955 : vector<1x16xf32>
    %cst_224 = arith.constant 1.000000e+00 : f32
    %957 = vector.broadcast %cst_224 : f32 to vector<1x16xf32>
    %958 = arith.addf %957, %956 : vector<1x16xf32>
    %959 = arith.divf %957, %958 : vector<1x16xf32>
    %960 = vector.extract_strided_slice %578 {offsets = [0, 32], sizes = [1, 16], strides = [1, 1]} : vector<1x48xf32> to vector<1x16xf32>
    %961 = vector.extract_strided_slice %943 {offsets = [0, 32], sizes = [1, 16], strides = [1, 1]} : vector<1x48xf32> to vector<1x16xf32>
    %962 = arith.mulf %951, %961 : vector<1x16xf32>
    %963 = arith.addf %960, %962 : vector<1x16xf32>
    %964 = math.tanh %963 : vector<1x16xf32>
    %cst_225 = arith.constant 1.000000e+00 : f32
    %965 = vector.broadcast %cst_225 : f32 to vector<1x16xf32>
    %966 = arith.subf %965, %959 : vector<1x16xf32>
    %967 = arith.mulf %966, %964 : vector<1x16xf32>
    %968 = arith.mulf %959, %939 : vector<1x16xf32>
    %969 = arith.addf %967, %968 : vector<1x16xf32>
    %970 = arith.index_cast %c12_i32_221 : i32 to index
    %c0_226 = arith.constant 0 : index
    %971 = vector.load %arg33[%970, %c0_226] : memref<16x16xf32, #tpu.memory_space<vmem>>, vector<1x16xf32>
    tpu.vector_store %arg33[%970, %c0_226], %969 {strides = array<i32>} : memref<16x16xf32, #tpu.memory_space<vmem>>, vector<1x16xf32>,
    %c13_i32_227 = arith.constant 13 : i32
    %cst_228 = arith.constant dense<0.000000e+00> : vector<1x48xf32>
    %972 = tpu.matmul %969, %579, %cst_228 {dimension_numbers = #tpu.dot_dimension_numbers<[1], [0], [0], [1], [0, 0, 1, 1], [], []>} : vector<1x16xf32>, vector<16x48xf32>, vector<1x48xf32> -> vector<1x48xf32>
    %973 = arith.addf %972, %580 : vector<1x48xf32>
    %974 = vector.extract_strided_slice %578 {offsets = [0, 0], sizes = [1, 16], strides = [1, 1]} : vector<1x48xf32> to vector<1x16xf32>
    %975 = vector.extract_strided_slice %973 {offsets = [0, 0], sizes = [1, 16], strides = [1, 1]} : vector<1x48xf32> to vector<1x16xf32>
    %976 = arith.addf %974, %975 : vector<1x16xf32>
    %977 = arith.negf %976 : vector<1x16xf32>
    %978 = math.exp %977 : vector<1x16xf32>
    %cst_229 = arith.constant 1.000000e+00 : f32
    %979 = vector.broadcast %cst_229 : f32 to vector<1x16xf32>
    %980 = arith.addf %979, %978 : vector<1x16xf32>
    %981 = arith.divf %979, %980 : vector<1x16xf32>
    %982 = vector.extract_strided_slice %578 {offsets = [0, 16], sizes = [1, 16], strides = [1, 1]} : vector<1x48xf32> to vector<1x16xf32>
    %983 = vector.extract_strided_slice %973 {offsets = [0, 16], sizes = [1, 16], strides = [1, 1]} : vector<1x48xf32> to vector<1x16xf32>
    %984 = arith.addf %982, %983 : vector<1x16xf32>
    %985 = arith.negf %984 : vector<1x16xf32>
    %986 = math.exp %985 : vector<1x16xf32>
    %cst_230 = arith.constant 1.000000e+00 : f32
    %987 = vector.broadcast %cst_230 : f32 to vector<1x16xf32>
    %988 = arith.addf %987, %986 : vector<1x16xf32>
    %989 = arith.divf %987, %988 : vector<1x16xf32>
    %990 = vector.extract_strided_slice %578 {offsets = [0, 32], sizes = [1, 16], strides = [1, 1]} : vector<1x48xf32> to vector<1x16xf32>
    %991 = vector.extract_strided_slice %973 {offsets = [0, 32], sizes = [1, 16], strides = [1, 1]} : vector<1x48xf32> to vector<1x16xf32>
    %992 = arith.mulf %981, %991 : vector<1x16xf32>
    %993 = arith.addf %990, %992 : vector<1x16xf32>
    %994 = math.tanh %993 : vector<1x16xf32>
    %cst_231 = arith.constant 1.000000e+00 : f32
    %995 = vector.broadcast %cst_231 : f32 to vector<1x16xf32>
    %996 = arith.subf %995, %989 : vector<1x16xf32>
    %997 = arith.mulf %996, %994 : vector<1x16xf32>
    %998 = arith.mulf %989, %969 : vector<1x16xf32>
    %999 = arith.addf %997, %998 : vector<1x16xf32>
    %1000 = arith.index_cast %c13_i32_227 : i32 to index
    %c0_232 = arith.constant 0 : index
    %1001 = vector.load %arg33[%1000, %c0_232] : memref<16x16xf32, #tpu.memory_space<vmem>>, vector<1x16xf32>
    tpu.vector_store %arg33[%1000, %c0_232], %999 {strides = array<i32>} : memref<16x16xf32, #tpu.memory_space<vmem>>, vector<1x16xf32>,
    %c14_i32_233 = arith.constant 14 : i32
    %cst_234 = arith.constant dense<0.000000e+00> : vector<1x48xf32>
    %1002 = tpu.matmul %999, %579, %cst_234 {dimension_numbers = #tpu.dot_dimension_numbers<[1], [0], [0], [1], [0, 0, 1, 1], [], []>} : vector<1x16xf32>, vector<16x48xf32>, vector<1x48xf32> -> vector<1x48xf32>
    %1003 = arith.addf %1002, %580 : vector<1x48xf32>
    %1004 = vector.extract_strided_slice %578 {offsets = [0, 0], sizes = [1, 16], strides = [1, 1]} : vector<1x48xf32> to vector<1x16xf32>
    %1005 = vector.extract_strided_slice %1003 {offsets = [0, 0], sizes = [1, 16], strides = [1, 1]} : vector<1x48xf32> to vector<1x16xf32>
    %1006 = arith.addf %1004, %1005 : vector<1x16xf32>
    %1007 = arith.negf %1006 : vector<1x16xf32>
    %1008 = math.exp %1007 : vector<1x16xf32>
    %cst_235 = arith.constant 1.000000e+00 : f32
    %1009 = vector.broadcast %cst_235 : f32 to vector<1x16xf32>
    %1010 = arith.addf %1009, %1008 : vector<1x16xf32>
    %1011 = arith.divf %1009, %1010 : vector<1x16xf32>
    %1012 = vector.extract_strided_slice %578 {offsets = [0, 16], sizes = [1, 16], strides = [1, 1]} : vector<1x48xf32> to vector<1x16xf32>
    %1013 = vector.extract_strided_slice %1003 {offsets = [0, 16], sizes = [1, 16], strides = [1, 1]} : vector<1x48xf32> to vector<1x16xf32>
    %1014 = arith.addf %1012, %1013 : vector<1x16xf32>
    %1015 = arith.negf %1014 : vector<1x16xf32>
    %1016 = math.exp %1015 : vector<1x16xf32>
    %cst_236 = arith.constant 1.000000e+00 : f32
    %1017 = vector.broadcast %cst_236 : f32 to vector<1x16xf32>
    %1018 = arith.addf %1017, %1016 : vector<1x16xf32>
    %1019 = arith.divf %1017, %1018 : vector<1x16xf32>
    %1020 = vector.extract_strided_slice %578 {offsets = [0, 32], sizes = [1, 16], strides = [1, 1]} : vector<1x48xf32> to vector<1x16xf32>
    %1021 = vector.extract_strided_slice %1003 {offsets = [0, 32], sizes = [1, 16], strides = [1, 1]} : vector<1x48xf32> to vector<1x16xf32>
    %1022 = arith.mulf %1011, %1021 : vector<1x16xf32>
    %1023 = arith.addf %1020, %1022 : vector<1x16xf32>
    %1024 = math.tanh %1023 : vector<1x16xf32>
    %cst_237 = arith.constant 1.000000e+00 : f32
    %1025 = vector.broadcast %cst_237 : f32 to vector<1x16xf32>
    %1026 = arith.subf %1025, %1019 : vector<1x16xf32>
    %1027 = arith.mulf %1026, %1024 : vector<1x16xf32>
    %1028 = arith.mulf %1019, %999 : vector<1x16xf32>
    %1029 = arith.addf %1027, %1028 : vector<1x16xf32>
    %1030 = arith.index_cast %c14_i32_233 : i32 to index
    %c0_238 = arith.constant 0 : index
    %1031 = vector.load %arg33[%1030, %c0_238] : memref<16x16xf32, #tpu.memory_space<vmem>>, vector<1x16xf32>
    tpu.vector_store %arg33[%1030, %c0_238], %1029 {strides = array<i32>} : memref<16x16xf32, #tpu.memory_space<vmem>>, vector<1x16xf32>,
    %c15_i32_239 = arith.constant 15 : i32
    %cst_240 = arith.constant dense<0.000000e+00> : vector<1x48xf32>
    %1032 = tpu.matmul %1029, %579, %cst_240 {dimension_numbers = #tpu.dot_dimension_numbers<[1], [0], [0], [1], [0, 0, 1, 1], [], []>} : vector<1x16xf32>, vector<16x48xf32>, vector<1x48xf32> -> vector<1x48xf32>
    %1033 = arith.addf %1032, %580 : vector<1x48xf32>
    %1034 = vector.extract_strided_slice %578 {offsets = [0, 0], sizes = [1, 16], strides = [1, 1]} : vector<1x48xf32> to vector<1x16xf32>
    %1035 = vector.extract_strided_slice %1033 {offsets = [0, 0], sizes = [1, 16], strides = [1, 1]} : vector<1x48xf32> to vector<1x16xf32>
    %1036 = arith.addf %1034, %1035 : vector<1x16xf32>
    %1037 = arith.negf %1036 : vector<1x16xf32>
    %1038 = math.exp %1037 : vector<1x16xf32>
    %cst_241 = arith.constant 1.000000e+00 : f32
    %1039 = vector.broadcast %cst_241 : f32 to vector<1x16xf32>
    %1040 = arith.addf %1039, %1038 : vector<1x16xf32>
    %1041 = arith.divf %1039, %1040 : vector<1x16xf32>
    %1042 = vector.extract_strided_slice %578 {offsets = [0, 16], sizes = [1, 16], strides = [1, 1]} : vector<1x48xf32> to vector<1x16xf32>
    %1043 = vector.extract_strided_slice %1033 {offsets = [0, 16], sizes = [1, 16], strides = [1, 1]} : vector<1x48xf32> to vector<1x16xf32>
    %1044 = arith.addf %1042, %1043 : vector<1x16xf32>
    %1045 = arith.negf %1044 : vector<1x16xf32>
    %1046 = math.exp %1045 : vector<1x16xf32>
    %cst_242 = arith.constant 1.000000e+00 : f32
    %1047 = vector.broadcast %cst_242 : f32 to vector<1x16xf32>
    %1048 = arith.addf %1047, %1046 : vector<1x16xf32>
    %1049 = arith.divf %1047, %1048 : vector<1x16xf32>
    %1050 = vector.extract_strided_slice %578 {offsets = [0, 32], sizes = [1, 16], strides = [1, 1]} : vector<1x48xf32> to vector<1x16xf32>
    %1051 = vector.extract_strided_slice %1033 {offsets = [0, 32], sizes = [1, 16], strides = [1, 1]} : vector<1x48xf32> to vector<1x16xf32>
    %1052 = arith.mulf %1041, %1051 : vector<1x16xf32>
    %1053 = arith.addf %1050, %1052 : vector<1x16xf32>
    %1054 = math.tanh %1053 : vector<1x16xf32>
    %cst_243 = arith.constant 1.000000e+00 : f32
    %1055 = vector.broadcast %cst_243 : f32 to vector<1x16xf32>
    %1056 = arith.subf %1055, %1049 : vector<1x16xf32>
    %1057 = arith.mulf %1056, %1054 : vector<1x16xf32>
    %1058 = arith.mulf %1049, %1029 : vector<1x16xf32>
    %1059 = arith.addf %1057, %1058 : vector<1x16xf32>
    %1060 = arith.index_cast %c15_i32_239 : i32 to index
    %c0_244 = arith.constant 0 : index
    %1061 = vector.load %arg33[%1060, %c0_244] : memref<16x16xf32, #tpu.memory_space<vmem>>, vector<1x16xf32>
    tpu.vector_store %arg33[%1060, %c0_244], %1059 {strides = array<i32>} : memref<16x16xf32, #tpu.memory_space<vmem>>, vector<1x16xf32>,
    %c16_i32_245 = arith.constant 16 : i32
    %c0_246 = arith.constant 0 : index
    %c0_247 = arith.constant 0 : index
    %1062 = vector.load %arg33[%c0_246, %c0_247] : memref<16x16xf32, #tpu.memory_space<vmem>>, vector<16x16xf32>
    %c0_248 = arith.constant 0 : index
    %c0_249 = arith.constant 0 : index
    %1063 = vector.load %arg22[%c0_248, %c0_249] : memref<16x8xf32, #tpu.memory_space<vmem>>, vector<16x8xf32>
    %cst_250 = arith.constant dense<0.000000e+00> : vector<16x8xf32>
    %1064 = tpu.matmul %1062, %1063, %cst_250 {dimension_numbers = #tpu.dot_dimension_numbers<[1], [0], [0], [1], [0, 0, 1, 1], [], []>} : vector<16x16xf32>, vector<16x8xf32>, vector<16x8xf32> -> vector<16x8xf32>
    %c0_251 = arith.constant 0 : index
    %c0_252 = arith.constant 0 : index
    %1065 = vector.load %arg23[%c0_251, %c0_252] : memref<1x8xf32, #tpu.memory_space<vmem>>, vector<1x8xf32>
    %1066 = vector.broadcast %1065 : vector<1x8xf32> to vector<16x8xf32>
    %1067 = arith.addf %1064, %1066 : vector<16x8xf32>
    %c0_253 = arith.constant 0 : index
    %c0_254 = arith.constant 0 : index
    %c0_255 = arith.constant 0 : index
    %1068 = vector.load %arg30[%c0_253, %c0_254, %c0_255] : memref<1x16x8xf32, #tpu.memory_space<vmem>>, vector<1x16x8xf32>
    %1069 = vector.shape_cast %1068 : vector<1x16x8xf32> to vector<16x8xf32>
    %1070 = vector.shape_cast %1067 : vector<16x8xf32> to vector<1x16x8xf32>
    tpu.vector_store %arg30[%c0_253, %c0_254, %c0_255], %1070 {strides = array<i32>} : memref<1x16x8xf32, #tpu.memory_space<vmem>>, vector<1x16x8xf32>,
    %c0_256 = arith.constant 0 : index
    %c0_257 = arith.constant 0 : index
    %1071 = vector.load %arg24[%c0_256, %c0_257] : memref<16x16xf32, #tpu.memory_space<vmem>>, vector<16x16xf32>
    %cst_258 = arith.constant dense<0.000000e+00> : vector<1x16xf32>
    %1072 = tpu.matmul %574, %1071, %cst_258 {dimension_numbers = #tpu.dot_dimension_numbers<[1], [0], [0], [1], [0, 0, 1, 1], [], []>} : vector<1x16xf32>, vector<16x16xf32>, vector<1x16xf32> -> vector<1x16xf32>
    %c0_259 = arith.constant 0 : index
    %c0_260 = arith.constant 0 : index
    %1073 = vector.load %arg25[%c0_259, %c0_260] : memref<1x16xf32, #tpu.memory_space<vmem>>, vector<1x16xf32>
    %1074 = arith.addf %1072, %1073 : vector<1x16xf32>
    %cst_261 = arith.constant 0.000000e+00 : f32
    %1075 = vector.broadcast %cst_261 : f32 to vector<1x16xf32>
    %1076 = arith.maximumf %1074, %1075 : vector<1x16xf32>
    %c0_262 = arith.constant 0 : index
    %c0_263 = arith.constant 0 : index
    %1077 = vector.load %arg26[%c0_262, %c0_263] : memref<16x16xf32, #tpu.memory_space<vmem>>, vector<16x16xf32>
    %cst_264 = arith.constant dense<0.000000e+00> : vector<1x16xf32>
    %1078 = tpu.matmul %1076, %1077, %cst_264 {dimension_numbers = #tpu.dot_dimension_numbers<[1], [0], [0], [1], [0, 0, 1, 1], [], []>} : vector<1x16xf32>, vector<16x16xf32>, vector<1x16xf32> -> vector<1x16xf32>
    %c0_265 = arith.constant 0 : index
    %c0_266 = arith.constant 0 : index
    %1079 = vector.load %arg27[%c0_265, %c0_266] : memref<1x16xf32, #tpu.memory_space<vmem>>, vector<1x16xf32>
    %1080 = arith.addf %1078, %1079 : vector<1x16xf32>
    %cst_267 = arith.constant 0.000000e+00 : f32
    %1081 = vector.broadcast %cst_267 : f32 to vector<1x16xf32>
    %1082 = arith.maximumf %1080, %1081 : vector<1x16xf32>
    %c0_268 = arith.constant 0 : index
    %c0_269 = arith.constant 0 : index
    %1083 = vector.load %arg28[%c0_268, %c0_269] : memref<16x8xf32, #tpu.memory_space<vmem>>, vector<16x8xf32>
    %cst_270 = arith.constant dense<0.000000e+00> : vector<1x8xf32>
    %1084 = tpu.matmul %1082, %1083, %cst_270 {dimension_numbers = #tpu.dot_dimension_numbers<[1], [0], [0], [1], [0, 0, 1, 1], [], []>} : vector<1x16xf32>, vector<16x8xf32>, vector<1x8xf32> -> vector<1x8xf32>
    %c0_271 = arith.constant 0 : index
    %c0_272 = arith.constant 0 : index
    %1085 = vector.load %arg29[%c0_271, %c0_272] : memref<1x8xf32, #tpu.memory_space<vmem>>, vector<1x8xf32>
    %1086 = arith.addf %1084, %1085 : vector<1x8xf32>
    %c0_273 = arith.constant 0 : index
    %c0_274 = arith.constant 0 : index
    %c0_275 = arith.constant 0 : index
    %1087 = vector.load %arg31[%c0_273, %c0_274, %c0_275] : memref<1x1x8xf32, #tpu.memory_space<vmem>>, vector<1x1x8xf32>
    %1088 = vector.shape_cast %1087 : vector<1x1x8xf32> to vector<1x8xf32>
    %1089 = vector.shape_cast %1086 : vector<1x8xf32> to vector<1x1x8xf32>
    tpu.vector_store %arg31[%c0_273, %c0_274, %c0_275], %1089 {strides = array<i32>} : memref<1x1x8xf32, #tpu.memory_space<vmem>>, vector<1x1x8xf32>,
    return
  }
  func.func @transform_0(%arg0: i32) -> (i32, i32, i32) {
    %c0_i32 = arith.constant 0 : i32
    %c0_i32_0 = arith.constant 0 : i32
    %c0_i32_1 = arith.constant 0 : i32
    return %arg0, %c0_i32, %c0_i32_0 : i32, i32, i32
  }
  func.func @transform_1(%arg0: i32) -> (i32, i32) {
    %c0_i32 = arith.constant 0 : i32
    %c0_i32_0 = arith.constant 0 : i32
    %c0_i32_1 = arith.constant 0 : i32
    return %c0_i32, %c0_i32_0 : i32, i32
  }
  func.func @transform_2(%arg0: i32) -> (i32, i32) {
    %c0_i32 = arith.constant 0 : i32
    %c0_i32_0 = arith.constant 0 : i32
    %c0_i32_1 = arith.constant 0 : i32
    return %c0_i32, %c0_i32_0 : i32, i32
  }
  func.func @transform_3(%arg0: i32) -> (i32, i32) {
    %c0_i32 = arith.constant 0 : i32
    %c0_i32_0 = arith.constant 0 : i32
    %c0_i32_1 = arith.constant 0 : i32
    return %c0_i32, %c0_i32_0 : i32, i32
  }
  func.func @transform_4(%arg0: i32) -> (i32, i32) {
    %c0_i32 = arith.constant 0 : i32
    %c0_i32_0 = arith.constant 0 : i32
    %c0_i32_1 = arith.constant 0 : i32
    return %c0_i32, %c0_i32_0 : i32, i32
  }
  func.func @transform_5(%arg0: i32) -> (i32, i32) {
    %c0_i32 = arith.constant 0 : i32
    %c0_i32_0 = arith.constant 0 : i32
    %c0_i32_1 = arith.constant 0 : i32
    return %c0_i32, %c0_i32_0 : i32, i32
  }
  func.func @transform_6(%arg0: i32) -> (i32, i32) {
    %c0_i32 = arith.constant 0 : i32
    %c0_i32_0 = arith.constant 0 : i32
    %c0_i32_1 = arith.constant 0 : i32
    return %c0_i32, %c0_i32_0 : i32, i32
  }
  func.func @transform_7(%arg0: i32) -> (i32, i32) {
    %c0_i32 = arith.constant 0 : i32
    %c0_i32_0 = arith.constant 0 : i32
    %c0_i32_1 = arith.constant 0 : i32
    return %c0_i32, %c0_i32_0 : i32, i32
  }
  func.func @transform_8(%arg0: i32) -> (i32, i32) {
    %c0_i32 = arith.constant 0 : i32
    %c0_i32_0 = arith.constant 0 : i32
    %c0_i32_1 = arith.constant 0 : i32
    return %c0_i32, %c0_i32_0 : i32, i32
  }
  func.func @transform_9(%arg0: i32) -> (i32, i32) {
    %c0_i32 = arith.constant 0 : i32
    %c0_i32_0 = arith.constant 0 : i32
    %c0_i32_1 = arith.constant 0 : i32
    return %c0_i32, %c0_i32_0 : i32, i32
  }
  func.func @transform_10(%arg0: i32) -> (i32, i32) {
    %c0_i32 = arith.constant 0 : i32
    %c0_i32_0 = arith.constant 0 : i32
    %c0_i32_1 = arith.constant 0 : i32
    return %c0_i32, %c0_i32_0 : i32, i32
  }
  func.func @transform_11(%arg0: i32) -> (i32, i32) {
    %c0_i32 = arith.constant 0 : i32
    %c0_i32_0 = arith.constant 0 : i32
    %c0_i32_1 = arith.constant 0 : i32
    return %c0_i32, %c0_i32_0 : i32, i32
  }
  func.func @transform_12(%arg0: i32) -> (i32, i32) {
    %c0_i32 = arith.constant 0 : i32
    %c0_i32_0 = arith.constant 0 : i32
    %c0_i32_1 = arith.constant 0 : i32
    return %c0_i32, %c0_i32_0 : i32, i32
  }
  func.func @transform_13(%arg0: i32) -> (i32, i32) {
    %c0_i32 = arith.constant 0 : i32
    %c0_i32_0 = arith.constant 0 : i32
    %c0_i32_1 = arith.constant 0 : i32
    return %c0_i32, %c0_i32_0 : i32, i32
  }
  func.func @transform_14(%arg0: i32) -> (i32, i32) {
    %c0_i32 = arith.constant 0 : i32
    %c0_i32_0 = arith.constant 0 : i32
    %c0_i32_1 = arith.constant 0 : i32
    return %c0_i32, %c0_i32_0 : i32, i32
  }
  func.func @transform_15(%arg0: i32) -> (i32, i32) {
    %c0_i32 = arith.constant 0 : i32
    %c0_i32_0 = arith.constant 0 : i32
    %c0_i32_1 = arith.constant 0 : i32
    return %c0_i32, %c0_i32_0 : i32, i32
  }
  func.func @transform_16(%arg0: i32) -> (i32, i32) {
    %c0_i32 = arith.constant 0 : i32
    %c0_i32_0 = arith.constant 0 : i32
    %c0_i32_1 = arith.constant 0 : i32
    return %c0_i32, %c0_i32_0 : i32, i32
  }
  func.func @transform_17(%arg0: i32) -> (i32, i32) {
    %c0_i32 = arith.constant 0 : i32
    %c0_i32_0 = arith.constant 0 : i32
    %c0_i32_1 = arith.constant 0 : i32
    return %c0_i32, %c0_i32_0 : i32, i32
  }
  func.func @transform_18(%arg0: i32) -> (i32, i32) {
    %c0_i32 = arith.constant 0 : i32
    %c0_i32_0 = arith.constant 0 : i32
    %c0_i32_1 = arith.constant 0 : i32
    return %c0_i32, %c0_i32_0 : i32, i32
  }
  func.func @transform_19(%arg0: i32) -> (i32, i32) {
    %c0_i32 = arith.constant 0 : i32
    %c0_i32_0 = arith.constant 0 : i32
    %c0_i32_1 = arith.constant 0 : i32
    return %c0_i32, %c0_i32_0 : i32, i32
  }
  func.func @transform_20(%arg0: i32) -> (i32, i32) {
    %c0_i32 = arith.constant 0 : i32
    %c0_i32_0 = arith.constant 0 : i32
    %c0_i32_1 = arith.constant 0 : i32
    return %c0_i32, %c0_i32_0 : i32, i32
  }
  func.func @transform_21(%arg0: i32) -> (i32, i32) {
    %c0_i32 = arith.constant 0 : i32
    %c0_i32_0 = arith.constant 0 : i32
    %c0_i32_1 = arith.constant 0 : i32
    return %c0_i32, %c0_i32_0 : i32, i32
  }
  func.func @transform_22(%arg0: i32) -> (i32, i32) {
    %c0_i32 = arith.constant 0 : i32
    %c0_i32_0 = arith.constant 0 : i32
    %c0_i32_1 = arith.constant 0 : i32
    return %c0_i32, %c0_i32_0 : i32, i32
  }
  func.func @transform_23(%arg0: i32) -> (i32, i32) {
    %c0_i32 = arith.constant 0 : i32
    %c0_i32_0 = arith.constant 0 : i32
    %c0_i32_1 = arith.constant 0 : i32
    return %c0_i32, %c0_i32_0 : i32, i32
  }
  func.func @transform_24(%arg0: i32) -> (i32, i32) {
    %c0_i32 = arith.constant 0 : i32
    %c0_i32_0 = arith.constant 0 : i32
    %c0_i32_1 = arith.constant 0 : i32
    return %c0_i32, %c0_i32_0 : i32, i32
  }
  func.func @transform_25(%arg0: i32) -> (i32, i32) {
    %c0_i32 = arith.constant 0 : i32
    %c0_i32_0 = arith.constant 0 : i32
    %c0_i32_1 = arith.constant 0 : i32
    return %c0_i32, %c0_i32_0 : i32, i32
  }
  func.func @transform_26(%arg0: i32) -> (i32, i32) {
    %c0_i32 = arith.constant 0 : i32
    %c0_i32_0 = arith.constant 0 : i32
    %c0_i32_1 = arith.constant 0 : i32
    return %c0_i32, %c0_i32_0 : i32, i32
  }
  func.func @transform_27(%arg0: i32) -> (i32, i32) {
    %c0_i32 = arith.constant 0 : i32
    %c0_i32_0 = arith.constant 0 : i32
    %c0_i32_1 = arith.constant 0 : i32
    return %c0_i32, %c0_i32_0 : i32, i32
  }
  func.func @transform_28(%arg0: i32) -> (i32, i32) {
    %c0_i32 = arith.constant 0 : i32
    %c0_i32_0 = arith.constant 0 : i32
    %c0_i32_1 = arith.constant 0 : i32
    return %c0_i32, %c0_i32_0 : i32, i32
  }
  func.func @transform_29(%arg0: i32) -> (i32, i32, i32) {
    %c0_i32 = arith.constant 0 : i32
    %c0_i32_0 = arith.constant 0 : i32
    %c0_i32_1 = arith.constant 0 : i32
    return %arg0, %c0_i32, %c0_i32_0 : i32, i32, i32
  }
  func.func @transform_30(%arg0: i32) -> (i32, i32, i32) {
    %c0_i32 = arith.constant 0 : i32
    %c0_i32_0 = arith.constant 0 : i32
    %c0_i32_1 = arith.constant 0 : i32
    return %arg0, %c0_i32, %c0_i32_0 : i32, i32, i32
  }
}

</mosaic_0001>

<llo_original>
// kernel: mtad_gat_forward.1
$region0: #{mtad_gat_forward.1}
  #allocation0 [shape = 'u32[]', space=smem, size = 0x4, offset = 0x4, fixed_abs, tag = 'smem constant byte address 0x4 - core index']
  #allocation1 [shape = 'u32[144,128]{1,0:T(1,128)}', space=vmem, size = 0x12000, scoped, tag = 'internal scratch']
  #allocation2 [shape = 'f32[16,48]{1,0:T(8,128)}', space=vmem, size = 0x2000, scoped, tag = 'scratch operand']
  #allocation3 [shape = 'f32[16,16]{1,0:T(8,128)}', space=vmem, size = 0x2000, scoped, tag = 'scratch operand']
  %s0 = inlined_call_operand.smem [shape: u32[31], index: -1, kind: input, shape index: {}]
  %s1 = sld [smem:[%s0]]
  %s2 = scalar_lea.smem %s0, 1
  %s3 = sld [smem:[%s2]]
  %s4 = scalar_lea.smem %s0, 2
  %s5 = sld [smem:[%s4]]
  %s6 = scalar_lea.smem %s0, 3
  %s7 = sld [smem:[%s6]]
  %s8 = scalar_lea.smem %s0, 4
  %s9 = sld [smem:[%s8]]
  %s10 = scalar_lea.smem %s0, 5
  %s11 = sld [smem:[%s10]]
  %s12 = scalar_lea.smem %s0, 6
  %s13 = sld [smem:[%s12]]
  %s14 = scalar_lea.smem %s0, 7
  %s15 = sld [smem:[%s14]]
  %s16 = scalar_lea.smem %s0, 8
  %s17 = sld [smem:[%s16]]
  %s18 = scalar_lea.smem %s0, 9
  %s19 = sld [smem:[%s18]]
  %s20 = scalar_lea.smem %s0, 10
  %s21 = sld [smem:[%s20]]
  %s22 = scalar_lea.smem %s0, 11
  %s23 = sld [smem:[%s22]]
  %s24 = scalar_lea.smem %s0, 12
  %s25 = sld [smem:[%s24]]
  %s26 = scalar_lea.smem %s0, 13
  %s27 = sld [smem:[%s26]]
  %s28 = scalar_lea.smem %s0, 14
  %s29 = sld [smem:[%s28]]
  %s30 = scalar_lea.smem %s0, 15
  %s31 = sld [smem:[%s30]]
  %s32 = scalar_lea.smem %s0, 16
  %s33 = sld [smem:[%s32]]
  %s34 = scalar_lea.smem %s0, 17
  %s35 = sld [smem:[%s34]]
  %s36 = scalar_lea.smem %s0, 18
  %s37 = sld [smem:[%s36]]
  %s38 = scalar_lea.smem %s0, 19
  %s39 = sld [smem:[%s38]]
  %s40 = scalar_lea.smem %s0, 20
  %s41 = sld [smem:[%s40]]
  %s42 = scalar_lea.smem %s0, 21
  %s43 = sld [smem:[%s42]]
  %s44 = scalar_lea.smem %s0, 22
  %s45 = sld [smem:[%s44]]
  %s46 = scalar_lea.smem %s0, 23
  %s47 = sld [smem:[%s46]]
  %s48 = scalar_lea.smem %s0, 24
  %s49 = sld [smem:[%s48]]
  %s50 = scalar_lea.smem %s0, 25
  %s51 = sld [smem:[%s50]]
  %s52 = scalar_lea.smem %s0, 26
  %s53 = sld [smem:[%s52]]
  %s54 = scalar_lea.smem %s0, 27
  %s55 = sld [smem:[%s54]]
  %s56 = scalar_lea.smem %s0, 28
  %s57 = sld [smem:[%s56]]
  %s58 = scalar_lea.smem %s0, 29
  %s59 = sld [smem:[%s58]]
  %s60 = scalar_lea.smem %s0, 30
  %s61 = sld [smem:[%s60]]
  %62 = xla_tuple %s59, %s61
  %s63 = sld [smem:[#allocation0]]
  $region157: #{mtad_gat_forward.1} parent=0
    _
  %s65 = ssub.s32 1, %s63
  %s66 = scalar_select 0, %s65, %s63
  $region1: #{mtad_gat_forward.1} parent=0
    #allocation4 [shape = 'u8[1024]{0}', space=vmem, size = 0x400, scoped, tag = 'output window, operand 1']
    #allocation5 [shape = 's32[2]{0}', space=sflag, size = 0x8, scoped, tag = 'scoped memory for mtad_gat_forward.1']
    %67 = vsyncpa [#allocation5], 0
    %s68 = scalar_lea.sflag [#allocation5], 1
    %69 = vsyncpa %s68, 0
    loop: start=0, step=1, limit=4
    $region2: #{mtad_gat_forward.1} parent=1 // loop_pre_header
      _
    $region3: #{mtad_gat_forward.1} parent=1 // loop_header
      %s71 = sphi 0, %s75
      %p72 = scmp.ge.s32.totalorder %s71, 4
      %s81 = sphi 0, %s83
      %s84 = sphi 0, %s81
      %s85 = sphi 0, %s84
      %s101 = sphi 0, %s85
      %s105 = sphi 0, %s105
      %s107 = sphi 0, %s105
      %s108 = sphi 0, %s107
      %s122 = sphi 0, %s108
      %s126 = sphi 0, %s126
      %s128 = sphi 0, %s126
      %s129 = sphi 0, %s128
      %s143 = sphi 0, %s129
      %s147 = sphi 0, %s147
      %s149 = sphi 0, %s147
      %s150 = sphi 0, %s149
      %s164 = sphi 0, %s150
      %s168 = sphi 0, %s168
      %s170 = sphi 0, %s168
      %s171 = sphi 0, %s170
      %s185 = sphi 0, %s171
      %s189 = sphi 0, %s189
      %s191 = sphi 0, %s189
      %s192 = sphi 0, %s191
      %s206 = sphi 0, %s192
      %s210 = sphi 0, %s210
      %s212 = sphi 0, %s210
      %s213 = sphi 0, %s212
      %s227 = sphi 0, %s213
      %s231 = sphi 0, %s231
      %s233 = sphi 0, %s231
      %s234 = sphi 0, %s233
      %s248 = sphi 0, %s234
      %s252 = sphi 0, %s252
      %s254 = sphi 0, %s252
      %s255 = sphi 0, %s254
      %s269 = sphi 0, %s255
      %s273 = sphi 0, %s273
      %s275 = sphi 0, %s273
      %s276 = sphi 0, %s275
      %s290 = sphi 0, %s276
      %s294 = sphi 0, %s294
      %s296 = sphi 0, %s294
      %s297 = sphi 0, %s296
      %s311 = sphi 0, %s297
      %s315 = sphi 0, %s315
      %s317 = sphi 0, %s315
      %s318 = sphi 0, %s317
      %s332 = sphi 0, %s318
      %s336 = sphi 0, %s336
      %s338 = sphi 0, %s336
      %s339 = sphi 0, %s338
      %s353 = sphi 0, %s339
      %s357 = sphi 0, %s357
      %s359 = sphi 0, %s357
      %s360 = sphi 0, %s359
      %s374 = sphi 0, %s360
      %s378 = sphi 0, %s378
      %s380 = sphi 0, %s378
      %s381 = sphi 0, %s380
      %s395 = sphi 0, %s381
      %s399 = sphi 0, %s399
      %s401 = sphi 0, %s399
      %s402 = sphi 0, %s401
      %s416 = sphi 0, %s402
      %s420 = sphi 0, %s420
      %s422 = sphi 0, %s420
      %s423 = sphi 0, %s422
      %s437 = sphi 0, %s423
      %s441 = sphi 0, %s441
      %s443 = sphi 0, %s441
      %s444 = sphi 0, %s443
      %s458 = sphi 0, %s444
      %s462 = sphi 0, %s462
      %s464 = sphi 0, %s462
      %s465 = sphi 0, %s464
      %s479 = sphi 0, %s465
      %s483 = sphi 0, %s483
      %s485 = sphi 0, %s483
      %s486 = sphi 0, %s485
      %s500 = sphi 0, %s486
      %s504 = sphi 0, %s504
      %s506 = sphi 0, %s504
      %s507 = sphi 0, %s506
      %s521 = sphi 0, %s507
      %s525 = sphi 0, %s525
      %s527 = sphi 0, %s525
      %s528 = sphi 0, %s527
      %s542 = sphi 0, %s528
      %s546 = sphi 0, %s546
      %s548 = sphi 0, %s546
      %s549 = sphi 0, %s548
      %s563 = sphi 0, %s549
      %s567 = sphi 0, %s567
      %s569 = sphi 0, %s567
      %s570 = sphi 0, %s569
      %s584 = sphi 0, %s570
      %s588 = sphi 0, %s588
      %s590 = sphi 0, %s588
      %s591 = sphi 0, %s590
      %s605 = sphi 0, %s591
      %s609 = sphi 0, %s609
      %s611 = sphi 0, %s609
      %s612 = sphi 0, %s611
      %s626 = sphi 0, %s612
      %s630 = sphi 0, %s630
      %s632 = sphi 0, %s630
      %s633 = sphi 0, %s632
      %s647 = sphi 0, %s633
      %s651 = sphi 0, %s651
      %s653 = sphi 0, %s651
      %s654 = sphi 0, %s653
      %s668 = sphi 0, %s654
      %s672 = sphi 0, %s672
      %s674 = sphi 0, %s672
      %s675 = sphi 0, %s674
      %s689 = sphi 0, %s675
      %s695 = sphi 0, %s697
      %s698 = sphi 0, %s695
      %s699 = sphi 0, %s698
      %s715 = sphi 0, %s699
      %s721 = sphi 0, %s723
      %s724 = sphi 0, %s721
      %s725 = sphi 0, %s724
      %s741 = sphi 0, %s725
    $region4: #{mtad_gat_forward.1} parent=1 // loop_header_branch
      %74 = sbr.rel (%p72) target = $region8
    $region5: #{mtad_gat_forward.1} parent=1 // loop_body
      %s76 = ssub.s32 %s71, 1
      %s77 = ssub.s32 %s71, 2
      %s78 = sadd.s32 %s71, 1
      %s79 = ssub.s32 %s71, %s78
      %p80 = scmp.eq.s32.totalorder %s79, 0
      %s82 = sadd.s32 %s81, 1
      %s83 = scalar_select %p80, %s81, %s82
      %p86 = pneg %p80
      %p87 = scmp.eq.s32.totalorder %s71, 1
      %p88 = por %p86, %p87
      %p89 = scmp.ne.s32.totalorder %s81, %s84
      %p90 = scmp.eq.s32.totalorder %s71, 0
      %p91 = por %p89, %p90
      %p92 = scmp.ne.s32.totalorder %s81, %s84
      %p93 = scmp.eq.s32.totalorder %s76, 1
      %p94 = por %p92, %p93
      %p95 = scmp.ne.s32.totalorder %s84, %s85
      %p96 = scmp.eq.s32.totalorder %s76, 0
      %p97 = por %p95, %p96
      %p98 = scmp.ne.s32.totalorder %s84, %s85
      %p99 = scmp.eq.s32.totalorder %s77, 1
      %p100 = por %p98, %p99
      %p102 = scmp.ne.s32.totalorder %s85, %s101
      %p103 = scmp.eq.s32.totalorder %s77, 0
      %p104 = por %p102, %p103
      %s106 = sadd.s32 %s105, 1
      %p109 = scmp.eq.s32.totalorder %s71, 1
      %p110 = scmp.ne.s32.totalorder %s105, %s107
      %p111 = scmp.eq.s32.totalorder %s71, 0
      %p112 = por %p110, %p111
      %p113 = scmp.ne.s32.totalorder %s105, %s107
      %p114 = scmp.eq.s32.totalorder %s76, 1
      %p115 = por %p113, %p114
      %p116 = scmp.ne.s32.totalorder %s107, %s108
      %p117 = scmp.eq.s32.totalorder %s76, 0
      %p118 = por %p116, %p117
      %p119 = scmp.ne.s32.totalorder %s107, %s108
      %p120 = scmp.eq.s32.totalorder %s77, 1
      %p121 = por %p119, %p120
      %p123 = scmp.ne.s32.totalorder %s108, %s122
      %p124 = scmp.eq.s32.totalorder %s77, 0
      %p125 = por %p123, %p124
      %s127 = sadd.s32 %s126, 1
      %p130 = scmp.eq.s32.totalorder %s71, 1
      %p131 = scmp.ne.s32.totalorder %s126, %s128
      %p132 = scmp.eq.s32.totalorder %s71, 0
      %p133 = por %p131, %p132
      %p134 = scmp.ne.s32.totalorder %s126, %s128
      %p135 = scmp.eq.s32.totalorder %s76, 1
      %p136 = por %p134, %p135
      %p137 = scmp.ne.s32.totalorder %s128, %s129
      %p138 = scmp.eq.s32.totalorder %s76, 0
      %p139 = por %p137, %p138
      %p140 = scmp.ne.s32.totalorder %s128, %s129
      %p141 = scmp.eq.s32.totalorder %s77, 1
      %p142 = por %p140, %p141
      %p144 = scmp.ne.s32.totalorder %s129, %s143
      %p145 = scmp.eq.s32.totalorder %s77, 0
      %p146 = por %p144, %p145
      %s148 = sadd.s32 %s147, 1
      %p151 = scmp.eq.s32.totalorder %s71, 1
      %p152 = scmp.ne.s32.totalorder %s147, %s149
      %p153 = scmp.eq.s32.totalorder %s71, 0
      %p154 = por %p152, %p153
      %p155 = scmp.ne.s32.totalorder %s147, %s149
      %p156 = scmp.eq.s32.totalorder %s76, 1
      %p157 = por %p155, %p156
      %p158 = scmp.ne.s32.totalorder %s149, %s150
      %p159 = scmp.eq.s32.totalorder %s76, 0
      %p160 = por %p158, %p159
      %p161 = scmp.ne.s32.totalorder %s149, %s150
      %p162 = scmp.eq.s32.totalorder %s77, 1
      %p163 = por %p161, %p162
      %p165 = scmp.ne.s32.totalorder %s150, %s164
      %p166 = scmp.eq.s32.totalorder %s77, 0
      %p167 = por %p165, %p166
      %s169 = sadd.s32 %s168, 1
      %p172 = scmp.eq.s32.totalorder %s71, 1
      %p173 = scmp.ne.s32.totalorder %s168, %s170
      %p174 = scmp.eq.s32.totalorder %s71, 0
      %p175 = por %p173, %p174
      %p176 = scmp.ne.s32.totalorder %s168, %s170
      %p177 = scmp.eq.s32.totalorder %s76, 1
      %p178 = por %p176, %p177
      %p179 = scmp.ne.s32.totalorder %s170, %s171
      %p180 = scmp.eq.s32.totalorder %s76, 0
      %p181 = por %p179, %p180
      %p182 = scmp.ne.s32.totalorder %s170, %s171
      %p183 = scmp.eq.s32.totalorder %s77, 1
      %p184 = por %p182, %p183
      %p186 = scmp.ne.s32.totalorder %s171, %s185
      %p187 = scmp.eq.s32.totalorder %s77, 0
      %p188 = por %p186, %p187
      %s190 = sadd.s32 %s189, 1
      %p193 = scmp.eq.s32.totalorder %s71, 1
      %p194 = scmp.ne.s32.totalorder %s189, %s191
      %p195 = scmp.eq.s32.totalorder %s71, 0
      %p196 = por %p194, %p195
      %p197 = scmp.ne.s32.totalorder %s189, %s191
      %p198 = scmp.eq.s32.totalorder %s76, 1
      %p199 = por %p197, %p198
      %p200 = scmp.ne.s32.totalorder %s191, %s192
      %p201 = scmp.eq.s32.totalorder %s76, 0
      %p202 = por %p200, %p201
      %p203 = scmp.ne.s32.totalorder %s191, %s192
      %p204 = scmp.eq.s32.totalorder %s77, 1
      %p205 = por %p203, %p204
      %p207 = scmp.ne.s32.totalorder %s192, %s206
      %p208 = scmp.eq.s32.totalorder %s77, 0
      %p209 = por %p207, %p208
      %s211 = sadd.s32 %s210, 1
      %p214 = scmp.eq.s32.totalorder %s71, 1
      %p215 = scmp.ne.s32.totalorder %s210, %s212
      %p216 = scmp.eq.s32.totalorder %s71, 0
      %p217 = por %p215, %p216
      %p218 = scmp.ne.s32.totalorder %s210, %s212
      %p219 = scmp.eq.s32.totalorder %s76, 1
      %p220 = por %p218, %p219
      %p221 = scmp.ne.s32.totalorder %s212, %s213
      %p222 = scmp.eq.s32.totalorder %s76, 0
      %p223 = por %p221, %p222
      %p224 = scmp.ne.s32.totalorder %s212, %s213
      %p225 = scmp.eq.s32.totalorder %s77, 1
      %p226 = por %p224, %p225
      %p228 = scmp.ne.s32.totalorder %s213, %s227
      %p229 = scmp.eq.s32.totalorder %s77, 0
      %p230 = por %p228, %p229
      %s232 = sadd.s32 %s231, 1
      %p235 = scmp.eq.s32.totalorder %s71, 1
      %p236 = scmp.ne.s32.totalorder %s231, %s233
      %p237 = scmp.eq.s32.totalorder %s71, 0
      %p238 = por %p236, %p237
      %p239 = scmp.ne.s32.totalorder %s231, %s233
      %p240 = scmp.eq.s32.totalorder %s76, 1
      %p241 = por %p239, %p240
      %p242 = scmp.ne.s32.totalorder %s233, %s234
      %p243 = scmp.eq.s32.totalorder %s76, 0
      %p244 = por %p242, %p243
      %p245 = scmp.ne.s32.totalorder %s233, %s234
      %p246 = scmp.eq.s32.totalorder %s77, 1
      %p247 = por %p245, %p246
      %p249 = scmp.ne.s32.totalorder %s234, %s248
      %p250 = scmp.eq.s32.totalorder %s77, 0
      %p251 = por %p249, %p250
      %s253 = sadd.s32 %s252, 1
      %p256 = scmp.eq.s32.totalorder %s71, 1
      %p257 = scmp.ne.s32.totalorder %s252, %s254
      %p258 = scmp.eq.s32.totalorder %s71, 0
      %p259 = por %p257, %p258
      %p260 = scmp.ne.s32.totalorder %s252, %s254
      %p261 = scmp.eq.s32.totalorder %s76, 1
      %p262 = por %p260, %p261
      %p263 = scmp.ne.s32.totalorder %s254, %s255
      %p264 = scmp.eq.s32.totalorder %s76, 0
      %p265 = por %p263, %p264
      %p266 = scmp.ne.s32.totalorder %s254, %s255
      %p267 = scmp.eq.s32.totalorder %s77, 1
      %p268 = por %p266, %p267
      %p270 = scmp.ne.s32.totalorder %s255, %s269
      %p271 = scmp.eq.s32.totalorder %s77, 0
      %p272 = por %p270, %p271
      %s274 = sadd.s32 %s273, 1
      %p277 = scmp.eq.s32.totalorder %s71, 1
      %p278 = scmp.ne.s32.totalorder %s273, %s275
      %p279 = scmp.eq.s32.totalorder %s71, 0
      %p280 = por %p278, %p279
      %p281 = scmp.ne.s32.totalorder %s273, %s275
      %p282 = scmp.eq.s32.totalorder %s76, 1
      %p283 = por %p281, %p282
      %p284 = scmp.ne.s32.totalorder %s275, %s276
      %p285 = scmp.eq.s32.totalorder %s76, 0
      %p286 = por %p284, %p285
      %p287 = scmp.ne.s32.totalorder %s275, %s276
      %p288 = scmp.eq.s32.totalorder %s77, 1
      %p289 = por %p287, %p288
      %p291 = scmp.ne.s32.totalorder %s276, %s290
      %p292 = scmp.eq.s32.totalorder %s77, 0
      %p293 = por %p291, %p292
      %s295 = sadd.s32 %s294, 1
      %p298 = scmp.eq.s32.totalorder %s71, 1
      %p299 = scmp.ne.s32.totalorder %s294, %s296
      %p300 = scmp.eq.s32.totalorder %s71, 0
      %p301 = por %p299, %p300
      %p302 = scmp.ne.s32.totalorder %s294, %s296
      %p303 = scmp.eq.s32.totalorder %s76, 1
      %p304 = por %p302, %p303
      %p305 = scmp.ne.s32.totalorder %s296, %s297
      %p306 = scmp.eq.s32.totalorder %s76, 0
      %p307 = por %p305, %p306
      %p308 = scmp.ne.s32.totalorder %s296, %s297
      %p309 = scmp.eq.s32.totalorder %s77, 1
      %p310 = por %p308, %p309
      %p312 = scmp.ne.s32.totalorder %s297, %s311
      %p313 = scmp.eq.s32.totalorder %s77, 0
      %p314 = por %p312, %p313
      %s316 = sadd.s32 %s315, 1
      %p319 = scmp.eq.s32.totalorder %s71, 1
      %p320 = scmp.ne.s32.totalorder %s315, %s317
      %p321 = scmp.eq.s32.totalorder %s71, 0
      %p322 = por %p320, %p321
      %p323 = scmp.ne.s32.totalorder %s315, %s317
      %p324 = scmp.eq.s32.totalorder %s76, 1
      %p325 = por %p323, %p324
      %p326 = scmp.ne.s32.totalorder %s317, %s318
      %p327 = scmp.eq.s32.totalorder %s76, 0
      %p328 = por %p326, %p327
      %p329 = scmp.ne.s32.totalorder %s317, %s318
      %p330 = scmp.eq.s32.totalorder %s77, 1
      %p331 = por %p329, %p330
      %p333 = scmp.ne.s32.totalorder %s318, %s332
      %p334 = scmp.eq.s32.totalorder %s77, 0
      %p335 = por %p333, %p334
      %s337 = sadd.s32 %s336, 1
      %p340 = scmp.eq.s32.totalorder %s71, 1
      %p341 = scmp.ne.s32.totalorder %s336, %s338
      %p342 = scmp.eq.s32.totalorder %s71, 0
      %p343 = por %p341, %p342
      %p344 = scmp.ne.s32.totalorder %s336, %s338
      %p345 = scmp.eq.s32.totalorder %s76, 1
      %p346 = por %p344, %p345
      %p347 = scmp.ne.s32.totalorder %s338, %s339
      %p348 = scmp.eq.s32.totalorder %s76, 0
      %p349 = por %p347, %p348
      %p350 = scmp.ne.s32.totalorder %s338, %s339
      %p351 = scmp.eq.s32.totalorder %s77, 1
      %p352 = por %p350, %p351
      %p354 = scmp.ne.s32.totalorder %s339, %s353
      %p355 = scmp.eq.s32.totalorder %s77, 0
      %p356 = por %p354, %p355
      %s358 = sadd.s32 %s357, 1
      %p361 = scmp.eq.s32.totalorder %s71, 1
      %p362 = scmp.ne.s32.totalorder %s357, %s359
      %p363 = scmp.eq.s32.totalorder %s71, 0
      %p364 = por %p362, %p363
      %p365 = scmp.ne.s32.totalorder %s357, %s359
      %p366 = scmp.eq.s32.totalorder %s76, 1
      %p367 = por %p365, %p366
      %p368 = scmp.ne.s32.totalorder %s359, %s360
      %p369 = scmp.eq.s32.totalorder %s76, 0
      %p370 = por %p368, %p369
      %p371 = scmp.ne.s32.totalorder %s359, %s360
      %p372 = scmp.eq.s32.totalorder %s77, 1
      %p373 = por %p371, %p372
      %p375 = scmp.ne.s32.totalorder %s360, %s374
      %p376 = scmp.eq.s32.totalorder %s77, 0
      %p377 = por %p375, %p376
      %s379 = sadd.s32 %s378, 1
      %p382 = scmp.eq.s32.totalorder %s71, 1
      %p383 = scmp.ne.s32.totalorder %s378, %s380
      %p384 = scmp.eq.s32.totalorder %s71, 0
      %p385 = por %p383, %p384
      %p386 = scmp.ne.s32.totalorder %s378, %s380
      %p387 = scmp.eq.s32.totalorder %s76, 1
      %p388 = por %p386, %p387
      %p389 = scmp.ne.s32.totalorder %s380, %s381
      %p390 = scmp.eq.s32.totalorder %s76, 0
      %p391 = por %p389, %p390
      %p392 = scmp.ne.s32.totalorder %s380, %s381
      %p393 = scmp.eq.s32.totalorder %s77, 1
      %p394 = por %p392, %p393
      %p396 = scmp.ne.s32.totalorder %s381, %s395
      %p397 = scmp.eq.s32.totalorder %s77, 0
      %p398 = por %p396, %p397
      %s400 = sadd.s32 %s399, 1
      %p403 = scmp.eq.s32.totalorder %s71, 1
      %p404 = scmp.ne.s32.totalorder %s399, %s401
      %p405 = scmp.eq.s32.totalorder %s71, 0
      %p406 = por %p404, %p405
      %p407 = scmp.ne.s32.totalorder %s399, %s401
      %p408 = scmp.eq.s32.totalorder %s76, 1
      %p409 = por %p407, %p408
      %p410 = scmp.ne.s32.totalorder %s401, %s402
      %p411 = scmp.eq.s32.totalorder %s76, 0
      %p412 = por %p410, %p411
      %p413 = scmp.ne.s32.totalorder %s401, %s402
      %p414 = scmp.eq.s32.totalorder %s77, 1
      %p415 = por %p413, %p414
      %p417 = scmp.ne.s32.totalorder %s402, %s416
      %p418 = scmp.eq.s32.totalorder %s77, 0
      %p419 = por %p417, %p418
      %s421 = sadd.s32 %s420, 1
      %p424 = scmp.eq.s32.totalorder %s71, 1
      %p425 = scmp.ne.s32.totalorder %s420, %s422
      %p426 = scmp.eq.s32.totalorder %s71, 0
      %p427 = por %p425, %p426
      %p428 = scmp.ne.s32.totalorder %s420, %s422
      %p429 = scmp.eq.s32.totalorder %s76, 1
      %p430 = por %p428, %p429
      %p431 = scmp.ne.s32.totalorder %s422, %s423
      %p432 = scmp.eq.s32.totalorder %s76, 0
      %p433 = por %p431, %p432
      %p434 = scmp.ne.s32.totalorder %s422, %s423
      %p435 = scmp.eq.s32.totalorder %s77, 1
      %p436 = por %p434, %p435
      %p438 = scmp.ne.s32.totalorder %s423, %s437
      %p439 = scmp.eq.s32.totalorder %s77, 0
      %p440 = por %p438, %p439
      %s442 = sadd.s32 %s441, 1
      %p445 = scmp.eq.s32.totalorder %s71, 1
      %p446 = scmp.ne.s32.totalorder %s441, %s443
      %p447 = scmp.eq.s32.totalorder %s71, 0
      %p448 = por %p446, %p447
      %p449 = scmp.ne.s32.totalorder %s441, %s443
      %p450 = scmp.eq.s32.totalorder %s76, 1
      %p451 = por %p449, %p450
      %p452 = scmp.ne.s32.totalorder %s443, %s444
      %p453 = scmp.eq.s32.totalorder %s76, 0
      %p454 = por %p452, %p453
      %p455 = scmp.ne.s32.totalorder %s443, %s444
      %p456 = scmp.eq.s32.totalorder %s77, 1
      %p457 = por %p455, %p456
      %p459 = scmp.ne.s32.totalorder %s444, %s458
      %p460 = scmp.eq.s32.totalorder %s77, 0
      %p461 = por %p459, %p460
      %s463 = sadd.s32 %s462, 1
      %p466 = scmp.eq.s32.totalorder %s71, 1
      %p467 = scmp.ne.s32.totalorder %s462, %s464
      %p468 = scmp.eq.s32.totalorder %s71, 0
      %p469 = por %p467, %p468
      %p470 = scmp.ne.s32.totalorder %s462, %s464
      %p471 = scmp.eq.s32.totalorder %s76, 1
      %p472 = por %p470, %p471
      %p473 = scmp.ne.s32.totalorder %s464, %s465
      %p474 = scmp.eq.s32.totalorder %s76, 0
      %p475 = por %p473, %p474
      %p476 = scmp.ne.s32.totalorder %s464, %s465
      %p477 = scmp.eq.s32.totalorder %s77, 1
      %p478 = por %p476, %p477
      %p480 = scmp.ne.s32.totalorder %s465, %s479
      %p481 = scmp.eq.s32.totalorder %s77, 0
      %p482 = por %p480, %p481
      %s484 = sadd.s32 %s483, 1
      %p487 = scmp.eq.s32.totalorder %s71, 1
      %p488 = scmp.ne.s32.totalorder %s483, %s485
      %p489 = scmp.eq.s32.totalorder %s71, 0
      %p490 = por %p488, %p489
      %p491 = scmp.ne.s32.totalorder %s483, %s485
      %p492 = scmp.eq.s32.totalorder %s76, 1
      %p493 = por %p491, %p492
      %p494 = scmp.ne.s32.totalorder %s485, %s486
      %p495 = scmp.eq.s32.totalorder %s76, 0
      %p496 = por %p494, %p495
      %p497 = scmp.ne.s32.totalorder %s485, %s486
      %p498 = scmp.eq.s32.totalorder %s77, 1
      %p499 = por %p497, %p498
      %p501 = scmp.ne.s32.totalorder %s486, %s500
      %p502 = scmp.eq.s32.totalorder %s77, 0
      %p503 = por %p501, %p502
      %s505 = sadd.s32 %s504, 1
      %p508 = scmp.eq.s32.totalorder %s71, 1
      %p509 = scmp.ne.s32.totalorder %s504, %s506
      %p510 = scmp.eq.s32.totalorder %s71, 0
      %p511 = por %p509, %p510
      %p512 = scmp.ne.s32.totalorder %s504, %s506
      %p513 = scmp.eq.s32.totalorder %s76, 1
      %p514 = por %p512, %p513
      %p515 = scmp.ne.s32.totalorder %s506, %s507
      %p516 = scmp.eq.s32.totalorder %s76, 0
      %p517 = por %p515, %p516
      %p518 = scmp.ne.s32.totalorder %s506, %s507
      %p519 = scmp.eq.s32.totalorder %s77, 1
      %p520 = por %p518, %p519
      %p522 = scmp.ne.s32.totalorder %s507, %s521
      %p523 = scmp.eq.s32.totalorder %s77, 0
      %p524 = por %p522, %p523
      %s526 = sadd.s32 %s525, 1
      %p529 = scmp.eq.s32.totalorder %s71, 1
      %p530 = scmp.ne.s32.totalorder %s525, %s527
      %p531 = scmp.eq.s32.totalorder %s71, 0
      %p532 = por %p530, %p531
      %p533 = scmp.ne.s32.totalorder %s525, %s527
      %p534 = scmp.eq.s32.totalorder %s76, 1
      %p535 = por %p533, %p534
      %p536 = scmp.ne.s32.totalorder %s527, %s528
      %p537 = scmp.eq.s32.totalorder %s76, 0
      %p538 = por %p536, %p537
      %p539 = scmp.ne.s32.totalorder %s527, %s528
      %p540 = scmp.eq.s32.totalorder %s77, 1
      %p541 = por %p539, %p540
      %p543 = scmp.ne.s32.totalorder %s528, %s542
      %p544 = scmp.eq.s32.totalorder %s77, 0
      %p545 = por %p543, %p544
      %s547 = sadd.s32 %s546, 1
      %p550 = scmp.eq.s32.totalorder %s71, 1
      %p551 = scmp.ne.s32.totalorder %s546, %s548
      %p552 = scmp.eq.s32.totalorder %s71, 0
      %p553 = por %p551, %p552
      %p554 = scmp.ne.s32.totalorder %s546, %s548
      %p555 = scmp.eq.s32.totalorder %s76, 1
      %p556 = por %p554, %p555
      %p557 = scmp.ne.s32.totalorder %s548, %s549
      %p558 = scmp.eq.s32.totalorder %s76, 0
      %p559 = por %p557, %p558
      %p560 = scmp.ne.s32.totalorder %s548, %s549
      %p561 = scmp.eq.s32.totalorder %s77, 1
      %p562 = por %p560, %p561
      %p564 = scmp.ne.s32.totalorder %s549, %s563
      %p565 = scmp.eq.s32.totalorder %s77, 0
      %p566 = por %p564, %p565
      %s568 = sadd.s32 %s567, 1
      %p571 = scmp.eq.s32.totalorder %s71, 1
      %p572 = scmp.ne.s32.totalorder %s567, %s569
      %p573 = scmp.eq.s32.totalorder %s71, 0
      %p574 = por %p572, %p573
      %p575 = scmp.ne.s32.totalorder %s567, %s569
      %p576 = scmp.eq.s32.totalorder %s76, 1
      %p577 = por %p575, %p576
      %p578 = scmp.ne.s32.totalorder %s569, %s570
      %p579 = scmp.eq.s32.totalorder %s76, 0
      %p580 = por %p578, %p579
      %p581 = scmp.ne.s32.totalorder %s569, %s570
      %p582 = scmp.eq.s32.totalorder %s77, 1
      %p583 = por %p581, %p582
      %p585 = scmp.ne.s32.totalorder %s570, %s584
      %p586 = scmp.eq.s32.totalorder %s77, 0
      %p587 = por %p585, %p586
      %s589 = sadd.s32 %s588, 1
      %p592 = scmp.eq.s32.totalorder %s71, 1
      %p593 = scmp.ne.s32.totalorder %s588, %s590
      %p594 = scmp.eq.s32.totalorder %s71, 0
      %p595 = por %p593, %p594
      %p596 = scmp.ne.s32.totalorder %s588, %s590
      %p597 = scmp.eq.s32.totalorder %s76, 1
      %p598 = por %p596, %p597
      %p599 = scmp.ne.s32.totalorder %s590, %s591
      %p600 = scmp.eq.s32.totalorder %s76, 0
      %p601 = por %p599, %p600
      %p602 = scmp.ne.s32.totalorder %s590, %s591
      %p603 = scmp.eq.s32.totalorder %s77, 1
      %p604 = por %p602, %p603
      %p606 = scmp.ne.s32.totalorder %s591, %s605
      %p607 = scmp.eq.s32.totalorder %s77, 0
      %p608 = por %p606, %p607
      %s610 = sadd.s32 %s609, 1
      %p613 = scmp.eq.s32.totalorder %s71, 1
      %p614 = scmp.ne.s32.totalorder %s609, %s611
      %p615 = scmp.eq.s32.totalorder %s71, 0
      %p616 = por %p614, %p615
      %p617 = scmp.ne.s32.totalorder %s609, %s611
      %p618 = scmp.eq.s32.totalorder %s76, 1
      %p619 = por %p617, %p618
      %p620 = scmp.ne.s32.totalorder %s611, %s612
      %p621 = scmp.eq.s32.totalorder %s76, 0
      %p622 = por %p620, %p621
      %p623 = scmp.ne.s32.totalorder %s611, %s612
      %p624 = scmp.eq.s32.totalorder %s77, 1
      %p625 = por %p623, %p624
      %p627 = scmp.ne.s32.totalorder %s612, %s626
      %p628 = scmp.eq.s32.totalorder %s77, 0
      %p629 = por %p627, %p628
      %s631 = sadd.s32 %s630, 1
      %p634 = scmp.eq.s32.totalorder %s71, 1
      %p635 = scmp.ne.s32.totalorder %s630, %s632
      %p636 = scmp.eq.s32.totalorder %s71, 0
      %p637 = por %p635, %p636
      %p638 = scmp.ne.s32.totalorder %s630, %s632
      %p639 = scmp.eq.s32.totalorder %s76, 1
      %p640 = por %p638, %p639
      %p641 = scmp.ne.s32.totalorder %s632, %s633
      %p642 = scmp.eq.s32.totalorder %s76, 0
      %p643 = por %p641, %p642
      %p644 = scmp.ne.s32.totalorder %s632, %s633
      %p645 = scmp.eq.s32.totalorder %s77, 1
      %p646 = por %p644, %p645
      %p648 = scmp.ne.s32.totalorder %s633, %s647
      %p649 = scmp.eq.s32.totalorder %s77, 0
      %p650 = por %p648, %p649
      %s652 = sadd.s32 %s651, 1
      %p655 = scmp.eq.s32.totalorder %s71, 1
      %p656 = scmp.ne.s32.totalorder %s651, %s653
      %p657 = scmp.eq.s32.totalorder %s71, 0
      %p658 = por %p656, %p657
      %p659 = scmp.ne.s32.totalorder %s651, %s653
      %p660 = scmp.eq.s32.totalorder %s76, 1
      %p661 = por %p659, %p660
      %p662 = scmp.ne.s32.totalorder %s653, %s654
      %p663 = scmp.eq.s32.totalorder %s76, 0
      %p664 = por %p662, %p663
      %p665 = scmp.ne.s32.totalorder %s653, %s654
      %p666 = scmp.eq.s32.totalorder %s77, 1
      %p667 = por %p665, %p666
      %p669 = scmp.ne.s32.totalorder %s654, %s668
      %p670 = scmp.eq.s32.totalorder %s77, 0
      %p671 = por %p669, %p670
      %s673 = sadd.s32 %s672, 1
      %p676 = scmp.eq.s32.totalorder %s71, 1
      %p677 = scmp.ne.s32.totalorder %s672, %s674
      %p678 = scmp.eq.s32.totalorder %s71, 0
      %p679 = por %p677, %p678
      %p680 = scmp.ne.s32.totalorder %s672, %s674
      %p681 = scmp.eq.s32.totalorder %s76, 1
      %p682 = por %p680, %p681
      %p683 = scmp.ne.s32.totalorder %s674, %s675
      %p684 = scmp.eq.s32.totalorder %s76, 0
      %p685 = por %p683, %p684
      %p686 = scmp.ne.s32.totalorder %s674, %s675
      %p687 = scmp.eq.s32.totalorder %s77, 1
      %p688 = por %p686, %p687
      %p690 = scmp.ne.s32.totalorder %s675, %s689
      %p691 = scmp.eq.s32.totalorder %s77, 0
      %p692 = por %p690, %p691
      %s693 = ssub.s32 %s71, %s78
      %p694 = scmp.eq.s32.totalorder %s693, 0
      %s696 = sadd.s32 %s695, 1
      %s697 = scalar_select %p694, %s695, %s696
      %p700 = pneg %p694
      %p701 = scmp.eq.s32.totalorder %s71, 1
      %p702 = por %p700, %p701
      %p703 = scmp.ne.s32.totalorder %s695, %s698
      %p704 = scmp.eq.s32.totalorder %s71, 0
      %p705 = por %p703, %p704
      %p706 = scmp.ne.s32.totalorder %s695, %s698
      %p707 = scmp.eq.s32.totalorder %s76, 1
      %p708 = por %p706, %p707
      %p709 = scmp.ne.s32.totalorder %s698, %s699
      %p710 = scmp.eq.s32.totalorder %s76, 0
      %p711 = por %p709, %p710
      %p712 = scmp.ne.s32.totalorder %s698, %s699
      %p713 = scmp.eq.s32.totalorder %s77, 1
      %p714 = por %p712, %p713
      %p716 = scmp.ne.s32.totalorder %s699, %s715
      %p717 = scmp.eq.s32.totalorder %s77, 0
      %p718 = por %p716, %p717
      %s719 = ssub.s32 %s71, %s78
      %p720 = scmp.eq.s32.totalorder %s719, 0
      %s722 = sadd.s32 %s721, 1
      %s723 = scalar_select %p720, %s721, %s722
      %p726 = pneg %p720
      %p727 = scmp.eq.s32.totalorder %s71, 1
      %p728 = por %p726, %p727
      %p729 = scmp.ne.s32.totalorder %s721, %s724
      %p730 = scmp.eq.s32.totalorder %s71, 0
      %p731 = por %p729, %p730
      %p732 = scmp.ne.s32.totalorder %s721, %s724
      %p733 = scmp.eq.s32.totalorder %s76, 1
      %p734 = por %p732, %p733
      %p735 = scmp.ne.s32.totalorder %s724, %s725
      %p736 = scmp.eq.s32.totalorder %s76, 0
      %p737 = por %p735, %p736
      %p738 = scmp.ne.s32.totalorder %s724, %s725
      %p739 = scmp.eq.s32.totalorder %s77, 1
      %p740 = por %p738, %p739
      %p742 = scmp.ne.s32.totalorder %s725, %s741
      %p743 = scmp.eq.s32.totalorder %s77, 0
      %p744 = por %p742, %p743
      %p745 = scmp.le.s32.totalorder 1, %s71
      %p746 = scmp.lt.s32.totalorder %s71, 3
      %p747 = pnand %p745, %p746
      %p748 = pneg %p747
      // Predicated region
      $region9: #{mtad_gat_forward.1} parent=5 // pred_check
        _
      $region10: #{mtad_gat_forward.1} parent=5 // pred_check_branch
        %750 = sbr.rel (%p747) target = $region12
      $region11: #{mtad_gat_forward.1} parent=5 // pred_region
        %s751 = ssub.s32 %s71, 1
        // Predicated region
        $region13: #{mtad_gat_forward.1} parent=11 // pred_check
          %p752 = pneg %p118
        $region14: #{mtad_gat_forward.1} parent=11 // pred_check_branch
          %754 = sbr.rel (%p752) target = $region16
        $region15: #{mtad_gat_forward.1} parent=11 // pred_region
          _
        $region16: #{mtad_gat_forward.1} parent=11 // pred_fallthru
          _
        // Predicated region
        $region17: #{mtad_gat_forward.1} parent=11 // pred_check
          %p755 = pneg %p139
        $region18: #{mtad_gat_forward.1} parent=11 // pred_check_branch
          %757 = sbr.rel (%p755) target = $region20
        $region19: #{mtad_gat_forward.1} parent=11 // pred_region
          _
        $region20: #{mtad_gat_forward.1} parent=11 // pred_fallthru
          _
        // Predicated region
        $region21: #{mtad_gat_forward.1} parent=11 // pred_check
          %p758 = pneg %p160
        $region22: #{mtad_gat_forward.1} parent=11 // pred_check_branch
          %760 = sbr.rel (%p758) target = $region24
        $region23: #{mtad_gat_forward.1} parent=11 // pred_region
          _
        $region24: #{mtad_gat_forward.1} parent=11 // pred_fallthru
          _
        // Predicated region
        $region25: #{mtad_gat_forward.1} parent=11 // pred_check
          %p761 = pneg %p181
        $region26: #{mtad_gat_forward.1} parent=11 // pred_check_branch
          %763 = sbr.rel (%p761) target = $region28
        $region27: #{mtad_gat_forward.1} parent=11 // pred_region
          _
        $region28: #{mtad_gat_forward.1} parent=11 // pred_fallthru
          _
        // Predicated region
        $region29: #{mtad_gat_forward.1} parent=11 // pred_check
          %p764 = pneg %p202
        $region30: #{mtad_gat_forward.1} parent=11 // pred_check_branch
          %766 = sbr.rel (%p764) target = $region32
        $region31: #{mtad_gat_forward.1} parent=11 // pred_region
          _
        $region32: #{mtad_gat_forward.1} parent=11 // pred_fallthru
          _
        // Predicated region
        $region33: #{mtad_gat_forward.1} parent=11 // pred_check
          %p767 = pneg %p223
        $region34: #{mtad_gat_forward.1} parent=11 // pred_check_branch
          %769 = sbr.rel (%p767) target = $region36
        $region35: #{mtad_gat_forward.1} parent=11 // pred_region
          _
        $region36: #{mtad_gat_forward.1} parent=11 // pred_fallthru
          _
        // Predicated region
        $region37: #{mtad_gat_forward.1} parent=11 // pred_check
          %p770 = pneg %p244
        $region38: #{mtad_gat_forward.1} parent=11 // pred_check_branch
          %772 = sbr.rel (%p770) target = $region40
        $region39: #{mtad_gat_forward.1} parent=11 // pred_region
          _
        $region40: #{mtad_gat_forward.1} parent=11 // pred_fallthru
          _
        // Predicated region
        $region41: #{mtad_gat_forward.1} parent=11 // pred_check
          %p773 = pneg %p265
        $region42: #{mtad_gat_forward.1} parent=11 // pred_check_branch
          %775 = sbr.rel (%p773) target = $region44
        $region43: #{mtad_gat_forward.1} parent=11 // pred_region
          _
        $region44: #{mtad_gat_forward.1} parent=11 // pred_fallthru
          _
        // Predicated region
        $region45: #{mtad_gat_forward.1} parent=11 // pred_check
          %p776 = pneg %p286
        $region46: #{mtad_gat_forward.1} parent=11 // pred_check_branch
          %778 = sbr.rel (%p776) target = $region48
        $region47: #{mtad_gat_forward.1} parent=11 // pred_region
          _
        $region48: #{mtad_gat_forward.1} parent=11 // pred_fallthru
          _
        // Predicated region
        $region49: #{mtad_gat_forward.1} parent=11 // pred_check
          %p779 = pneg %p307
        $region50: #{mtad_gat_forward.1} parent=11 // pred_check_branch
          %781 = sbr.rel (%p779) target = $region52
        $region51: #{mtad_gat_forward.1} parent=11 // pred_region
          _
        $region52: #{mtad_gat_forward.1} parent=11 // pred_fallthru
          _
        // Predicated region
        $region53: #{mtad_gat_forward.1} parent=11 // pred_check
          %p782 = pneg %p328
        $region54: #{mtad_gat_forward.1} parent=11 // pred_check_branch
          %784 = sbr.rel (%p782) target = $region56
        $region55: #{mtad_gat_forward.1} parent=11 // pred_region
          _
        $region56: #{mtad_gat_forward.1} parent=11 // pred_fallthru
          _
        // Predicated region
        $region57: #{mtad_gat_forward.1} parent=11 // pred_check
          %p785 = pneg %p349
        $region58: #{mtad_gat_forward.1} parent=11 // pred_check_branch
          %787 = sbr.rel (%p785) target = $region60
        $region59: #{mtad_gat_forward.1} parent=11 // pred_region
          _
        $region60: #{mtad_gat_forward.1} parent=11 // pred_fallthru
          _
        // Predicated region
        $region61: #{mtad_gat_forward.1} parent=11 // pred_check
          %p788 = pneg %p370
        $region62: #{mtad_gat_forward.1} parent=11 // pred_check_branch
          %790 = sbr.rel (%p788) target = $region64
        $region63: #{mtad_gat_forward.1} parent=11 // pred_region
          _
        $region64: #{mtad_gat_forward.1} parent=11 // pred_fallthru
          _
        // Predicated region
        $region65: #{mtad_gat_forward.1} parent=11 // pred_check
          %p791 = pneg %p391
        $region66: #{mtad_gat_forward.1} parent=11 // pred_check_branch
          %793 = sbr.rel (%p791) target = $region68
        $region67: #{mtad_gat_forward.1} parent=11 // pred_region
          _
        $region68: #{mtad_gat_forward.1} parent=11 // pred_fallthru
          _
        // Predicated region
        $region69: #{mtad_gat_forward.1} parent=11 // pred_check
          %p794 = pneg %p412
        $region70: #{mtad_gat_forward.1} parent=11 // pred_check_branch
          %796 = sbr.rel (%p794) target = $region72
        $region71: #{mtad_gat_forward.1} parent=11 // pred_region
          _
        $region72: #{mtad_gat_forward.1} parent=11 // pred_fallthru
          _
        // Predicated region
        $region73: #{mtad_gat_forward.1} parent=11 // pred_check
          %p797 = pneg %p433
        $region74: #{mtad_gat_forward.1} parent=11 // pred_check_branch
          %799 = sbr.rel (%p797) target = $region76
        $region75: #{mtad_gat_forward.1} parent=11 // pred_region
          _
        $region76: #{mtad_gat_forward.1} parent=11 // pred_fallthru
          _
        // Predicated region
        $region77: #{mtad_gat_forward.1} parent=11 // pred_check
          %p800 = pneg %p454
        $region78: #{mtad_gat_forward.1} parent=11 // pred_check_branch
          %802 = sbr.rel (%p800) target = $region80
        $region79: #{mtad_gat_forward.1} parent=11 // pred_region
          _
        $region80: #{mtad_gat_forward.1} parent=11 // pred_fallthru
          _
        // Predicated region
        $region81: #{mtad_gat_forward.1} parent=11 // pred_check
          %p803 = pneg %p475
        $region82: #{mtad_gat_forward.1} parent=11 // pred_check_branch
          %805 = sbr.rel (%p803) target = $region84
        $region83: #{mtad_gat_forward.1} parent=11 // pred_region
          _
        $region84: #{mtad_gat_forward.1} parent=11 // pred_fallthru
          _
        // Predicated region
        $region85: #{mtad_gat_forward.1} parent=11 // pred_check
          %p806 = pneg %p496
        $region86: #{mtad_gat_forward.1} parent=11 // pred_check_branch
          %808 = sbr.rel (%p806) target = $region88
        $region87: #{mtad_gat_forward.1} parent=11 // pred_region
          _
        $region88: #{mtad_gat_forward.1} parent=11 // pred_fallthru
          _
        // Predicated region
        $region89: #{mtad_gat_forward.1} parent=11 // pred_check
          %p809 = pneg %p517
        $region90: #{mtad_gat_forward.1} parent=11 // pred_check_branch
          %811 = sbr.rel (%p809) target = $region92
        $region91: #{mtad_gat_forward.1} parent=11 // pred_region
          _
        $region92: #{mtad_gat_forward.1} parent=11 // pred_fallthru
          _
        // Predicated region
        $region93: #{mtad_gat_forward.1} parent=11 // pred_check
          %p812 = pneg %p538
        $region94: #{mtad_gat_forward.1} parent=11 // pred_check_branch
          %814 = sbr.rel (%p812) target = $region96
        $region95: #{mtad_gat_forward.1} parent=11 // pred_region
          _
        $region96: #{mtad_gat_forward.1} parent=11 // pred_fallthru
          _
        // Predicated region
        $region97: #{mtad_gat_forward.1} parent=11 // pred_check
          %p815 = pneg %p559
        $region98: #{mtad_gat_forward.1} parent=11 // pred_check_branch
          %817 = sbr.rel (%p815) target = $region100
        $region99: #{mtad_gat_forward.1} parent=11 // pred_region
          _
        $region100: #{mtad_gat_forward.1} parent=11 // pred_fallthru
          _
        // Predicated region
        $region101: #{mtad_gat_forward.1} parent=11 // pred_check
          %p818 = pneg %p580
        $region102: #{mtad_gat_forward.1} parent=11 // pred_check_branch
          %820 = sbr.rel (%p818) target = $region104
        $region103: #{mtad_gat_forward.1} parent=11 // pred_region
          _
        $region104: #{mtad_gat_forward.1} parent=11 // pred_fallthru
          _
        // Predicated region
        $region105: #{mtad_gat_forward.1} parent=11 // pred_check
          %p821 = pneg %p601
        $region106: #{mtad_gat_forward.1} parent=11 // pred_check_branch
          %823 = sbr.rel (%p821) target = $region108
        $region107: #{mtad_gat_forward.1} parent=11 // pred_region
          _
        $region108: #{mtad_gat_forward.1} parent=11 // pred_fallthru
          _
        // Predicated region
        $region109: #{mtad_gat_forward.1} parent=11 // pred_check
          %p824 = pneg %p622
        $region110: #{mtad_gat_forward.1} parent=11 // pred_check_branch
          %826 = sbr.rel (%p824) target = $region112
        $region111: #{mtad_gat_forward.1} parent=11 // pred_region
          _
        $region112: #{mtad_gat_forward.1} parent=11 // pred_fallthru
          _
        // Predicated region
        $region113: #{mtad_gat_forward.1} parent=11 // pred_check
          %p827 = pneg %p643
        $region114: #{mtad_gat_forward.1} parent=11 // pred_check_branch
          %829 = sbr.rel (%p827) target = $region116
        $region115: #{mtad_gat_forward.1} parent=11 // pred_region
          _
        $region116: #{mtad_gat_forward.1} parent=11 // pred_fallthru
          _
        // Predicated region
        $region117: #{mtad_gat_forward.1} parent=11 // pred_check
          %p830 = pneg %p664
        $region118: #{mtad_gat_forward.1} parent=11 // pred_check_branch
          %832 = sbr.rel (%p830) target = $region120
        $region119: #{mtad_gat_forward.1} parent=11 // pred_region
          _
        $region120: #{mtad_gat_forward.1} parent=11 // pred_fallthru
          _
        // Predicated region
        $region121: #{mtad_gat_forward.1} parent=11 // pred_check
          %p833 = pneg %p685
        $region122: #{mtad_gat_forward.1} parent=11 // pred_check_branch
          %835 = sbr.rel (%p833) target = $region124
        $region123: #{mtad_gat_forward.1} parent=11 // pred_region
          _
        $region124: #{mtad_gat_forward.1} parent=11 // pred_fallthru
          _
      $region12: #{mtad_gat_forward.1} parent=5 // pred_fallthru
        _
      %p836 = scmp.lt.s32.totalorder %s71, 2
      // Predicated region
      $region125: #{mtad_gat_forward.1} parent=5 // pred_check
        %p837 = pneg %p836
      $region126: #{mtad_gat_forward.1} parent=5 // pred_check_branch
        %839 = sbr.rel (%p837) target = $region128
      $region127: #{mtad_gat_forward.1} parent=5 // pred_region
        // Predicated region
        $region129: #{mtad_gat_forward.1} parent=127 // pred_check
          %p840 = pneg %p91
        $region130: #{mtad_gat_forward.1} parent=127 // pred_check_branch
          %842 = sbr.rel (%p840) target = $region132
        $region131: #{mtad_gat_forward.1} parent=127 // pred_region
          %p843 = scmp.lt.s32.totalorder %s71, 1
          %s844 = scalar_select %p843, %s71, 1
          %s845 = smul.addr %s844, 2
          %s846 = smul.addr %s845, 8
          %s847 = scalar_lea.vmem %s1, %s846
        $region132: #{mtad_gat_forward.1} parent=127 // pred_fallthru
          _
      $region128: #{mtad_gat_forward.1} parent=5 // pred_fallthru
        _
      %p848 = scmp.le.s32.totalorder 1, %s71
      %p849 = scmp.lt.s32.totalorder %s71, 3
      %p850 = pnand %p848, %p849
      %p851 = pneg %p850
      // Predicated region
      $region133: #{mtad_gat_forward.1} parent=5 // pred_check
        _
      $region134: #{mtad_gat_forward.1} parent=5 // pred_check_branch
        %853 = sbr.rel (%p850) target = $region136
      $region135: #{mtad_gat_forward.1} parent=5 // pred_region
        %s854 = ssub.s32 %s71, 1
        %p855 = scmp.lt.s32.totalorder %s76, 1
        %s856 = scalar_select %p855, %s76, 1
        %s857 = smul.addr %s856, 2
        %s858 = smul.addr %s857, 8
        %s859 = scalar_lea.vmem %s1, %s858
        %p860 = pneg %p97
        %p861 = pneg %p94
        %p862 = pneg %p118
        %p863 = pneg %p115
        %p864 = pneg %p139
        %p865 = pneg %p136
        %p866 = pneg %p160
        %p867 = pneg %p157
        %p868 = pneg %p181
        %p869 = pneg %p178
        %p870 = pneg %p202
        %p871 = pneg %p199
        %p872 = pneg %p223
        %p873 = pneg %p220
        %p874 = pneg %p244
        %p875 = pneg %p241
        %p876 = pneg %p265
        %p877 = pneg %p262
        %p878 = pneg %p286
        %p879 = pneg %p283
        %p880 = pneg %p307
        %p881 = pneg %p304
        %p882 = pneg %p328
        %p883 = pneg %p325
        %p884 = pneg %p349
        %p885 = pneg %p346
        %p886 = pneg %p370
        %p887 = pneg %p367
        %p888 = pneg %p391
        %p889 = pneg %p388
        %p890 = pneg %p412
        %p891 = pneg %p409
        %p892 = pneg %p433
        %p893 = pneg %p430
        %p894 = pneg %p454
        %p895 = pneg %p451
        %p896 = pneg %p475
        %p897 = pneg %p472
        %p898 = pneg %p496
        %p899 = pneg %p493
        %p900 = pneg %p517
        %p901 = pneg %p514
        %p902 = pneg %p538
        %p903 = pneg %p535
        %p904 = pneg %p559
        %p905 = pneg %p556
        %p906 = pneg %p580
        %p907 = pneg %p577
        %p908 = pneg %p601
        %p909 = pneg %p598
        %p910 = pneg %p622
        %p911 = pneg %p619
        %p912 = pneg %p643
        %p913 = pneg %p640
        %p914 = pneg %p664
        %p915 = pneg %p661
        %p916 = pneg %p685
        %p917 = pneg %p682
        %p918 = pneg %p711
        %p919 = pneg %p708
        %p920 = scmp.lt.s32.totalorder %s76, 1
        %s921 = scalar_select %p920, %s76, 1
        %s922 = smul.addr %s921, 2
        %s923 = smul.addr %s922, 8
        %s924 = scalar_lea.vmem %s59, %s923
        %p925 = pneg %p737
        %p926 = pneg %p734
        %s927 = sand.u32 %s724, 1
        %s928 = scalar_lea.sflag [#allocation5], %s927
        %s929 = sand.u32 %s724, 1
        %s930 = scalar_lea.vmem [#allocation4], %s929
        %p931 = scmp.lt.s32.totalorder %s76, 1
        %s932 = scalar_select %p931, %s76, 1
        %s933 = smul.addr %s932, 2
        %s934 = smul.addr %s933, 8
        %s935 = scalar_lea.vmem %s1, %s934
        %p936 = scmp.lt.s32.totalorder %s76, 1
        %s937 = scalar_select %p936, %s76, 1
        %s938 = smul.addr %s937, 2
        %s939 = smul.addr %s938, 8
        %s940 = scalar_lea.vmem %s59, %s939
        %v941 = vld [vmem:[%s935] sm:$0xff]
        %v942 = vld [vmem:[%s935 + $0x8] sm:$0xff]
        %v943 = vld [vmem:[%s3] sm:$0xff]
        %v944 = vld [vmem:[%s3 + $0x8] sm:$0xff]
        %v945 = vld [vmem:[%s3 + $0x10] sm:$0xff]
        %v946 = vld [vmem:[%s3 + $0x18] sm:$0xff]
        %v947 = vld [vmem:[%s3 + $0x20] sm:$0xff]
        %v948 = vld [vmem:[%s3 + $0x28] sm:$0xff]
        %v949 = vld [vmem:[%s3 + $0x30] sm:$0xff]
        %v950 = vld [vmem:[%s5] sm:$0x1]
        %v952 = vlaneseq
        %v953 = vshrl.u32 %v952, 7
        %v954 = vsub.s32 0, %v953
        %v955 = vrot.slane %v950, %v954
        %vm957 = vcmask 457728
        %v959 = vsel %vm957, %v941, 0
        %v962 = vsel %vm957, %v942, 0
        %964 = vmatprep.subr.mxu0 0.0
        %965 = vmatpush1.msra.mxu0 %v943
        %966 = vmatprep.subr.mxu0 0.0
        %967 = vmatpush1.msra.mxu0 %v944
        %968 = vmatprep.subr.mxu0 0.0
        %969 = vmatpush1.msra.mxu0 %v945
        %970 = vmatprep.subr.mxu0 0.0
        %971 = vmatpush1.msra.mxu0 %v946
        %972 = vmatprep.subr.mxu0 0.0
        %973 = vmatpush1.msra.mxu0 %v947
        %974 = vmatprep.subr.mxu0 0.0
        %975 = vmatpush1.msra.mxu0 %v948
        %976 = vmatprep.subr.mxu0 0.0
        %977 = vmatpush1.msra.mxu0 %v949
        %978 = vmatprep.subr.mxu0 0.0
        %979 = vmatpush1.msra.mxu0 0.0
        %980 = vmatprep.subr.mxu0 0.0
        %981 = vmatpush1.msra.mxu0 0.0
        %982 = vmatprep.subr.mxu0 0.0
        %983 = vmatpush1.msra.mxu0 0.0
        %984 = vmatprep.subr.mxu0 0.0
        %985 = vmatpush1.msra.mxu0 0.0
        %986 = vmatprep.subr.mxu0 0.0
        %987 = vmatpush1.msra.mxu0 0.0
        %988 = vmatprep.subr.mxu0 0.0
        %989 = vmatpush1.msra.mxu0 0.0
        %990 = vmatprep.subr.mxu0 0.0
        %991 = vmatpush1.msra.mxu0 0.0
        %992 = vmatprep.subr.mxu0 0.0
        %993 = vmatpush1.msra.mxu0 0.0
        %994 = vmatprep.subr.mxu0 0.0
        %995 = vmatpush1.msra.mxu0 0.0
        %996 = vmatprep.subr.mxu0 0.0
        %997 = vmatpush1.msra.mxu0 0.0
        %998 = vmatprep.subr.mxu0 0.0
        %999 = vmatpush1.msra.mxu0 0.0
        %1000 = vmatprep.subr.mxu0 0.0
        %1001 = vmatpush1.msra.mxu0 0.0
        %1002 = vmatprep.subr.mxu0 0.0
        %1003 = vmatpush1.msra.mxu0 0.0
        %1004 = vmatprep.subr.mxu0 0.0
        %1005 = vmatpush1.msra.mxu0 0.0
        %1006 = vmatprep.subr.mxu0 0.0
        %1007 = vmatpush1.msra.mxu0 0.0
        %1008 = vmatprep.subr.mxu0 0.0
        %1009 = vmatpush1.msra.mxu0 0.0
        %1010 = vmatprep.subr.mxu0 0.0
        %1011 = vmatpush1.msra.mxu0 0.0
        %1012 = vmatprep.subr.mxu0 0.0
        %1013 = vmatpush1.msra.mxu0 0.0
        %1014 = vmatprep.subr.mxu0 0.0
        %1015 = vmatpush1.msra.mxu0 0.0
        %1016 = vmatprep.subr.mxu0 0.0
        %1017 = vmatpush1.msra.mxu0 0.0
        %1018 = vmatprep.subr.mxu0 0.0
        %1019 = vmatpush1.msra.mxu0 0.0
        %1020 = vmatprep.subr.mxu0 0.0
        %1021 = vmatpush1.msra.mxu0 0.0
        %1022 = vmatprep.subr.mxu0 0.0
        %1023 = vmatpush1.msra.mxu0 0.0
        %1024 = vmatprep.subr.mxu0 0.0
        %1025 = vmatpush1.msra.mxu0 0.0
        %1026 = vmatprep.subr.mxu0 0.0
        %1027 = vmatpush1.msra.mxu0 0.0
        %1028 = vmatprep.mubr.f32.mxu0 0.0
        %1029 = vmatmul.mubr.f32.gmra.mrb[0].mxu0 %v959
        %v1030 = vpop.f32.mrb[0].mxu0
        %v1031 = vadd.f32 %v955, %v1030
        %v1032 = vpop.f32.mrb[0].mxu0
        %1033 = vmatprep.mubr.f32.mxu0 0.0
        %1034 = vmatmul.mubr.f32.gmra.mrb[0].mxu0 %v962
        %v1035 = vpop.f32.mrb[0].mxu0
        %v1036 = vadd.f32 %v955, %v1035
        %v1037 = vpop.f32.mrb[0].mxu0
        %1038 = vdwg.mxu0
        %v1039 = vmax.f32 %v1031, 0.0
        %v1040 = vmax.f32 %v1036, 0.0
        %v1041 = vld [vmem:[%s7] sm:$0xff]
        %v1042 = vld [vmem:[%s7 + $0x8] sm:$0xff]
        %v1043 = vld [vmem:[%s9] sm:$0x1]
        %v1045 = vlaneseq
        %v1046 = vshrl.u32 %v1045, 7
        %v1047 = vsub.s32 0, %v1046
        %v1048 = vrot.slane %v1043, %v1047
        %1050 = vxpose.xlu0.b32.start [1/16] %v1039, 128
        %1051 = vxpose.xlu0.b32.cont [2/16] %v1040, 128
        %1052 = vxpose.xlu0.b32.cont [3/16] 0.0, 128
        %1053 = vxpose.xlu0.b32.cont [4/16] 0.0, 128
        %1054 = vxpose.xlu0.b32.cont [5/16] 0.0, 128
        %1055 = vxpose.xlu0.b32.cont [6/16] 0.0, 128
        %1056 = vxpose.xlu0.b32.cont [7/16] 0.0, 128
        %1057 = vxpose.xlu0.b32.cont [8/16] 0.0, 128
        %1058 = vxpose.xlu0.b32.cont [9/16] 0.0, 128
        %1059 = vxpose.xlu0.b32.cont [10/16] 0.0, 128
        %1060 = vxpose.xlu0.b32.cont [11/16] 0.0, 128
        %1061 = vxpose.xlu0.b32.cont [12/16] 0.0, 128
        %1062 = vxpose.xlu0.b32.cont [13/16] 0.0, 128
        %1063 = vxpose.xlu0.b32.cont [14/16] 0.0, 128
        %1064 = vxpose.xlu0.b32.cont [15/16] 0.0, 128
        %1065 = vxpose.xlu0.b32.end [16/16] 0.0, 128
        %v1066 = vpop.trf.xlu0
        %v1067 = vpop.trf.xlu0
        %v1068 = vpop.trf.xlu0
        %v1069 = vpop.trf.xlu0
        %v1070 = vpop.trf.xlu0
        %v1071 = vpop.trf.xlu0
        %v1072 = vpop.trf.xlu0
        %v1073 = vpop.trf.xlu0
        %v1074 = vpop.trf.xlu0
        %v1075 = vpop.trf.xlu0
        %v1076 = vpop.trf.xlu0
        %v1077 = vpop.trf.xlu0
        %v1078 = vpop.trf.xlu0
        %v1079 = vpop.trf.xlu0
        %v1080 = vpop.trf.xlu0
        %v1081 = vpop.trf.xlu0
        %vm1082 = vcmask 130048
        %v1084 = vsel %vm1082, %v1066, 0
        %1086 = vmatprep.subr.mxu0 0.0
        %1087 = vmatpush1.msra.mxu0 %v1041
        %1088 = vmatprep.subr.mxu0 0.0
        %1089 = vmatpush1.msra.mxu0 %v1042
        %1090 = vmatprep.subr.mxu0 0.0
        %1091 = vmatpush1.msra.mxu0 0.0
        %1092 = vmatprep.subr.mxu0 0.0
        %1093 = vmatpush1.msra.mxu0 0.0
        %1094 = vmatprep.subr.mxu0 0.0
        %1095 = vmatpush1.msra.mxu0 0.0
        %1096 = vmatprep.subr.mxu0 0.0
        %1097 = vmatpush1.msra.mxu0 0.0
        %1098 = vmatprep.subr.mxu0 0.0
        %1099 = vmatpush1.msra.mxu0 0.0
        %1100 = vmatprep.subr.mxu0 0.0
        %1101 = vmatpush1.msra.mxu0 0.0
        %1102 = vmatprep.subr.mxu0 0.0
        %1103 = vmatpush1.msra.mxu0 0.0
        %1104 = vmatprep.subr.mxu0 0.0
        %1105 = vmatpush1.msra.mxu0 0.0
        %1106 = vmatprep.subr.mxu0 0.0
        %1107 = vmatpush1.msra.mxu0 0.0
        %1108 = vmatprep.subr.mxu0 0.0
        %1109 = vmatpush1.msra.mxu0 0.0
        %1110 = vmatprep.subr.mxu0 0.0
        %1111 = vmatpush1.msra.mxu0 0.0
        %1112 = vmatprep.subr.mxu0 0.0
        %1113 = vmatpush1.msra.mxu0 0.0
        %1114 = vmatprep.subr.mxu0 0.0
        %1115 = vmatpush1.msra.mxu0 0.0
        %1116 = vmatprep.subr.mxu0 0.0
        %1117 = vmatpush1.msra.mxu0 0.0
        %1118 = vmatprep.subr.mxu0 0.0
        %1119 = vmatpush1.msra.mxu0 0.0
        %1120 = vmatprep.subr.mxu0 0.0
        %1121 = vmatpush1.msra.mxu0 0.0
        %1122 = vmatprep.subr.mxu0 0.0
        %1123 = vmatpush1.msra.mxu0 0.0
        %1124 = vmatprep.subr.mxu0 0.0
        %1125 = vmatpush1.msra.mxu0 0.0
        %1126 = vmatprep.subr.mxu0 0.0
        %1127 = vmatpush1.msra.mxu0 0.0
        %1128 = vmatprep.subr.mxu0 0.0
        %1129 = vmatpush1.msra.mxu0 0.0
        %1130 = vmatprep.subr.mxu0 0.0
        %1131 = vmatpush1.msra.mxu0 0.0
        %1132 = vmatprep.subr.mxu0 0.0
        %1133 = vmatpush1.msra.mxu0 0.0
        %1134 = vmatprep.subr.mxu0 0.0
        %1135 = vmatpush1.msra.mxu0 0.0
        %1136 = vmatprep.subr.mxu0 0.0
        %1137 = vmatpush1.msra.mxu0 0.0
        %1138 = vmatprep.subr.mxu0 0.0
        %1139 = vmatpush1.msra.mxu0 0.0
        %1140 = vmatprep.subr.mxu0 0.0
        %1141 = vmatpush1.msra.mxu0 0.0
        %1142 = vmatprep.subr.mxu0 0.0
        %1143 = vmatpush1.msra.mxu0 0.0
        %1144 = vmatprep.subr.mxu0 0.0
        %1145 = vmatpush1.msra.mxu0 0.0
        %1146 = vmatprep.subr.mxu0 0.0
        %1147 = vmatpush1.msra.mxu0 0.0
        %1148 = vmatprep.subr.mxu0 0.0
        %1149 = vmatpush1.msra.mxu0 0.0
        %1150 = vmatprep.mubr.f32.mxu0 0.0
        %1151 = vmatmul.mubr.f32.gmra.mrb[0].mxu0 %v1084
        %v1152 = vpop.f32.mrb[0].mxu0
        %v1153 = vadd.f32 %v1048, %v1152
        %v1154 = vpop.f32.mrb[0].mxu0
        %1155 = vdwg.mxu0
        %v1156 = vld [vmem:[%s11] sm:$0x1]
        %v1157 = vld [vmem:[%s13] sm:$0x1]
        %v1158 = vld [vmem:[%s15] sm:$0xff]
        %v1160 = vlaneseq
        %v1161 = vshrl.u32 %v1160, 7
        %v1162 = vsub.s32 0, %v1161
        %v1163 = vrot.slane %v1156, %v1162
        %v1165 = vmul.f32 %v1153, %v1163
        %v1166 = vsel %vm1082, %v1165, 0.0
        %1167 = vadd.xlane.f32.xlu0 %v1166
        %v1168 = vpop.xlane.xlu0 %1167
        %v1170 = vsel %vm1082, %v1157, 0
        %v1173 = vsel %vm1082, %v1153, 0
        %1175 = vmatprep.subr.mxu0 0.0
        %1176 = vmatpush1.xpose.msra.mxu0 %v1173
        %1177 = vmatprep.subr.mxu0 0.0
        %1178 = vmatpush1.xpose.msra.mxu0 0.0
        %1179 = vmatprep.subr.mxu0 0.0
        %1180 = vmatpush1.xpose.msra.mxu0 0.0
        %1181 = vmatprep.subr.mxu0 0.0
        %1182 = vmatpush1.xpose.msra.mxu0 0.0
        %1183 = vmatprep.subr.mxu0 0.0
        %1184 = vmatpush1.xpose.msra.mxu0 0.0
        %1185 = vmatprep.subr.mxu0 0.0
        %1186 = vmatpush1.xpose.msra.mxu0 0.0
        %1187 = vmatprep.subr.mxu0 0.0
        %1188 = vmatpush1.xpose.msra.mxu0 0.0
        %1189 = vmatprep.subr.mxu0 0.0
        %1190 = vmatpush1.xpose.msra.mxu0 0.0
        %1191 = vmatprep.subr.mxu0 0.0
        %1192 = vmatpush1.xpose.msra.mxu0 0.0
        %1193 = vmatprep.subr.mxu0 0.0
        %1194 = vmatpush1.xpose.msra.mxu0 0.0
        %1195 = vmatprep.subr.mxu0 0.0
        %1196 = vmatpush1.xpose.msra.mxu0 0.0
        %1197 = vmatprep.subr.mxu0 0.0
        %1198 = vmatpush1.xpose.msra.mxu0 0.0
        %1199 = vmatprep.subr.mxu0 0.0
        %1200 = vmatpush1.xpose.msra.mxu0 0.0
        %1201 = vmatprep.subr.mxu0 0.0
        %1202 = vmatpush1.xpose.msra.mxu0 0.0
        %1203 = vmatprep.subr.mxu0 0.0
        %1204 = vmatpush1.xpose.msra.mxu0 0.0
        %1205 = vmatprep.subr.mxu0 0.0
        %1206 = vmatpush1.xpose.msra.mxu0 0.0
        %1207 = vmatprep.subr.mxu0 0.0
        %1208 = vmatpush1.xpose.msra.mxu0 0.0
        %1209 = vmatprep.subr.mxu0 0.0
        %1210 = vmatpush1.xpose.msra.mxu0 0.0
        %1211 = vmatprep.subr.mxu0 0.0
        %1212 = vmatpush1.xpose.msra.mxu0 0.0
        %1213 = vmatprep.subr.mxu0 0.0
        %1214 = vmatpush1.xpose.msra.mxu0 0.0
        %1215 = vmatprep.subr.mxu0 0.0
        %1216 = vmatpush1.xpose.msra.mxu0 0.0
        %1217 = vmatprep.subr.mxu0 0.0
        %1218 = vmatpush1.xpose.msra.mxu0 0.0
        %1219 = vmatprep.subr.mxu0 0.0
        %1220 = vmatpush1.xpose.msra.mxu0 0.0
        %1221 = vmatprep.subr.mxu0 0.0
        %1222 = vmatpush1.xpose.msra.mxu0 0.0
        %1223 = vmatprep.subr.mxu0 0.0
        %1224 = vmatpush1.xpose.msra.mxu0 0.0
        %1225 = vmatprep.subr.mxu0 0.0
        %1226 = vmatpush1.xpose.msra.mxu0 0.0
        %1227 = vmatprep.subr.mxu0 0.0
        %1228 = vmatpush1.xpose.msra.mxu0 0.0
        %1229 = vmatprep.subr.mxu0 0.0
        %1230 = vmatpush1.xpose.msra.mxu0 0.0
        %1231 = vmatprep.subr.mxu0 0.0
        %1232 = vmatpush1.xpose.msra.mxu0 0.0
        %1233 = vmatprep.subr.mxu0 0.0
        %1234 = vmatpush1.xpose.msra.mxu0 0.0
        %1235 = vmatprep.subr.mxu0 0.0
        %1236 = vmatpush1.xpose.msra.mxu0 0.0
        %1237 = vmatprep.subr.mxu0 0.0
        %1238 = vmatpush1.xpose.msra.mxu0 0.0
        %1239 = vmatprep.mubr.f32.mxu0 0.0
        %1240 = vmatmul.mubr.f32.gmra.mrb[0].mxu0 %v1170
        %v1241 = vpop.f32.mrb[0].mxu0
        %v1242 = vadd.f32 0.0, %v1241
        %v1243 = vpop.f32.mrb[0].mxu0
        %1244 = vdwg.mxu0
        %v1245 = vlaneseq
        %v1246 = vshrl.u32 %v1245, 7
        %v1247 = vsub.s32 0, %v1246
        %v1248 = vrot.slane %v1242, %v1247
        %v1249 = vadd.f32 %v1168, %v1248
        %vm1250 = vcmp.gt.f32.partialorder %v1249, 0.0
        %v1251 = vmul.f32 %v1249, 0.2
        %v1252 = vsel %vm1250, %v1249, %v1251
        %v1253 = vadd.f32 %v1252, %v1158
        %vm1254 = vcmask 64512
        %v1255 = vsel %vm1254, %v1253, -inf
        %1256 = vmax.xlane.f32.xlu0 %v1255
        %v1257 = vpop.xlane.xlu0 %1256
        %v1258 = vsub.f32 %v1253, %v1257
        %v1259 = vmul.f32 %v1258, 1.442695
        %v1260 = vpow.pop %v1259
        %v1261 = vsel %vm1254, %v1260, 0.0
        %1262 = vadd.xlane.f32.xlu0 %v1261
        %v1263 = vpop.xlane.xlu0 %1262
        %v1264 = vrcp.pop %v1263
        %v1265 = vmul.f32 %v1260, %v1264
        %v1267 = vsel %vm1254, %v1039, 0
        %v1270 = vsel %vm1254, %v1040, 0
        %v1273 = vsel %vm1254, %v1265, 0
        %1275 = vmatprep.subr.mxu0 0.0
        %1276 = vmatpush1.xpose.msra.mxu0 %v1273
        %1277 = vmatprep.subr.mxu0 0.0
        %1278 = vmatpush1.xpose.msra.mxu0 0.0
        %1279 = vmatprep.subr.mxu0 0.0
        %1280 = vmatpush1.xpose.msra.mxu0 0.0
        %1281 = vmatprep.subr.mxu0 0.0
        %1282 = vmatpush1.xpose.msra.mxu0 0.0
        %1283 = vmatprep.subr.mxu0 0.0
        %1284 = vmatpush1.xpose.msra.mxu0 0.0
        %1285 = vmatprep.subr.mxu0 0.0
        %1286 = vmatpush1.xpose.msra.mxu0 0.0
        %1287 = vmatprep.subr.mxu0 0.0
        %1288 = vmatpush1.xpose.msra.mxu0 0.0
        %1289 = vmatprep.subr.mxu0 0.0
        %1290 = vmatpush1.xpose.msra.mxu0 0.0
        %1291 = vmatprep.subr.mxu0 0.0
        %1292 = vmatpush1.xpose.msra.mxu0 0.0
        %1293 = vmatprep.subr.mxu0 0.0
        %1294 = vmatpush1.xpose.msra.mxu0 0.0
        %1295 = vmatprep.subr.mxu0 0.0
        %1296 = vmatpush1.xpose.msra.mxu0 0.0
        %1297 = vmatprep.subr.mxu0 0.0
        %1298 = vmatpush1.xpose.msra.mxu0 0.0
        %1299 = vmatprep.subr.mxu0 0.0
        %1300 = vmatpush1.xpose.msra.mxu0 0.0
        %1301 = vmatprep.subr.mxu0 0.0
        %1302 = vmatpush1.xpose.msra.mxu0 0.0
        %1303 = vmatprep.subr.mxu0 0.0
        %1304 = vmatpush1.xpose.msra.mxu0 0.0
        %1305 = vmatprep.subr.mxu0 0.0
        %1306 = vmatpush1.xpose.msra.mxu0 0.0
        %1307 = vmatprep.subr.mxu0 0.0
        %1308 = vmatpush1.xpose.msra.mxu0 0.0
        %1309 = vmatprep.subr.mxu0 0.0
        %1310 = vmatpush1.xpose.msra.mxu0 0.0
        %1311 = vmatprep.subr.mxu0 0.0
        %1312 = vmatpush1.xpose.msra.mxu0 0.0
        %1313 = vmatprep.subr.mxu0 0.0
        %1314 = vmatpush1.xpose.msra.mxu0 0.0
        %1315 = vmatprep.subr.mxu0 0.0
        %1316 = vmatpush1.xpose.msra.mxu0 0.0
        %1317 = vmatprep.subr.mxu0 0.0
        %1318 = vmatpush1.xpose.msra.mxu0 0.0
        %1319 = vmatprep.subr.mxu0 0.0
        %1320 = vmatpush1.xpose.msra.mxu0 0.0
        %1321 = vmatprep.subr.mxu0 0.0
        %1322 = vmatpush1.xpose.msra.mxu0 0.0
        %1323 = vmatprep.subr.mxu0 0.0
        %1324 = vmatpush1.xpose.msra.mxu0 0.0
        %1325 = vmatprep.subr.mxu0 0.0
        %1326 = vmatpush1.xpose.msra.mxu0 0.0
        %1327 = vmatprep.subr.mxu0 0.0
        %1328 = vmatpush1.xpose.msra.mxu0 0.0
        %1329 = vmatprep.subr.mxu0 0.0
        %1330 = vmatpush1.xpose.msra.mxu0 0.0
        %1331 = vmatprep.subr.mxu0 0.0
        %1332 = vmatpush1.xpose.msra.mxu0 0.0
        %1333 = vmatprep.subr.mxu0 0.0
        %1334 = vmatpush1.xpose.msra.mxu0 0.0
        %1335 = vmatprep.subr.mxu0 0.0
        %1336 = vmatpush1.xpose.msra.mxu0 0.0
        %1337 = vmatprep.subr.mxu0 0.0
        %1338 = vmatpush1.xpose.msra.mxu0 0.0
        %1339 = vmatprep.mubr.f32.mxu0 0.0
        %1340 = vmatmul.mubr.f32.gmra.mrb[0].mxu0 %v1267
        %v1341 = vpop.f32.mrb[0].mxu0
        %v1342 = vadd.f32 0.0, %v1341
        %v1343 = vpop.f32.mrb[0].mxu0
        %1344 = vmatprep.mubr.f32.mxu0 0.0
        %1345 = vmatmul.mubr.f32.gmra.mrb[0].mxu0 %v1270
        %v1346 = vpop.f32.mrb[0].mxu0
        %v1347 = vadd.f32 0.0, %v1346
        %v1348 = vpop.f32.mrb[0].mxu0
        %1349 = vdwg.mxu0
        %v1350 = vxor.u32 %v1342, 2147483648
        %v1351 = vxor.u32 %v1347, 2147483648
        %v1352 = vmul.f32 %v1350, 1.442695
        %v1353 = vpow.pop %v1352
        %v1354 = vmul.f32 %v1351, 1.442695
        %v1355 = vpow.pop %v1354
        %v1356 = vadd.f32 %v1353, 1.0
        %v1357 = vadd.f32 %v1355, 1.0
        %v1358 = vrcp.pop %v1356
        %v1359 = vmul.f32 1.0, %v1358
        %v1360 = vrcp.pop %v1357
        %v1361 = vmul.f32 1.0, %v1360
        %v1362 = vld [vmem:[%s17] sm:$0xff]
        %v1363 = vld [vmem:[%s19] sm:$0x1]
        %v1365 = vlaneseq
        %v1366 = vshrl.u32 %v1365, 7
        %v1367 = vsub.s32 0, %v1366
        %v1368 = vrot.slane %v1363, %v1367
        %1370 = vmatprep.subr.mxu0 0.0
        %1371 = vmatpush1.msra.mxu0 %v1362
        %1372 = vmatprep.subr.mxu0 0.0
        %1373 = vmatpush1.msra.mxu0 0.0
        %1374 = vmatprep.subr.mxu0 0.0
        %1375 = vmatpush1.msra.mxu0 0.0
        %1376 = vmatprep.subr.mxu0 0.0
        %1377 = vmatpush1.msra.mxu0 0.0
        %1378 = vmatprep.subr.mxu0 0.0
        %1379 = vmatpush1.msra.mxu0 0.0
        %1380 = vmatprep.subr.mxu0 0.0
        %1381 = vmatpush1.msra.mxu0 0.0
        %1382 = vmatprep.subr.mxu0 0.0
        %1383 = vmatpush1.msra.mxu0 0.0
        %1384 = vmatprep.subr.mxu0 0.0
        %1385 = vmatpush1.msra.mxu0 0.0
        %1386 = vmatprep.subr.mxu0 0.0
        %1387 = vmatpush1.msra.mxu0 0.0
        %1388 = vmatprep.subr.mxu0 0.0
        %1389 = vmatpush1.msra.mxu0 0.0
        %1390 = vmatprep.subr.mxu0 0.0
        %1391 = vmatpush1.msra.mxu0 0.0
        %1392 = vmatprep.subr.mxu0 0.0
        %1393 = vmatpush1.msra.mxu0 0.0
        %1394 = vmatprep.subr.mxu0 0.0
        %1395 = vmatpush1.msra.mxu0 0.0
        %1396 = vmatprep.subr.mxu0 0.0
        %1397 = vmatpush1.msra.mxu0 0.0
        %1398 = vmatprep.subr.mxu0 0.0
        %1399 = vmatpush1.msra.mxu0 0.0
        %1400 = vmatprep.subr.mxu0 0.0
        %1401 = vmatpush1.msra.mxu0 0.0
        %1402 = vmatprep.subr.mxu0 0.0
        %1403 = vmatpush1.msra.mxu0 0.0
        %1404 = vmatprep.subr.mxu0 0.0
        %1405 = vmatpush1.msra.mxu0 0.0
        %1406 = vmatprep.subr.mxu0 0.0
        %1407 = vmatpush1.msra.mxu0 0.0
        %1408 = vmatprep.subr.mxu0 0.0
        %1409 = vmatpush1.msra.mxu0 0.0
        %1410 = vmatprep.subr.mxu0 0.0
        %1411 = vmatpush1.msra.mxu0 0.0
        %1412 = vmatprep.subr.mxu0 0.0
        %1413 = vmatpush1.msra.mxu0 0.0
        %1414 = vmatprep.subr.mxu0 0.0
        %1415 = vmatpush1.msra.mxu0 0.0
        %1416 = vmatprep.subr.mxu0 0.0
        %1417 = vmatpush1.msra.mxu0 0.0
        %1418 = vmatprep.subr.mxu0 0.0
        %1419 = vmatpush1.msra.mxu0 0.0
        %1420 = vmatprep.subr.mxu0 0.0
        %1421 = vmatpush1.msra.mxu0 0.0
        %1422 = vmatprep.subr.mxu0 0.0
        %1423 = vmatpush1.msra.mxu0 0.0
        %1424 = vmatprep.subr.mxu0 0.0
        %1425 = vmatpush1.msra.mxu0 0.0
        %1426 = vmatprep.subr.mxu0 0.0
        %1427 = vmatpush1.msra.mxu0 0.0
        %1428 = vmatprep.subr.mxu0 0.0
        %1429 = vmatpush1.msra.mxu0 0.0
        %1430 = vmatprep.subr.mxu0 0.0
        %1431 = vmatpush1.msra.mxu0 0.0
        %1432 = vmatprep.subr.mxu0 0.0
        %1433 = vmatpush1.msra.mxu0 0.0
        %1434 = vmatprep.mubr.f32.mxu0 0.0
        %1435 = vmatmul.mubr.f32.gmra.mrb[0].mxu0 %v1267
        %v1436 = vpop.f32.mrb[0].mxu0
        %v1437 = vadd.f32 %v1368, %v1436
        %v1438 = vpop.f32.mrb[0].mxu0
        %1439 = vmatprep.mubr.f32.mxu0 0.0
        %1440 = vmatmul.mubr.f32.gmra.mrb[0].mxu0 %v1270
        %v1441 = vpop.f32.mrb[0].mxu0
        %v1442 = vadd.f32 %v1368, %v1441
        %v1443 = vpop.f32.mrb[0].mxu0
        %1444 = vdwg.mxu0
        %v1445 = vld [vmem:[%s21] sm:$0x1]
        %v1446 = vld [vmem:[%s23] sm:$0x1]
        %v1447 = vld [vmem:[%s25] sm:$0xff]
        %v1448 = vld [vmem:[%s25 + $0x8] sm:$0xff]
        %v1450 = vlaneseq
        %v1451 = vshrl.u32 %v1450, 7
        %v1452 = vsub.s32 0, %v1451
        %v1453 = vrot.slane %v1445, %v1452
        %v1455 = vmul.f32 %v1437, %v1453
        %v1456 = vmul.f32 %v1442, %v1453
        %v1457 = vsel %vm1082, %v1455, 0.0
        %1458 = vadd.xlane.f32.xlu0 %v1457
        %v1459 = vpop.xlane.xlu0 %1458
        %v1460 = vsel %vm1082, %v1456, 0.0
        %1461 = vadd.xlane.f32.xlu0 %v1460
        %v1462 = vpop.xlane.xlu0 %1461
        %v1464 = vsel %vm1082, %v1446, 0
        %v1467 = vsel %vm1082, %v1437, 0
        %v1470 = vsel %vm1082, %v1442, 0
        %1472 = vmatprep.subr.mxu0 0.0
        %1473 = vmatpush1.xpose.msra.mxu0 %v1467
        %1474 = vmatprep.subr.mxu0 0.0
        %1475 = vmatpush1.xpose.msra.mxu0 %v1470
        %1476 = vmatprep.subr.mxu0 0.0
        %1477 = vmatpush1.xpose.msra.mxu0 0.0
        %1478 = vmatprep.subr.mxu0 0.0
        %1479 = vmatpush1.xpose.msra.mxu0 0.0
        %1480 = vmatprep.subr.mxu0 0.0
        %1481 = vmatpush1.xpose.msra.mxu0 0.0
        %1482 = vmatprep.subr.mxu0 0.0
        %1483 = vmatpush1.xpose.msra.mxu0 0.0
        %1484 = vmatprep.subr.mxu0 0.0
        %1485 = vmatpush1.xpose.msra.mxu0 0.0
        %1486 = vmatprep.subr.mxu0 0.0
        %1487 = vmatpush1.xpose.msra.mxu0 0.0
        %1488 = vmatprep.subr.mxu0 0.0
        %1489 = vmatpush1.xpose.msra.mxu0 0.0
        %1490 = vmatprep.subr.mxu0 0.0
        %1491 = vmatpush1.xpose.msra.mxu0 0.0
        %1492 = vmatprep.subr.mxu0 0.0
        %1493 = vmatpush1.xpose.msra.mxu0 0.0
        %1494 = vmatprep.subr.mxu0 0.0
        %1495 = vmatpush1.xpose.msra.mxu0 0.0
        %1496 = vmatprep.subr.mxu0 0.0
        %1497 = vmatpush1.xpose.msra.mxu0 0.0
        %1498 = vmatprep.subr.mxu0 0.0
        %1499 = vmatpush1.xpose.msra.mxu0 0.0
        %1500 = vmatprep.subr.mxu0 0.0
        %1501 = vmatpush1.xpose.msra.mxu0 0.0
        %1502 = vmatprep.subr.mxu0 0.0
        %1503 = vmatpush1.xpose.msra.mxu0 0.0
        %1504 = vmatprep.subr.mxu0 0.0
        %1505 = vmatpush1.xpose.msra.mxu0 0.0
        %1506 = vmatprep.subr.mxu0 0.0
        %1507 = vmatpush1.xpose.msra.mxu0 0.0
        %1508 = vmatprep.subr.mxu0 0.0
        %1509 = vmatpush1.xpose.msra.mxu0 0.0
        %1510 = vmatprep.subr.mxu0 0.0
        %1511 = vmatpush1.xpose.msra.mxu0 0.0
        %1512 = vmatprep.subr.mxu0 0.0
        %1513 = vmatpush1.xpose.msra.mxu0 0.0
        %1514 = vmatprep.subr.mxu0 0.0
        %1515 = vmatpush1.xpose.msra.mxu0 0.0
        %1516 = vmatprep.subr.mxu0 0.0
        %1517 = vmatpush1.xpose.msra.mxu0 0.0
        %1518 = vmatprep.subr.mxu0 0.0
        %1519 = vmatpush1.xpose.msra.mxu0 0.0
        %1520 = vmatprep.subr.mxu0 0.0
        %1521 = vmatpush1.xpose.msra.mxu0 0.0
        %1522 = vmatprep.subr.mxu0 0.0
        %1523 = vmatpush1.xpose.msra.mxu0 0.0
        %1524 = vmatprep.subr.mxu0 0.0
        %1525 = vmatpush1.xpose.msra.mxu0 0.0
        %1526 = vmatprep.subr.mxu0 0.0
        %1527 = vmatpush1.xpose.msra.mxu0 0.0
        %1528 = vmatprep.subr.mxu0 0.0
        %1529 = vmatpush1.xpose.msra.mxu0 0.0
        %1530 = vmatprep.subr.mxu0 0.0
        %1531 = vmatpush1.xpose.msra.mxu0 0.0
        %1532 = vmatprep.subr.mxu0 0.0
        %1533 = vmatpush1.xpose.msra.mxu0 0.0
        %1534 = vmatprep.subr.mxu0 0.0
        %1535 = vmatpush1.xpose.msra.mxu0 0.0
        %1536 = vmatprep.mubr.f32.mxu0 0.0
        %1537 = vmatmul.mubr.f32.gmra.mrb[0].mxu0 %v1464
        %v1538 = vpop.f32.mrb[0].mxu0
        %v1539 = vadd.f32 0.0, %v1538
        %v1540 = vpop.f32.mrb[0].mxu0
        %1541 = vdwg.mxu0
        %v1542 = vlaneseq
        %v1543 = vshrl.u32 %v1542, 7
        %v1544 = vsub.s32 0, %v1543
        %v1545 = vrot.slane %v1539, %v1544
        %v1546 = vadd.f32 %v1459, %v1545
        %v1547 = vadd.f32 %v1462, %v1545
        %vm1548 = vcmp.gt.f32.partialorder %v1546, 0.0
        %vm1549 = vcmp.gt.f32.partialorder %v1547, 0.0
        %v1550 = vmul.f32 %v1546, 0.2
        %v1551 = vmul.f32 %v1547, 0.2
        %v1552 = vsel %vm1548, %v1546, %v1550
        %v1553 = vsel %vm1549, %v1547, %v1551
        %v1554 = vadd.f32 %v1552, %v1447
        %v1555 = vadd.f32 %v1553, %v1448
        %v1556 = vsel %vm1082, %v1554, -inf
        %1557 = vmax.xlane.f32.xlu0 %v1556
        %v1558 = vpop.xlane.xlu0 %1557
        %v1559 = vsel %vm1082, %v1555, -inf
        %1560 = vmax.xlane.f32.xlu0 %v1559
        %v1561 = vpop.xlane.xlu0 %1560
        %v1562 = vsub.f32 %v1554, %v1558
        %v1563 = vsub.f32 %v1555, %v1561
        %v1564 = vmul.f32 %v1562, 1.442695
        %v1565 = vpow.pop %v1564
        %v1566 = vmul.f32 %v1563, 1.442695
        %v1567 = vpow.pop %v1566
        %v1568 = vsel %vm1082, %v1565, 0.0
        %1569 = vadd.xlane.f32.xlu0 %v1568
        %v1570 = vpop.xlane.xlu0 %1569
        %v1571 = vsel %vm1082, %v1567, 0.0
        %1572 = vadd.xlane.f32.xlu0 %v1571
        %v1573 = vpop.xlane.xlu0 %1572
        %v1574 = vrcp.pop %v1570
        %v1575 = vrcp.pop %v1573
        %v1576 = vmul.f32 %v1565, %v1574
        %v1577 = vmul.f32 %v1567, %v1575
        %v1579 = vsel %vm1082, %v1576, 0
        %v1582 = vsel %vm1082, %v1577, 0
        %1584 = vmatprep.subr.mxu0 0.0
        %1585 = vmatpush1.msra.mxu0 %v1039
        %1586 = vmatprep.subr.mxu0 0.0
        %1587 = vmatpush1.msra.mxu0 %v1040
        %1588 = vmatprep.subr.mxu0 0.0
        %1589 = vmatpush1.msra.mxu0 0.0
        %1590 = vmatprep.subr.mxu0 0.0
        %1591 = vmatpush1.msra.mxu0 0.0
        %1592 = vmatprep.subr.mxu0 0.0
        %1593 = vmatpush1.msra.mxu0 0.0
        %1594 = vmatprep.subr.mxu0 0.0
        %1595 = vmatpush1.msra.mxu0 0.0
        %1596 = vmatprep.subr.mxu0 0.0
        %1597 = vmatpush1.msra.mxu0 0.0
        %1598 = vmatprep.subr.mxu0 0.0
        %1599 = vmatpush1.msra.mxu0 0.0
        %1600 = vmatprep.subr.mxu0 0.0
        %1601 = vmatpush1.msra.mxu0 0.0
        %1602 = vmatprep.subr.mxu0 0.0
        %1603 = vmatpush1.msra.mxu0 0.0
        %1604 = vmatprep.subr.mxu0 0.0
        %1605 = vmatpush1.msra.mxu0 0.0
        %1606 = vmatprep.subr.mxu0 0.0
        %1607 = vmatpush1.msra.mxu0 0.0
        %1608 = vmatprep.subr.mxu0 0.0
        %1609 = vmatpush1.msra.mxu0 0.0
        %1610 = vmatprep.subr.mxu0 0.0
        %1611 = vmatpush1.msra.mxu0 0.0
        %1612 = vmatprep.subr.mxu0 0.0
        %1613 = vmatpush1.msra.mxu0 0.0
        %1614 = vmatprep.subr.mxu0 0.0
        %1615 = vmatpush1.msra.mxu0 0.0
        %1616 = vmatprep.subr.mxu0 0.0
        %1617 = vmatpush1.msra.mxu0 0.0
        %1618 = vmatprep.subr.mxu0 0.0
        %1619 = vmatpush1.msra.mxu0 0.0
        %1620 = vmatprep.subr.mxu0 0.0
        %1621 = vmatpush1.msra.mxu0 0.0
        %1622 = vmatprep.subr.mxu0 0.0
        %1623 = vmatpush1.msra.mxu0 0.0
        %1624 = vmatprep.subr.mxu0 0.0
        %1625 = vmatpush1.msra.mxu0 0.0
        %1626 = vmatprep.subr.mxu0 0.0
        %1627 = vmatpush1.msra.mxu0 0.0
        %1628 = vmatprep.subr.mxu0 0.0
        %1629 = vmatpush1.msra.mxu0 0.0
        %1630 = vmatprep.subr.mxu0 0.0
        %1631 = vmatpush1.msra.mxu0 0.0
        %1632 = vmatprep.subr.mxu0 0.0
        %1633 = vmatpush1.msra.mxu0 0.0
        %1634 = vmatprep.subr.mxu0 0.0
        %1635 = vmatpush1.msra.mxu0 0.0
        %1636 = vmatprep.subr.mxu0 0.0
        %1637 = vmatpush1.msra.mxu0 0.0
        %1638 = vmatprep.subr.mxu0 0.0
        %1639 = vmatpush1.msra.mxu0 0.0
        %1640 = vmatprep.subr.mxu0 0.0
        %1641 = vmatpush1.msra.mxu0 0.0
        %1642 = vmatprep.subr.mxu0 0.0
        %1643 = vmatpush1.msra.mxu0 0.0
        %1644 = vmatprep.subr.mxu0 0.0
        %1645 = vmatpush1.msra.mxu0 0.0
        %1646 = vmatprep.subr.mxu0 0.0
        %1647 = vmatpush1.msra.mxu0 0.0
        %1648 = vmatprep.mubr.f32.mxu0 0.0
        %1649 = vmatmul.mubr.f32.gmra.mrb[0].mxu0 %v1579
        %v1650 = vpop.f32.mrb[0].mxu0
        %v1651 = vadd.f32 0.0, %v1650
        %v1652 = vpop.f32.mrb[0].mxu0
        %1653 = vmatprep.mubr.f32.mxu0 0.0
        %1654 = vmatmul.mubr.f32.gmra.mrb[0].mxu0 %v1582
        %v1655 = vpop.f32.mrb[0].mxu0
        %v1656 = vadd.f32 0.0, %v1655
        %v1657 = vpop.f32.mrb[0].mxu0
        %1658 = vdwg.mxu0
        %v1659 = vxor.u32 %v1651, 2147483648
        %v1660 = vxor.u32 %v1656, 2147483648
        %v1661 = vmul.f32 %v1659, 1.442695
        %v1662 = vpow.pop %v1661
        %v1663 = vmul.f32 %v1660, 1.442695
        %v1664 = vpow.pop %v1663
        %v1665 = vadd.f32 %v1662, 1.0
        %v1666 = vadd.f32 %v1664, 1.0
        %v1667 = vrcp.pop %v1665
        %v1668 = vmul.f32 1.0, %v1667
        %v1669 = vrcp.pop %v1666
        %v1670 = vmul.f32 1.0, %v1669
        %v1671 = vld [vmem:[%s27] sm:$0xff]
        %v1672 = vld [vmem:[%s27 + $0x8] sm:$0xff]
        %v1673 = vld [vmem:[%s27 + $0x10] sm:$0xff]
        %v1675 = vsel %vm1254, %v1359, 0
        %v1678 = vsel %vm1254, %v1361, 0
        %1680 = vmatprep.subr.mxu0 0.0
        %1681 = vmatpush1.msra.mxu0 %v1672
        %1682 = vmatprep.subr.mxu0 0.0
        %1683 = vmatpush1.msra.mxu0 0.0
        %1684 = vmatprep.subr.mxu0 0.0
        %1685 = vmatpush1.msra.mxu0 0.0
        %1686 = vmatprep.subr.mxu0 0.0
        %1687 = vmatpush1.msra.mxu0 0.0
        %1688 = vmatprep.subr.mxu0 0.0
        %1689 = vmatpush1.msra.mxu0 0.0
        %1690 = vmatprep.subr.mxu0 0.0
        %1691 = vmatpush1.msra.mxu0 0.0
        %1692 = vmatprep.subr.mxu0 0.0
        %1693 = vmatpush1.msra.mxu0 0.0
        %1694 = vmatprep.subr.mxu0 0.0
        %1695 = vmatpush1.msra.mxu0 0.0
        %1696 = vmatprep.subr.mxu0 0.0
        %1697 = vmatpush1.msra.mxu0 0.0
        %1698 = vmatprep.subr.mxu0 0.0
        %1699 = vmatpush1.msra.mxu0 0.0
        %1700 = vmatprep.subr.mxu0 0.0
        %1701 = vmatpush1.msra.mxu0 0.0
        %1702 = vmatprep.subr.mxu0 0.0
        %1703 = vmatpush1.msra.mxu0 0.0
        %1704 = vmatprep.subr.mxu0 0.0
        %1705 = vmatpush1.msra.mxu0 0.0
        %1706 = vmatprep.subr.mxu0 0.0
        %1707 = vmatpush1.msra.mxu0 0.0
        %1708 = vmatprep.subr.mxu0 0.0
        %1709 = vmatpush1.msra.mxu0 0.0
        %1710 = vmatprep.subr.mxu0 0.0
        %1711 = vmatpush1.msra.mxu0 0.0
        %1712 = vmatprep.subr.mxu0 0.0
        %1713 = vmatpush1.msra.mxu0 0.0
        %1714 = vmatprep.subr.mxu0 0.0
        %1715 = vmatpush1.msra.mxu0 0.0
        %1716 = vmatprep.subr.mxu0 0.0
        %1717 = vmatpush1.msra.mxu0 0.0
        %1718 = vmatprep.subr.mxu0 0.0
        %1719 = vmatpush1.msra.mxu0 0.0
        %1720 = vmatprep.subr.mxu0 0.0
        %1721 = vmatpush1.msra.mxu0 0.0
        %1722 = vmatprep.subr.mxu0 0.0
        %1723 = vmatpush1.msra.mxu0 0.0
        %1724 = vmatprep.subr.mxu0 0.0
        %1725 = vmatpush1.msra.mxu0 0.0
        %1726 = vmatprep.subr.mxu0 0.0
        %1727 = vmatpush1.msra.mxu0 0.0
        %1728 = vmatprep.subr.mxu0 0.0
        %1729 = vmatpush1.msra.mxu0 0.0
        %1730 = vmatprep.subr.mxu0 0.0
        %1731 = vmatpush1.msra.mxu0 0.0
        %1732 = vmatprep.subr.mxu0 0.0
        %1733 = vmatpush1.msra.mxu0 0.0
        %1734 = vmatprep.subr.mxu0 0.0
        %1735 = vmatpush1.msra.mxu0 0.0
        %1736 = vmatprep.subr.mxu0 0.0
        %1737 = vmatpush1.msra.mxu0 0.0
        %1738 = vmatprep.subr.mxu0 0.0
        %1739 = vmatpush1.msra.mxu0 0.0
        %1740 = vmatprep.subr.mxu0 0.0
        %1741 = vmatpush1.msra.mxu0 0.0
        %1742 = vmatprep.subr.mxu0 0.0
        %1743 = vmatpush1.msra.mxu0 0.0
        %1744 = vmatprep.mubr.f32.mxu0 0.0
        %1745 = vmatmul.mubr.f32.gmra.mrb[0].mxu0 %v1675
        %v1746 = vpop.f32.mrb[0].mxu0
        %v1747 = vadd.f32 0.0, %v1746
        %v1748 = vpop.f32.mrb[0].mxu0
        %1749 = vmatprep.mubr.f32.mxu0 0.0
        %1750 = vmatmul.mubr.f32.gmra.mrb[0].mxu0 %v1678
        %v1751 = vpop.f32.mrb[0].mxu0
        %v1752 = vadd.f32 0.0, %v1751
        %v1753 = vpop.f32.mrb[0].mxu0
        %1754 = vdwg.mxu0
        %1755 = vmatprep.subr.mxu0 0.0
        %1756 = vmatpush1.msra.mxu0 %v1671
        %1757 = vmatprep.subr.mxu0 0.0
        %1758 = vmatpush1.msra.mxu0 0.0
        %1759 = vmatprep.subr.mxu0 0.0
        %1760 = vmatpush1.msra.mxu0 0.0
        %1761 = vmatprep.subr.mxu0 0.0
        %1762 = vmatpush1.msra.mxu0 0.0
        %1763 = vmatprep.subr.mxu0 0.0
        %1764 = vmatpush1.msra.mxu0 0.0
        %1765 = vmatprep.subr.mxu0 0.0
        %1766 = vmatpush1.msra.mxu0 0.0
        %1767 = vmatprep.subr.mxu0 0.0
        %1768 = vmatpush1.msra.mxu0 0.0
        %1769 = vmatprep.subr.mxu0 0.0
        %1770 = vmatpush1.msra.mxu0 0.0
        %1771 = vmatprep.subr.mxu0 0.0
        %1772 = vmatpush1.msra.mxu0 0.0
        %1773 = vmatprep.subr.mxu0 0.0
        %1774 = vmatpush1.msra.mxu0 0.0
        %1775 = vmatprep.subr.mxu0 0.0
        %1776 = vmatpush1.msra.mxu0 0.0
        %1777 = vmatprep.subr.mxu0 0.0
        %1778 = vmatpush1.msra.mxu0 0.0
        %1779 = vmatprep.subr.mxu0 0.0
        %1780 = vmatpush1.msra.mxu0 0.0
        %1781 = vmatprep.subr.mxu0 0.0
        %1782 = vmatpush1.msra.mxu0 0.0
        %1783 = vmatprep.subr.mxu0 0.0
        %1784 = vmatpush1.msra.mxu0 0.0
        %1785 = vmatprep.subr.mxu0 0.0
        %1786 = vmatpush1.msra.mxu0 0.0
        %1787 = vmatprep.subr.mxu0 0.0
        %1788 = vmatpush1.msra.mxu0 0.0
        %1789 = vmatprep.subr.mxu0 0.0
        %1790 = vmatpush1.msra.mxu0 0.0
        %1791 = vmatprep.subr.mxu0 0.0
        %1792 = vmatpush1.msra.mxu0 0.0
        %1793 = vmatprep.subr.mxu0 0.0
        %1794 = vmatpush1.msra.mxu0 0.0
        %1795 = vmatprep.subr.mxu0 0.0
        %1796 = vmatpush1.msra.mxu0 0.0
        %1797 = vmatprep.subr.mxu0 0.0
        %1798 = vmatpush1.msra.mxu0 0.0
        %1799 = vmatprep.subr.mxu0 0.0
        %1800 = vmatpush1.msra.mxu0 0.0
        %1801 = vmatprep.subr.mxu0 0.0
        %1802 = vmatpush1.msra.mxu0 0.0
        %1803 = vmatprep.subr.mxu0 0.0
        %1804 = vmatpush1.msra.mxu0 0.0
        %1805 = vmatprep.subr.mxu0 0.0
        %1806 = vmatpush1.msra.mxu0 0.0
        %1807 = vmatprep.subr.mxu0 0.0
        %1808 = vmatpush1.msra.mxu0 0.0
        %1809 = vmatprep.subr.mxu0 0.0
        %1810 = vmatpush1.msra.mxu0 0.0
        %1811 = vmatprep.subr.mxu0 0.0
        %1812 = vmatpush1.msra.mxu0 0.0
        %1813 = vmatprep.subr.mxu0 0.0
        %1814 = vmatpush1.msra.mxu0 0.0
        %1815 = vmatprep.subr.mxu0 0.0
        %1816 = vmatpush1.msra.mxu0 0.0
        %1817 = vmatprep.subr.mxu0 0.0
        %1818 = vmatpush1.msra.mxu0 0.0
        %1819 = vmatprep.mubr.f32.mxu0 0.0
        %1820 = vmatmul.mubr.f32.gmra.mrb[0].mxu0 %v1267
        %v1821 = vpop.f32.mrb[0].mxu0
        %v1822 = vadd.f32 %v1747, %v1821
        %v1823 = vpop.f32.mrb[0].mxu0
        %1824 = vmatprep.mubr.f32.mxu0 0.0
        %1825 = vmatmul.mubr.f32.gmra.mrb[0].mxu0 %v1270
        %v1826 = vpop.f32.mrb[0].mxu0
        %v1827 = vadd.f32 %v1752, %v1826
        %v1828 = vpop.f32.mrb[0].mxu0
        %1829 = vdwg.mxu0
        %v1831 = vsel %vm1254, %v1668, 0
        %v1834 = vsel %vm1254, %v1670, 0
        %1836 = vmatprep.subr.mxu0 0.0
        %1837 = vmatpush1.msra.mxu0 %v1673
        %1838 = vmatprep.subr.mxu0 0.0
        %1839 = vmatpush1.msra.mxu0 0.0
        %1840 = vmatprep.subr.mxu0 0.0
        %1841 = vmatpush1.msra.mxu0 0.0
        %1842 = vmatprep.subr.mxu0 0.0
        %1843 = vmatpush1.msra.mxu0 0.0
        %1844 = vmatprep.subr.mxu0 0.0
        %1845 = vmatpush1.msra.mxu0 0.0
        %1846 = vmatprep.subr.mxu0 0.0
        %1847 = vmatpush1.msra.mxu0 0.0
        %1848 = vmatprep.subr.mxu0 0.0
        %1849 = vmatpush1.msra.mxu0 0.0
        %1850 = vmatprep.subr.mxu0 0.0
        %1851 = vmatpush1.msra.mxu0 0.0
        %1852 = vmatprep.subr.mxu0 0.0
        %1853 = vmatpush1.msra.mxu0 0.0
        %1854 = vmatprep.subr.mxu0 0.0
        %1855 = vmatpush1.msra.mxu0 0.0
        %1856 = vmatprep.subr.mxu0 0.0
        %1857 = vmatpush1.msra.mxu0 0.0
        %1858 = vmatprep.subr.mxu0 0.0
        %1859 = vmatpush1.msra.mxu0 0.0
        %1860 = vmatprep.subr.mxu0 0.0
        %1861 = vmatpush1.msra.mxu0 0.0
        %1862 = vmatprep.subr.mxu0 0.0
        %1863 = vmatpush1.msra.mxu0 0.0
        %1864 = vmatprep.subr.mxu0 0.0
        %1865 = vmatpush1.msra.mxu0 0.0
        %1866 = vmatprep.subr.mxu0 0.0
        %1867 = vmatpush1.msra.mxu0 0.0
        %1868 = vmatprep.subr.mxu0 0.0
        %1869 = vmatpush1.msra.mxu0 0.0
        %1870 = vmatprep.subr.mxu0 0.0
        %1871 = vmatpush1.msra.mxu0 0.0
        %1872 = vmatprep.subr.mxu0 0.0
        %1873 = vmatpush1.msra.mxu0 0.0
        %1874 = vmatprep.subr.mxu0 0.0
        %1875 = vmatpush1.msra.mxu0 0.0
        %1876 = vmatprep.subr.mxu0 0.0
        %1877 = vmatpush1.msra.mxu0 0.0
        %1878 = vmatprep.subr.mxu0 0.0
        %1879 = vmatpush1.msra.mxu0 0.0
        %1880 = vmatprep.subr.mxu0 0.0
        %1881 = vmatpush1.msra.mxu0 0.0
        %1882 = vmatprep.subr.mxu0 0.0
        %1883 = vmatpush1.msra.mxu0 0.0
        %1884 = vmatprep.subr.mxu0 0.0
        %1885 = vmatpush1.msra.mxu0 0.0
        %1886 = vmatprep.subr.mxu0 0.0
        %1887 = vmatpush1.msra.mxu0 0.0
        %1888 = vmatprep.subr.mxu0 0.0
        %1889 = vmatpush1.msra.mxu0 0.0
        %1890 = vmatprep.subr.mxu0 0.0
        %1891 = vmatpush1.msra.mxu0 0.0
        %1892 = vmatprep.subr.mxu0 0.0
        %1893 = vmatpush1.msra.mxu0 0.0
        %1894 = vmatprep.subr.mxu0 0.0
        %1895 = vmatpush1.msra.mxu0 0.0
        %1896 = vmatprep.subr.mxu0 0.0
        %1897 = vmatpush1.msra.mxu0 0.0
        %1898 = vmatprep.subr.mxu0 0.0
        %1899 = vmatpush1.msra.mxu0 0.0
        %1900 = vmatprep.mubr.f32.mxu0 0.0
        %1901 = vmatmul.mubr.f32.gmra.mrb[0].mxu0 %v1831
        %v1902 = vpop.f32.mrb[0].mxu0
        %v1903 = vadd.f32 0.0, %v1902
        %v1904 = vpop.f32.mrb[0].mxu0
        %1905 = vmatprep.mubr.f32.mxu0 0.0
        %1906 = vmatmul.mubr.f32.gmra.mrb[0].mxu0 %v1834
        %v1907 = vpop.f32.mrb[0].mxu0
        %v1908 = vadd.f32 0.0, %v1907
        %v1909 = vpop.f32.mrb[0].mxu0
        %1910 = vdwg.mxu0
        %v1911 = vadd.f32 %v1822, %v1903
        %v1912 = vadd.f32 %v1827, %v1908
        %v1913 = vld [vmem:[%s31] sm:$0x1]
        %v1915 = vlaneseq
        %v1916 = vshrl.u32 %v1915, 7
        %v1917 = vsub.s32 0, %v1916
        %v1918 = vrot.slane %v1913, %v1917
        %v1920 = vadd.f32 %v1911, %v1918
        %v1921 = vadd.f32 %v1912, %v1918
        %vm1922 = vcmask 392192
        %1923 = vst.msk [vmem:[#allocation2] sm:$0xff] %vm1922, %v1920
        %1924 = vst.msk [vmem:[#allocation2 + $0x8] sm:$0xff] %vm1922, %v1921
        %v1925 = vld [vmem:[%s29] sm:$0xff]
        %v1926 = vld [vmem:[%s29 + $0x8] sm:$0xff]
        %v1927 = vld [vmem:[%s33] sm:$0x1]
        %v1928 = vld [vmem:[#allocation2] sm:$0x1]
        %v1930 = vsel %vm1082, 0.0, 0
        %1932 = vmatprep.subr.mxu0 0.0
        %1933 = vmatpush1.msra.mxu0 %v1925
        %1934 = vmatprep.subr.mxu0 0.0
        %1935 = vmatpush1.msra.mxu0 %v1926
        %1936 = vmatprep.subr.mxu0 0.0
        %1937 = vmatpush1.msra.mxu0 0.0
        %1938 = vmatprep.subr.mxu0 0.0
        %1939 = vmatpush1.msra.mxu0 0.0
        %1940 = vmatprep.subr.mxu0 0.0
        %1941 = vmatpush1.msra.mxu0 0.0
        %1942 = vmatprep.subr.mxu0 0.0
        %1943 = vmatpush1.msra.mxu0 0.0
        %1944 = vmatprep.subr.mxu0 0.0
        %1945 = vmatpush1.msra.mxu0 0.0
        %1946 = vmatprep.subr.mxu0 0.0
        %1947 = vmatpush1.msra.mxu0 0.0
        %1948 = vmatprep.subr.mxu0 0.0
        %1949 = vmatpush1.msra.mxu0 0.0
        %1950 = vmatprep.subr.mxu0 0.0
        %1951 = vmatpush1.msra.mxu0 0.0
        %1952 = vmatprep.subr.mxu0 0.0
        %1953 = vmatpush1.msra.mxu0 0.0
        %1954 = vmatprep.subr.mxu0 0.0
        %1955 = vmatpush1.msra.mxu0 0.0
        %1956 = vmatprep.subr.mxu0 0.0
        %1957 = vmatpush1.msra.mxu0 0.0
        %1958 = vmatprep.subr.mxu0 0.0
        %1959 = vmatpush1.msra.mxu0 0.0
        %1960 = vmatprep.subr.mxu0 0.0
        %1961 = vmatpush1.msra.mxu0 0.0
        %1962 = vmatprep.subr.mxu0 0.0
        %1963 = vmatpush1.msra.mxu0 0.0
        %1964 = vmatprep.subr.mxu0 0.0
        %1965 = vmatpush1.msra.mxu0 0.0
        %1966 = vmatprep.subr.mxu0 0.0
        %1967 = vmatpush1.msra.mxu0 0.0
        %1968 = vmatprep.subr.mxu0 0.0
        %1969 = vmatpush1.msra.mxu0 0.0
        %1970 = vmatprep.subr.mxu0 0.0
        %1971 = vmatpush1.msra.mxu0 0.0
        %1972 = vmatprep.subr.mxu0 0.0
        %1973 = vmatpush1.msra.mxu0 0.0
        %1974 = vmatprep.subr.mxu0 0.0
        %1975 = vmatpush1.msra.mxu0 0.0
        %1976 = vmatprep.subr.mxu0 0.0
        %1977 = vmatpush1.msra.mxu0 0.0
        %1978 = vmatprep.subr.mxu0 0.0
        %1979 = vmatpush1.msra.mxu0 0.0
        %1980 = vmatprep.subr.mxu0 0.0
        %1981 = vmatpush1.msra.mxu0 0.0
        %1982 = vmatprep.subr.mxu0 0.0
        %1983 = vmatpush1.msra.mxu0 0.0
        %1984 = vmatprep.subr.mxu0 0.0
        %1985 = vmatpush1.msra.mxu0 0.0
        %1986 = vmatprep.subr.mxu0 0.0
        %1987 = vmatpush1.msra.mxu0 0.0
        %1988 = vmatprep.subr.mxu0 0.0
        %1989 = vmatpush1.msra.mxu0 0.0
        %1990 = vmatprep.subr.mxu0 0.0
        %1991 = vmatpush1.msra.mxu0 0.0
        %1992 = vmatprep.subr.mxu0 0.0
        %1993 = vmatpush1.msra.mxu0 0.0
        %1994 = vmatprep.subr.mxu0 0.0
        %1995 = vmatpush1.msra.mxu0 0.0
        %1996 = vmatprep.mubr.f32.mxu0 0.0
        %1997 = vmatmul.mubr.f32.gmra.mrb[0].mxu0 %v1930
        %v1998 = vpop.f32.mrb[0].mxu0
        %v1999 = vadd.f32 %v1927, %v1998
        %v2000 = vpop.f32.mrb[0].mxu0
        %2001 = vdwg.mxu0
        %v2002 = vadd.f32 %v1928, %v1999
        %v2003 = vxor.u32 %v2002, 2147483648
        %v2004 = vmul.f32 %v2003, 1.442695
        %v2005 = vpow.pop %v2004
        %v2006 = vadd.f32 %v2005, 1.0
        %v2007 = vrcp.pop %v2006
        %v2008 = vmul.f32 1.0, %v2007
        %2010 = vrot.lane.b32.xlu0 %v1999, 96
        %v2011 = vpop.permute.xlu0 %2010
        %v2013 = vmul.f32 %v2008, %v2011
        %2015 = vrot.lane.b32.xlu0 %v2013, 32
        %v2016 = vpop.permute.xlu0 %2015
        %v2018 = vadd.f32 %v1928, %v2016
        %v2019 = vtanh.pop %v2018
        %v2020 = vsub.f32 1.0, %v2008
        %2022 = vrot.lane.b32.xlu0 %v2019, 112
        %v2023 = vpop.permute.xlu0 %2022
        %v2025 = vmul.f32 %v2020, %v2023
        %v2026 = vmul.f32 %v2008, 0.0
        %v2027 = vadd.f32 %v2025, %v2026
        %v2028 = vld [vmem:[#allocation2 + $0x1] sm:$0x1]
        %2030 = vrot.lane.b32.xlu0 %v2027, 112
        %v2031 = vpop.permute.xlu0 %2030
        %v2032 = vsel %vm1082, %v2031, 0
        %2034 = vmatprep.subr.mxu0 0.0
        %2035 = vmatpush1.msra.mxu0 %v1925
        %2036 = vmatprep.subr.mxu0 0.0
        %2037 = vmatpush1.msra.mxu0 %v1926
        %2038 = vmatprep.subr.mxu0 0.0
        %2039 = vmatpush1.msra.mxu0 0.0
        %2040 = vmatprep.subr.mxu0 0.0
        %2041 = vmatpush1.msra.mxu0 0.0
        %2042 = vmatprep.subr.mxu0 0.0
        %2043 = vmatpush1.msra.mxu0 0.0
        %2044 = vmatprep.subr.mxu0 0.0
        %2045 = vmatpush1.msra.mxu0 0.0
        %2046 = vmatprep.subr.mxu0 0.0
        %2047 = vmatpush1.msra.mxu0 0.0
        %2048 = vmatprep.subr.mxu0 0.0
        %2049 = vmatpush1.msra.mxu0 0.0
        %2050 = vmatprep.subr.mxu0 0.0
        %2051 = vmatpush1.msra.mxu0 0.0
        %2052 = vmatprep.subr.mxu0 0.0
        %2053 = vmatpush1.msra.mxu0 0.0
        %2054 = vmatprep.subr.mxu0 0.0
        %2055 = vmatpush1.msra.mxu0 0.0
        %2056 = vmatprep.subr.mxu0 0.0
        %2057 = vmatpush1.msra.mxu0 0.0
        %2058 = vmatprep.subr.mxu0 0.0
        %2059 = vmatpush1.msra.mxu0 0.0
        %2060 = vmatprep.subr.mxu0 0.0
        %2061 = vmatpush1.msra.mxu0 0.0
        %2062 = vmatprep.subr.mxu0 0.0
        %2063 = vmatpush1.msra.mxu0 0.0
        %2064 = vmatprep.subr.mxu0 0.0
        %2065 = vmatpush1.msra.mxu0 0.0
        %2066 = vmatprep.subr.mxu0 0.0
        %2067 = vmatpush1.msra.mxu0 0.0
        %2068 = vmatprep.subr.mxu0 0.0
        %2069 = vmatpush1.msra.mxu0 0.0
        %2070 = vmatprep.subr.mxu0 0.0
        %2071 = vmatpush1.msra.mxu0 0.0
        %2072 = vmatprep.subr.mxu0 0.0
        %2073 = vmatpush1.msra.mxu0 0.0
        %2074 = vmatprep.subr.mxu0 0.0
        %2075 = vmatpush1.msra.mxu0 0.0
        %2076 = vmatprep.subr.mxu0 0.0
        %2077 = vmatpush1.msra.mxu0 0.0
        %2078 = vmatprep.subr.mxu0 0.0
        %2079 = vmatpush1.msra.mxu0 0.0
        %2080 = vmatprep.subr.mxu0 0.0
        %2081 = vmatpush1.msra.mxu0 0.0
        %2082 = vmatprep.subr.mxu0 0.0
        %2083 = vmatpush1.msra.mxu0 0.0
        %2084 = vmatprep.subr.mxu0 0.0
        %2085 = vmatpush1.msra.mxu0 0.0
        %2086 = vmatprep.subr.mxu0 0.0
        %2087 = vmatpush1.msra.mxu0 0.0
        %2088 = vmatprep.subr.mxu0 0.0
        %2089 = vmatpush1.msra.mxu0 0.0
        %2090 = vmatprep.subr.mxu0 0.0
        %2091 = vmatpush1.msra.mxu0 0.0
        %2092 = vmatprep.subr.mxu0 0.0
        %2093 = vmatpush1.msra.mxu0 0.0
        %2094 = vmatprep.subr.mxu0 0.0
        %2095 = vmatpush1.msra.mxu0 0.0
        %2096 = vmatprep.subr.mxu0 0.0
        %2097 = vmatpush1.msra.mxu0 0.0
        %2098 = vmatprep.mubr.f32.mxu0 0.0
        %2099 = vmatmul.mubr.f32.gmra.mrb[0].mxu0 %v2032
        %v2100 = vpop.f32.mrb[0].mxu0
        %v2101 = vadd.f32 %v1927, %v2100
        %v2102 = vpop.f32.mrb[0].mxu0
        %2103 = vdwg.mxu0
        %v2104 = vadd.f32 %v2028, %v2101
        %v2105 = vxor.u32 %v2104, 2147483648
        %v2106 = vmul.f32 %v2105, 1.442695
        %v2107 = vpow.pop %v2106
        %v2108 = vadd.f32 %v2107, 1.0
        %v2109 = vrcp.pop %v2108
        %v2110 = vmul.f32 1.0, %v2109
        %2112 = vrot.lane.b32.xlu0 %v2101, 96
        %v2113 = vpop.permute.xlu0 %2112
        %v2115 = vmul.f32 %v2110, %v2113
        %2117 = vrot.lane.b32.xlu0 %v2115, 32
        %v2118 = vpop.permute.xlu0 %2117
        %v2120 = vadd.f32 %v2028, %v2118
        %v2121 = vtanh.pop %v2120
        %v2122 = vsub.f32 1.0, %v2110
        %2124 = vrot.lane.b32.xlu0 %v2121, 112
        %v2125 = vpop.permute.xlu0 %2124
        %v2127 = vmul.f32 %v2122, %v2125
        %v2128 = vmul.f32 %v2110, %v2027
        %v2129 = vadd.f32 %v2127, %v2128
        %v2130 = vld [vmem:[#allocation2 + $0x2] sm:$0x1]
        %2132 = vrot.lane.b32.xlu0 %v2129, 112
        %v2133 = vpop.permute.xlu0 %2132
        %v2134 = vsel %vm1082, %v2133, 0
        %2136 = vmatprep.subr.mxu0 0.0
        %2137 = vmatpush1.msra.mxu0 %v1925
        %2138 = vmatprep.subr.mxu0 0.0
        %2139 = vmatpush1.msra.mxu0 %v1926
        %2140 = vmatprep.subr.mxu0 0.0
        %2141 = vmatpush1.msra.mxu0 0.0
        %2142 = vmatprep.subr.mxu0 0.0
        %2143 = vmatpush1.msra.mxu0 0.0
        %2144 = vmatprep.subr.mxu0 0.0
        %2145 = vmatpush1.msra.mxu0 0.0
        %2146 = vmatprep.subr.mxu0 0.0
        %2147 = vmatpush1.msra.mxu0 0.0
        %2148 = vmatprep.subr.mxu0 0.0
        %2149 = vmatpush1.msra.mxu0 0.0
        %2150 = vmatprep.subr.mxu0 0.0
        %2151 = vmatpush1.msra.mxu0 0.0
        %2152 = vmatprep.subr.mxu0 0.0
        %2153 = vmatpush1.msra.mxu0 0.0
        %2154 = vmatprep.subr.mxu0 0.0
        %2155 = vmatpush1.msra.mxu0 0.0
        %2156 = vmatprep.subr.mxu0 0.0
        %2157 = vmatpush1.msra.mxu0 0.0
        %2158 = vmatprep.subr.mxu0 0.0
        %2159 = vmatpush1.msra.mxu0 0.0
        %2160 = vmatprep.subr.mxu0 0.0
        %2161 = vmatpush1.msra.mxu0 0.0
        %2162 = vmatprep.subr.mxu0 0.0
        %2163 = vmatpush1.msra.mxu0 0.0
        %2164 = vmatprep.subr.mxu0 0.0
        %2165 = vmatpush1.msra.mxu0 0.0
        %2166 = vmatprep.subr.mxu0 0.0
        %2167 = vmatpush1.msra.mxu0 0.0
        %2168 = vmatprep.subr.mxu0 0.0
        %2169 = vmatpush1.msra.mxu0 0.0
        %2170 = vmatprep.subr.mxu0 0.0
        %2171 = vmatpush1.msra.mxu0 0.0
        %2172 = vmatprep.subr.mxu0 0.0
        %2173 = vmatpush1.msra.mxu0 0.0
        %2174 = vmatprep.subr.mxu0 0.0
        %2175 = vmatpush1.msra.mxu0 0.0
        %2176 = vmatprep.subr.mxu0 0.0
        %2177 = vmatpush1.msra.mxu0 0.0
        %2178 = vmatprep.subr.mxu0 0.0
        %2179 = vmatpush1.msra.mxu0 0.0
        %2180 = vmatprep.subr.mxu0 0.0
        %2181 = vmatpush1.msra.mxu0 0.0
        %2182 = vmatprep.subr.mxu0 0.0
        %2183 = vmatpush1.msra.mxu0 0.0
        %2184 = vmatprep.subr.mxu0 0.0
        %2185 = vmatpush1.msra.mxu0 0.0
        %2186 = vmatprep.subr.mxu0 0.0
        %2187 = vmatpush1.msra.mxu0 0.0
        %2188 = vmatprep.subr.mxu0 0.0
        %2189 = vmatpush1.msra.mxu0 0.0
        %2190 = vmatprep.subr.mxu0 0.0
        %2191 = vmatpush1.msra.mxu0 0.0
        %2192 = vmatprep.subr.mxu0 0.0
        %2193 = vmatpush1.msra.mxu0 0.0
        %2194 = vmatprep.subr.mxu0 0.0
        %2195 = vmatpush1.msra.mxu0 0.0
        %2196 = vmatprep.subr.mxu0 0.0
        %2197 = vmatpush1.msra.mxu0 0.0
        %2198 = vmatprep.subr.mxu0 0.0
        %2199 = vmatpush1.msra.mxu0 0.0
        %2200 = vmatprep.mubr.f32.mxu0 0.0
        %2201 = vmatmul.mubr.f32.gmra.mrb[0].mxu0 %v2134
        %v2202 = vpop.f32.mrb[0].mxu0
        %v2203 = vadd.f32 %v1927, %v2202
        %v2204 = vpop.f32.mrb[0].mxu0
        %2205 = vdwg.mxu0
        %v2206 = vadd.f32 %v2130, %v2203
        %v2207 = vxor.u32 %v2206, 2147483648
        %v2208 = vmul.f32 %v2207, 1.442695
        %v2209 = vpow.pop %v2208
        %v2210 = vadd.f32 %v2209, 1.0
        %v2211 = vrcp.pop %v2210
        %v2212 = vmul.f32 1.0, %v2211
        %2214 = vrot.lane.b32.xlu0 %v2203, 96
        %v2215 = vpop.permute.xlu0 %2214
        %v2217 = vmul.f32 %v2212, %v2215
        %2219 = vrot.lane.b32.xlu0 %v2217, 32
        %v2220 = vpop.permute.xlu0 %2219
        %v2222 = vadd.f32 %v2130, %v2220
        %v2223 = vtanh.pop %v2222
        %v2224 = vsub.f32 1.0, %v2212
        %2226 = vrot.lane.b32.xlu0 %v2223, 112
        %v2227 = vpop.permute.xlu0 %2226
        %v2229 = vmul.f32 %v2224, %v2227
        %v2230 = vmul.f32 %v2212, %v2129
        %v2231 = vadd.f32 %v2229, %v2230
        %v2232 = vld [vmem:[#allocation2 + $0x3] sm:$0x1]
        %2234 = vrot.lane.b32.xlu0 %v2231, 112
        %v2235 = vpop.permute.xlu0 %2234
        %v2236 = vsel %vm1082, %v2235, 0
        %2238 = vmatprep.subr.mxu0 0.0
        %2239 = vmatpush1.msra.mxu0 %v1925
        %2240 = vmatprep.subr.mxu0 0.0
        %2241 = vmatpush1.msra.mxu0 %v1926
        %2242 = vmatprep.subr.mxu0 0.0
        %2243 = vmatpush1.msra.mxu0 0.0
        %2244 = vmatprep.subr.mxu0 0.0
        %2245 = vmatpush1.msra.mxu0 0.0
        %2246 = vmatprep.subr.mxu0 0.0
        %2247 = vmatpush1.msra.mxu0 0.0
        %2248 = vmatprep.subr.mxu0 0.0
        %2249 = vmatpush1.msra.mxu0 0.0
        %2250 = vmatprep.subr.mxu0 0.0
        %2251 = vmatpush1.msra.mxu0 0.0
        %2252 = vmatprep.subr.mxu0 0.0
        %2253 = vmatpush1.msra.mxu0 0.0
        %2254 = vmatprep.subr.mxu0 0.0
        %2255 = vmatpush1.msra.mxu0 0.0
        %2256 = vmatprep.subr.mxu0 0.0
        %2257 = vmatpush1.msra.mxu0 0.0
        %2258 = vmatprep.subr.mxu0 0.0
        %2259 = vmatpush1.msra.mxu0 0.0
        %2260 = vmatprep.subr.mxu0 0.0
        %2261 = vmatpush1.msra.mxu0 0.0
        %2262 = vmatprep.subr.mxu0 0.0
        %2263 = vmatpush1.msra.mxu0 0.0
        %2264 = vmatprep.subr.mxu0 0.0
        %2265 = vmatpush1.msra.mxu0 0.0
        %2266 = vmatprep.subr.mxu0 0.0
        %2267 = vmatpush1.msra.mxu0 0.0
        %2268 = vmatprep.subr.mxu0 0.0
        %2269 = vmatpush1.msra.mxu0 0.0
        %2270 = vmatprep.subr.mxu0 0.0
        %2271 = vmatpush1.msra.mxu0 0.0
        %2272 = vmatprep.subr.mxu0 0.0
        %2273 = vmatpush1.msra.mxu0 0.0
        %2274 = vmatprep.subr.mxu0 0.0
        %2275 = vmatpush1.msra.mxu0 0.0
        %2276 = vmatprep.subr.mxu0 0.0
        %2277 = vmatpush1.msra.mxu0 0.0
        %2278 = vmatprep.subr.mxu0 0.0
        %2279 = vmatpush1.msra.mxu0 0.0
        %2280 = vmatprep.subr.mxu0 0.0
        %2281 = vmatpush1.msra.mxu0 0.0
        %2282 = vmatprep.subr.mxu0 0.0
        %2283 = vmatpush1.msra.mxu0 0.0
        %2284 = vmatprep.subr.mxu0 0.0
        %2285 = vmatpush1.msra.mxu0 0.0
        %2286 = vmatprep.subr.mxu0 0.0
        %2287 = vmatpush1.msra.mxu0 0.0
        %2288 = vmatprep.subr.mxu0 0.0
        %2289 = vmatpush1.msra.mxu0 0.0
        %2290 = vmatprep.subr.mxu0 0.0
        %2291 = vmatpush1.msra.mxu0 0.0
        %2292 = vmatprep.subr.mxu0 0.0
        %2293 = vmatpush1.msra.mxu0 0.0
        %2294 = vmatprep.subr.mxu0 0.0
        %2295 = vmatpush1.msra.mxu0 0.0
        %2296 = vmatprep.subr.mxu0 0.0
        %2297 = vmatpush1.msra.mxu0 0.0
        %2298 = vmatprep.subr.mxu0 0.0
        %2299 = vmatpush1.msra.mxu0 0.0
        %2300 = vmatprep.subr.mxu0 0.0
        %2301 = vmatpush1.msra.mxu0 0.0
        %2302 = vmatprep.mubr.f32.mxu0 0.0
        %2303 = vmatmul.mubr.f32.gmra.mrb[0].mxu0 %v2236
        %v2304 = vpop.f32.mrb[0].mxu0
        %v2305 = vadd.f32 %v1927, %v2304
        %v2306 = vpop.f32.mrb[0].mxu0
        %2307 = vdwg.mxu0
        %v2308 = vadd.f32 %v2232, %v2305
        %v2309 = vxor.u32 %v2308, 2147483648
        %v2310 = vmul.f32 %v2309, 1.442695
        %v2311 = vpow.pop %v2310
        %v2312 = vadd.f32 %v2311, 1.0
        %v2313 = vrcp.pop %v2312
        %v2314 = vmul.f32 1.0, %v2313
        %2316 = vrot.lane.b32.xlu0 %v2305, 96
        %v2317 = vpop.permute.xlu0 %2316
        %v2319 = vmul.f32 %v2314, %v2317
        %2321 = vrot.lane.b32.xlu0 %v2319, 32
        %v2322 = vpop.permute.xlu0 %2321
        %v2324 = vadd.f32 %v2232, %v2322
        %v2325 = vtanh.pop %v2324
        %v2326 = vsub.f32 1.0, %v2314
        %2328 = vrot.lane.b32.xlu0 %v2325, 112
        %v2329 = vpop.permute.xlu0 %2328
        %v2331 = vmul.f32 %v2326, %v2329
        %v2332 = vmul.f32 %v2314, %v2231
        %v2333 = vadd.f32 %v2331, %v2332
        %v2334 = vld [vmem:[#allocation2 + $0x4] sm:$0x1]
        %2336 = vrot.lane.b32.xlu0 %v2333, 112
        %v2337 = vpop.permute.xlu0 %2336
        %v2338 = vsel %vm1082, %v2337, 0
        %2340 = vmatprep.subr.mxu0 0.0
        %2341 = vmatpush1.msra.mxu0 %v1925
        %2342 = vmatprep.subr.mxu0 0.0
        %2343 = vmatpush1.msra.mxu0 %v1926
        %2344 = vmatprep.subr.mxu0 0.0
        %2345 = vmatpush1.msra.mxu0 0.0
        %2346 = vmatprep.subr.mxu0 0.0
        %2347 = vmatpush1.msra.mxu0 0.0
        %2348 = vmatprep.subr.mxu0 0.0
        %2349 = vmatpush1.msra.mxu0 0.0
        %2350 = vmatprep.subr.mxu0 0.0
        %2351 = vmatpush1.msra.mxu0 0.0
        %2352 = vmatprep.subr.mxu0 0.0
        %2353 = vmatpush1.msra.mxu0 0.0
        %2354 = vmatprep.subr.mxu0 0.0
        %2355 = vmatpush1.msra.mxu0 0.0
        %2356 = vmatprep.subr.mxu0 0.0
        %2357 = vmatpush1.msra.mxu0 0.0
        %2358 = vmatprep.subr.mxu0 0.0
        %2359 = vmatpush1.msra.mxu0 0.0
        %2360 = vmatprep.subr.mxu0 0.0
        %2361 = vmatpush1.msra.mxu0 0.0
        %2362 = vmatprep.subr.mxu0 0.0
        %2363 = vmatpush1.msra.mxu0 0.0
        %2364 = vmatprep.subr.mxu0 0.0
        %2365 = vmatpush1.msra.mxu0 0.0
        %2366 = vmatprep.subr.mxu0 0.0
        %2367 = vmatpush1.msra.mxu0 0.0
        %2368 = vmatprep.subr.mxu0 0.0
        %2369 = vmatpush1.msra.mxu0 0.0
        %2370 = vmatprep.subr.mxu0 0.0
        %2371 = vmatpush1.msra.mxu0 0.0
        %2372 = vmatprep.subr.mxu0 0.0
        %2373 = vmatpush1.msra.mxu0 0.0
        %2374 = vmatprep.subr.mxu0 0.0
        %2375 = vmatpush1.msra.mxu0 0.0
        %2376 = vmatprep.subr.mxu0 0.0
        %2377 = vmatpush1.msra.mxu0 0.0
        %2378 = vmatprep.subr.mxu0 0.0
        %2379 = vmatpush1.msra.mxu0 0.0
        %2380 = vmatprep.subr.mxu0 0.0
        %2381 = vmatpush1.msra.mxu0 0.0
        %2382 = vmatprep.subr.mxu0 0.0
        %2383 = vmatpush1.msra.mxu0 0.0
        %2384 = vmatprep.subr.mxu0 0.0
        %2385 = vmatpush1.msra.mxu0 0.0
        %2386 = vmatprep.subr.mxu0 0.0
        %2387 = vmatpush1.msra.mxu0 0.0
        %2388 = vmatprep.subr.mxu0 0.0
        %2389 = vmatpush1.msra.mxu0 0.0
        %2390 = vmatprep.subr.mxu0 0.0
        %2391 = vmatpush1.msra.mxu0 0.0
        %2392 = vmatprep.subr.mxu0 0.0
        %2393 = vmatpush1.msra.mxu0 0.0
        %2394 = vmatprep.subr.mxu0 0.0
        %2395 = vmatpush1.msra.mxu0 0.0
        %2396 = vmatprep.subr.mxu0 0.0
        %2397 = vmatpush1.msra.mxu0 0.0
        %2398 = vmatprep.subr.mxu0 0.0
        %2399 = vmatpush1.msra.mxu0 0.0
        %2400 = vmatprep.subr.mxu0 0.0
        %2401 = vmatpush1.msra.mxu0 0.0
        %2402 = vmatprep.subr.mxu0 0.0
        %2403 = vmatpush1.msra.mxu0 0.0
        %2404 = vmatprep.mubr.f32.mxu0 0.0
        %2405 = vmatmul.mubr.f32.gmra.mrb[0].mxu0 %v2338
        %v2406 = vpop.f32.mrb[0].mxu0
        %v2407 = vadd.f32 %v1927, %v2406
        %v2408 = vpop.f32.mrb[0].mxu0
        %2409 = vdwg.mxu0
        %v2410 = vadd.f32 %v2334, %v2407
        %v2411 = vxor.u32 %v2410, 2147483648
        %v2412 = vmul.f32 %v2411, 1.442695
        %v2413 = vpow.pop %v2412
        %v2414 = vadd.f32 %v2413, 1.0
        %v2415 = vrcp.pop %v2414
        %v2416 = vmul.f32 1.0, %v2415
        %2418 = vrot.lane.b32.xlu0 %v2407, 96
        %v2419 = vpop.permute.xlu0 %2418
        %v2421 = vmul.f32 %v2416, %v2419
        %2423 = vrot.lane.b32.xlu0 %v2421, 32
        %v2424 = vpop.permute.xlu0 %2423
        %v2426 = vadd.f32 %v2334, %v2424
        %v2427 = vtanh.pop %v2426
        %v2428 = vsub.f32 1.0, %v2416
        %2430 = vrot.lane.b32.xlu0 %v2427, 112
        %v2431 = vpop.permute.xlu0 %2430
        %v2433 = vmul.f32 %v2428, %v2431
        %v2434 = vmul.f32 %v2416, %v2333
        %v2435 = vadd.f32 %v2433, %v2434
        %v2436 = vld [vmem:[#allocation2 + $0x5] sm:$0x1]
        %2438 = vrot.lane.b32.xlu0 %v2435, 112
        %v2439 = vpop.permute.xlu0 %2438
        %v2440 = vsel %vm1082, %v2439, 0
        %2442 = vmatprep.subr.mxu0 0.0
        %2443 = vmatpush1.msra.mxu0 %v1925
        %2444 = vmatprep.subr.mxu0 0.0
        %2445 = vmatpush1.msra.mxu0 %v1926
        %2446 = vmatprep.subr.mxu0 0.0
        %2447 = vmatpush1.msra.mxu0 0.0
        %2448 = vmatprep.subr.mxu0 0.0
        %2449 = vmatpush1.msra.mxu0 0.0
        %2450 = vmatprep.subr.mxu0 0.0
        %2451 = vmatpush1.msra.mxu0 0.0
        %2452 = vmatprep.subr.mxu0 0.0
        %2453 = vmatpush1.msra.mxu0 0.0
        %2454 = vmatprep.subr.mxu0 0.0
        %2455 = vmatpush1.msra.mxu0 0.0
        %2456 = vmatprep.subr.mxu0 0.0
        %2457 = vmatpush1.msra.mxu0 0.0
        %2458 = vmatprep.subr.mxu0 0.0
        %2459 = vmatpush1.msra.mxu0 0.0
        %2460 = vmatprep.subr.mxu0 0.0
        %2461 = vmatpush1.msra.mxu0 0.0
        %2462 = vmatprep.subr.mxu0 0.0
        %2463 = vmatpush1.msra.mxu0 0.0
        %2464 = vmatprep.subr.mxu0 0.0
        %2465 = vmatpush1.msra.mxu0 0.0
        %2466 = vmatprep.subr.mxu0 0.0
        %2467 = vmatpush1.msra.mxu0 0.0
        %2468 = vmatprep.subr.mxu0 0.0
        %2469 = vmatpush1.msra.mxu0 0.0
        %2470 = vmatprep.subr.mxu0 0.0
        %2471 = vmatpush1.msra.mxu0 0.0
        %2472 = vmatprep.subr.mxu0 0.0
        %2473 = vmatpush1.msra.mxu0 0.0
        %2474 = vmatprep.subr.mxu0 0.0
        %2475 = vmatpush1.msra.mxu0 0.0
        %2476 = vmatprep.subr.mxu0 0.0
        %2477 = vmatpush1.msra.mxu0 0.0
        %2478 = vmatprep.subr.mxu0 0.0
        %2479 = vmatpush1.msra.mxu0 0.0
        %2480 = vmatprep.subr.mxu0 0.0
        %2481 = vmatpush1.msra.mxu0 0.0
        %2482 = vmatprep.subr.mxu0 0.0
        %2483 = vmatpush1.msra.mxu0 0.0
        %2484 = vmatprep.subr.mxu0 0.0
        %2485 = vmatpush1.msra.mxu0 0.0
        %2486 = vmatprep.subr.mxu0 0.0
        %2487 = vmatpush1.msra.mxu0 0.0
        %2488 = vmatprep.subr.mxu0 0.0
        %2489 = vmatpush1.msra.mxu0 0.0
        %2490 = vmatprep.subr.mxu0 0.0
        %2491 = vmatpush1.msra.mxu0 0.0
        %2492 = vmatprep.subr.mxu0 0.0
        %2493 = vmatpush1.msra.mxu0 0.0
        %2494 = vmatprep.subr.mxu0 0.0
        %2495 = vmatpush1.msra.mxu0 0.0
        %2496 = vmatprep.subr.mxu0 0.0
        %2497 = vmatpush1.msra.mxu0 0.0
        %2498 = vmatprep.subr.mxu0 0.0
        %2499 = vmatpush1.msra.mxu0 0.0
        %2500 = vmatprep.subr.mxu0 0.0
        %2501 = vmatpush1.msra.mxu0 0.0
        %2502 = vmatprep.subr.mxu0 0.0
        %2503 = vmatpush1.msra.mxu0 0.0
        %2504 = vmatprep.subr.mxu0 0.0
        %2505 = vmatpush1.msra.mxu0 0.0
        %2506 = vmatprep.mubr.f32.mxu0 0.0
        %2507 = vmatmul.mubr.f32.gmra.mrb[0].mxu0 %v2440
        %v2508 = vpop.f32.mrb[0].mxu0
        %v2509 = vadd.f32 %v1927, %v2508
        %v2510 = vpop.f32.mrb[0].mxu0
        %2511 = vdwg.mxu0
        %v2512 = vadd.f32 %v2436, %v2509
        %v2513 = vxor.u32 %v2512, 2147483648
        %v2514 = vmul.f32 %v2513, 1.442695
        %v2515 = vpow.pop %v2514
        %v2516 = vadd.f32 %v2515, 1.0
        %v2517 = vrcp.pop %v2516
        %v2518 = vmul.f32 1.0, %v2517
        %2520 = vrot.lane.b32.xlu0 %v2509, 96
        %v2521 = vpop.permute.xlu0 %2520
        %v2523 = vmul.f32 %v2518, %v2521
        %2525 = vrot.lane.b32.xlu0 %v2523, 32
        %v2526 = vpop.permute.xlu0 %2525
        %v2528 = vadd.f32 %v2436, %v2526
        %v2529 = vtanh.pop %v2528
        %v2530 = vsub.f32 1.0, %v2518
        %2532 = vrot.lane.b32.xlu0 %v2529, 112
        %v2533 = vpop.permute.xlu0 %2532
        %v2535 = vmul.f32 %v2530, %v2533
        %v2536 = vmul.f32 %v2518, %v2435
        %v2537 = vadd.f32 %v2535, %v2536
        %v2538 = vld [vmem:[#allocation2 + $0x6] sm:$0x1]
        %2540 = vrot.lane.b32.xlu0 %v2537, 112
        %v2541 = vpop.permute.xlu0 %2540
        %v2542 = vsel %vm1082, %v2541, 0
        %2544 = vmatprep.subr.mxu0 0.0
        %2545 = vmatpush1.msra.mxu0 %v1925
        %2546 = vmatprep.subr.mxu0 0.0
        %2547 = vmatpush1.msra.mxu0 %v1926
        %2548 = vmatprep.subr.mxu0 0.0
        %2549 = vmatpush1.msra.mxu0 0.0
        %2550 = vmatprep.subr.mxu0 0.0
        %2551 = vmatpush1.msra.mxu0 0.0
        %2552 = vmatprep.subr.mxu0 0.0
        %2553 = vmatpush1.msra.mxu0 0.0
        %2554 = vmatprep.subr.mxu0 0.0
        %2555 = vmatpush1.msra.mxu0 0.0
        %2556 = vmatprep.subr.mxu0 0.0
        %2557 = vmatpush1.msra.mxu0 0.0
        %2558 = vmatprep.subr.mxu0 0.0
        %2559 = vmatpush1.msra.mxu0 0.0
        %2560 = vmatprep.subr.mxu0 0.0
        %2561 = vmatpush1.msra.mxu0 0.0
        %2562 = vmatprep.subr.mxu0 0.0
        %2563 = vmatpush1.msra.mxu0 0.0
        %2564 = vmatprep.subr.mxu0 0.0
        %2565 = vmatpush1.msra.mxu0 0.0
        %2566 = vmatprep.subr.mxu0 0.0
        %2567 = vmatpush1.msra.mxu0 0.0
        %2568 = vmatprep.subr.mxu0 0.0
        %2569 = vmatpush1.msra.mxu0 0.0
        %2570 = vmatprep.subr.mxu0 0.0
        %2571 = vmatpush1.msra.mxu0 0.0
        %2572 = vmatprep.subr.mxu0 0.0
        %2573 = vmatpush1.msra.mxu0 0.0
        %2574 = vmatprep.subr.mxu0 0.0
        %2575 = vmatpush1.msra.mxu0 0.0
        %2576 = vmatprep.subr.mxu0 0.0
        %2577 = vmatpush1.msra.mxu0 0.0
        %2578 = vmatprep.subr.mxu0 0.0
        %2579 = vmatpush1.msra.mxu0 0.0
        %2580 = vmatprep.subr.mxu0 0.0
        %2581 = vmatpush1.msra.mxu0 0.0
        %2582 = vmatprep.subr.mxu0 0.0
        %2583 = vmatpush1.msra.mxu0 0.0
        %2584 = vmatprep.subr.mxu0 0.0
        %2585 = vmatpush1.msra.mxu0 0.0
        %2586 = vmatprep.subr.mxu0 0.0
        %2587 = vmatpush1.msra.mxu0 0.0
        %2588 = vmatprep.subr.mxu0 0.0
        %2589 = vmatpush1.msra.mxu0 0.0
        %2590 = vmatprep.subr.mxu0 0.0
        %2591 = vmatpush1.msra.mxu0 0.0
        %2592 = vmatprep.subr.mxu0 0.0
        %2593 = vmatpush1.msra.mxu0 0.0
        %2594 = vmatprep.subr.mxu0 0.0
        %2595 = vmatpush1.msra.mxu0 0.0
        %2596 = vmatprep.subr.mxu0 0.0
        %2597 = vmatpush1.msra.mxu0 0.0
        %2598 = vmatprep.subr.mxu0 0.0
        %2599 = vmatpush1.msra.mxu0 0.0
        %2600 = vmatprep.subr.mxu0 0.0
        %2601 = vmatpush1.msra.mxu0 0.0
        %2602 = vmatprep.subr.mxu0 0.0
        %2603 = vmatpush1.msra.mxu0 0.0
        %2604 = vmatprep.subr.mxu0 0.0
        %2605 = vmatpush1.msra.mxu0 0.0
        %2606 = vmatprep.subr.mxu0 0.0
        %2607 = vmatpush1.msra.mxu0 0.0
        %2608 = vmatprep.mubr.f32.mxu0 0.0
        %2609 = vmatmul.mubr.f32.gmra.mrb[0].mxu0 %v2542
        %v2610 = vpop.f32.mrb[0].mxu0
        %v2611 = vadd.f32 %v1927, %v2610
        %v2612 = vpop.f32.mrb[0].mxu0
        %2613 = vdwg.mxu0
        %v2614 = vadd.f32 %v2538, %v2611
        %v2615 = vxor.u32 %v2614, 2147483648
        %v2616 = vmul.f32 %v2615, 1.442695
        %v2617 = vpow.pop %v2616
        %v2618 = vadd.f32 %v2617, 1.0
        %v2619 = vrcp.pop %v2618
        %v2620 = vmul.f32 1.0, %v2619
        %2622 = vrot.lane.b32.xlu0 %v2611, 96
        %v2623 = vpop.permute.xlu0 %2622
        %v2625 = vmul.f32 %v2620, %v2623
        %2627 = vrot.lane.b32.xlu0 %v2625, 32
        %v2628 = vpop.permute.xlu0 %2627
        %v2630 = vadd.f32 %v2538, %v2628
        %v2631 = vtanh.pop %v2630
        %v2632 = vsub.f32 1.0, %v2620
        %2634 = vrot.lane.b32.xlu0 %v2631, 112
        %v2635 = vpop.permute.xlu0 %2634
        %v2637 = vmul.f32 %v2632, %v2635
        %v2638 = vmul.f32 %v2620, %v2537
        %v2639 = vadd.f32 %v2637, %v2638
        %v2640 = vld [vmem:[#allocation2 + $0x7] sm:$0x1]
        %2642 = vrot.lane.b32.xlu0 %v2639, 112
        %v2643 = vpop.permute.xlu0 %2642
        %v2644 = vsel %vm1082, %v2643, 0
        %2646 = vmatprep.subr.mxu0 0.0
        %2647 = vmatpush1.msra.mxu0 %v1925
        %2648 = vmatprep.subr.mxu0 0.0
        %2649 = vmatpush1.msra.mxu0 %v1926
        %2650 = vmatprep.subr.mxu0 0.0
        %2651 = vmatpush1.msra.mxu0 0.0
        %2652 = vmatprep.subr.mxu0 0.0
        %2653 = vmatpush1.msra.mxu0 0.0
        %2654 = vmatprep.subr.mxu0 0.0
        %2655 = vmatpush1.msra.mxu0 0.0
        %2656 = vmatprep.subr.mxu0 0.0
        %2657 = vmatpush1.msra.mxu0 0.0
        %2658 = vmatprep.subr.mxu0 0.0
        %2659 = vmatpush1.msra.mxu0 0.0
        %2660 = vmatprep.subr.mxu0 0.0
        %2661 = vmatpush1.msra.mxu0 0.0
        %2662 = vmatprep.subr.mxu0 0.0
        %2663 = vmatpush1.msra.mxu0 0.0
        %2664 = vmatprep.subr.mxu0 0.0
        %2665 = vmatpush1.msra.mxu0 0.0
        %2666 = vmatprep.subr.mxu0 0.0
        %2667 = vmatpush1.msra.mxu0 0.0
        %2668 = vmatprep.subr.mxu0 0.0
        %2669 = vmatpush1.msra.mxu0 0.0
        %2670 = vmatprep.subr.mxu0 0.0
        %2671 = vmatpush1.msra.mxu0 0.0
        %2672 = vmatprep.subr.mxu0 0.0
        %2673 = vmatpush1.msra.mxu0 0.0
        %2674 = vmatprep.subr.mxu0 0.0
        %2675 = vmatpush1.msra.mxu0 0.0
        %2676 = vmatprep.subr.mxu0 0.0
        %2677 = vmatpush1.msra.mxu0 0.0
        %2678 = vmatprep.subr.mxu0 0.0
        %2679 = vmatpush1.msra.mxu0 0.0
        %2680 = vmatprep.subr.mxu0 0.0
        %2681 = vmatpush1.msra.mxu0 0.0
        %2682 = vmatprep.subr.mxu0 0.0
        %2683 = vmatpush1.msra.mxu0 0.0
        %2684 = vmatprep.subr.mxu0 0.0
        %2685 = vmatpush1.msra.mxu0 0.0
        %2686 = vmatprep.subr.mxu0 0.0
        %2687 = vmatpush1.msra.mxu0 0.0
        %2688 = vmatprep.subr.mxu0 0.0
        %2689 = vmatpush1.msra.mxu0 0.0
        %2690 = vmatprep.subr.mxu0 0.0
        %2691 = vmatpush1.msra.mxu0 0.0
        %2692 = vmatprep.subr.mxu0 0.0
        %2693 = vmatpush1.msra.mxu0 0.0
        %2694 = vmatprep.subr.mxu0 0.0
        %2695 = vmatpush1.msra.mxu0 0.0
        %2696 = vmatprep.subr.mxu0 0.0
        %2697 = vmatpush1.msra.mxu0 0.0
        %2698 = vmatprep.subr.mxu0 0.0
        %2699 = vmatpush1.msra.mxu0 0.0
        %2700 = vmatprep.subr.mxu0 0.0
        %2701 = vmatpush1.msra.mxu0 0.0
        %2702 = vmatprep.subr.mxu0 0.0
        %2703 = vmatpush1.msra.mxu0 0.0
        %2704 = vmatprep.subr.mxu0 0.0
        %2705 = vmatpush1.msra.mxu0 0.0
        %2706 = vmatprep.subr.mxu0 0.0
        %2707 = vmatpush1.msra.mxu0 0.0
        %2708 = vmatprep.subr.mxu0 0.0
        %2709 = vmatpush1.msra.mxu0 0.0
        %2710 = vmatprep.mubr.f32.mxu0 0.0
        %2711 = vmatmul.mubr.f32.gmra.mrb[0].mxu0 %v2644
        %v2712 = vpop.f32.mrb[0].mxu0
        %v2713 = vadd.f32 %v1927, %v2712
        %v2714 = vpop.f32.mrb[0].mxu0
        %2715 = vdwg.mxu0
        %v2716 = vadd.f32 %v2640, %v2713
        %v2717 = vxor.u32 %v2716, 2147483648
        %v2718 = vmul.f32 %v2717, 1.442695
        %v2719 = vpow.pop %v2718
        %v2720 = vadd.f32 %v2719, 1.0
        %v2721 = vrcp.pop %v2720
        %v2722 = vmul.f32 1.0, %v2721
        %2724 = vrot.lane.b32.xlu0 %v2713, 96
        %v2725 = vpop.permute.xlu0 %2724
        %v2727 = vmul.f32 %v2722, %v2725
        %2729 = vrot.lane.b32.xlu0 %v2727, 32
        %v2730 = vpop.permute.xlu0 %2729
        %v2732 = vadd.f32 %v2640, %v2730
        %v2733 = vtanh.pop %v2732
        %v2734 = vsub.f32 1.0, %v2722
        %2736 = vrot.lane.b32.xlu0 %v2733, 112
        %v2737 = vpop.permute.xlu0 %2736
        %v2739 = vmul.f32 %v2734, %v2737
        %v2740 = vmul.f32 %v2722, %v2639
        %v2741 = vadd.f32 %v2739, %v2740
        %v2742 = vld [vmem:[#allocation2 + $0x8] sm:$0x1]
        %2744 = vrot.lane.b32.xlu0 %v2741, 112
        %v2745 = vpop.permute.xlu0 %2744
        %v2746 = vsel %vm1082, %v2745, 0
        %2748 = vmatprep.subr.mxu0 0.0
        %2749 = vmatpush1.msra.mxu0 %v1925
        %2750 = vmatprep.subr.mxu0 0.0
        %2751 = vmatpush1.msra.mxu0 %v1926
        %2752 = vmatprep.subr.mxu0 0.0
        %2753 = vmatpush1.msra.mxu0 0.0
        %2754 = vmatprep.subr.mxu0 0.0
        %2755 = vmatpush1.msra.mxu0 0.0
        %2756 = vmatprep.subr.mxu0 0.0
        %2757 = vmatpush1.msra.mxu0 0.0
        %2758 = vmatprep.subr.mxu0 0.0
        %2759 = vmatpush1.msra.mxu0 0.0
        %2760 = vmatprep.subr.mxu0 0.0
        %2761 = vmatpush1.msra.mxu0 0.0
        %2762 = vmatprep.subr.mxu0 0.0
        %2763 = vmatpush1.msra.mxu0 0.0
        %2764 = vmatprep.subr.mxu0 0.0
        %2765 = vmatpush1.msra.mxu0 0.0
        %2766 = vmatprep.subr.mxu0 0.0
        %2767 = vmatpush1.msra.mxu0 0.0
        %2768 = vmatprep.subr.mxu0 0.0
        %2769 = vmatpush1.msra.mxu0 0.0
        %2770 = vmatprep.subr.mxu0 0.0
        %2771 = vmatpush1.msra.mxu0 0.0
        %2772 = vmatprep.subr.mxu0 0.0
        %2773 = vmatpush1.msra.mxu0 0.0
        %2774 = vmatprep.subr.mxu0 0.0
        %2775 = vmatpush1.msra.mxu0 0.0
        %2776 = vmatprep.subr.mxu0 0.0
        %2777 = vmatpush1.msra.mxu0 0.0
        %2778 = vmatprep.subr.mxu0 0.0
        %2779 = vmatpush1.msra.mxu0 0.0
        %2780 = vmatprep.subr.mxu0 0.0
        %2781 = vmatpush1.msra.mxu0 0.0
        %2782 = vmatprep.subr.mxu0 0.0
        %2783 = vmatpush1.msra.mxu0 0.0
        %2784 = vmatprep.subr.mxu0 0.0
        %2785 = vmatpush1.msra.mxu0 0.0
        %2786 = vmatprep.subr.mxu0 0.0
        %2787 = vmatpush1.msra.mxu0 0.0
        %2788 = vmatprep.subr.mxu0 0.0
        %2789 = vmatpush1.msra.mxu0 0.0
        %2790 = vmatprep.subr.mxu0 0.0
        %2791 = vmatpush1.msra.mxu0 0.0
        %2792 = vmatprep.subr.mxu0 0.0
        %2793 = vmatpush1.msra.mxu0 0.0
        %2794 = vmatprep.subr.mxu0 0.0
        %2795 = vmatpush1.msra.mxu0 0.0
        %2796 = vmatprep.subr.mxu0 0.0
        %2797 = vmatpush1.msra.mxu0 0.0
        %2798 = vmatprep.subr.mxu0 0.0
        %2799 = vmatpush1.msra.mxu0 0.0
        %2800 = vmatprep.subr.mxu0 0.0
        %2801 = vmatpush1.msra.mxu0 0.0
        %2802 = vmatprep.subr.mxu0 0.0
        %2803 = vmatpush1.msra.mxu0 0.0
        %2804 = vmatprep.subr.mxu0 0.0
        %2805 = vmatpush1.msra.mxu0 0.0
        %2806 = vmatprep.subr.mxu0 0.0
        %2807 = vmatpush1.msra.mxu0 0.0
        %2808 = vmatprep.subr.mxu0 0.0
        %2809 = vmatpush1.msra.mxu0 0.0
        %2810 = vmatprep.subr.mxu0 0.0
        %2811 = vmatpush1.msra.mxu0 0.0
        %2812 = vmatprep.mubr.f32.mxu0 0.0
        %2813 = vmatmul.mubr.f32.gmra.mrb[0].mxu0 %v2746
        %v2814 = vpop.f32.mrb[0].mxu0
        %v2815 = vadd.f32 %v1927, %v2814
        %v2816 = vpop.f32.mrb[0].mxu0
        %2817 = vdwg.mxu0
        %v2818 = vadd.f32 %v2742, %v2815
        %v2819 = vxor.u32 %v2818, 2147483648
        %v2820 = vmul.f32 %v2819, 1.442695
        %v2821 = vpow.pop %v2820
        %v2822 = vadd.f32 %v2821, 1.0
        %v2823 = vrcp.pop %v2822
        %v2824 = vmul.f32 1.0, %v2823
        %2826 = vrot.lane.b32.xlu0 %v2815, 96
        %v2827 = vpop.permute.xlu0 %2826
        %v2829 = vmul.f32 %v2824, %v2827
        %2831 = vrot.lane.b32.xlu0 %v2829, 32
        %v2832 = vpop.permute.xlu0 %2831
        %v2834 = vadd.f32 %v2742, %v2832
        %v2835 = vtanh.pop %v2834
        %v2836 = vsub.f32 1.0, %v2824
        %2838 = vrot.lane.b32.xlu0 %v2835, 112
        %v2839 = vpop.permute.xlu0 %2838
        %v2841 = vmul.f32 %v2836, %v2839
        %v2842 = vmul.f32 %v2824, %v2741
        %v2843 = vadd.f32 %v2841, %v2842
        %v2844 = vld [vmem:[#allocation2 + $0x9] sm:$0x1]
        %2846 = vrot.lane.b32.xlu0 %v2843, 112
        %v2847 = vpop.permute.xlu0 %2846
        %v2848 = vsel %vm1082, %v2847, 0
        %2850 = vmatprep.subr.mxu0 0.0
        %2851 = vmatpush1.msra.mxu0 %v1925
        %2852 = vmatprep.subr.mxu0 0.0
        %2853 = vmatpush1.msra.mxu0 %v1926
        %2854 = vmatprep.subr.mxu0 0.0
        %2855 = vmatpush1.msra.mxu0 0.0
        %2856 = vmatprep.subr.mxu0 0.0
        %2857 = vmatpush1.msra.mxu0 0.0
        %2858 = vmatprep.subr.mxu0 0.0
        %2859 = vmatpush1.msra.mxu0 0.0
        %2860 = vmatprep.subr.mxu0 0.0
        %2861 = vmatpush1.msra.mxu0 0.0
        %2862 = vmatprep.subr.mxu0 0.0
        %2863 = vmatpush1.msra.mxu0 0.0
        %2864 = vmatprep.subr.mxu0 0.0
        %2865 = vmatpush1.msra.mxu0 0.0
        %2866 = vmatprep.subr.mxu0 0.0
        %2867 = vmatpush1.msra.mxu0 0.0
        %2868 = vmatprep.subr.mxu0 0.0
        %2869 = vmatpush1.msra.mxu0 0.0
        %2870 = vmatprep.subr.mxu0 0.0
        %2871 = vmatpush1.msra.mxu0 0.0
        %2872 = vmatprep.subr.mxu0 0.0
        %2873 = vmatpush1.msra.mxu0 0.0
        %2874 = vmatprep.subr.mxu0 0.0
        %2875 = vmatpush1.msra.mxu0 0.0
        %2876 = vmatprep.subr.mxu0 0.0
        %2877 = vmatpush1.msra.mxu0 0.0
        %2878 = vmatprep.subr.mxu0 0.0
        %2879 = vmatpush1.msra.mxu0 0.0
        %2880 = vmatprep.subr.mxu0 0.0
        %2881 = vmatpush1.msra.mxu0 0.0
        %2882 = vmatprep.subr.mxu0 0.0
        %2883 = vmatpush1.msra.mxu0 0.0
        %2884 = vmatprep.subr.mxu0 0.0
        %2885 = vmatpush1.msra.mxu0 0.0
        %2886 = vmatprep.subr.mxu0 0.0
        %2887 = vmatpush1.msra.mxu0 0.0
        %2888 = vmatprep.subr.mxu0 0.0
        %2889 = vmatpush1.msra.mxu0 0.0
        %2890 = vmatprep.subr.mxu0 0.0
        %2891 = vmatpush1.msra.mxu0 0.0
        %2892 = vmatprep.subr.mxu0 0.0
        %2893 = vmatpush1.msra.mxu0 0.0
        %2894 = vmatprep.subr.mxu0 0.0
        %2895 = vmatpush1.msra.mxu0 0.0
        %2896 = vmatprep.subr.mxu0 0.0
        %2897 = vmatpush1.msra.mxu0 0.0
        %2898 = vmatprep.subr.mxu0 0.0
        %2899 = vmatpush1.msra.mxu0 0.0
        %2900 = vmatprep.subr.mxu0 0.0
        %2901 = vmatpush1.msra.mxu0 0.0
        %2902 = vmatprep.subr.mxu0 0.0
        %2903 = vmatpush1.msra.mxu0 0.0
        %2904 = vmatprep.subr.mxu0 0.0
        %2905 = vmatpush1.msra.mxu0 0.0
        %2906 = vmatprep.subr.mxu0 0.0
        %2907 = vmatpush1.msra.mxu0 0.0
        %2908 = vmatprep.subr.mxu0 0.0
        %2909 = vmatpush1.msra.mxu0 0.0
        %2910 = vmatprep.subr.mxu0 0.0
        %2911 = vmatpush1.msra.mxu0 0.0
        %2912 = vmatprep.subr.mxu0 0.0
        %2913 = vmatpush1.msra.mxu0 0.0
        %2914 = vmatprep.mubr.f32.mxu0 0.0
        %2915 = vmatmul.mubr.f32.gmra.mrb[0].mxu0 %v2848
        %v2916 = vpop.f32.mrb[0].mxu0
        %v2917 = vadd.f32 %v1927, %v2916
        %v2918 = vpop.f32.mrb[0].mxu0
        %2919 = vdwg.mxu0
        %v2920 = vadd.f32 %v2844, %v2917
        %v2921 = vxor.u32 %v2920, 2147483648
        %v2922 = vmul.f32 %v2921, 1.442695
        %v2923 = vpow.pop %v2922
        %v2924 = vadd.f32 %v2923, 1.0
        %v2925 = vrcp.pop %v2924
        %v2926 = vmul.f32 1.0, %v2925
        %2928 = vrot.lane.b32.xlu0 %v2917, 96
        %v2929 = vpop.permute.xlu0 %2928
        %v2931 = vmul.f32 %v2926, %v2929
        %2933 = vrot.lane.b32.xlu0 %v2931, 32
        %v2934 = vpop.permute.xlu0 %2933
        %v2936 = vadd.f32 %v2844, %v2934
        %v2937 = vtanh.pop %v2936
        %v2938 = vsub.f32 1.0, %v2926
        %2940 = vrot.lane.b32.xlu0 %v2937, 112
        %v2941 = vpop.permute.xlu0 %2940
        %v2943 = vmul.f32 %v2938, %v2941
        %v2944 = vmul.f32 %v2926, %v2843
        %v2945 = vadd.f32 %v2943, %v2944
        %v2946 = vld [vmem:[#allocation2 + $0xa] sm:$0x1]
        %2948 = vrot.lane.b32.xlu0 %v2945, 112
        %v2949 = vpop.permute.xlu0 %2948
        %v2950 = vsel %vm1082, %v2949, 0
        %2952 = vmatprep.subr.mxu0 0.0
        %2953 = vmatpush1.msra.mxu0 %v1925
        %2954 = vmatprep.subr.mxu0 0.0
        %2955 = vmatpush1.msra.mxu0 %v1926
        %2956 = vmatprep.subr.mxu0 0.0
        %2957 = vmatpush1.msra.mxu0 0.0
        %2958 = vmatprep.subr.mxu0 0.0
        %2959 = vmatpush1.msra.mxu0 0.0
        %2960 = vmatprep.subr.mxu0 0.0
        %2961 = vmatpush1.msra.mxu0 0.0
        %2962 = vmatprep.subr.mxu0 0.0
        %2963 = vmatpush1.msra.mxu0 0.0
        %2964 = vmatprep.subr.mxu0 0.0
        %2965 = vmatpush1.msra.mxu0 0.0
        %2966 = vmatprep.subr.mxu0 0.0
        %2967 = vmatpush1.msra.mxu0 0.0
        %2968 = vmatprep.subr.mxu0 0.0
        %2969 = vmatpush1.msra.mxu0 0.0
        %2970 = vmatprep.subr.mxu0 0.0
        %2971 = vmatpush1.msra.mxu0 0.0
        %2972 = vmatprep.subr.mxu0 0.0
        %2973 = vmatpush1.msra.mxu0 0.0
        %2974 = vmatprep.subr.mxu0 0.0
        %2975 = vmatpush1.msra.mxu0 0.0
        %2976 = vmatprep.subr.mxu0 0.0
        %2977 = vmatpush1.msra.mxu0 0.0
        %2978 = vmatprep.subr.mxu0 0.0
        %2979 = vmatpush1.msra.mxu0 0.0
        %2980 = vmatprep.subr.mxu0 0.0
        %2981 = vmatpush1.msra.mxu0 0.0
        %2982 = vmatprep.subr.mxu0 0.0
        %2983 = vmatpush1.msra.mxu0 0.0
        %2984 = vmatprep.subr.mxu0 0.0
        %2985 = vmatpush1.msra.mxu0 0.0
        %2986 = vmatprep.subr.mxu0 0.0
        %2987 = vmatpush1.msra.mxu0 0.0
        %2988 = vmatprep.subr.mxu0 0.0
        %2989 = vmatpush1.msra.mxu0 0.0
        %2990 = vmatprep.subr.mxu0 0.0
        %2991 = vmatpush1.msra.mxu0 0.0
        %2992 = vmatprep.subr.mxu0 0.0
        %2993 = vmatpush1.msra.mxu0 0.0
        %2994 = vmatprep.subr.mxu0 0.0
        %2995 = vmatpush1.msra.mxu0 0.0
        %2996 = vmatprep.subr.mxu0 0.0
        %2997 = vmatpush1.msra.mxu0 0.0
        %2998 = vmatprep.subr.mxu0 0.0
        %2999 = vmatpush1.msra.mxu0 0.0
        %3000 = vmatprep.subr.mxu0 0.0
        %3001 = vmatpush1.msra.mxu0 0.0
        %3002 = vmatprep.subr.mxu0 0.0
        %3003 = vmatpush1.msra.mxu0 0.0
        %3004 = vmatprep.subr.mxu0 0.0
        %3005 = vmatpush1.msra.mxu0 0.0
        %3006 = vmatprep.subr.mxu0 0.0
        %3007 = vmatpush1.msra.mxu0 0.0
        %3008 = vmatprep.subr.mxu0 0.0
        %3009 = vmatpush1.msra.mxu0 0.0
        %3010 = vmatprep.subr.mxu0 0.0
        %3011 = vmatpush1.msra.mxu0 0.0
        %3012 = vmatprep.subr.mxu0 0.0
        %3013 = vmatpush1.msra.mxu0 0.0
        %3014 = vmatprep.subr.mxu0 0.0
        %3015 = vmatpush1.msra.mxu0 0.0
        %3016 = vmatprep.mubr.f32.mxu0 0.0
        %3017 = vmatmul.mubr.f32.gmra.mrb[0].mxu0 %v2950
        %v3018 = vpop.f32.mrb[0].mxu0
        %v3019 = vadd.f32 %v1927, %v3018
        %v3020 = vpop.f32.mrb[0].mxu0
        %3021 = vdwg.mxu0
        %v3022 = vadd.f32 %v2946, %v3019
        %v3023 = vxor.u32 %v3022, 2147483648
        %v3024 = vmul.f32 %v3023, 1.442695
        %v3025 = vpow.pop %v3024
        %v3026 = vadd.f32 %v3025, 1.0
        %v3027 = vrcp.pop %v3026
        %v3028 = vmul.f32 1.0, %v3027
        %3030 = vrot.lane.b32.xlu0 %v3019, 96
        %v3031 = vpop.permute.xlu0 %3030
        %v3033 = vmul.f32 %v3028, %v3031
        %3035 = vrot.lane.b32.xlu0 %v3033, 32
        %v3036 = vpop.permute.xlu0 %3035
        %v3038 = vadd.f32 %v2946, %v3036
        %v3039 = vtanh.pop %v3038
        %v3040 = vsub.f32 1.0, %v3028
        %3042 = vrot.lane.b32.xlu0 %v3039, 112
        %v3043 = vpop.permute.xlu0 %3042
        %v3045 = vmul.f32 %v3040, %v3043
        %v3046 = vmul.f32 %v3028, %v2945
        %v3047 = vadd.f32 %v3045, %v3046
        %v3048 = vld [vmem:[#allocation2 + $0xb] sm:$0x1]
        %3050 = vrot.lane.b32.xlu0 %v3047, 112
        %v3051 = vpop.permute.xlu0 %3050
        %v3052 = vsel %vm1082, %v3051, 0
        %3054 = vmatprep.subr.mxu0 0.0
        %3055 = vmatpush1.msra.mxu0 %v1925
        %3056 = vmatprep.subr.mxu0 0.0
        %3057 = vmatpush1.msra.mxu0 %v1926
        %3058 = vmatprep.subr.mxu0 0.0
        %3059 = vmatpush1.msra.mxu0 0.0
        %3060 = vmatprep.subr.mxu0 0.0
        %3061 = vmatpush1.msra.mxu0 0.0
        %3062 = vmatprep.subr.mxu0 0.0
        %3063 = vmatpush1.msra.mxu0 0.0
        %3064 = vmatprep.subr.mxu0 0.0
        %3065 = vmatpush1.msra.mxu0 0.0
        %3066 = vmatprep.subr.mxu0 0.0
        %3067 = vmatpush1.msra.mxu0 0.0
        %3068 = vmatprep.subr.mxu0 0.0
        %3069 = vmatpush1.msra.mxu0 0.0
        %3070 = vmatprep.subr.mxu0 0.0
        %3071 = vmatpush1.msra.mxu0 0.0
        %3072 = vmatprep.subr.mxu0 0.0
        %3073 = vmatpush1.msra.mxu0 0.0
        %3074 = vmatprep.subr.mxu0 0.0
        %3075 = vmatpush1.msra.mxu0 0.0
        %3076 = vmatprep.subr.mxu0 0.0
        %3077 = vmatpush1.msra.mxu0 0.0
        %3078 = vmatprep.subr.mxu0 0.0
        %3079 = vmatpush1.msra.mxu0 0.0
        %3080 = vmatprep.subr.mxu0 0.0
        %3081 = vmatpush1.msra.mxu0 0.0
        %3082 = vmatprep.subr.mxu0 0.0
        %3083 = vmatpush1.msra.mxu0 0.0
        %3084 = vmatprep.subr.mxu0 0.0
        %3085 = vmatpush1.msra.mxu0 0.0
        %3086 = vmatprep.subr.mxu0 0.0
        %3087 = vmatpush1.msra.mxu0 0.0
        %3088 = vmatprep.subr.mxu0 0.0
        %3089 = vmatpush1.msra.mxu0 0.0
        %3090 = vmatprep.subr.mxu0 0.0
        %3091 = vmatpush1.msra.mxu0 0.0
        %3092 = vmatprep.subr.mxu0 0.0
        %3093 = vmatpush1.msra.mxu0 0.0
        %3094 = vmatprep.subr.mxu0 0.0
        %3095 = vmatpush1.msra.mxu0 0.0
        %3096 = vmatprep.subr.mxu0 0.0
        %3097 = vmatpush1.msra.mxu0 0.0
        %3098 = vmatprep.subr.mxu0 0.0
        %3099 = vmatpush1.msra.mxu0 0.0
        %3100 = vmatprep.subr.mxu0 0.0
        %3101 = vmatpush1.msra.mxu0 0.0
        %3102 = vmatprep.subr.mxu0 0.0
        %3103 = vmatpush1.msra.mxu0 0.0
        %3104 = vmatprep.subr.mxu0 0.0
        %3105 = vmatpush1.msra.mxu0 0.0
        %3106 = vmatprep.subr.mxu0 0.0
        %3107 = vmatpush1.msra.mxu0 0.0
        %3108 = vmatprep.subr.mxu0 0.0
        %3109 = vmatpush1.msra.mxu0 0.0
        %3110 = vmatprep.subr.mxu0 0.0
        %3111 = vmatpush1.msra.mxu0 0.0
        %3112 = vmatprep.subr.mxu0 0.0
        %3113 = vmatpush1.msra.mxu0 0.0
        %3114 = vmatprep.subr.mxu0 0.0
        %3115 = vmatpush1.msra.mxu0 0.0
        %3116 = vmatprep.subr.mxu0 0.0
        %3117 = vmatpush1.msra.mxu0 0.0
        %3118 = vmatprep.mubr.f32.mxu0 0.0
        %3119 = vmatmul.mubr.f32.gmra.mrb[0].mxu0 %v3052
        %v3120 = vpop.f32.mrb[0].mxu0
        %v3121 = vadd.f32 %v1927, %v3120
        %v3122 = vpop.f32.mrb[0].mxu0
        %3123 = vdwg.mxu0
        %v3124 = vadd.f32 %v3048, %v3121
        %v3125 = vxor.u32 %v3124, 2147483648
        %v3126 = vmul.f32 %v3125, 1.442695
        %v3127 = vpow.pop %v3126
        %v3128 = vadd.f32 %v3127, 1.0
        %v3129 = vrcp.pop %v3128
        %v3130 = vmul.f32 1.0, %v3129
        %3132 = vrot.lane.b32.xlu0 %v3121, 96
        %v3133 = vpop.permute.xlu0 %3132
        %v3135 = vmul.f32 %v3130, %v3133
        %3137 = vrot.lane.b32.xlu0 %v3135, 32
        %v3138 = vpop.permute.xlu0 %3137
        %v3140 = vadd.f32 %v3048, %v3138
        %v3141 = vtanh.pop %v3140
        %v3142 = vsub.f32 1.0, %v3130
        %3144 = vrot.lane.b32.xlu0 %v3141, 112
        %v3145 = vpop.permute.xlu0 %3144
        %v3147 = vmul.f32 %v3142, %v3145
        %v3148 = vmul.f32 %v3130, %v3047
        %v3149 = vadd.f32 %v3147, %v3148
        %v3150 = vld [vmem:[#allocation2 + $0xc] sm:$0x1]
        %3152 = vrot.lane.b32.xlu0 %v3149, 112
        %v3153 = vpop.permute.xlu0 %3152
        %v3154 = vsel %vm1082, %v3153, 0
        %3156 = vmatprep.subr.mxu0 0.0
        %3157 = vmatpush1.msra.mxu0 %v1925
        %3158 = vmatprep.subr.mxu0 0.0
        %3159 = vmatpush1.msra.mxu0 %v1926
        %3160 = vmatprep.subr.mxu0 0.0
        %3161 = vmatpush1.msra.mxu0 0.0
        %3162 = vmatprep.subr.mxu0 0.0
        %3163 = vmatpush1.msra.mxu0 0.0
        %3164 = vmatprep.subr.mxu0 0.0
        %3165 = vmatpush1.msra.mxu0 0.0
        %3166 = vmatprep.subr.mxu0 0.0
        %3167 = vmatpush1.msra.mxu0 0.0
        %3168 = vmatprep.subr.mxu0 0.0
        %3169 = vmatpush1.msra.mxu0 0.0
        %3170 = vmatprep.subr.mxu0 0.0
        %3171 = vmatpush1.msra.mxu0 0.0
        %3172 = vmatprep.subr.mxu0 0.0
        %3173 = vmatpush1.msra.mxu0 0.0
        %3174 = vmatprep.subr.mxu0 0.0
        %3175 = vmatpush1.msra.mxu0 0.0
        %3176 = vmatprep.subr.mxu0 0.0
        %3177 = vmatpush1.msra.mxu0 0.0
        %3178 = vmatprep.subr.mxu0 0.0
        %3179 = vmatpush1.msra.mxu0 0.0
        %3180 = vmatprep.subr.mxu0 0.0
        %3181 = vmatpush1.msra.mxu0 0.0
        %3182 = vmatprep.subr.mxu0 0.0
        %3183 = vmatpush1.msra.mxu0 0.0
        %3184 = vmatprep.subr.mxu0 0.0
        %3185 = vmatpush1.msra.mxu0 0.0
        %3186 = vmatprep.subr.mxu0 0.0
        %3187 = vmatpush1.msra.mxu0 0.0
        %3188 = vmatprep.subr.mxu0 0.0
        %3189 = vmatpush1.msra.mxu0 0.0
        %3190 = vmatprep.subr.mxu0 0.0
        %3191 = vmatpush1.msra.mxu0 0.0
        %3192 = vmatprep.subr.mxu0 0.0
        %3193 = vmatpush1.msra.mxu0 0.0
        %3194 = vmatprep.subr.mxu0 0.0
        %3195 = vmatpush1.msra.mxu0 0.0
        %3196 = vmatprep.subr.mxu0 0.0
        %3197 = vmatpush1.msra.mxu0 0.0
        %3198 = vmatprep.subr.mxu0 0.0
        %3199 = vmatpush1.msra.mxu0 0.0
        %3200 = vmatprep.subr.mxu0 0.0
        %3201 = vmatpush1.msra.mxu0 0.0
        %3202 = vmatprep.subr.mxu0 0.0
        %3203 = vmatpush1.msra.mxu0 0.0
        %3204 = vmatprep.subr.mxu0 0.0
        %3205 = vmatpush1.msra.mxu0 0.0
        %3206 = vmatprep.subr.mxu0 0.0
        %3207 = vmatpush1.msra.mxu0 0.0
        %3208 = vmatprep.subr.mxu0 0.0
        %3209 = vmatpush1.msra.mxu0 0.0
        %3210 = vmatprep.subr.mxu0 0.0
        %3211 = vmatpush1.msra.mxu0 0.0
        %3212 = vmatprep.subr.mxu0 0.0
        %3213 = vmatpush1.msra.mxu0 0.0
        %3214 = vmatprep.subr.mxu0 0.0
        %3215 = vmatpush1.msra.mxu0 0.0
        %3216 = vmatprep.subr.mxu0 0.0
        %3217 = vmatpush1.msra.mxu0 0.0
        %3218 = vmatprep.subr.mxu0 0.0
        %3219 = vmatpush1.msra.mxu0 0.0
        %3220 = vmatprep.mubr.f32.mxu0 0.0
        %3221 = vmatmul.mubr.f32.gmra.mrb[0].mxu0 %v3154
        %v3222 = vpop.f32.mrb[0].mxu0
        %v3223 = vadd.f32 %v1927, %v3222
        %v3224 = vpop.f32.mrb[0].mxu0
        %3225 = vdwg.mxu0
        %v3226 = vadd.f32 %v3150, %v3223
        %v3227 = vxor.u32 %v3226, 2147483648
        %v3228 = vmul.f32 %v3227, 1.442695
        %v3229 = vpow.pop %v3228
        %v3230 = vadd.f32 %v3229, 1.0
        %v3231 = vrcp.pop %v3230
        %v3232 = vmul.f32 1.0, %v3231
        %3234 = vrot.lane.b32.xlu0 %v3223, 96
        %v3235 = vpop.permute.xlu0 %3234
        %v3237 = vmul.f32 %v3232, %v3235
        %3239 = vrot.lane.b32.xlu0 %v3237, 32
        %v3240 = vpop.permute.xlu0 %3239
        %v3242 = vadd.f32 %v3150, %v3240
        %v3243 = vtanh.pop %v3242
        %v3244 = vsub.f32 1.0, %v3232
        %3246 = vrot.lane.b32.xlu0 %v3243, 112
        %v3247 = vpop.permute.xlu0 %3246
        %v3249 = vmul.f32 %v3244, %v3247
        %v3250 = vmul.f32 %v3232, %v3149
        %v3251 = vadd.f32 %v3249, %v3250
        %v3252 = vld [vmem:[#allocation2 + $0xd] sm:$0x1]
        %3254 = vrot.lane.b32.xlu0 %v3251, 112
        %v3255 = vpop.permute.xlu0 %3254
        %v3256 = vsel %vm1082, %v3255, 0
        %3258 = vmatprep.subr.mxu0 0.0
        %3259 = vmatpush1.msra.mxu0 %v1925
        %3260 = vmatprep.subr.mxu0 0.0
        %3261 = vmatpush1.msra.mxu0 %v1926
        %3262 = vmatprep.subr.mxu0 0.0
        %3263 = vmatpush1.msra.mxu0 0.0
        %3264 = vmatprep.subr.mxu0 0.0
        %3265 = vmatpush1.msra.mxu0 0.0
        %3266 = vmatprep.subr.mxu0 0.0
        %3267 = vmatpush1.msra.mxu0 0.0
        %3268 = vmatprep.subr.mxu0 0.0
        %3269 = vmatpush1.msra.mxu0 0.0
        %3270 = vmatprep.subr.mxu0 0.0
        %3271 = vmatpush1.msra.mxu0 0.0
        %3272 = vmatprep.subr.mxu0 0.0
        %3273 = vmatpush1.msra.mxu0 0.0
        %3274 = vmatprep.subr.mxu0 0.0
        %3275 = vmatpush1.msra.mxu0 0.0
        %3276 = vmatprep.subr.mxu0 0.0
        %3277 = vmatpush1.msra.mxu0 0.0
        %3278 = vmatprep.subr.mxu0 0.0
        %3279 = vmatpush1.msra.mxu0 0.0
        %3280 = vmatprep.subr.mxu0 0.0
        %3281 = vmatpush1.msra.mxu0 0.0
        %3282 = vmatprep.subr.mxu0 0.0
        %3283 = vmatpush1.msra.mxu0 0.0
        %3284 = vmatprep.subr.mxu0 0.0
        %3285 = vmatpush1.msra.mxu0 0.0
        %3286 = vmatprep.subr.mxu0 0.0
        %3287 = vmatpush1.msra.mxu0 0.0
        %3288 = vmatprep.subr.mxu0 0.0
        %3289 = vmatpush1.msra.mxu0 0.0
        %3290 = vmatprep.subr.mxu0 0.0
        %3291 = vmatpush1.msra.mxu0 0.0
        %3292 = vmatprep.subr.mxu0 0.0
        %3293 = vmatpush1.msra.mxu0 0.0
        %3294 = vmatprep.subr.mxu0 0.0
        %3295 = vmatpush1.msra.mxu0 0.0
        %3296 = vmatprep.subr.mxu0 0.0
        %3297 = vmatpush1.msra.mxu0 0.0
        %3298 = vmatprep.subr.mxu0 0.0
        %3299 = vmatpush1.msra.mxu0 0.0
        %3300 = vmatprep.subr.mxu0 0.0
        %3301 = vmatpush1.msra.mxu0 0.0
        %3302 = vmatprep.subr.mxu0 0.0
        %3303 = vmatpush1.msra.mxu0 0.0
        %3304 = vmatprep.subr.mxu0 0.0
        %3305 = vmatpush1.msra.mxu0 0.0
        %3306 = vmatprep.subr.mxu0 0.0
        %3307 = vmatpush1.msra.mxu0 0.0
        %3308 = vmatprep.subr.mxu0 0.0
        %3309 = vmatpush1.msra.mxu0 0.0
        %3310 = vmatprep.subr.mxu0 0.0
        %3311 = vmatpush1.msra.mxu0 0.0
        %3312 = vmatprep.subr.mxu0 0.0
        %3313 = vmatpush1.msra.mxu0 0.0
        %3314 = vmatprep.subr.mxu0 0.0
        %3315 = vmatpush1.msra.mxu0 0.0
        %3316 = vmatprep.subr.mxu0 0.0
        %3317 = vmatpush1.msra.mxu0 0.0
        %3318 = vmatprep.subr.mxu0 0.0
        %3319 = vmatpush1.msra.mxu0 0.0
        %3320 = vmatprep.subr.mxu0 0.0
        %3321 = vmatpush1.msra.mxu0 0.0
        %3322 = vmatprep.mubr.f32.mxu0 0.0
        %3323 = vmatmul.mubr.f32.gmra.mrb[0].mxu0 %v3256
        %v3324 = vpop.f32.mrb[0].mxu0
        %v3325 = vadd.f32 %v1927, %v3324
        %v3326 = vpop.f32.mrb[0].mxu0
        %3327 = vdwg.mxu0
        %v3328 = vadd.f32 %v3252, %v3325
        %v3329 = vxor.u32 %v3328, 2147483648
        %v3330 = vmul.f32 %v3329, 1.442695
        %v3331 = vpow.pop %v3330
        %v3332 = vadd.f32 %v3331, 1.0
        %v3333 = vrcp.pop %v3332
        %v3334 = vmul.f32 1.0, %v3333
        %3336 = vrot.lane.b32.xlu0 %v3325, 96
        %v3337 = vpop.permute.xlu0 %3336
        %v3339 = vmul.f32 %v3334, %v3337
        %3341 = vrot.lane.b32.xlu0 %v3339, 32
        %v3342 = vpop.permute.xlu0 %3341
        %v3344 = vadd.f32 %v3252, %v3342
        %v3345 = vtanh.pop %v3344
        %v3346 = vsub.f32 1.0, %v3334
        %3348 = vrot.lane.b32.xlu0 %v3345, 112
        %v3349 = vpop.permute.xlu0 %3348
        %v3351 = vmul.f32 %v3346, %v3349
        %v3352 = vmul.f32 %v3334, %v3251
        %v3353 = vadd.f32 %v3351, %v3352
        %v3354 = vld [vmem:[#allocation2 + $0xe] sm:$0x1]
        %3356 = vrot.lane.b32.xlu0 %v3353, 112
        %v3357 = vpop.permute.xlu0 %3356
        %v3358 = vsel %vm1082, %v3357, 0
        %3360 = vmatprep.subr.mxu0 0.0
        %3361 = vmatpush1.msra.mxu0 %v1925
        %3362 = vmatprep.subr.mxu0 0.0
        %3363 = vmatpush1.msra.mxu0 %v1926
        %3364 = vmatprep.subr.mxu0 0.0
        %3365 = vmatpush1.msra.mxu0 0.0
        %3366 = vmatprep.subr.mxu0 0.0
        %3367 = vmatpush1.msra.mxu0 0.0
        %3368 = vmatprep.subr.mxu0 0.0
        %3369 = vmatpush1.msra.mxu0 0.0
        %3370 = vmatprep.subr.mxu0 0.0
        %3371 = vmatpush1.msra.mxu0 0.0
        %3372 = vmatprep.subr.mxu0 0.0
        %3373 = vmatpush1.msra.mxu0 0.0
        %3374 = vmatprep.subr.mxu0 0.0
        %3375 = vmatpush1.msra.mxu0 0.0
        %3376 = vmatprep.subr.mxu0 0.0
        %3377 = vmatpush1.msra.mxu0 0.0
        %3378 = vmatprep.subr.mxu0 0.0
        %3379 = vmatpush1.msra.mxu0 0.0
        %3380 = vmatprep.subr.mxu0 0.0
        %3381 = vmatpush1.msra.mxu0 0.0
        %3382 = vmatprep.subr.mxu0 0.0
        %3383 = vmatpush1.msra.mxu0 0.0
        %3384 = vmatprep.subr.mxu0 0.0
        %3385 = vmatpush1.msra.mxu0 0.0
        %3386 = vmatprep.subr.mxu0 0.0
        %3387 = vmatpush1.msra.mxu0 0.0
        %3388 = vmatprep.subr.mxu0 0.0
        %3389 = vmatpush1.msra.mxu0 0.0
        %3390 = vmatprep.subr.mxu0 0.0
        %3391 = vmatpush1.msra.mxu0 0.0
        %3392 = vmatprep.subr.mxu0 0.0
        %3393 = vmatpush1.msra.mxu0 0.0
        %3394 = vmatprep.subr.mxu0 0.0
        %3395 = vmatpush1.msra.mxu0 0.0
        %3396 = vmatprep.subr.mxu0 0.0
        %3397 = vmatpush1.msra.mxu0 0.0
        %3398 = vmatprep.subr.mxu0 0.0
        %3399 = vmatpush1.msra.mxu0 0.0
        %3400 = vmatprep.subr.mxu0 0.0
        %3401 = vmatpush1.msra.mxu0 0.0
        %3402 = vmatprep.subr.mxu0 0.0
        %3403 = vmatpush1.msra.mxu0 0.0
        %3404 = vmatprep.subr.mxu0 0.0
        %3405 = vmatpush1.msra.mxu0 0.0
        %3406 = vmatprep.subr.mxu0 0.0
        %3407 = vmatpush1.msra.mxu0 0.0
        %3408 = vmatprep.subr.mxu0 0.0
        %3409 = vmatpush1.msra.mxu0 0.0
        %3410 = vmatprep.subr.mxu0 0.0
        %3411 = vmatpush1.msra.mxu0 0.0
        %3412 = vmatprep.subr.mxu0 0.0
        %3413 = vmatpush1.msra.mxu0 0.0
        %3414 = vmatprep.subr.mxu0 0.0
        %3415 = vmatpush1.msra.mxu0 0.0
        %3416 = vmatprep.subr.mxu0 0.0
        %3417 = vmatpush1.msra.mxu0 0.0
        %3418 = vmatprep.subr.mxu0 0.0
        %3419 = vmatpush1.msra.mxu0 0.0
        %3420 = vmatprep.subr.mxu0 0.0
        %3421 = vmatpush1.msra.mxu0 0.0
        %3422 = vmatprep.subr.mxu0 0.0
        %3423 = vmatpush1.msra.mxu0 0.0
        %3424 = vmatprep.mubr.f32.mxu0 0.0
        %3425 = vmatmul.mubr.f32.gmra.mrb[0].mxu0 %v3358
        %v3426 = vpop.f32.mrb[0].mxu0
        %v3427 = vadd.f32 %v1927, %v3426
        %v3428 = vpop.f32.mrb[0].mxu0
        %3429 = vdwg.mxu0
        %v3430 = vadd.f32 %v3354, %v3427
        %v3431 = vxor.u32 %v3430, 2147483648
        %v3432 = vmul.f32 %v3431, 1.442695
        %v3433 = vpow.pop %v3432
        %v3434 = vadd.f32 %v3433, 1.0
        %v3435 = vrcp.pop %v3434
        %v3436 = vmul.f32 1.0, %v3435
        %3438 = vrot.lane.b32.xlu0 %v3427, 96
        %v3439 = vpop.permute.xlu0 %3438
        %v3441 = vmul.f32 %v3436, %v3439
        %3443 = vrot.lane.b32.xlu0 %v3441, 32
        %v3444 = vpop.permute.xlu0 %3443
        %v3446 = vadd.f32 %v3354, %v3444
        %v3447 = vtanh.pop %v3446
        %v3448 = vsub.f32 1.0, %v3436
        %3450 = vrot.lane.b32.xlu0 %v3447, 112
        %v3451 = vpop.permute.xlu0 %3450
        %v3453 = vmul.f32 %v3448, %v3451
        %v3454 = vmul.f32 %v3436, %v3353
        %v3455 = vadd.f32 %v3453, %v3454
        %v3456 = vld [vmem:[#allocation2 + $0xf] sm:$0x1]
        %3458 = vrot.lane.b32.xlu0 %v3455, 112
        %v3459 = vpop.permute.xlu0 %3458
        %v3460 = vsel %vm1082, %v3459, 0
        %3462 = vmatprep.subr.mxu0 0.0
        %3463 = vmatpush1.msra.mxu0 %v1925
        %3464 = vmatprep.subr.mxu0 0.0
        %3465 = vmatpush1.msra.mxu0 %v1926
        %3466 = vmatprep.subr.mxu0 0.0
        %3467 = vmatpush1.msra.mxu0 0.0
        %3468 = vmatprep.subr.mxu0 0.0
        %3469 = vmatpush1.msra.mxu0 0.0
        %3470 = vmatprep.subr.mxu0 0.0
        %3471 = vmatpush1.msra.mxu0 0.0
        %3472 = vmatprep.subr.mxu0 0.0
        %3473 = vmatpush1.msra.mxu0 0.0
        %3474 = vmatprep.subr.mxu0 0.0
        %3475 = vmatpush1.msra.mxu0 0.0
        %3476 = vmatprep.subr.mxu0 0.0
        %3477 = vmatpush1.msra.mxu0 0.0
        %3478 = vmatprep.subr.mxu0 0.0
        %3479 = vmatpush1.msra.mxu0 0.0
        %3480 = vmatprep.subr.mxu0 0.0
        %3481 = vmatpush1.msra.mxu0 0.0
        %3482 = vmatprep.subr.mxu0 0.0
        %3483 = vmatpush1.msra.mxu0 0.0
        %3484 = vmatprep.subr.mxu0 0.0
        %3485 = vmatpush1.msra.mxu0 0.0
        %3486 = vmatprep.subr.mxu0 0.0
        %3487 = vmatpush1.msra.mxu0 0.0
        %3488 = vmatprep.subr.mxu0 0.0
        %3489 = vmatpush1.msra.mxu0 0.0
        %3490 = vmatprep.subr.mxu0 0.0
        %3491 = vmatpush1.msra.mxu0 0.0
        %3492 = vmatprep.subr.mxu0 0.0
        %3493 = vmatpush1.msra.mxu0 0.0
        %3494 = vmatprep.subr.mxu0 0.0
        %3495 = vmatpush1.msra.mxu0 0.0
        %3496 = vmatprep.subr.mxu0 0.0
        %3497 = vmatpush1.msra.mxu0 0.0
        %3498 = vmatprep.subr.mxu0 0.0
        %3499 = vmatpush1.msra.mxu0 0.0
        %3500 = vmatprep.subr.mxu0 0.0
        %3501 = vmatpush1.msra.mxu0 0.0
        %3502 = vmatprep.subr.mxu0 0.0
        %3503 = vmatpush1.msra.mxu0 0.0
        %3504 = vmatprep.subr.mxu0 0.0
        %3505 = vmatpush1.msra.mxu0 0.0
        %3506 = vmatprep.subr.mxu0 0.0
        %3507 = vmatpush1.msra.mxu0 0.0
        %3508 = vmatprep.subr.mxu0 0.0
        %3509 = vmatpush1.msra.mxu0 0.0
        %3510 = vmatprep.subr.mxu0 0.0
        %3511 = vmatpush1.msra.mxu0 0.0
        %3512 = vmatprep.subr.mxu0 0.0
        %3513 = vmatpush1.msra.mxu0 0.0
        %3514 = vmatprep.subr.mxu0 0.0
        %3515 = vmatpush1.msra.mxu0 0.0
        %3516 = vmatprep.subr.mxu0 0.0
        %3517 = vmatpush1.msra.mxu0 0.0
        %3518 = vmatprep.subr.mxu0 0.0
        %3519 = vmatpush1.msra.mxu0 0.0
        %3520 = vmatprep.subr.mxu0 0.0
        %3521 = vmatpush1.msra.mxu0 0.0
        %3522 = vmatprep.subr.mxu0 0.0
        %3523 = vmatpush1.msra.mxu0 0.0
        %3524 = vmatprep.subr.mxu0 0.0
        %3525 = vmatpush1.msra.mxu0 0.0
        %3526 = vmatprep.mubr.f32.mxu0 0.0
        %3527 = vmatmul.mubr.f32.gmra.mrb[0].mxu0 %v3460
        %v3528 = vpop.f32.mrb[0].mxu0
        %v3529 = vadd.f32 %v1927, %v3528
        %v3530 = vpop.f32.mrb[0].mxu0
        %3531 = vdwg.mxu0
        %v3532 = vadd.f32 %v3456, %v3529
        %v3533 = vxor.u32 %v3532, 2147483648
        %v3534 = vmul.f32 %v3533, 1.442695
        %v3535 = vpow.pop %v3534
        %v3536 = vadd.f32 %v3535, 1.0
        %v3537 = vrcp.pop %v3536
        %v3538 = vmul.f32 1.0, %v3537
        %3540 = vrot.lane.b32.xlu0 %v3529, 96
        %v3541 = vpop.permute.xlu0 %3540
        %v3543 = vmul.f32 %v3538, %v3541
        %3545 = vrot.lane.b32.xlu0 %v3543, 32
        %v3546 = vpop.permute.xlu0 %3545
        %v3548 = vadd.f32 %v3456, %v3546
        %v3549 = vtanh.pop %v3548
        %v3550 = vsub.f32 1.0, %v3538
        %3552 = vrot.lane.b32.xlu0 %v3549, 112
        %v3553 = vpop.permute.xlu0 %3552
        %v3555 = vmul.f32 %v3550, %v3553
        %v3556 = vmul.f32 %v3538, %v3455
        %v3557 = vadd.f32 %v3555, %v3556
        %v3558 = vld [vmem:[%s35] sm:$0xff]
        %v3559 = vld [vmem:[%s35 + $0x8] sm:$0xff]
        %v3560 = vld [vmem:[%s39] sm:$0x1]
        %3562 = vrot.lane.b32.xlu0 %v3557, 112
        %v3563 = vpop.permute.xlu0 %3562
        %v3564 = vsel %vm1082, %v3563, 0
        %3566 = vmatprep.subr.mxu0 0.0
        %3567 = vmatpush1.msra.mxu0 %v3558
        %3568 = vmatprep.subr.mxu0 0.0
        %3569 = vmatpush1.msra.mxu0 %v3559
        %3570 = vmatprep.subr.mxu0 0.0
        %3571 = vmatpush1.msra.mxu0 0.0
        %3572 = vmatprep.subr.mxu0 0.0
        %3573 = vmatpush1.msra.mxu0 0.0
        %3574 = vmatprep.subr.mxu0 0.0
        %3575 = vmatpush1.msra.mxu0 0.0
        %3576 = vmatprep.subr.mxu0 0.0
        %3577 = vmatpush1.msra.mxu0 0.0
        %3578 = vmatprep.subr.mxu0 0.0
        %3579 = vmatpush1.msra.mxu0 0.0
        %3580 = vmatprep.subr.mxu0 0.0
        %3581 = vmatpush1.msra.mxu0 0.0
        %3582 = vmatprep.subr.mxu0 0.0
        %3583 = vmatpush1.msra.mxu0 0.0
        %3584 = vmatprep.subr.mxu0 0.0
        %3585 = vmatpush1.msra.mxu0 0.0
        %3586 = vmatprep.subr.mxu0 0.0
        %3587 = vmatpush1.msra.mxu0 0.0
        %3588 = vmatprep.subr.mxu0 0.0
        %3589 = vmatpush1.msra.mxu0 0.0
        %3590 = vmatprep.subr.mxu0 0.0
        %3591 = vmatpush1.msra.mxu0 0.0
        %3592 = vmatprep.subr.mxu0 0.0
        %3593 = vmatpush1.msra.mxu0 0.0
        %3594 = vmatprep.subr.mxu0 0.0
        %3595 = vmatpush1.msra.mxu0 0.0
        %3596 = vmatprep.subr.mxu0 0.0
        %3597 = vmatpush1.msra.mxu0 0.0
        %3598 = vmatprep.subr.mxu0 0.0
        %3599 = vmatpush1.msra.mxu0 0.0
        %3600 = vmatprep.subr.mxu0 0.0
        %3601 = vmatpush1.msra.mxu0 0.0
        %3602 = vmatprep.subr.mxu0 0.0
        %3603 = vmatpush1.msra.mxu0 0.0
        %3604 = vmatprep.subr.mxu0 0.0
        %3605 = vmatpush1.msra.mxu0 0.0
        %3606 = vmatprep.subr.mxu0 0.0
        %3607 = vmatpush1.msra.mxu0 0.0
        %3608 = vmatprep.subr.mxu0 0.0
        %3609 = vmatpush1.msra.mxu0 0.0
        %3610 = vmatprep.subr.mxu0 0.0
        %3611 = vmatpush1.msra.mxu0 0.0
        %3612 = vmatprep.subr.mxu0 0.0
        %3613 = vmatpush1.msra.mxu0 0.0
        %3614 = vmatprep.subr.mxu0 0.0
        %3615 = vmatpush1.msra.mxu0 0.0
        %3616 = vmatprep.subr.mxu0 0.0
        %3617 = vmatpush1.msra.mxu0 0.0
        %3618 = vmatprep.subr.mxu0 0.0
        %3619 = vmatpush1.msra.mxu0 0.0
        %3620 = vmatprep.subr.mxu0 0.0
        %3621 = vmatpush1.msra.mxu0 0.0
        %3622 = vmatprep.subr.mxu0 0.0
        %3623 = vmatpush1.msra.mxu0 0.0
        %3624 = vmatprep.subr.mxu0 0.0
        %3625 = vmatpush1.msra.mxu0 0.0
        %3626 = vmatprep.subr.mxu0 0.0
        %3627 = vmatpush1.msra.mxu0 0.0
        %3628 = vmatprep.subr.mxu0 0.0
        %3629 = vmatpush1.msra.mxu0 0.0
        %3630 = vmatprep.mubr.f32.mxu0 0.0
        %3631 = vmatmul.mubr.f32.gmra.mrb[0].mxu0 %v3564
        %v3632 = vpop.f32.mrb[0].mxu0
        %v3633 = vadd.f32 %v3560, %v3632
        %v3634 = vpop.f32.mrb[0].mxu0
        %3635 = vdwg.mxu0
        %v3636 = vld [vmem:[%s37] sm:$0xff]
        %v3637 = vld [vmem:[%s37 + $0x8] sm:$0xff]
        %v3638 = vld [vmem:[%s41] sm:$0x1]
        %3639 = vmatprep.subr.mxu0 0.0
        %3640 = vmatpush1.msra.mxu0 %v3636
        %3641 = vmatprep.subr.mxu0 0.0
        %3642 = vmatpush1.msra.mxu0 %v3637
        %3643 = vmatprep.subr.mxu0 0.0
        %3644 = vmatpush1.msra.mxu0 0.0
        %3645 = vmatprep.subr.mxu0 0.0
        %3646 = vmatpush1.msra.mxu0 0.0
        %3647 = vmatprep.subr.mxu0 0.0
        %3648 = vmatpush1.msra.mxu0 0.0
        %3649 = vmatprep.subr.mxu0 0.0
        %3650 = vmatpush1.msra.mxu0 0.0
        %3651 = vmatprep.subr.mxu0 0.0
        %3652 = vmatpush1.msra.mxu0 0.0
        %3653 = vmatprep.subr.mxu0 0.0
        %3654 = vmatpush1.msra.mxu0 0.0
        %3655 = vmatprep.subr.mxu0 0.0
        %3656 = vmatpush1.msra.mxu0 0.0
        %3657 = vmatprep.subr.mxu0 0.0
        %3658 = vmatpush1.msra.mxu0 0.0
        %3659 = vmatprep.subr.mxu0 0.0
        %3660 = vmatpush1.msra.mxu0 0.0
        %3661 = vmatprep.subr.mxu0 0.0
        %3662 = vmatpush1.msra.mxu0 0.0
        %3663 = vmatprep.subr.mxu0 0.0
        %3664 = vmatpush1.msra.mxu0 0.0
        %3665 = vmatprep.subr.mxu0 0.0
        %3666 = vmatpush1.msra.mxu0 0.0
        %3667 = vmatprep.subr.mxu0 0.0
        %3668 = vmatpush1.msra.mxu0 0.0
        %3669 = vmatprep.subr.mxu0 0.0
        %3670 = vmatpush1.msra.mxu0 0.0
        %3671 = vmatprep.subr.mxu0 0.0
        %3672 = vmatpush1.msra.mxu0 0.0
        %3673 = vmatprep.subr.mxu0 0.0
        %3674 = vmatpush1.msra.mxu0 0.0
        %3675 = vmatprep.subr.mxu0 0.0
        %3676 = vmatpush1.msra.mxu0 0.0
        %3677 = vmatprep.subr.mxu0 0.0
        %3678 = vmatpush1.msra.mxu0 0.0
        %3679 = vmatprep.subr.mxu0 0.0
        %3680 = vmatpush1.msra.mxu0 0.0
        %3681 = vmatprep.subr.mxu0 0.0
        %3682 = vmatpush1.msra.mxu0 0.0
        %3683 = vmatprep.subr.mxu0 0.0
        %3684 = vmatpush1.msra.mxu0 0.0
        %3685 = vmatprep.subr.mxu0 0.0
        %3686 = vmatpush1.msra.mxu0 0.0
        %3687 = vmatprep.subr.mxu0 0.0
        %3688 = vmatpush1.msra.mxu0 0.0
        %3689 = vmatprep.subr.mxu0 0.0
        %3690 = vmatpush1.msra.mxu0 0.0
        %3691 = vmatprep.subr.mxu0 0.0
        %3692 = vmatpush1.msra.mxu0 0.0
        %3693 = vmatprep.subr.mxu0 0.0
        %3694 = vmatpush1.msra.mxu0 0.0
        %3695 = vmatprep.subr.mxu0 0.0
        %3696 = vmatpush1.msra.mxu0 0.0
        %3697 = vmatprep.subr.mxu0 0.0
        %3698 = vmatpush1.msra.mxu0 0.0
        %3699 = vmatprep.subr.mxu0 0.0
        %3700 = vmatpush1.msra.mxu0 0.0
        %3701 = vmatprep.subr.mxu0 0.0
        %3702 = vmatpush1.msra.mxu0 0.0
        %3703 = vmatprep.mubr.f32.mxu0 0.0
        %3704 = vmatmul.mubr.f32.gmra.mrb[0].mxu0 %v1930
        %v3705 = vpop.f32.mrb[0].mxu0
        %v3706 = vadd.f32 %v3638, %v3705
        %v3707 = vpop.f32.mrb[0].mxu0
        %3708 = vdwg.mxu0
        %v3709 = vadd.f32 %v3633, %v3706
        %v3710 = vxor.u32 %v3709, 2147483648
        %v3711 = vmul.f32 %v3710, 1.442695
        %v3712 = vpow.pop %v3711
        %v3713 = vadd.f32 %v3712, 1.0
        %v3714 = vrcp.pop %v3713
        %v3715 = vmul.f32 1.0, %v3714
        %3717 = vrot.lane.b32.xlu0 %v3706, 96
        %v3718 = vpop.permute.xlu0 %3717
        %v3720 = vmul.f32 %v3715, %v3718
        %3722 = vrot.lane.b32.xlu0 %v3720, 32
        %v3723 = vpop.permute.xlu0 %3722
        %v3725 = vadd.f32 %v3633, %v3723
        %v3726 = vtanh.pop %v3725
        %v3727 = vsub.f32 1.0, %v3715
        %3729 = vrot.lane.b32.xlu0 %v3726, 112
        %v3730 = vpop.permute.xlu0 %3729
        %v3732 = vmul.f32 %v3727, %v3730
        %v3733 = vmul.f32 %v3715, 0.0
        %v3734 = vadd.f32 %v3732, %v3733
        %3736 = vrot.lane.b32.xlu0 %v3734, 112
        %v3737 = vpop.permute.xlu0 %3736
        %vm3739 = vcmask 122880
        %3740 = vst.msk [vmem:[#allocation3] sm:$0x1] %vm3739, %v3737
        %v3741 = vsel %vm1082, %v3737, 0
        %3743 = vmatprep.subr.mxu0 0.0
        %3744 = vmatpush1.msra.mxu0 %v3636
        %3745 = vmatprep.subr.mxu0 0.0
        %3746 = vmatpush1.msra.mxu0 %v3637
        %3747 = vmatprep.subr.mxu0 0.0
        %3748 = vmatpush1.msra.mxu0 0.0
        %3749 = vmatprep.subr.mxu0 0.0
        %3750 = vmatpush1.msra.mxu0 0.0
        %3751 = vmatprep.subr.mxu0 0.0
        %3752 = vmatpush1.msra.mxu0 0.0
        %3753 = vmatprep.subr.mxu0 0.0
        %3754 = vmatpush1.msra.mxu0 0.0
        %3755 = vmatprep.subr.mxu0 0.0
        %3756 = vmatpush1.msra.mxu0 0.0
        %3757 = vmatprep.subr.mxu0 0.0
        %3758 = vmatpush1.msra.mxu0 0.0
        %3759 = vmatprep.subr.mxu0 0.0
        %3760 = vmatpush1.msra.mxu0 0.0
        %3761 = vmatprep.subr.mxu0 0.0
        %3762 = vmatpush1.msra.mxu0 0.0
        %3763 = vmatprep.subr.mxu0 0.0
        %3764 = vmatpush1.msra.mxu0 0.0
        %3765 = vmatprep.subr.mxu0 0.0
        %3766 = vmatpush1.msra.mxu0 0.0
        %3767 = vmatprep.subr.mxu0 0.0
        %3768 = vmatpush1.msra.mxu0 0.0
        %3769 = vmatprep.subr.mxu0 0.0
        %3770 = vmatpush1.msra.mxu0 0.0
        %3771 = vmatprep.subr.mxu0 0.0
        %3772 = vmatpush1.msra.mxu0 0.0
        %3773 = vmatprep.subr.mxu0 0.0
        %3774 = vmatpush1.msra.mxu0 0.0
        %3775 = vmatprep.subr.mxu0 0.0
        %3776 = vmatpush1.msra.mxu0 0.0
        %3777 = vmatprep.subr.mxu0 0.0
        %3778 = vmatpush1.msra.mxu0 0.0
        %3779 = vmatprep.subr.mxu0 0.0
        %3780 = vmatpush1.msra.mxu0 0.0
        %3781 = vmatprep.subr.mxu0 0.0
        %3782 = vmatpush1.msra.mxu0 0.0
        %3783 = vmatprep.subr.mxu0 0.0
        %3784 = vmatpush1.msra.mxu0 0.0
        %3785 = vmatprep.subr.mxu0 0.0
        %3786 = vmatpush1.msra.mxu0 0.0
        %3787 = vmatprep.subr.mxu0 0.0
        %3788 = vmatpush1.msra.mxu0 0.0
        %3789 = vmatprep.subr.mxu0 0.0
        %3790 = vmatpush1.msra.mxu0 0.0
        %3791 = vmatprep.subr.mxu0 0.0
        %3792 = vmatpush1.msra.mxu0 0.0
        %3793 = vmatprep.subr.mxu0 0.0
        %3794 = vmatpush1.msra.mxu0 0.0
        %3795 = vmatprep.subr.mxu0 0.0
        %3796 = vmatpush1.msra.mxu0 0.0
        %3797 = vmatprep.subr.mxu0 0.0
        %3798 = vmatpush1.msra.mxu0 0.0
        %3799 = vmatprep.subr.mxu0 0.0
        %3800 = vmatpush1.msra.mxu0 0.0
        %3801 = vmatprep.subr.mxu0 0.0
        %3802 = vmatpush1.msra.mxu0 0.0
        %3803 = vmatprep.subr.mxu0 0.0
        %3804 = vmatpush1.msra.mxu0 0.0
        %3805 = vmatprep.subr.mxu0 0.0
        %3806 = vmatpush1.msra.mxu0 0.0
        %3807 = vmatprep.mubr.f32.mxu0 0.0
        %3808 = vmatmul.mubr.f32.gmra.mrb[0].mxu0 %v3741
        %v3809 = vpop.f32.mrb[0].mxu0
        %v3810 = vadd.f32 %v3638, %v3809
        %v3811 = vpop.f32.mrb[0].mxu0
        %3812 = vdwg.mxu0
        %v3813 = vadd.f32 %v3633, %v3810
        %v3814 = vxor.u32 %v3813, 2147483648
        %v3815 = vmul.f32 %v3814, 1.442695
        %v3816 = vpow.pop %v3815
        %v3817 = vadd.f32 %v3816, 1.0
        %v3818 = vrcp.pop %v3817
        %v3819 = vmul.f32 1.0, %v3818
        %3821 = vrot.lane.b32.xlu0 %v3810, 96
        %v3822 = vpop.permute.xlu0 %3821
        %v3824 = vmul.f32 %v3819, %v3822
        %3826 = vrot.lane.b32.xlu0 %v3824, 32
        %v3827 = vpop.permute.xlu0 %3826
        %v3829 = vadd.f32 %v3633, %v3827
        %v3830 = vtanh.pop %v3829
        %v3831 = vsub.f32 1.0, %v3819
        %3833 = vrot.lane.b32.xlu0 %v3830, 112
        %v3834 = vpop.permute.xlu0 %3833
        %v3836 = vmul.f32 %v3831, %v3834
        %v3837 = vmul.f32 %v3819, %v3734
        %v3838 = vadd.f32 %v3836, %v3837
        %3840 = vrot.lane.b32.xlu0 %v3838, 112
        %v3841 = vpop.permute.xlu0 %3840
        %3843 = vst.msk [vmem:[#allocation3 + $0x1] sm:$0x1] %vm3739, %v3841
        %v3844 = vsel %vm1082, %v3841, 0
        %3846 = vmatprep.subr.mxu0 0.0
        %3847 = vmatpush1.msra.mxu0 %v3636
        %3848 = vmatprep.subr.mxu0 0.0
        %3849 = vmatpush1.msra.mxu0 %v3637
        %3850 = vmatprep.subr.mxu0 0.0
        %3851 = vmatpush1.msra.mxu0 0.0
        %3852 = vmatprep.subr.mxu0 0.0
        %3853 = vmatpush1.msra.mxu0 0.0
        %3854 = vmatprep.subr.mxu0 0.0
        %3855 = vmatpush1.msra.mxu0 0.0
        %3856 = vmatprep.subr.mxu0 0.0
        %3857 = vmatpush1.msra.mxu0 0.0
        %3858 = vmatprep.subr.mxu0 0.0
        %3859 = vmatpush1.msra.mxu0 0.0
        %3860 = vmatprep.subr.mxu0 0.0
        %3861 = vmatpush1.msra.mxu0 0.0
        %3862 = vmatprep.subr.mxu0 0.0
        %3863 = vmatpush1.msra.mxu0 0.0
        %3864 = vmatprep.subr.mxu0 0.0
        %3865 = vmatpush1.msra.mxu0 0.0
        %3866 = vmatprep.subr.mxu0 0.0
        %3867 = vmatpush1.msra.mxu0 0.0
        %3868 = vmatprep.subr.mxu0 0.0
        %3869 = vmatpush1.msra.mxu0 0.0
        %3870 = vmatprep.subr.mxu0 0.0
        %3871 = vmatpush1.msra.mxu0 0.0
        %3872 = vmatprep.subr.mxu0 0.0
        %3873 = vmatpush1.msra.mxu0 0.0
        %3874 = vmatprep.subr.mxu0 0.0
        %3875 = vmatpush1.msra.mxu0 0.0
        %3876 = vmatprep.subr.mxu0 0.0
        %3877 = vmatpush1.msra.mxu0 0.0
        %3878 = vmatprep.subr.mxu0 0.0
        %3879 = vmatpush1.msra.mxu0 0.0
        %3880 = vmatprep.subr.mxu0 0.0
        %3881 = vmatpush1.msra.mxu0 0.0
        %3882 = vmatprep.subr.mxu0 0.0
        %3883 = vmatpush1.msra.mxu0 0.0
        %3884 = vmatprep.subr.mxu0 0.0
        %3885 = vmatpush1.msra.mxu0 0.0
        %3886 = vmatprep.subr.mxu0 0.0
        %3887 = vmatpush1.msra.mxu0 0.0
        %3888 = vmatprep.subr.mxu0 0.0
        %3889 = vmatpush1.msra.mxu0 0.0
        %3890 = vmatprep.subr.mxu0 0.0
        %3891 = vmatpush1.msra.mxu0 0.0
        %3892 = vmatprep.subr.mxu0 0.0
        %3893 = vmatpush1.msra.mxu0 0.0
        %3894 = vmatprep.subr.mxu0 0.0
        %3895 = vmatpush1.msra.mxu0 0.0
        %3896 = vmatprep.subr.mxu0 0.0
        %3897 = vmatpush1.msra.mxu0 0.0
        %3898 = vmatprep.subr.mxu0 0.0
        %3899 = vmatpush1.msra.mxu0 0.0
        %3900 = vmatprep.subr.mxu0 0.0
        %3901 = vmatpush1.msra.mxu0 0.0
        %3902 = vmatprep.subr.mxu0 0.0
        %3903 = vmatpush1.msra.mxu0 0.0
        %3904 = vmatprep.subr.mxu0 0.0
        %3905 = vmatpush1.msra.mxu0 0.0
        %3906 = vmatprep.subr.mxu0 0.0
        %3907 = vmatpush1.msra.mxu0 0.0
        %3908 = vmatprep.subr.mxu0 0.0
        %3909 = vmatpush1.msra.mxu0 0.0
        %3910 = vmatprep.mubr.f32.mxu0 0.0
        %3911 = vmatmul.mubr.f32.gmra.mrb[0].mxu0 %v3844
        %v3912 = vpop.f32.mrb[0].mxu0
        %v3913 = vadd.f32 %v3638, %v3912
        %v3914 = vpop.f32.mrb[0].mxu0
        %3915 = vdwg.mxu0
        %v3916 = vadd.f32 %v3633, %v3913
        %v3917 = vxor.u32 %v3916, 2147483648
        %v3918 = vmul.f32 %v3917, 1.442695
        %v3919 = vpow.pop %v3918
        %v3920 = vadd.f32 %v3919, 1.0
        %v3921 = vrcp.pop %v3920
        %v3922 = vmul.f32 1.0, %v3921
        %3924 = vrot.lane.b32.xlu0 %v3913, 96
        %v3925 = vpop.permute.xlu0 %3924
        %v3927 = vmul.f32 %v3922, %v3925
        %3929 = vrot.lane.b32.xlu0 %v3927, 32
        %v3930 = vpop.permute.xlu0 %3929
        %v3932 = vadd.f32 %v3633, %v3930
        %v3933 = vtanh.pop %v3932
        %v3934 = vsub.f32 1.0, %v3922
        %3936 = vrot.lane.b32.xlu0 %v3933, 112
        %v3937 = vpop.permute.xlu0 %3936
        %v3939 = vmul.f32 %v3934, %v3937
        %v3940 = vmul.f32 %v3922, %v3838
        %v3941 = vadd.f32 %v3939, %v3940
        %3943 = vrot.lane.b32.xlu0 %v3941, 112
        %v3944 = vpop.permute.xlu0 %3943
        %3946 = vst.msk [vmem:[#allocation3 + $0x2] sm:$0x1] %vm3739, %v3944
        %v3947 = vsel %vm1082, %v3944, 0
        %3949 = vmatprep.subr.mxu0 0.0
        %3950 = vmatpush1.msra.mxu0 %v3636
        %3951 = vmatprep.subr.mxu0 0.0
        %3952 = vmatpush1.msra.mxu0 %v3637
        %3953 = vmatprep.subr.mxu0 0.0
        %3954 = vmatpush1.msra.mxu0 0.0
        %3955 = vmatprep.subr.mxu0 0.0
        %3956 = vmatpush1.msra.mxu0 0.0
        %3957 = vmatprep.subr.mxu0 0.0
        %3958 = vmatpush1.msra.mxu0 0.0
        %3959 = vmatprep.subr.mxu0 0.0
        %3960 = vmatpush1.msra.mxu0 0.0
        %3961 = vmatprep.subr.mxu0 0.0
        %3962 = vmatpush1.msra.mxu0 0.0
        %3963 = vmatprep.subr.mxu0 0.0
        %3964 = vmatpush1.msra.mxu0 0.0
        %3965 = vmatprep.subr.mxu0 0.0
        %3966 = vmatpush1.msra.mxu0 0.0
        %3967 = vmatprep.subr.mxu0 0.0
        %3968 = vmatpush1.msra.mxu0 0.0
        %3969 = vmatprep.subr.mxu0 0.0
        %3970 = vmatpush1.msra.mxu0 0.0
        %3971 = vmatprep.subr.mxu0 0.0
        %3972 = vmatpush1.msra.mxu0 0.0
        %3973 = vmatprep.subr.mxu0 0.0
        %3974 = vmatpush1.msra.mxu0 0.0
        %3975 = vmatprep.subr.mxu0 0.0
        %3976 = vmatpush1.msra.mxu0 0.0
        %3977 = vmatprep.subr.mxu0 0.0
        %3978 = vmatpush1.msra.mxu0 0.0
        %3979 = vmatprep.subr.mxu0 0.0
        %3980 = vmatpush1.msra.mxu0 0.0
        %3981 = vmatprep.subr.mxu0 0.0
        %3982 = vmatpush1.msra.mxu0 0.0
        %3983 = vmatprep.subr.mxu0 0.0
        %3984 = vmatpush1.msra.mxu0 0.0
        %3985 = vmatprep.subr.mxu0 0.0
        %3986 = vmatpush1.msra.mxu0 0.0
        %3987 = vmatprep.subr.mxu0 0.0
        %3988 = vmatpush1.msra.mxu0 0.0
        %3989 = vmatprep.subr.mxu0 0.0
        %3990 = vmatpush1.msra.mxu0 0.0
        %3991 = vmatprep.subr.mxu0 0.0
        %3992 = vmatpush1.msra.mxu0 0.0
        %3993 = vmatprep.subr.mxu0 0.0
        %3994 = vmatpush1.msra.mxu0 0.0
        %3995 = vmatprep.subr.mxu0 0.0
        %3996 = vmatpush1.msra.mxu0 0.0
        %3997 = vmatprep.subr.mxu0 0.0
        %3998 = vmatpush1.msra.mxu0 0.0
        %3999 = vmatprep.subr.mxu0 0.0
        %4000 = vmatpush1.msra.mxu0 0.0
        %4001 = vmatprep.subr.mxu0 0.0
        %4002 = vmatpush1.msra.mxu0 0.0
        %4003 = vmatprep.subr.mxu0 0.0
        %4004 = vmatpush1.msra.mxu0 0.0
        %4005 = vmatprep.subr.mxu0 0.0
        %4006 = vmatpush1.msra.mxu0 0.0
        %4007 = vmatprep.subr.mxu0 0.0
        %4008 = vmatpush1.msra.mxu0 0.0
        %4009 = vmatprep.subr.mxu0 0.0
        %4010 = vmatpush1.msra.mxu0 0.0
        %4011 = vmatprep.subr.mxu0 0.0
        %4012 = vmatpush1.msra.mxu0 0.0
        %4013 = vmatprep.mubr.f32.mxu0 0.0
        %4014 = vmatmul.mubr.f32.gmra.mrb[0].mxu0 %v3947
        %v4015 = vpop.f32.mrb[0].mxu0
        %v4016 = vadd.f32 %v3638, %v4015
        %v4017 = vpop.f32.mrb[0].mxu0
        %4018 = vdwg.mxu0
        %v4019 = vadd.f32 %v3633, %v4016
        %v4020 = vxor.u32 %v4019, 2147483648
        %v4021 = vmul.f32 %v4020, 1.442695
        %v4022 = vpow.pop %v4021
        %v4023 = vadd.f32 %v4022, 1.0
        %v4024 = vrcp.pop %v4023
        %v4025 = vmul.f32 1.0, %v4024
        %4027 = vrot.lane.b32.xlu0 %v4016, 96
        %v4028 = vpop.permute.xlu0 %4027
        %v4030 = vmul.f32 %v4025, %v4028
        %4032 = vrot.lane.b32.xlu0 %v4030, 32
        %v4033 = vpop.permute.xlu0 %4032
        %v4035 = vadd.f32 %v3633, %v4033
        %v4036 = vtanh.pop %v4035
        %v4037 = vsub.f32 1.0, %v4025
        %4039 = vrot.lane.b32.xlu0 %v4036, 112
        %v4040 = vpop.permute.xlu0 %4039
        %v4042 = vmul.f32 %v4037, %v4040
        %v4043 = vmul.f32 %v4025, %v3941
        %v4044 = vadd.f32 %v4042, %v4043
        %4046 = vrot.lane.b32.xlu0 %v4044, 112
        %v4047 = vpop.permute.xlu0 %4046
        %4049 = vst.msk [vmem:[#allocation3 + $0x3] sm:$0x1] %vm3739, %v4047
        %v4050 = vsel %vm1082, %v4047, 0
        %4052 = vmatprep.subr.mxu0 0.0
        %4053 = vmatpush1.msra.mxu0 %v3636
        %4054 = vmatprep.subr.mxu0 0.0
        %4055 = vmatpush1.msra.mxu0 %v3637
        %4056 = vmatprep.subr.mxu0 0.0
        %4057 = vmatpush1.msra.mxu0 0.0
        %4058 = vmatprep.subr.mxu0 0.0
        %4059 = vmatpush1.msra.mxu0 0.0
        %4060 = vmatprep.subr.mxu0 0.0
        %4061 = vmatpush1.msra.mxu0 0.0
        %4062 = vmatprep.subr.mxu0 0.0
        %4063 = vmatpush1.msra.mxu0 0.0
        %4064 = vmatprep.subr.mxu0 0.0
        %4065 = vmatpush1.msra.mxu0 0.0
        %4066 = vmatprep.subr.mxu0 0.0
        %4067 = vmatpush1.msra.mxu0 0.0
        %4068 = vmatprep.subr.mxu0 0.0
        %4069 = vmatpush1.msra.mxu0 0.0
        %4070 = vmatprep.subr.mxu0 0.0
        %4071 = vmatpush1.msra.mxu0 0.0
        %4072 = vmatprep.subr.mxu0 0.0
        %4073 = vmatpush1.msra.mxu0 0.0
        %4074 = vmatprep.subr.mxu0 0.0
        %4075 = vmatpush1.msra.mxu0 0.0
        %4076 = vmatprep.subr.mxu0 0.0
        %4077 = vmatpush1.msra.mxu0 0.0
        %4078 = vmatprep.subr.mxu0 0.0
        %4079 = vmatpush1.msra.mxu0 0.0
        %4080 = vmatprep.subr.mxu0 0.0
        %4081 = vmatpush1.msra.mxu0 0.0
        %4082 = vmatprep.subr.mxu0 0.0
        %4083 = vmatpush1.msra.mxu0 0.0
        %4084 = vmatprep.subr.mxu0 0.0
        %4085 = vmatpush1.msra.mxu0 0.0
        %4086 = vmatprep.subr.mxu0 0.0
        %4087 = vmatpush1.msra.mxu0 0.0
        %4088 = vmatprep.subr.mxu0 0.0
        %4089 = vmatpush1.msra.mxu0 0.0
        %4090 = vmatprep.subr.mxu0 0.0
        %4091 = vmatpush1.msra.mxu0 0.0
        %4092 = vmatprep.subr.mxu0 0.0
        %4093 = vmatpush1.msra.mxu0 0.0
        %4094 = vmatprep.subr.mxu0 0.0
        %4095 = vmatpush1.msra.mxu0 0.0
        %4096 = vmatprep.subr.mxu0 0.0
        %4097 = vmatpush1.msra.mxu0 0.0
        %4098 = vmatprep.subr.mxu0 0.0
        %4099 = vmatpush1.msra.mxu0 0.0
        %4100 = vmatprep.subr.mxu0 0.0
        %4101 = vmatpush1.msra.mxu0 0.0
        %4102 = vmatprep.subr.mxu0 0.0
        %4103 = vmatpush1.msra.mxu0 0.0
        %4104 = vmatprep.subr.mxu0 0.0
        %4105 = vmatpush1.msra.mxu0 0.0
        %4106 = vmatprep.subr.mxu0 0.0
        %4107 = vmatpush1.msra.mxu0 0.0
        %4108 = vmatprep.subr.mxu0 0.0
        %4109 = vmatpush1.msra.mxu0 0.0
        %4110 = vmatprep.subr.mxu0 0.0
        %4111 = vmatpush1.msra.mxu0 0.0
        %4112 = vmatprep.subr.mxu0 0.0
        %4113 = vmatpush1.msra.mxu0 0.0
        %4114 = vmatprep.subr.mxu0 0.0
        %4115 = vmatpush1.msra.mxu0 0.0
        %4116 = vmatprep.mubr.f32.mxu0 0.0
        %4117 = vmatmul.mubr.f32.gmra.mrb[0].mxu0 %v4050
        %v4118 = vpop.f32.mrb[0].mxu0
        %v4119 = vadd.f32 %v3638, %v4118
        %v4120 = vpop.f32.mrb[0].mxu0
        %4121 = vdwg.mxu0
        %v4122 = vadd.f32 %v3633, %v4119
        %v4123 = vxor.u32 %v4122, 2147483648
        %v4124 = vmul.f32 %v4123, 1.442695
        %v4125 = vpow.pop %v4124
        %v4126 = vadd.f32 %v4125, 1.0
        %v4127 = vrcp.pop %v4126
        %v4128 = vmul.f32 1.0, %v4127
        %4130 = vrot.lane.b32.xlu0 %v4119, 96
        %v4131 = vpop.permute.xlu0 %4130
        %v4133 = vmul.f32 %v4128, %v4131
        %4135 = vrot.lane.b32.xlu0 %v4133, 32
        %v4136 = vpop.permute.xlu0 %4135
        %v4138 = vadd.f32 %v3633, %v4136
        %v4139 = vtanh.pop %v4138
        %v4140 = vsub.f32 1.0, %v4128
        %4142 = vrot.lane.b32.xlu0 %v4139, 112
        %v4143 = vpop.permute.xlu0 %4142
        %v4145 = vmul.f32 %v4140, %v4143
        %v4146 = vmul.f32 %v4128, %v4044
        %v4147 = vadd.f32 %v4145, %v4146
        %4149 = vrot.lane.b32.xlu0 %v4147, 112
        %v4150 = vpop.permute.xlu0 %4149
        %4152 = vst.msk [vmem:[#allocation3 + $0x4] sm:$0x1] %vm3739, %v4150
        %v4153 = vsel %vm1082, %v4150, 0
        %4155 = vmatprep.subr.mxu0 0.0
        %4156 = vmatpush1.msra.mxu0 %v3636
        %4157 = vmatprep.subr.mxu0 0.0
        %4158 = vmatpush1.msra.mxu0 %v3637
        %4159 = vmatprep.subr.mxu0 0.0
        %4160 = vmatpush1.msra.mxu0 0.0
        %4161 = vmatprep.subr.mxu0 0.0
        %4162 = vmatpush1.msra.mxu0 0.0
        %4163 = vmatprep.subr.mxu0 0.0
        %4164 = vmatpush1.msra.mxu0 0.0
        %4165 = vmatprep.subr.mxu0 0.0
        %4166 = vmatpush1.msra.mxu0 0.0
        %4167 = vmatprep.subr.mxu0 0.0
        %4168 = vmatpush1.msra.mxu0 0.0
        %4169 = vmatprep.subr.mxu0 0.0
        %4170 = vmatpush1.msra.mxu0 0.0
        %4171 = vmatprep.subr.mxu0 0.0
        %4172 = vmatpush1.msra.mxu0 0.0
        %4173 = vmatprep.subr.mxu0 0.0
        %4174 = vmatpush1.msra.mxu0 0.0
        %4175 = vmatprep.subr.mxu0 0.0
        %4176 = vmatpush1.msra.mxu0 0.0
        %4177 = vmatprep.subr.mxu0 0.0
        %4178 = vmatpush1.msra.mxu0 0.0
        %4179 = vmatprep.subr.mxu0 0.0
        %4180 = vmatpush1.msra.mxu0 0.0
        %4181 = vmatprep.subr.mxu0 0.0
        %4182 = vmatpush1.msra.mxu0 0.0
        %4183 = vmatprep.subr.mxu0 0.0
        %4184 = vmatpush1.msra.mxu0 0.0
        %4185 = vmatprep.subr.mxu0 0.0
        %4186 = vmatpush1.msra.mxu0 0.0
        %4187 = vmatprep.subr.mxu0 0.0
        %4188 = vmatpush1.msra.mxu0 0.0
        %4189 = vmatprep.subr.mxu0 0.0
        %4190 = vmatpush1.msra.mxu0 0.0
        %4191 = vmatprep.subr.mxu0 0.0
        %4192 = vmatpush1.msra.mxu0 0.0
        %4193 = vmatprep.subr.mxu0 0.0
        %4194 = vmatpush1.msra.mxu0 0.0
        %4195 = vmatprep.subr.mxu0 0.0
        %4196 = vmatpush1.msra.mxu0 0.0
        %4197 = vmatprep.subr.mxu0 0.0
        %4198 = vmatpush1.msra.mxu0 0.0
        %4199 = vmatprep.subr.mxu0 0.0
        %4200 = vmatpush1.msra.mxu0 0.0
        %4201 = vmatprep.subr.mxu0 0.0
        %4202 = vmatpush1.msra.mxu0 0.0
        %4203 = vmatprep.subr.mxu0 0.0
        %4204 = vmatpush1.msra.mxu0 0.0
        %4205 = vmatprep.subr.mxu0 0.0
        %4206 = vmatpush1.msra.mxu0 0.0
        %4207 = vmatprep.subr.mxu0 0.0
        %4208 = vmatpush1.msra.mxu0 0.0
        %4209 = vmatprep.subr.mxu0 0.0
        %4210 = vmatpush1.msra.mxu0 0.0
        %4211 = vmatprep.subr.mxu0 0.0
        %4212 = vmatpush1.msra.mxu0 0.0
        %4213 = vmatprep.subr.mxu0 0.0
        %4214 = vmatpush1.msra.mxu0 0.0
        %4215 = vmatprep.subr.mxu0 0.0
        %4216 = vmatpush1.msra.mxu0 0.0
        %4217 = vmatprep.subr.mxu0 0.0
        %4218 = vmatpush1.msra.mxu0 0.0
        %4219 = vmatprep.mubr.f32.mxu0 0.0
        %4220 = vmatmul.mubr.f32.gmra.mrb[0].mxu0 %v4153
        %v4221 = vpop.f32.mrb[0].mxu0
        %v4222 = vadd.f32 %v3638, %v4221
        %v4223 = vpop.f32.mrb[0].mxu0
        %4224 = vdwg.mxu0
        %v4225 = vadd.f32 %v3633, %v4222
        %v4226 = vxor.u32 %v4225, 2147483648
        %v4227 = vmul.f32 %v4226, 1.442695
        %v4228 = vpow.pop %v4227
        %v4229 = vadd.f32 %v4228, 1.0
        %v4230 = vrcp.pop %v4229
        %v4231 = vmul.f32 1.0, %v4230
        %4233 = vrot.lane.b32.xlu0 %v4222, 96
        %v4234 = vpop.permute.xlu0 %4233
        %v4236 = vmul.f32 %v4231, %v4234
        %4238 = vrot.lane.b32.xlu0 %v4236, 32
        %v4239 = vpop.permute.xlu0 %4238
        %v4241 = vadd.f32 %v3633, %v4239
        %v4242 = vtanh.pop %v4241
        %v4243 = vsub.f32 1.0, %v4231
        %4245 = vrot.lane.b32.xlu0 %v4242, 112
        %v4246 = vpop.permute.xlu0 %4245
        %v4248 = vmul.f32 %v4243, %v4246
        %v4249 = vmul.f32 %v4231, %v4147
        %v4250 = vadd.f32 %v4248, %v4249
        %4252 = vrot.lane.b32.xlu0 %v4250, 112
        %v4253 = vpop.permute.xlu0 %4252
        %4255 = vst.msk [vmem:[#allocation3 + $0x5] sm:$0x1] %vm3739, %v4253
        %v4256 = vsel %vm1082, %v4253, 0
        %4258 = vmatprep.subr.mxu0 0.0
        %4259 = vmatpush1.msra.mxu0 %v3636
        %4260 = vmatprep.subr.mxu0 0.0
        %4261 = vmatpush1.msra.mxu0 %v3637
        %4262 = vmatprep.subr.mxu0 0.0
        %4263 = vmatpush1.msra.mxu0 0.0
        %4264 = vmatprep.subr.mxu0 0.0
        %4265 = vmatpush1.msra.mxu0 0.0
        %4266 = vmatprep.subr.mxu0 0.0
        %4267 = vmatpush1.msra.mxu0 0.0
        %4268 = vmatprep.subr.mxu0 0.0
        %4269 = vmatpush1.msra.mxu0 0.0
        %4270 = vmatprep.subr.mxu0 0.0
        %4271 = vmatpush1.msra.mxu0 0.0
        %4272 = vmatprep.subr.mxu0 0.0
        %4273 = vmatpush1.msra.mxu0 0.0
        %4274 = vmatprep.subr.mxu0 0.0
        %4275 = vmatpush1.msra.mxu0 0.0
        %4276 = vmatprep.subr.mxu0 0.0
        %4277 = vmatpush1.msra.mxu0 0.0
        %4278 = vmatprep.subr.mxu0 0.0
        %4279 = vmatpush1.msra.mxu0 0.0
        %4280 = vmatprep.subr.mxu0 0.0
        %4281 = vmatpush1.msra.mxu0 0.0
        %4282 = vmatprep.subr.mxu0 0.0
        %4283 = vmatpush1.msra.mxu0 0.0
        %4284 = vmatprep.subr.mxu0 0.0
        %4285 = vmatpush1.msra.mxu0 0.0
        %4286 = vmatprep.subr.mxu0 0.0
        %4287 = vmatpush1.msra.mxu0 0.0
        %4288 = vmatprep.subr.mxu0 0.0
        %4289 = vmatpush1.msra.mxu0 0.0
        %4290 = vmatprep.subr.mxu0 0.0
        %4291 = vmatpush1.msra.mxu0 0.0
        %4292 = vmatprep.subr.mxu0 0.0
        %4293 = vmatpush1.msra.mxu0 0.0
        %4294 = vmatprep.subr.mxu0 0.0
        %4295 = vmatpush1.msra.mxu0 0.0
        %4296 = vmatprep.subr.mxu0 0.0
        %4297 = vmatpush1.msra.mxu0 0.0
        %4298 = vmatprep.subr.mxu0 0.0
        %4299 = vmatpush1.msra.mxu0 0.0
        %4300 = vmatprep.subr.mxu0 0.0
        %4301 = vmatpush1.msra.mxu0 0.0
        %4302 = vmatprep.subr.mxu0 0.0
        %4303 = vmatpush1.msra.mxu0 0.0
        %4304 = vmatprep.subr.mxu0 0.0
        %4305 = vmatpush1.msra.mxu0 0.0
        %4306 = vmatprep.subr.mxu0 0.0
        %4307 = vmatpush1.msra.mxu0 0.0
        %4308 = vmatprep.subr.mxu0 0.0
        %4309 = vmatpush1.msra.mxu0 0.0
        %4310 = vmatprep.subr.mxu0 0.0
        %4311 = vmatpush1.msra.mxu0 0.0
        %4312 = vmatprep.subr.mxu0 0.0
        %4313 = vmatpush1.msra.mxu0 0.0
        %4314 = vmatprep.subr.mxu0 0.0
        %4315 = vmatpush1.msra.mxu0 0.0
        %4316 = vmatprep.subr.mxu0 0.0
        %4317 = vmatpush1.msra.mxu0 0.0
        %4318 = vmatprep.subr.mxu0 0.0
        %4319 = vmatpush1.msra.mxu0 0.0
        %4320 = vmatprep.subr.mxu0 0.0
        %4321 = vmatpush1.msra.mxu0 0.0
        %4322 = vmatprep.mubr.f32.mxu0 0.0
        %4323 = vmatmul.mubr.f32.gmra.mrb[0].mxu0 %v4256
        %v4324 = vpop.f32.mrb[0].mxu0
        %v4325 = vadd.f32 %v3638, %v4324
        %v4326 = vpop.f32.mrb[0].mxu0
        %4327 = vdwg.mxu0
        %v4328 = vadd.f32 %v3633, %v4325
        %v4329 = vxor.u32 %v4328, 2147483648
        %v4330 = vmul.f32 %v4329, 1.442695
        %v4331 = vpow.pop %v4330
        %v4332 = vadd.f32 %v4331, 1.0
        %v4333 = vrcp.pop %v4332
        %v4334 = vmul.f32 1.0, %v4333
        %4336 = vrot.lane.b32.xlu0 %v4325, 96
        %v4337 = vpop.permute.xlu0 %4336
        %v4339 = vmul.f32 %v4334, %v4337
        %4341 = vrot.lane.b32.xlu0 %v4339, 32
        %v4342 = vpop.permute.xlu0 %4341
        %v4344 = vadd.f32 %v3633, %v4342
        %v4345 = vtanh.pop %v4344
        %v4346 = vsub.f32 1.0, %v4334
        %4348 = vrot.lane.b32.xlu0 %v4345, 112
        %v4349 = vpop.permute.xlu0 %4348
        %v4351 = vmul.f32 %v4346, %v4349
        %v4352 = vmul.f32 %v4334, %v4250
        %v4353 = vadd.f32 %v4351, %v4352
        %4355 = vrot.lane.b32.xlu0 %v4353, 112
        %v4356 = vpop.permute.xlu0 %4355
        %4358 = vst.msk [vmem:[#allocation3 + $0x6] sm:$0x1] %vm3739, %v4356
        %v4359 = vsel %vm1082, %v4356, 0
        %4361 = vmatprep.subr.mxu0 0.0
        %4362 = vmatpush1.msra.mxu0 %v3636
        %4363 = vmatprep.subr.mxu0 0.0
        %4364 = vmatpush1.msra.mxu0 %v3637
        %4365 = vmatprep.subr.mxu0 0.0
        %4366 = vmatpush1.msra.mxu0 0.0
        %4367 = vmatprep.subr.mxu0 0.0
        %4368 = vmatpush1.msra.mxu0 0.0
        %4369 = vmatprep.subr.mxu0 0.0
        %4370 = vmatpush1.msra.mxu0 0.0
        %4371 = vmatprep.subr.mxu0 0.0
        %4372 = vmatpush1.msra.mxu0 0.0
        %4373 = vmatprep.subr.mxu0 0.0
        %4374 = vmatpush1.msra.mxu0 0.0
        %4375 = vmatprep.subr.mxu0 0.0
        %4376 = vmatpush1.msra.mxu0 0.0
        %4377 = vmatprep.subr.mxu0 0.0
        %4378 = vmatpush1.msra.mxu0 0.0
        %4379 = vmatprep.subr.mxu0 0.0
        %4380 = vmatpush1.msra.mxu0 0.0
        %4381 = vmatprep.subr.mxu0 0.0
        %4382 = vmatpush1.msra.mxu0 0.0
        %4383 = vmatprep.subr.mxu0 0.0
        %4384 = vmatpush1.msra.mxu0 0.0
        %4385 = vmatprep.subr.mxu0 0.0
        %4386 = vmatpush1.msra.mxu0 0.0
        %4387 = vmatprep.subr.mxu0 0.0
        %4388 = vmatpush1.msra.mxu0 0.0
        %4389 = vmatprep.subr.mxu0 0.0
        %4390 = vmatpush1.msra.mxu0 0.0
        %4391 = vmatprep.subr.mxu0 0.0
        %4392 = vmatpush1.msra.mxu0 0.0
        %4393 = vmatprep.subr.mxu0 0.0
        %4394 = vmatpush1.msra.mxu0 0.0
        %4395 = vmatprep.subr.mxu0 0.0
        %4396 = vmatpush1.msra.mxu0 0.0
        %4397 = vmatprep.subr.mxu0 0.0
        %4398 = vmatpush1.msra.mxu0 0.0
        %4399 = vmatprep.subr.mxu0 0.0
        %4400 = vmatpush1.msra.mxu0 0.0
        %4401 = vmatprep.subr.mxu0 0.0
        %4402 = vmatpush1.msra.mxu0 0.0
        %4403 = vmatprep.subr.mxu0 0.0
        %4404 = vmatpush1.msra.mxu0 0.0
        %4405 = vmatprep.subr.mxu0 0.0
        %4406 = vmatpush1.msra.mxu0 0.0
        %4407 = vmatprep.subr.mxu0 0.0
        %4408 = vmatpush1.msra.mxu0 0.0
        %4409 = vmatprep.subr.mxu0 0.0
        %4410 = vmatpush1.msra.mxu0 0.0
        %4411 = vmatprep.subr.mxu0 0.0
        %4412 = vmatpush1.msra.mxu0 0.0
        %4413 = vmatprep.subr.mxu0 0.0
        %4414 = vmatpush1.msra.mxu0 0.0
        %4415 = vmatprep.subr.mxu0 0.0
        %4416 = vmatpush1.msra.mxu0 0.0
        %4417 = vmatprep.subr.mxu0 0.0
        %4418 = vmatpush1.msra.mxu0 0.0
        %4419 = vmatprep.subr.mxu0 0.0
        %4420 = vmatpush1.msra.mxu0 0.0
        %4421 = vmatprep.subr.mxu0 0.0
        %4422 = vmatpush1.msra.mxu0 0.0
        %4423 = vmatprep.subr.mxu0 0.0
        %4424 = vmatpush1.msra.mxu0 0.0
        %4425 = vmatprep.mubr.f32.mxu0 0.0
        %4426 = vmatmul.mubr.f32.gmra.mrb[0].mxu0 %v4359
        %v4427 = vpop.f32.mrb[0].mxu0
        %v4428 = vadd.f32 %v3638, %v4427
        %v4429 = vpop.f32.mrb[0].mxu0
        %4430 = vdwg.mxu0
        %v4431 = vadd.f32 %v3633, %v4428
        %v4432 = vxor.u32 %v4431, 2147483648
        %v4433 = vmul.f32 %v4432, 1.442695
        %v4434 = vpow.pop %v4433
        %v4435 = vadd.f32 %v4434, 1.0
        %v4436 = vrcp.pop %v4435
        %v4437 = vmul.f32 1.0, %v4436
        %4439 = vrot.lane.b32.xlu0 %v4428, 96
        %v4440 = vpop.permute.xlu0 %4439
        %v4442 = vmul.f32 %v4437, %v4440
        %4444 = vrot.lane.b32.xlu0 %v4442, 32
        %v4445 = vpop.permute.xlu0 %4444
        %v4447 = vadd.f32 %v3633, %v4445
        %v4448 = vtanh.pop %v4447
        %v4449 = vsub.f32 1.0, %v4437
        %4451 = vrot.lane.b32.xlu0 %v4448, 112
        %v4452 = vpop.permute.xlu0 %4451
        %v4454 = vmul.f32 %v4449, %v4452
        %v4455 = vmul.f32 %v4437, %v4353
        %v4456 = vadd.f32 %v4454, %v4455
        %4458 = vrot.lane.b32.xlu0 %v4456, 112
        %v4459 = vpop.permute.xlu0 %4458
        %4461 = vst.msk [vmem:[#allocation3 + $0x7] sm:$0x1] %vm3739, %v4459
        %v4462 = vsel %vm1082, %v4459, 0
        %4464 = vmatprep.subr.mxu0 0.0
        %4465 = vmatpush1.msra.mxu0 %v3636
        %4466 = vmatprep.subr.mxu0 0.0
        %4467 = vmatpush1.msra.mxu0 %v3637
        %4468 = vmatprep.subr.mxu0 0.0
        %4469 = vmatpush1.msra.mxu0 0.0
        %4470 = vmatprep.subr.mxu0 0.0
        %4471 = vmatpush1.msra.mxu0 0.0
        %4472 = vmatprep.subr.mxu0 0.0
        %4473 = vmatpush1.msra.mxu0 0.0
        %4474 = vmatprep.subr.mxu0 0.0
        %4475 = vmatpush1.msra.mxu0 0.0
        %4476 = vmatprep.subr.mxu0 0.0
        %4477 = vmatpush1.msra.mxu0 0.0
        %4478 = vmatprep.subr.mxu0 0.0
        %4479 = vmatpush1.msra.mxu0 0.0
        %4480 = vmatprep.subr.mxu0 0.0
        %4481 = vmatpush1.msra.mxu0 0.0
        %4482 = vmatprep.subr.mxu0 0.0
        %4483 = vmatpush1.msra.mxu0 0.0
        %4484 = vmatprep.subr.mxu0 0.0
        %4485 = vmatpush1.msra.mxu0 0.0
        %4486 = vmatprep.subr.mxu0 0.0
        %4487 = vmatpush1.msra.mxu0 0.0
        %4488 = vmatprep.subr.mxu0 0.0
        %4489 = vmatpush1.msra.mxu0 0.0
        %4490 = vmatprep.subr.mxu0 0.0
        %4491 = vmatpush1.msra.mxu0 0.0
        %4492 = vmatprep.subr.mxu0 0.0
        %4493 = vmatpush1.msra.mxu0 0.0
        %4494 = vmatprep.subr.mxu0 0.0
        %4495 = vmatpush1.msra.mxu0 0.0
        %4496 = vmatprep.subr.mxu0 0.0
        %4497 = vmatpush1.msra.mxu0 0.0
        %4498 = vmatprep.subr.mxu0 0.0
        %4499 = vmatpush1.msra.mxu0 0.0
        %4500 = vmatprep.subr.mxu0 0.0
        %4501 = vmatpush1.msra.mxu0 0.0
        %4502 = vmatprep.subr.mxu0 0.0
        %4503 = vmatpush1.msra.mxu0 0.0
        %4504 = vmatprep.subr.mxu0 0.0
        %4505 = vmatpush1.msra.mxu0 0.0
        %4506 = vmatprep.subr.mxu0 0.0
        %4507 = vmatpush1.msra.mxu0 0.0
        %4508 = vmatprep.subr.mxu0 0.0
        %4509 = vmatpush1.msra.mxu0 0.0
        %4510 = vmatprep.subr.mxu0 0.0
        %4511 = vmatpush1.msra.mxu0 0.0
        %4512 = vmatprep.subr.mxu0 0.0
        %4513 = vmatpush1.msra.mxu0 0.0
        %4514 = vmatprep.subr.mxu0 0.0
        %4515 = vmatpush1.msra.mxu0 0.0
        %4516 = vmatprep.subr.mxu0 0.0
        %4517 = vmatpush1.msra.mxu0 0.0
        %4518 = vmatprep.subr.mxu0 0.0
        %4519 = vmatpush1.msra.mxu0 0.0
        %4520 = vmatprep.subr.mxu0 0.0
        %4521 = vmatpush1.msra.mxu0 0.0
        %4522 = vmatprep.subr.mxu0 0.0
        %4523 = vmatpush1.msra.mxu0 0.0
        %4524 = vmatprep.subr.mxu0 0.0
        %4525 = vmatpush1.msra.mxu0 0.0
        %4526 = vmatprep.subr.mxu0 0.0
        %4527 = vmatpush1.msra.mxu0 0.0
        %4528 = vmatprep.mubr.f32.mxu0 0.0
        %4529 = vmatmul.mubr.f32.gmra.mrb[0].mxu0 %v4462
        %v4530 = vpop.f32.mrb[0].mxu0
        %v4531 = vadd.f32 %v3638, %v4530
        %v4532 = vpop.f32.mrb[0].mxu0
        %4533 = vdwg.mxu0
        %v4534 = vadd.f32 %v3633, %v4531
        %v4535 = vxor.u32 %v4534, 2147483648
        %v4536 = vmul.f32 %v4535, 1.442695
        %v4537 = vpow.pop %v4536
        %v4538 = vadd.f32 %v4537, 1.0
        %v4539 = vrcp.pop %v4538
        %v4540 = vmul.f32 1.0, %v4539
        %4542 = vrot.lane.b32.xlu0 %v4531, 96
        %v4543 = vpop.permute.xlu0 %4542
        %v4545 = vmul.f32 %v4540, %v4543
        %4547 = vrot.lane.b32.xlu0 %v4545, 32
        %v4548 = vpop.permute.xlu0 %4547
        %v4550 = vadd.f32 %v3633, %v4548
        %v4551 = vtanh.pop %v4550
        %v4552 = vsub.f32 1.0, %v4540
        %4554 = vrot.lane.b32.xlu0 %v4551, 112
        %v4555 = vpop.permute.xlu0 %4554
        %v4557 = vmul.f32 %v4552, %v4555
        %v4558 = vmul.f32 %v4540, %v4456
        %v4559 = vadd.f32 %v4557, %v4558
        %4561 = vrot.lane.b32.xlu0 %v4559, 112
        %v4562 = vpop.permute.xlu0 %4561
        %4564 = vst.msk [vmem:[#allocation3 + $0x8] sm:$0x1] %vm3739, %v4562
        %v4565 = vsel %vm1082, %v4562, 0
        %4567 = vmatprep.subr.mxu0 0.0
        %4568 = vmatpush1.msra.mxu0 %v3636
        %4569 = vmatprep.subr.mxu0 0.0
        %4570 = vmatpush1.msra.mxu0 %v3637
        %4571 = vmatprep.subr.mxu0 0.0
        %4572 = vmatpush1.msra.mxu0 0.0
        %4573 = vmatprep.subr.mxu0 0.0
        %4574 = vmatpush1.msra.mxu0 0.0
        %4575 = vmatprep.subr.mxu0 0.0
        %4576 = vmatpush1.msra.mxu0 0.0
        %4577 = vmatprep.subr.mxu0 0.0
        %4578 = vmatpush1.msra.mxu0 0.0
        %4579 = vmatprep.subr.mxu0 0.0
        %4580 = vmatpush1.msra.mxu0 0.0
        %4581 = vmatprep.subr.mxu0 0.0
        %4582 = vmatpush1.msra.mxu0 0.0
        %4583 = vmatprep.subr.mxu0 0.0
        %4584 = vmatpush1.msra.mxu0 0.0
        %4585 = vmatprep.subr.mxu0 0.0
        %4586 = vmatpush1.msra.mxu0 0.0
        %4587 = vmatprep.subr.mxu0 0.0
        %4588 = vmatpush1.msra.mxu0 0.0
        %4589 = vmatprep.subr.mxu0 0.0
        %4590 = vmatpush1.msra.mxu0 0.0
        %4591 = vmatprep.subr.mxu0 0.0
        %4592 = vmatpush1.msra.mxu0 0.0
        %4593 = vmatprep.subr.mxu0 0.0
        %4594 = vmatpush1.msra.mxu0 0.0
        %4595 = vmatprep.subr.mxu0 0.0
        %4596 = vmatpush1.msra.mxu0 0.0
        %4597 = vmatprep.subr.mxu0 0.0
        %4598 = vmatpush1.msra.mxu0 0.0
        %4599 = vmatprep.subr.mxu0 0.0
        %4600 = vmatpush1.msra.mxu0 0.0
        %4601 = vmatprep.subr.mxu0 0.0
        %4602 = vmatpush1.msra.mxu0 0.0
        %4603 = vmatprep.subr.mxu0 0.0
        %4604 = vmatpush1.msra.mxu0 0.0
        %4605 = vmatprep.subr.mxu0 0.0
        %4606 = vmatpush1.msra.mxu0 0.0
        %4607 = vmatprep.subr.mxu0 0.0
        %4608 = vmatpush1.msra.mxu0 0.0
        %4609 = vmatprep.subr.mxu0 0.0
        %4610 = vmatpush1.msra.mxu0 0.0
        %4611 = vmatprep.subr.mxu0 0.0
        %4612 = vmatpush1.msra.mxu0 0.0
        %4613 = vmatprep.subr.mxu0 0.0
        %4614 = vmatpush1.msra.mxu0 0.0
        %4615 = vmatprep.subr.mxu0 0.0
        %4616 = vmatpush1.msra.mxu0 0.0
        %4617 = vmatprep.subr.mxu0 0.0
        %4618 = vmatpush1.msra.mxu0 0.0
        %4619 = vmatprep.subr.mxu0 0.0
        %4620 = vmatpush1.msra.mxu0 0.0
        %4621 = vmatprep.subr.mxu0 0.0
        %4622 = vmatpush1.msra.mxu0 0.0
        %4623 = vmatprep.subr.mxu0 0.0
        %4624 = vmatpush1.msra.mxu0 0.0
        %4625 = vmatprep.subr.mxu0 0.0
        %4626 = vmatpush1.msra.mxu0 0.0
        %4627 = vmatprep.subr.mxu0 0.0
        %4628 = vmatpush1.msra.mxu0 0.0
        %4629 = vmatprep.subr.mxu0 0.0
        %4630 = vmatpush1.msra.mxu0 0.0
        %4631 = vmatprep.mubr.f32.mxu0 0.0
        %4632 = vmatmul.mubr.f32.gmra.mrb[0].mxu0 %v4565
        %v4633 = vpop.f32.mrb[0].mxu0
        %v4634 = vadd.f32 %v3638, %v4633
        %v4635 = vpop.f32.mrb[0].mxu0
        %4636 = vdwg.mxu0
        %v4637 = vadd.f32 %v3633, %v4634
        %v4638 = vxor.u32 %v4637, 2147483648
        %v4639 = vmul.f32 %v4638, 1.442695
        %v4640 = vpow.pop %v4639
        %v4641 = vadd.f32 %v4640, 1.0
        %v4642 = vrcp.pop %v4641
        %v4643 = vmul.f32 1.0, %v4642
        %4645 = vrot.lane.b32.xlu0 %v4634, 96
        %v4646 = vpop.permute.xlu0 %4645
        %v4648 = vmul.f32 %v4643, %v4646
        %4650 = vrot.lane.b32.xlu0 %v4648, 32
        %v4651 = vpop.permute.xlu0 %4650
        %v4653 = vadd.f32 %v3633, %v4651
        %v4654 = vtanh.pop %v4653
        %v4655 = vsub.f32 1.0, %v4643
        %4657 = vrot.lane.b32.xlu0 %v4654, 112
        %v4658 = vpop.permute.xlu0 %4657
        %v4660 = vmul.f32 %v4655, %v4658
        %v4661 = vmul.f32 %v4643, %v4559
        %v4662 = vadd.f32 %v4660, %v4661
        %4664 = vrot.lane.b32.xlu0 %v4662, 112
        %v4665 = vpop.permute.xlu0 %4664
        %4667 = vst.msk [vmem:[#allocation3 + $0x9] sm:$0x1] %vm3739, %v4665
        %v4668 = vsel %vm1082, %v4665, 0
        %4670 = vmatprep.subr.mxu0 0.0
        %4671 = vmatpush1.msra.mxu0 %v3636
        %4672 = vmatprep.subr.mxu0 0.0
        %4673 = vmatpush1.msra.mxu0 %v3637
        %4674 = vmatprep.subr.mxu0 0.0
        %4675 = vmatpush1.msra.mxu0 0.0
        %4676 = vmatprep.subr.mxu0 0.0
        %4677 = vmatpush1.msra.mxu0 0.0
        %4678 = vmatprep.subr.mxu0 0.0
        %4679 = vmatpush1.msra.mxu0 0.0
        %4680 = vmatprep.subr.mxu0 0.0
        %4681 = vmatpush1.msra.mxu0 0.0
        %4682 = vmatprep.subr.mxu0 0.0
        %4683 = vmatpush1.msra.mxu0 0.0
        %4684 = vmatprep.subr.mxu0 0.0
        %4685 = vmatpush1.msra.mxu0 0.0
        %4686 = vmatprep.subr.mxu0 0.0
        %4687 = vmatpush1.msra.mxu0 0.0
        %4688 = vmatprep.subr.mxu0 0.0
        %4689 = vmatpush1.msra.mxu0 0.0
        %4690 = vmatprep.subr.mxu0 0.0
        %4691 = vmatpush1.msra.mxu0 0.0
        %4692 = vmatprep.subr.mxu0 0.0
        %4693 = vmatpush1.msra.mxu0 0.0
        %4694 = vmatprep.subr.mxu0 0.0
        %4695 = vmatpush1.msra.mxu0 0.0
        %4696 = vmatprep.subr.mxu0 0.0
        %4697 = vmatpush1.msra.mxu0 0.0
        %4698 = vmatprep.subr.mxu0 0.0
        %4699 = vmatpush1.msra.mxu0 0.0
        %4700 = vmatprep.subr.mxu0 0.0
        %4701 = vmatpush1.msra.mxu0 0.0
        %4702 = vmatprep.subr.mxu0 0.0
        %4703 = vmatpush1.msra.mxu0 0.0
        %4704 = vmatprep.subr.mxu0 0.0
        %4705 = vmatpush1.msra.mxu0 0.0
        %4706 = vmatprep.subr.mxu0 0.0
        %4707 = vmatpush1.msra.mxu0 0.0
        %4708 = vmatprep.subr.mxu0 0.0
        %4709 = vmatpush1.msra.mxu0 0.0
        %4710 = vmatprep.subr.mxu0 0.0
        %4711 = vmatpush1.msra.mxu0 0.0
        %4712 = vmatprep.subr.mxu0 0.0
        %4713 = vmatpush1.msra.mxu0 0.0
        %4714 = vmatprep.subr.mxu0 0.0
        %4715 = vmatpush1.msra.mxu0 0.0
        %4716 = vmatprep.subr.mxu0 0.0
        %4717 = vmatpush1.msra.mxu0 0.0
        %4718 = vmatprep.subr.mxu0 0.0
        %4719 = vmatpush1.msra.mxu0 0.0
        %4720 = vmatprep.subr.mxu0 0.0
        %4721 = vmatpush1.msra.mxu0 0.0
        %4722 = vmatprep.subr.mxu0 0.0
        %4723 = vmatpush1.msra.mxu0 0.0
        %4724 = vmatprep.subr.mxu0 0.0
        %4725 = vmatpush1.msra.mxu0 0.0
        %4726 = vmatprep.subr.mxu0 0.0
        %4727 = vmatpush1.msra.mxu0 0.0
        %4728 = vmatprep.subr.mxu0 0.0
        %4729 = vmatpush1.msra.mxu0 0.0
        %4730 = vmatprep.subr.mxu0 0.0
        %4731 = vmatpush1.msra.mxu0 0.0
        %4732 = vmatprep.subr.mxu0 0.0
        %4733 = vmatpush1.msra.mxu0 0.0
        %4734 = vmatprep.mubr.f32.mxu0 0.0
        %4735 = vmatmul.mubr.f32.gmra.mrb[0].mxu0 %v4668
        %v4736 = vpop.f32.mrb[0].mxu0
        %v4737 = vadd.f32 %v3638, %v4736
        %v4738 = vpop.f32.mrb[0].mxu0
        %4739 = vdwg.mxu0
        %v4740 = vadd.f32 %v3633, %v4737
        %v4741 = vxor.u32 %v4740, 2147483648
        %v4742 = vmul.f32 %v4741, 1.442695
        %v4743 = vpow.pop %v4742
        %v4744 = vadd.f32 %v4743, 1.0
        %v4745 = vrcp.pop %v4744
        %v4746 = vmul.f32 1.0, %v4745
        %4748 = vrot.lane.b32.xlu0 %v4737, 96
        %v4749 = vpop.permute.xlu0 %4748
        %v4751 = vmul.f32 %v4746, %v4749
        %4753 = vrot.lane.b32.xlu0 %v4751, 32
        %v4754 = vpop.permute.xlu0 %4753
        %v4756 = vadd.f32 %v3633, %v4754
        %v4757 = vtanh.pop %v4756
        %v4758 = vsub.f32 1.0, %v4746
        %4760 = vrot.lane.b32.xlu0 %v4757, 112
        %v4761 = vpop.permute.xlu0 %4760
        %v4763 = vmul.f32 %v4758, %v4761
        %v4764 = vmul.f32 %v4746, %v4662
        %v4765 = vadd.f32 %v4763, %v4764
        %4767 = vrot.lane.b32.xlu0 %v4765, 112
        %v4768 = vpop.permute.xlu0 %4767
        %4770 = vst.msk [vmem:[#allocation3 + $0xa] sm:$0x1] %vm3739, %v4768
        %v4771 = vsel %vm1082, %v4768, 0
        %4773 = vmatprep.subr.mxu0 0.0
        %4774 = vmatpush1.msra.mxu0 %v3636
        %4775 = vmatprep.subr.mxu0 0.0
        %4776 = vmatpush1.msra.mxu0 %v3637
        %4777 = vmatprep.subr.mxu0 0.0
        %4778 = vmatpush1.msra.mxu0 0.0
        %4779 = vmatprep.subr.mxu0 0.0
        %4780 = vmatpush1.msra.mxu0 0.0
        %4781 = vmatprep.subr.mxu0 0.0
        %4782 = vmatpush1.msra.mxu0 0.0
        %4783 = vmatprep.subr.mxu0 0.0
        %4784 = vmatpush1.msra.mxu0 0.0
        %4785 = vmatprep.subr.mxu0 0.0
        %4786 = vmatpush1.msra.mxu0 0.0
        %4787 = vmatprep.subr.mxu0 0.0
        %4788 = vmatpush1.msra.mxu0 0.0
        %4789 = vmatprep.subr.mxu0 0.0
        %4790 = vmatpush1.msra.mxu0 0.0
        %4791 = vmatprep.subr.mxu0 0.0
        %4792 = vmatpush1.msra.mxu0 0.0
        %4793 = vmatprep.subr.mxu0 0.0
        %4794 = vmatpush1.msra.mxu0 0.0
        %4795 = vmatprep.subr.mxu0 0.0
        %4796 = vmatpush1.msra.mxu0 0.0
        %4797 = vmatprep.subr.mxu0 0.0
        %4798 = vmatpush1.msra.mxu0 0.0
        %4799 = vmatprep.subr.mxu0 0.0
        %4800 = vmatpush1.msra.mxu0 0.0
        %4801 = vmatprep.subr.mxu0 0.0
        %4802 = vmatpush1.msra.mxu0 0.0
        %4803 = vmatprep.subr.mxu0 0.0
        %4804 = vmatpush1.msra.mxu0 0.0
        %4805 = vmatprep.subr.mxu0 0.0
        %4806 = vmatpush1.msra.mxu0 0.0
        %4807 = vmatprep.subr.mxu0 0.0
        %4808 = vmatpush1.msra.mxu0 0.0
        %4809 = vmatprep.subr.mxu0 0.0
        %4810 = vmatpush1.msra.mxu0 0.0
        %4811 = vmatprep.subr.mxu0 0.0
        %4812 = vmatpush1.msra.mxu0 0.0
        %4813 = vmatprep.subr.mxu0 0.0
        %4814 = vmatpush1.msra.mxu0 0.0
        %4815 = vmatprep.subr.mxu0 0.0
        %4816 = vmatpush1.msra.mxu0 0.0
        %4817 = vmatprep.subr.mxu0 0.0
        %4818 = vmatpush1.msra.mxu0 0.0
        %4819 = vmatprep.subr.mxu0 0.0
        %4820 = vmatpush1.msra.mxu0 0.0
        %4821 = vmatprep.subr.mxu0 0.0
        %4822 = vmatpush1.msra.mxu0 0.0
        %4823 = vmatprep.subr.mxu0 0.0
        %4824 = vmatpush1.msra.mxu0 0.0
        %4825 = vmatprep.subr.mxu0 0.0
        %4826 = vmatpush1.msra.mxu0 0.0
        %4827 = vmatprep.subr.mxu0 0.0
        %4828 = vmatpush1.msra.mxu0 0.0
        %4829 = vmatprep.subr.mxu0 0.0
        %4830 = vmatpush1.msra.mxu0 0.0
        %4831 = vmatprep.subr.mxu0 0.0
        %4832 = vmatpush1.msra.mxu0 0.0
        %4833 = vmatprep.subr.mxu0 0.0
        %4834 = vmatpush1.msra.mxu0 0.0
        %4835 = vmatprep.subr.mxu0 0.0
        %4836 = vmatpush1.msra.mxu0 0.0
        %4837 = vmatprep.mubr.f32.mxu0 0.0
        %4838 = vmatmul.mubr.f32.gmra.mrb[0].mxu0 %v4771
        %v4839 = vpop.f32.mrb[0].mxu0
        %v4840 = vadd.f32 %v3638, %v4839
        %v4841 = vpop.f32.mrb[0].mxu0
        %4842 = vdwg.mxu0
        %v4843 = vadd.f32 %v3633, %v4840
        %v4844 = vxor.u32 %v4843, 2147483648
        %v4845 = vmul.f32 %v4844, 1.442695
        %v4846 = vpow.pop %v4845
        %v4847 = vadd.f32 %v4846, 1.0
        %v4848 = vrcp.pop %v4847
        %v4849 = vmul.f32 1.0, %v4848
        %4851 = vrot.lane.b32.xlu0 %v4840, 96
        %v4852 = vpop.permute.xlu0 %4851
        %v4854 = vmul.f32 %v4849, %v4852
        %4856 = vrot.lane.b32.xlu0 %v4854, 32
        %v4857 = vpop.permute.xlu0 %4856
        %v4859 = vadd.f32 %v3633, %v4857
        %v4860 = vtanh.pop %v4859
        %v4861 = vsub.f32 1.0, %v4849
        %4863 = vrot.lane.b32.xlu0 %v4860, 112
        %v4864 = vpop.permute.xlu0 %4863
        %v4866 = vmul.f32 %v4861, %v4864
        %v4867 = vmul.f32 %v4849, %v4765
        %v4868 = vadd.f32 %v4866, %v4867
        %4870 = vrot.lane.b32.xlu0 %v4868, 112
        %v4871 = vpop.permute.xlu0 %4870
        %4873 = vst.msk [vmem:[#allocation3 + $0xb] sm:$0x1] %vm3739, %v4871
        %v4874 = vsel %vm1082, %v4871, 0
        %4876 = vmatprep.subr.mxu0 0.0
        %4877 = vmatpush1.msra.mxu0 %v3636
        %4878 = vmatprep.subr.mxu0 0.0
        %4879 = vmatpush1.msra.mxu0 %v3637
        %4880 = vmatprep.subr.mxu0 0.0
        %4881 = vmatpush1.msra.mxu0 0.0
        %4882 = vmatprep.subr.mxu0 0.0
        %4883 = vmatpush1.msra.mxu0 0.0
        %4884 = vmatprep.subr.mxu0 0.0
        %4885 = vmatpush1.msra.mxu0 0.0
        %4886 = vmatprep.subr.mxu0 0.0
        %4887 = vmatpush1.msra.mxu0 0.0
        %4888 = vmatprep.subr.mxu0 0.0
        %4889 = vmatpush1.msra.mxu0 0.0
        %4890 = vmatprep.subr.mxu0 0.0
        %4891 = vmatpush1.msra.mxu0 0.0
        %4892 = vmatprep.subr.mxu0 0.0
        %4893 = vmatpush1.msra.mxu0 0.0
        %4894 = vmatprep.subr.mxu0 0.0
        %4895 = vmatpush1.msra.mxu0 0.0
        %4896 = vmatprep.subr.mxu0 0.0
        %4897 = vmatpush1.msra.mxu0 0.0
        %4898 = vmatprep.subr.mxu0 0.0
        %4899 = vmatpush1.msra.mxu0 0.0
        %4900 = vmatprep.subr.mxu0 0.0
        %4901 = vmatpush1.msra.mxu0 0.0
        %4902 = vmatprep.subr.mxu0 0.0
        %4903 = vmatpush1.msra.mxu0 0.0
        %4904 = vmatprep.subr.mxu0 0.0
        %4905 = vmatpush1.msra.mxu0 0.0
        %4906 = vmatprep.subr.mxu0 0.0
        %4907 = vmatpush1.msra.mxu0 0.0
        %4908 = vmatprep.subr.mxu0 0.0
        %4909 = vmatpush1.msra.mxu0 0.0
        %4910 = vmatprep.subr.mxu0 0.0
        %4911 = vmatpush1.msra.mxu0 0.0
        %4912 = vmatprep.subr.mxu0 0.0
        %4913 = vmatpush1.msra.mxu0 0.0
        %4914 = vmatprep.subr.mxu0 0.0
        %4915 = vmatpush1.msra.mxu0 0.0
        %4916 = vmatprep.subr.mxu0 0.0
        %4917 = vmatpush1.msra.mxu0 0.0
        %4918 = vmatprep.subr.mxu0 0.0
        %4919 = vmatpush1.msra.mxu0 0.0
        %4920 = vmatprep.subr.mxu0 0.0
        %4921 = vmatpush1.msra.mxu0 0.0
        %4922 = vmatprep.subr.mxu0 0.0
        %4923 = vmatpush1.msra.mxu0 0.0
        %4924 = vmatprep.subr.mxu0 0.0
        %4925 = vmatpush1.msra.mxu0 0.0
        %4926 = vmatprep.subr.mxu0 0.0
        %4927 = vmatpush1.msra.mxu0 0.0
        %4928 = vmatprep.subr.mxu0 0.0
        %4929 = vmatpush1.msra.mxu0 0.0
        %4930 = vmatprep.subr.mxu0 0.0
        %4931 = vmatpush1.msra.mxu0 0.0
        %4932 = vmatprep.subr.mxu0 0.0
        %4933 = vmatpush1.msra.mxu0 0.0
        %4934 = vmatprep.subr.mxu0 0.0
        %4935 = vmatpush1.msra.mxu0 0.0
        %4936 = vmatprep.subr.mxu0 0.0
        %4937 = vmatpush1.msra.mxu0 0.0
        %4938 = vmatprep.subr.mxu0 0.0
        %4939 = vmatpush1.msra.mxu0 0.0
        %4940 = vmatprep.mubr.f32.mxu0 0.0
        %4941 = vmatmul.mubr.f32.gmra.mrb[0].mxu0 %v4874
        %v4942 = vpop.f32.mrb[0].mxu0
        %v4943 = vadd.f32 %v3638, %v4942
        %v4944 = vpop.f32.mrb[0].mxu0
        %4945 = vdwg.mxu0
        %v4946 = vadd.f32 %v3633, %v4943
        %v4947 = vxor.u32 %v4946, 2147483648
        %v4948 = vmul.f32 %v4947, 1.442695
        %v4949 = vpow.pop %v4948
        %v4950 = vadd.f32 %v4949, 1.0
        %v4951 = vrcp.pop %v4950
        %v4952 = vmul.f32 1.0, %v4951
        %4954 = vrot.lane.b32.xlu0 %v4943, 96
        %v4955 = vpop.permute.xlu0 %4954
        %v4957 = vmul.f32 %v4952, %v4955
        %4959 = vrot.lane.b32.xlu0 %v4957, 32
        %v4960 = vpop.permute.xlu0 %4959
        %v4962 = vadd.f32 %v3633, %v4960
        %v4963 = vtanh.pop %v4962
        %v4964 = vsub.f32 1.0, %v4952
        %4966 = vrot.lane.b32.xlu0 %v4963, 112
        %v4967 = vpop.permute.xlu0 %4966
        %v4969 = vmul.f32 %v4964, %v4967
        %v4970 = vmul.f32 %v4952, %v4868
        %v4971 = vadd.f32 %v4969, %v4970
        %4973 = vrot.lane.b32.xlu0 %v4971, 112
        %v4974 = vpop.permute.xlu0 %4973
        %4976 = vst.msk [vmem:[#allocation3 + $0xc] sm:$0x1] %vm3739, %v4974
        %v4977 = vsel %vm1082, %v4974, 0
        %4979 = vmatprep.subr.mxu0 0.0
        %4980 = vmatpush1.msra.mxu0 %v3636
        %4981 = vmatprep.subr.mxu0 0.0
        %4982 = vmatpush1.msra.mxu0 %v3637
        %4983 = vmatprep.subr.mxu0 0.0
        %4984 = vmatpush1.msra.mxu0 0.0
        %4985 = vmatprep.subr.mxu0 0.0
        %4986 = vmatpush1.msra.mxu0 0.0
        %4987 = vmatprep.subr.mxu0 0.0
        %4988 = vmatpush1.msra.mxu0 0.0
        %4989 = vmatprep.subr.mxu0 0.0
        %4990 = vmatpush1.msra.mxu0 0.0
        %4991 = vmatprep.subr.mxu0 0.0
        %4992 = vmatpush1.msra.mxu0 0.0
        %4993 = vmatprep.subr.mxu0 0.0
        %4994 = vmatpush1.msra.mxu0 0.0
        %4995 = vmatprep.subr.mxu0 0.0
        %4996 = vmatpush1.msra.mxu0 0.0
        %4997 = vmatprep.subr.mxu0 0.0
        %4998 = vmatpush1.msra.mxu0 0.0
        %4999 = vmatprep.subr.mxu0 0.0
        %5000 = vmatpush1.msra.mxu0 0.0
        %5001 = vmatprep.subr.mxu0 0.0
        %5002 = vmatpush1.msra.mxu0 0.0
        %5003 = vmatprep.subr.mxu0 0.0
        %5004 = vmatpush1.msra.mxu0 0.0
        %5005 = vmatprep.subr.mxu0 0.0
        %5006 = vmatpush1.msra.mxu0 0.0
        %5007 = vmatprep.subr.mxu0 0.0
        %5008 = vmatpush1.msra.mxu0 0.0
        %5009 = vmatprep.subr.mxu0 0.0
        %5010 = vmatpush1.msra.mxu0 0.0
        %5011 = vmatprep.subr.mxu0 0.0
        %5012 = vmatpush1.msra.mxu0 0.0
        %5013 = vmatprep.subr.mxu0 0.0
        %5014 = vmatpush1.msra.mxu0 0.0
        %5015 = vmatprep.subr.mxu0 0.0
        %5016 = vmatpush1.msra.mxu0 0.0
        %5017 = vmatprep.subr.mxu0 0.0
        %5018 = vmatpush1.msra.mxu0 0.0
        %5019 = vmatprep.subr.mxu0 0.0
        %5020 = vmatpush1.msra.mxu0 0.0
        %5021 = vmatprep.subr.mxu0 0.0
        %5022 = vmatpush1.msra.mxu0 0.0
        %5023 = vmatprep.subr.mxu0 0.0
        %5024 = vmatpush1.msra.mxu0 0.0
        %5025 = vmatprep.subr.mxu0 0.0
        %5026 = vmatpush1.msra.mxu0 0.0
        %5027 = vmatprep.subr.mxu0 0.0
        %5028 = vmatpush1.msra.mxu0 0.0
        %5029 = vmatprep.subr.mxu0 0.0
        %5030 = vmatpush1.msra.mxu0 0.0
        %5031 = vmatprep.subr.mxu0 0.0
        %5032 = vmatpush1.msra.mxu0 0.0
        %5033 = vmatprep.subr.mxu0 0.0
        %5034 = vmatpush1.msra.mxu0 0.0
        %5035 = vmatprep.subr.mxu0 0.0
        %5036 = vmatpush1.msra.mxu0 0.0
        %5037 = vmatprep.subr.mxu0 0.0
        %5038 = vmatpush1.msra.mxu0 0.0
        %5039 = vmatprep.subr.mxu0 0.0
        %5040 = vmatpush1.msra.mxu0 0.0
        %5041 = vmatprep.subr.mxu0 0.0
        %5042 = vmatpush1.msra.mxu0 0.0
        %5043 = vmatprep.mubr.f32.mxu0 0.0
        %5044 = vmatmul.mubr.f32.gmra.mrb[0].mxu0 %v4977
        %v5045 = vpop.f32.mrb[0].mxu0
        %v5046 = vadd.f32 %v3638, %v5045
        %v5047 = vpop.f32.mrb[0].mxu0
        %5048 = vdwg.mxu0
        %v5049 = vadd.f32 %v3633, %v5046
        %v5050 = vxor.u32 %v5049, 2147483648
        %v5051 = vmul.f32 %v5050, 1.442695
        %v5052 = vpow.pop %v5051
        %v5053 = vadd.f32 %v5052, 1.0
        %v5054 = vrcp.pop %v5053
        %v5055 = vmul.f32 1.0, %v5054
        %5057 = vrot.lane.b32.xlu0 %v5046, 96
        %v5058 = vpop.permute.xlu0 %5057
        %v5060 = vmul.f32 %v5055, %v5058
        %5062 = vrot.lane.b32.xlu0 %v5060, 32
        %v5063 = vpop.permute.xlu0 %5062
        %v5065 = vadd.f32 %v3633, %v5063
        %v5066 = vtanh.pop %v5065
        %v5067 = vsub.f32 1.0, %v5055
        %5069 = vrot.lane.b32.xlu0 %v5066, 112
        %v5070 = vpop.permute.xlu0 %5069
        %v5072 = vmul.f32 %v5067, %v5070
        %v5073 = vmul.f32 %v5055, %v4971
        %v5074 = vadd.f32 %v5072, %v5073
        %5076 = vrot.lane.b32.xlu0 %v5074, 112
        %v5077 = vpop.permute.xlu0 %5076
        %5079 = vst.msk [vmem:[#allocation3 + $0xd] sm:$0x1] %vm3739, %v5077
        %v5080 = vsel %vm1082, %v5077, 0
        %5082 = vmatprep.subr.mxu0 0.0
        %5083 = vmatpush1.msra.mxu0 %v3636
        %5084 = vmatprep.subr.mxu0 0.0
        %5085 = vmatpush1.msra.mxu0 %v3637
        %5086 = vmatprep.subr.mxu0 0.0
        %5087 = vmatpush1.msra.mxu0 0.0
        %5088 = vmatprep.subr.mxu0 0.0
        %5089 = vmatpush1.msra.mxu0 0.0
        %5090 = vmatprep.subr.mxu0 0.0
        %5091 = vmatpush1.msra.mxu0 0.0
        %5092 = vmatprep.subr.mxu0 0.0
        %5093 = vmatpush1.msra.mxu0 0.0
        %5094 = vmatprep.subr.mxu0 0.0
        %5095 = vmatpush1.msra.mxu0 0.0
        %5096 = vmatprep.subr.mxu0 0.0
        %5097 = vmatpush1.msra.mxu0 0.0
        %5098 = vmatprep.subr.mxu0 0.0
        %5099 = vmatpush1.msra.mxu0 0.0
        %5100 = vmatprep.subr.mxu0 0.0
        %5101 = vmatpush1.msra.mxu0 0.0
        %5102 = vmatprep.subr.mxu0 0.0
        %5103 = vmatpush1.msra.mxu0 0.0
        %5104 = vmatprep.subr.mxu0 0.0
        %5105 = vmatpush1.msra.mxu0 0.0
        %5106 = vmatprep.subr.mxu0 0.0
        %5107 = vmatpush1.msra.mxu0 0.0
        %5108 = vmatprep.subr.mxu0 0.0
        %5109 = vmatpush1.msra.mxu0 0.0
        %5110 = vmatprep.subr.mxu0 0.0
        %5111 = vmatpush1.msra.mxu0 0.0
        %5112 = vmatprep.subr.mxu0 0.0
        %5113 = vmatpush1.msra.mxu0 0.0
        %5114 = vmatprep.subr.mxu0 0.0
        %5115 = vmatpush1.msra.mxu0 0.0
        %5116 = vmatprep.subr.mxu0 0.0
        %5117 = vmatpush1.msra.mxu0 0.0
        %5118 = vmatprep.subr.mxu0 0.0
        %5119 = vmatpush1.msra.mxu0 0.0
        %5120 = vmatprep.subr.mxu0 0.0
        %5121 = vmatpush1.msra.mxu0 0.0
        %5122 = vmatprep.subr.mxu0 0.0
        %5123 = vmatpush1.msra.mxu0 0.0
        %5124 = vmatprep.subr.mxu0 0.0
        %5125 = vmatpush1.msra.mxu0 0.0
        %5126 = vmatprep.subr.mxu0 0.0
        %5127 = vmatpush1.msra.mxu0 0.0
        %5128 = vmatprep.subr.mxu0 0.0
        %5129 = vmatpush1.msra.mxu0 0.0
        %5130 = vmatprep.subr.mxu0 0.0
        %5131 = vmatpush1.msra.mxu0 0.0
        %5132 = vmatprep.subr.mxu0 0.0
        %5133 = vmatpush1.msra.mxu0 0.0
        %5134 = vmatprep.subr.mxu0 0.0
        %5135 = vmatpush1.msra.mxu0 0.0
        %5136 = vmatprep.subr.mxu0 0.0
        %5137 = vmatpush1.msra.mxu0 0.0
        %5138 = vmatprep.subr.mxu0 0.0
        %5139 = vmatpush1.msra.mxu0 0.0
        %5140 = vmatprep.subr.mxu0 0.0
        %5141 = vmatpush1.msra.mxu0 0.0
        %5142 = vmatprep.subr.mxu0 0.0
        %5143 = vmatpush1.msra.mxu0 0.0
        %5144 = vmatprep.subr.mxu0 0.0
        %5145 = vmatpush1.msra.mxu0 0.0
        %5146 = vmatprep.mubr.f32.mxu0 0.0
        %5147 = vmatmul.mubr.f32.gmra.mrb[0].mxu0 %v5080
        %v5148 = vpop.f32.mrb[0].mxu0
        %v5149 = vadd.f32 %v3638, %v5148
        %v5150 = vpop.f32.mrb[0].mxu0
        %5151 = vdwg.mxu0
        %v5152 = vadd.f32 %v3633, %v5149
        %v5153 = vxor.u32 %v5152, 2147483648
        %v5154 = vmul.f32 %v5153, 1.442695
        %v5155 = vpow.pop %v5154
        %v5156 = vadd.f32 %v5155, 1.0
        %v5157 = vrcp.pop %v5156
        %v5158 = vmul.f32 1.0, %v5157
        %5160 = vrot.lane.b32.xlu0 %v5149, 96
        %v5161 = vpop.permute.xlu0 %5160
        %v5163 = vmul.f32 %v5158, %v5161
        %5165 = vrot.lane.b32.xlu0 %v5163, 32
        %v5166 = vpop.permute.xlu0 %5165
        %v5168 = vadd.f32 %v3633, %v5166
        %v5169 = vtanh.pop %v5168
        %v5170 = vsub.f32 1.0, %v5158
        %5172 = vrot.lane.b32.xlu0 %v5169, 112
        %v5173 = vpop.permute.xlu0 %5172
        %v5175 = vmul.f32 %v5170, %v5173
        %v5176 = vmul.f32 %v5158, %v5074
        %v5177 = vadd.f32 %v5175, %v5176
        %5179 = vrot.lane.b32.xlu0 %v5177, 112
        %v5180 = vpop.permute.xlu0 %5179
        %5182 = vst.msk [vmem:[#allocation3 + $0xe] sm:$0x1] %vm3739, %v5180
        %v5183 = vsel %vm1082, %v5180, 0
        %5185 = vmatprep.subr.mxu0 0.0
        %5186 = vmatpush1.msra.mxu0 %v3636
        %5187 = vmatprep.subr.mxu0 0.0
        %5188 = vmatpush1.msra.mxu0 %v3637
        %5189 = vmatprep.subr.mxu0 0.0
        %5190 = vmatpush1.msra.mxu0 0.0
        %5191 = vmatprep.subr.mxu0 0.0
        %5192 = vmatpush1.msra.mxu0 0.0
        %5193 = vmatprep.subr.mxu0 0.0
        %5194 = vmatpush1.msra.mxu0 0.0
        %5195 = vmatprep.subr.mxu0 0.0
        %5196 = vmatpush1.msra.mxu0 0.0
        %5197 = vmatprep.subr.mxu0 0.0
        %5198 = vmatpush1.msra.mxu0 0.0
        %5199 = vmatprep.subr.mxu0 0.0
        %5200 = vmatpush1.msra.mxu0 0.0
        %5201 = vmatprep.subr.mxu0 0.0
        %5202 = vmatpush1.msra.mxu0 0.0
        %5203 = vmatprep.subr.mxu0 0.0
        %5204 = vmatpush1.msra.mxu0 0.0
        %5205 = vmatprep.subr.mxu0 0.0
        %5206 = vmatpush1.msra.mxu0 0.0
        %5207 = vmatprep.subr.mxu0 0.0
        %5208 = vmatpush1.msra.mxu0 0.0
        %5209 = vmatprep.subr.mxu0 0.0
        %5210 = vmatpush1.msra.mxu0 0.0
        %5211 = vmatprep.subr.mxu0 0.0
        %5212 = vmatpush1.msra.mxu0 0.0
        %5213 = vmatprep.subr.mxu0 0.0
        %5214 = vmatpush1.msra.mxu0 0.0
        %5215 = vmatprep.subr.mxu0 0.0
        %5216 = vmatpush1.msra.mxu0 0.0
        %5217 = vmatprep.subr.mxu0 0.0
        %5218 = vmatpush1.msra.mxu0 0.0
        %5219 = vmatprep.subr.mxu0 0.0
        %5220 = vmatpush1.msra.mxu0 0.0
        %5221 = vmatprep.subr.mxu0 0.0
        %5222 = vmatpush1.msra.mxu0 0.0
        %5223 = vmatprep.subr.mxu0 0.0
        %5224 = vmatpush1.msra.mxu0 0.0
        %5225 = vmatprep.subr.mxu0 0.0
        %5226 = vmatpush1.msra.mxu0 0.0
        %5227 = vmatprep.subr.mxu0 0.0
        %5228 = vmatpush1.msra.mxu0 0.0
        %5229 = vmatprep.subr.mxu0 0.0
        %5230 = vmatpush1.msra.mxu0 0.0
        %5231 = vmatprep.subr.mxu0 0.0
        %5232 = vmatpush1.msra.mxu0 0.0
        %5233 = vmatprep.subr.mxu0 0.0
        %5234 = vmatpush1.msra.mxu0 0.0
        %5235 = vmatprep.subr.mxu0 0.0
        %5236 = vmatpush1.msra.mxu0 0.0
        %5237 = vmatprep.subr.mxu0 0.0
        %5238 = vmatpush1.msra.mxu0 0.0
        %5239 = vmatprep.subr.mxu0 0.0
        %5240 = vmatpush1.msra.mxu0 0.0
        %5241 = vmatprep.subr.mxu0 0.0
        %5242 = vmatpush1.msra.mxu0 0.0
        %5243 = vmatprep.subr.mxu0 0.0
        %5244 = vmatpush1.msra.mxu0 0.0
        %5245 = vmatprep.subr.mxu0 0.0
        %5246 = vmatpush1.msra.mxu0 0.0
        %5247 = vmatprep.subr.mxu0 0.0
        %5248 = vmatpush1.msra.mxu0 0.0
        %5249 = vmatprep.mubr.f32.mxu0 0.0
        %5250 = vmatmul.mubr.f32.gmra.mrb[0].mxu0 %v5183
        %v5251 = vpop.f32.mrb[0].mxu0
        %v5252 = vadd.f32 %v3638, %v5251
        %v5253 = vpop.f32.mrb[0].mxu0
        %5254 = vdwg.mxu0
        %v5255 = vadd.f32 %v3633, %v5252
        %v5256 = vxor.u32 %v5255, 2147483648
        %v5257 = vmul.f32 %v5256, 1.442695
        %v5258 = vpow.pop %v5257
        %v5259 = vadd.f32 %v5258, 1.0
        %v5260 = vrcp.pop %v5259
        %v5261 = vmul.f32 1.0, %v5260
        %5263 = vrot.lane.b32.xlu0 %v5252, 96
        %v5264 = vpop.permute.xlu0 %5263
        %v5266 = vmul.f32 %v5261, %v5264
        %5268 = vrot.lane.b32.xlu0 %v5266, 32
        %v5269 = vpop.permute.xlu0 %5268
        %v5271 = vadd.f32 %v3633, %v5269
        %v5272 = vtanh.pop %v5271
        %v5273 = vsub.f32 1.0, %v5261
        %5275 = vrot.lane.b32.xlu0 %v5272, 112
        %v5276 = vpop.permute.xlu0 %5275
        %v5278 = vmul.f32 %v5273, %v5276
        %v5279 = vmul.f32 %v5261, %v5177
        %v5280 = vadd.f32 %v5278, %v5279
        %5282 = vrot.lane.b32.xlu0 %v5280, 112
        %v5283 = vpop.permute.xlu0 %5282
        %5285 = vst.msk [vmem:[#allocation3 + $0xf] sm:$0x1] %vm3739, %v5283
        %v5286 = vld [vmem:[#allocation3] sm:$0xff]
        %v5287 = vld [vmem:[#allocation3 + $0x8] sm:$0xff]
        %v5288 = vld [vmem:[%s43] sm:$0xff]
        %v5289 = vld [vmem:[%s43 + $0x8] sm:$0xff]
        %v5290 = vld [vmem:[%s45] sm:$0x1]
        %v5292 = vlaneseq
        %v5293 = vshrl.u32 %v5292, 7
        %v5294 = vsub.s32 0, %v5293
        %v5295 = vrot.slane %v5290, %v5294
        %v5298 = vsel %vm1082, %v5286, 0
        %v5301 = vsel %vm1082, %v5287, 0
        %5303 = vmatprep.subr.mxu0 0.0
        %5304 = vmatpush1.msra.mxu0 %v5288
        %5305 = vmatprep.subr.mxu0 0.0
        %5306 = vmatpush1.msra.mxu0 %v5289
        %5307 = vmatprep.subr.mxu0 0.0
        %5308 = vmatpush1.msra.mxu0 0.0
        %5309 = vmatprep.subr.mxu0 0.0
        %5310 = vmatpush1.msra.mxu0 0.0
        %5311 = vmatprep.subr.mxu0 0.0
        %5312 = vmatpush1.msra.mxu0 0.0
        %5313 = vmatprep.subr.mxu0 0.0
        %5314 = vmatpush1.msra.mxu0 0.0
        %5315 = vmatprep.subr.mxu0 0.0
        %5316 = vmatpush1.msra.mxu0 0.0
        %5317 = vmatprep.subr.mxu0 0.0
        %5318 = vmatpush1.msra.mxu0 0.0
        %5319 = vmatprep.subr.mxu0 0.0
        %5320 = vmatpush1.msra.mxu0 0.0
        %5321 = vmatprep.subr.mxu0 0.0
        %5322 = vmatpush1.msra.mxu0 0.0
        %5323 = vmatprep.subr.mxu0 0.0
        %5324 = vmatpush1.msra.mxu0 0.0
        %5325 = vmatprep.subr.mxu0 0.0
        %5326 = vmatpush1.msra.mxu0 0.0
        %5327 = vmatprep.subr.mxu0 0.0
        %5328 = vmatpush1.msra.mxu0 0.0
        %5329 = vmatprep.subr.mxu0 0.0
        %5330 = vmatpush1.msra.mxu0 0.0
        %5331 = vmatprep.subr.mxu0 0.0
        %5332 = vmatpush1.msra.mxu0 0.0
        %5333 = vmatprep.subr.mxu0 0.0
        %5334 = vmatpush1.msra.mxu0 0.0
        %5335 = vmatprep.subr.mxu0 0.0
        %5336 = vmatpush1.msra.mxu0 0.0
        %5337 = vmatprep.subr.mxu0 0.0
        %5338 = vmatpush1.msra.mxu0 0.0
        %5339 = vmatprep.subr.mxu0 0.0
        %5340 = vmatpush1.msra.mxu0 0.0
        %5341 = vmatprep.subr.mxu0 0.0
        %5342 = vmatpush1.msra.mxu0 0.0
        %5343 = vmatprep.subr.mxu0 0.0
        %5344 = vmatpush1.msra.mxu0 0.0
        %5345 = vmatprep.subr.mxu0 0.0
        %5346 = vmatpush1.msra.mxu0 0.0
        %5347 = vmatprep.subr.mxu0 0.0
        %5348 = vmatpush1.msra.mxu0 0.0
        %5349 = vmatprep.subr.mxu0 0.0
        %5350 = vmatpush1.msra.mxu0 0.0
        %5351 = vmatprep.subr.mxu0 0.0
        %5352 = vmatpush1.msra.mxu0 0.0
        %5353 = vmatprep.subr.mxu0 0.0
        %5354 = vmatpush1.msra.mxu0 0.0
        %5355 = vmatprep.subr.mxu0 0.0
        %5356 = vmatpush1.msra.mxu0 0.0
        %5357 = vmatprep.subr.mxu0 0.0
        %5358 = vmatpush1.msra.mxu0 0.0
        %5359 = vmatprep.subr.mxu0 0.0
        %5360 = vmatpush1.msra.mxu0 0.0
        %5361 = vmatprep.subr.mxu0 0.0
        %5362 = vmatpush1.msra.mxu0 0.0
        %5363 = vmatprep.subr.mxu0 0.0
        %5364 = vmatpush1.msra.mxu0 0.0
        %5365 = vmatprep.subr.mxu0 0.0
        %5366 = vmatpush1.msra.mxu0 0.0
        %5367 = vmatprep.mubr.f32.mxu0 0.0
        %5368 = vmatmul.mubr.f32.gmra.mrb[0].mxu0 %v5298
        %v5369 = vpop.f32.mrb[0].mxu0
        %v5370 = vadd.f32 %v5295, %v5369
        %v5371 = vpop.f32.mrb[0].mxu0
        %5372 = vmatprep.mubr.f32.mxu0 0.0
        %5373 = vmatmul.mubr.f32.gmra.mrb[0].mxu0 %v5301
        %v5374 = vpop.f32.mrb[0].mxu0
        %v5375 = vadd.f32 %v5295, %v5374
        %v5376 = vpop.f32.mrb[0].mxu0
        %5377 = vdwg.mxu0
        %5378 = vst.msk [vmem:[%s940] sm:$0xff] %vm1254, %v5370
        %5379 = vst.msk [vmem:[%s940 + $0x8] sm:$0xff] %vm1254, %v5375
        %v5380 = vld [vmem:[%s47] sm:$0xff]
        %v5381 = vld [vmem:[%s47 + $0x8] sm:$0xff]
        %v5382 = vld [vmem:[%s49] sm:$0x1]
        %5383 = vmatprep.subr.mxu0 0.0
        %5384 = vmatpush1.msra.mxu0 %v5380
        %5385 = vmatprep.subr.mxu0 0.0
        %5386 = vmatpush1.msra.mxu0 %v5381
        %5387 = vmatprep.subr.mxu0 0.0
        %5388 = vmatpush1.msra.mxu0 0.0
        %5389 = vmatprep.subr.mxu0 0.0
        %5390 = vmatpush1.msra.mxu0 0.0
        %5391 = vmatprep.subr.mxu0 0.0
        %5392 = vmatpush1.msra.mxu0 0.0
        %5393 = vmatprep.subr.mxu0 0.0
        %5394 = vmatpush1.msra.mxu0 0.0
        %5395 = vmatprep.subr.mxu0 0.0
        %5396 = vmatpush1.msra.mxu0 0.0
        %5397 = vmatprep.subr.mxu0 0.0
        %5398 = vmatpush1.msra.mxu0 0.0
        %5399 = vmatprep.subr.mxu0 0.0
        %5400 = vmatpush1.msra.mxu0 0.0
        %5401 = vmatprep.subr.mxu0 0.0
        %5402 = vmatpush1.msra.mxu0 0.0
        %5403 = vmatprep.subr.mxu0 0.0
        %5404 = vmatpush1.msra.mxu0 0.0
        %5405 = vmatprep.subr.mxu0 0.0
        %5406 = vmatpush1.msra.mxu0 0.0
        %5407 = vmatprep.subr.mxu0 0.0
        %5408 = vmatpush1.msra.mxu0 0.0
        %5409 = vmatprep.subr.mxu0 0.0
        %5410 = vmatpush1.msra.mxu0 0.0
        %5411 = vmatprep.subr.mxu0 0.0
        %5412 = vmatpush1.msra.mxu0 0.0
        %5413 = vmatprep.subr.mxu0 0.0
        %5414 = vmatpush1.msra.mxu0 0.0
        %5415 = vmatprep.subr.mxu0 0.0
        %5416 = vmatpush1.msra.mxu0 0.0
        %5417 = vmatprep.subr.mxu0 0.0
        %5418 = vmatpush1.msra.mxu0 0.0
        %5419 = vmatprep.subr.mxu0 0.0
        %5420 = vmatpush1.msra.mxu0 0.0
        %5421 = vmatprep.subr.mxu0 0.0
        %5422 = vmatpush1.msra.mxu0 0.0
        %5423 = vmatprep.subr.mxu0 0.0
        %5424 = vmatpush1.msra.mxu0 0.0
        %5425 = vmatprep.subr.mxu0 0.0
        %5426 = vmatpush1.msra.mxu0 0.0
        %5427 = vmatprep.subr.mxu0 0.0
        %5428 = vmatpush1.msra.mxu0 0.0
        %5429 = vmatprep.subr.mxu0 0.0
        %5430 = vmatpush1.msra.mxu0 0.0
        %5431 = vmatprep.subr.mxu0 0.0
        %5432 = vmatpush1.msra.mxu0 0.0
        %5433 = vmatprep.subr.mxu0 0.0
        %5434 = vmatpush1.msra.mxu0 0.0
        %5435 = vmatprep.subr.mxu0 0.0
        %5436 = vmatpush1.msra.mxu0 0.0
        %5437 = vmatprep.subr.mxu0 0.0
        %5438 = vmatpush1.msra.mxu0 0.0
        %5439 = vmatprep.subr.mxu0 0.0
        %5440 = vmatpush1.msra.mxu0 0.0
        %5441 = vmatprep.subr.mxu0 0.0
        %5442 = vmatpush1.msra.mxu0 0.0
        %5443 = vmatprep.subr.mxu0 0.0
        %5444 = vmatpush1.msra.mxu0 0.0
        %5445 = vmatprep.subr.mxu0 0.0
        %5446 = vmatpush1.msra.mxu0 0.0
        %5447 = vmatprep.mubr.f32.mxu0 0.0
        %5448 = vmatmul.mubr.f32.gmra.mrb[0].mxu0 %v3564
        %v5449 = vpop.f32.mrb[0].mxu0
        %v5450 = vadd.f32 %v5382, %v5449
        %v5451 = vpop.f32.mrb[0].mxu0
        %5452 = vdwg.mxu0
        %v5453 = vmax.f32 %v5450, 0.0
        %v5454 = vld [vmem:[%s51] sm:$0xff]
        %v5455 = vld [vmem:[%s51 + $0x8] sm:$0xff]
        %v5456 = vld [vmem:[%s53] sm:$0x1]
        %v5458 = vsel %vm1082, %v5453, 0
        %5460 = vmatprep.subr.mxu0 0.0
        %5461 = vmatpush1.msra.mxu0 %v5454
        %5462 = vmatprep.subr.mxu0 0.0
        %5463 = vmatpush1.msra.mxu0 %v5455
        %5464 = vmatprep.subr.mxu0 0.0
        %5465 = vmatpush1.msra.mxu0 0.0
        %5466 = vmatprep.subr.mxu0 0.0
        %5467 = vmatpush1.msra.mxu0 0.0
        %5468 = vmatprep.subr.mxu0 0.0
        %5469 = vmatpush1.msra.mxu0 0.0
        %5470 = vmatprep.subr.mxu0 0.0
        %5471 = vmatpush1.msra.mxu0 0.0
        %5472 = vmatprep.subr.mxu0 0.0
        %5473 = vmatpush1.msra.mxu0 0.0
        %5474 = vmatprep.subr.mxu0 0.0
        %5475 = vmatpush1.msra.mxu0 0.0
        %5476 = vmatprep.subr.mxu0 0.0
        %5477 = vmatpush1.msra.mxu0 0.0
        %5478 = vmatprep.subr.mxu0 0.0
        %5479 = vmatpush1.msra.mxu0 0.0
        %5480 = vmatprep.subr.mxu0 0.0
        %5481 = vmatpush1.msra.mxu0 0.0
        %5482 = vmatprep.subr.mxu0 0.0
        %5483 = vmatpush1.msra.mxu0 0.0
        %5484 = vmatprep.subr.mxu0 0.0
        %5485 = vmatpush1.msra.mxu0 0.0
        %5486 = vmatprep.subr.mxu0 0.0
        %5487 = vmatpush1.msra.mxu0 0.0
        %5488 = vmatprep.subr.mxu0 0.0
        %5489 = vmatpush1.msra.mxu0 0.0
        %5490 = vmatprep.subr.mxu0 0.0
        %5491 = vmatpush1.msra.mxu0 0.0
        %5492 = vmatprep.subr.mxu0 0.0
        %5493 = vmatpush1.msra.mxu0 0.0
        %5494 = vmatprep.subr.mxu0 0.0
        %5495 = vmatpush1.msra.mxu0 0.0
        %5496 = vmatprep.subr.mxu0 0.0
        %5497 = vmatpush1.msra.mxu0 0.0
        %5498 = vmatprep.subr.mxu0 0.0
        %5499 = vmatpush1.msra.mxu0 0.0
        %5500 = vmatprep.subr.mxu0 0.0
        %5501 = vmatpush1.msra.mxu0 0.0
        %5502 = vmatprep.subr.mxu0 0.0
        %5503 = vmatpush1.msra.mxu0 0.0
        %5504 = vmatprep.subr.mxu0 0.0
        %5505 = vmatpush1.msra.mxu0 0.0
        %5506 = vmatprep.subr.mxu0 0.0
        %5507 = vmatpush1.msra.mxu0 0.0
        %5508 = vmatprep.subr.mxu0 0.0
        %5509 = vmatpush1.msra.mxu0 0.0
        %5510 = vmatprep.subr.mxu0 0.0
        %5511 = vmatpush1.msra.mxu0 0.0
        %5512 = vmatprep.subr.mxu0 0.0
        %5513 = vmatpush1.msra.mxu0 0.0
        %5514 = vmatprep.subr.mxu0 0.0
        %5515 = vmatpush1.msra.mxu0 0.0
        %5516 = vmatprep.subr.mxu0 0.0
        %5517 = vmatpush1.msra.mxu0 0.0
        %5518 = vmatprep.subr.mxu0 0.0
        %5519 = vmatpush1.msra.mxu0 0.0
        %5520 = vmatprep.subr.mxu0 0.0
        %5521 = vmatpush1.msra.mxu0 0.0
        %5522 = vmatprep.subr.mxu0 0.0
        %5523 = vmatpush1.msra.mxu0 0.0
        %5524 = vmatprep.mubr.f32.mxu0 0.0
        %5525 = vmatmul.mubr.f32.gmra.mrb[0].mxu0 %v5458
        %v5526 = vpop.f32.mrb[0].mxu0
        %v5527 = vadd.f32 %v5456, %v5526
        %v5528 = vpop.f32.mrb[0].mxu0
        %5529 = vdwg.mxu0
        %v5530 = vmax.f32 %v5527, 0.0
        %v5531 = vld [vmem:[%s55] sm:$0xff]
        %v5532 = vld [vmem:[%s55 + $0x8] sm:$0xff]
        %v5533 = vld [vmem:[%s57] sm:$0x1]
        %v5535 = vsel %vm1082, %v5530, 0
        %5537 = vmatprep.subr.mxu0 0.0
        %5538 = vmatpush1.msra.mxu0 %v5531
        %5539 = vmatprep.subr.mxu0 0.0
        %5540 = vmatpush1.msra.mxu0 %v5532
        %5541 = vmatprep.subr.mxu0 0.0
        %5542 = vmatpush1.msra.mxu0 0.0
        %5543 = vmatprep.subr.mxu0 0.0
        %5544 = vmatpush1.msra.mxu0 0.0
        %5545 = vmatprep.subr.mxu0 0.0
        %5546 = vmatpush1.msra.mxu0 0.0
        %5547 = vmatprep.subr.mxu0 0.0
        %5548 = vmatpush1.msra.mxu0 0.0
        %5549 = vmatprep.subr.mxu0 0.0
        %5550 = vmatpush1.msra.mxu0 0.0
        %5551 = vmatprep.subr.mxu0 0.0
        %5552 = vmatpush1.msra.mxu0 0.0
        %5553 = vmatprep.subr.mxu0 0.0
        %5554 = vmatpush1.msra.mxu0 0.0
        %5555 = vmatprep.subr.mxu0 0.0
        %5556 = vmatpush1.msra.mxu0 0.0
        %5557 = vmatprep.subr.mxu0 0.0
        %5558 = vmatpush1.msra.mxu0 0.0
        %5559 = vmatprep.subr.mxu0 0.0
        %5560 = vmatpush1.msra.mxu0 0.0
        %5561 = vmatprep.subr.mxu0 0.0
        %5562 = vmatpush1.msra.mxu0 0.0
        %5563 = vmatprep.subr.mxu0 0.0
        %5564 = vmatpush1.msra.mxu0 0.0
        %5565 = vmatprep.subr.mxu0 0.0
        %5566 = vmatpush1.msra.mxu0 0.0
        %5567 = vmatprep.subr.mxu0 0.0
        %5568 = vmatpush1.msra.mxu0 0.0
        %5569 = vmatprep.subr.mxu0 0.0
        %5570 = vmatpush1.msra.mxu0 0.0
        %5571 = vmatprep.subr.mxu0 0.0
        %5572 = vmatpush1.msra.mxu0 0.0
        %5573 = vmatprep.subr.mxu0 0.0
        %5574 = vmatpush1.msra.mxu0 0.0
        %5575 = vmatprep.subr.mxu0 0.0
        %5576 = vmatpush1.msra.mxu0 0.0
        %5577 = vmatprep.subr.mxu0 0.0
        %5578 = vmatpush1.msra.mxu0 0.0
        %5579 = vmatprep.subr.mxu0 0.0
        %5580 = vmatpush1.msra.mxu0 0.0
        %5581 = vmatprep.subr.mxu0 0.0
        %5582 = vmatpush1.msra.mxu0 0.0
        %5583 = vmatprep.subr.mxu0 0.0
        %5584 = vmatpush1.msra.mxu0 0.0
        %5585 = vmatprep.subr.mxu0 0.0
        %5586 = vmatpush1.msra.mxu0 0.0
        %5587 = vmatprep.subr.mxu0 0.0
        %5588 = vmatpush1.msra.mxu0 0.0
        %5589 = vmatprep.subr.mxu0 0.0
        %5590 = vmatpush1.msra.mxu0 0.0
        %5591 = vmatprep.subr.mxu0 0.0
        %5592 = vmatpush1.msra.mxu0 0.0
        %5593 = vmatprep.subr.mxu0 0.0
        %5594 = vmatpush1.msra.mxu0 0.0
        %5595 = vmatprep.subr.mxu0 0.0
        %5596 = vmatpush1.msra.mxu0 0.0
        %5597 = vmatprep.subr.mxu0 0.0
        %5598 = vmatpush1.msra.mxu0 0.0
        %5599 = vmatprep.subr.mxu0 0.0
        %5600 = vmatpush1.msra.mxu0 0.0
        %5601 = vmatprep.mubr.f32.mxu0 0.0
        %5602 = vmatmul.mubr.f32.gmra.mrb[0].mxu0 %v5535
        %v5603 = vpop.f32.mrb[0].mxu0
        %v5604 = vadd.f32 %v5533, %v5603
        %v5605 = vpop.f32.mrb[0].mxu0
        %5606 = vdwg.mxu0
        %vm5607 = vcmask 57344
        %5608 = vst.msk [vmem:[%s930] sm:$0x1] %vm5607, %v5604
        %p5609 = scmp.lt.s32.totalorder %s76, 1
        %s5610 = scalar_select %p5609, %s76, 1
        %s5611 = smul.addr %s5610, 2
        %s5612 = smul.addr %s5611, 8
        %s5613 = scalar_lea.vmem %s59, %s5612
        %s5614 = sand.u32 %s724, 1
        %s5615 = scalar_lea.sflag [#allocation5], %s5614
        %s5616 = sand.u32 %s724, 1
        %s5617 = scalar_lea.vmem [#allocation4], %s5616
        // Predicated region
        $region137: #{mtad_gat_forward.1} parent=135 // pred_check
          %p5618 = pneg %p708
        $region138: #{mtad_gat_forward.1} parent=135 // pred_check_branch
          %5620 = sbr.rel (%p5618) target = $region140
        $region139: #{mtad_gat_forward.1} parent=135 // pred_region
          _
        $region140: #{mtad_gat_forward.1} parent=135 // pred_fallthru
          _
        // Predicated region
        $region141: #{mtad_gat_forward.1} parent=135 // pred_check
          %p5621 = pneg %p734
        $region142: #{mtad_gat_forward.1} parent=135 // pred_check_branch
          %5623 = sbr.rel (%p5621) target = $region144
        $region143: #{mtad_gat_forward.1} parent=135 // pred_region
          %s5625 = ssub.s32 16, 16
          %5626 = vsyncadd %s5615, %s5625
          %s5627 = smul.addr %s76, 16
          %s5628 = scalar_lea.hbm %s61, %s5627
          %s5630 = sshll.u32 %s5617, 4
          %s5631 = int_to_ptr.vmem [resolvable:$true] %s5630
          %5633 = dma.vmem_to_hbm [thread:$0]  %s5631, 16, %s5628, %s5615
        $region144: #{mtad_gat_forward.1} parent=135 // pred_fallthru
          _
      $region136: #{mtad_gat_forward.1} parent=5 // pred_fallthru
        _
      %p5634 = scmp.le.s32.totalorder 2, %s71
      // Predicated region
      $region145: #{mtad_gat_forward.1} parent=5 // pred_check
        %p5635 = pneg %p5634
      $region146: #{mtad_gat_forward.1} parent=5 // pred_check_branch
        %5637 = sbr.rel (%p5635) target = $region148
      $region147: #{mtad_gat_forward.1} parent=5 // pred_region
        %s5638 = ssub.s32 %s71, 2
        // Predicated region
        $region149: #{mtad_gat_forward.1} parent=147 // pred_check
          %p5639 = pneg %p714
        $region150: #{mtad_gat_forward.1} parent=147 // pred_check_branch
          %5641 = sbr.rel (%p5639) target = $region152
        $region151: #{mtad_gat_forward.1} parent=147 // pred_region
          %p5642 = scmp.lt.s32.totalorder %s77, 1
          %s5643 = scalar_select %p5642, %s77, 1
          %s5644 = smul.addr %s5643, 2
          %s5645 = smul.addr %s5644, 8
          %s5646 = scalar_lea.vmem %s59, %s5645
        $region152: #{mtad_gat_forward.1} parent=147 // pred_fallthru
          _
        // Predicated region
        $region153: #{mtad_gat_forward.1} parent=147 // pred_check
          %p5647 = pneg %p740
        $region154: #{mtad_gat_forward.1} parent=147 // pred_check_branch
          %5649 = sbr.rel (%p5647) target = $region156
        $region155: #{mtad_gat_forward.1} parent=147 // pred_region
          %s5650 = sand.u32 %s725, 1
          %s5651 = scalar_lea.sflag [#allocation5], %s5650
          %s5652 = sand.u32 %s725, 1
          %s5653 = scalar_lea.vmem [#allocation4], %s5652
          %5654 = dma.done %s5651, 16
        $region156: #{mtad_gat_forward.1} parent=147 // pred_fallthru
          _
      $region148: #{mtad_gat_forward.1} parent=5 // pred_fallthru
        _
    $region6: #{mtad_gat_forward.1} parent=1 // loop_footer
      %s75 = sadd.s32 1, %s71
    $region7: #{mtad_gat_forward.1} parent=1 // loop_footer_branch
      %70 = sbr.rel target = $region3
    $region8: #{mtad_gat_forward.1} parent=1 // loop_exit
      _
    %5655 = vsyncpa [#allocation5], 1
    %s5656 = scalar_lea.sflag [#allocation5], 1
    %5657 = vsyncpa %s5656, 1

</llo_original>
